<compile_context>
chip_gen: v7x
topology: tpu7x:2x2x1
jax: 0.10.0
libtpu: 0.0.40
codegen_flags: <defaults>
</compile_context>

<pallas_src>
import functools

import jax
import jax.numpy as jnp
from jax.experimental import pallas as pl
from jax.experimental.pallas import tpu as pltpu


# ---------------------------------------------------------------------------
# Helpers traced inside the kernels (operate on VMEM values).
# ---------------------------------------------------------------------------
def _apply_act(x, act):
    if act == 'leaky':
        return jnp.where(x > 0, x, 0.2 * x)
    if act == 'sigmoid':
        return jax.nn.sigmoid(x)
    if act == 'tanh':
        return jnp.tanh(x)
    return x


def _shift_up(x, k):
    """result[i] = x[i + k] for i + k < n, else 0 (k: static int >= 0)."""
    if k == 0:
        return x
    pad = jnp.zeros((k,) + x.shape[1:], x.dtype)
    return jnp.concatenate([x[k:], pad], axis=0)


def _shift_down(x, k):
    """result[i] = x[i - k] for i >= k, else 0 (k: static int >= 0)."""
    if k == 0:
        return x
    pad = jnp.zeros((k,) + x.shape[1:], x.dtype)
    return jnp.concatenate([pad, x[:-k]], axis=0)


def _conv3x3_leaky(a, w_flat, b, H, W, left_ok, right_ok):
    """3x3 / stride 1 / pad 1 conv + LeakyReLU(0.2) on row-flattened NHWC.

    a       : (H*W, Cin) value, row-major over (H, W), channels on lanes
    w_flat  : (9*Cin, Cout) bf16 value, K block order = (kh, kw, Cin)
    b       : (1, Cout) f32 value
    left_ok, right_ok : ((H+2)*W, Cin) bool masks (hoisted by the caller)
    """
    HW, Cin = a.shape
    zrow = jnp.zeros((W, Cin), a.dtype)
    ap = jnp.concatenate([zrow, a, zrow], axis=0)            # ((H+2)*W, Cin)
    # W-shifted copies (zeros outside the image row): per-tap work below only
    # slices the leading (row) axis, never the lane axis.
    a_l = jnp.where(left_ok, _shift_down(ap, 1), 0.0)        # x[., j-1]
    a_r = jnp.where(right_ok, _shift_up(ap, 1), 0.0)         # x[., j+1]
    cols = (a_l, ap, a_r)                                    # indexed by dw
    taps = [cols[dw][dh * W:dh * W + HW, :].astype(jnp.bfloat16)
            for dh in range(3) for dw in range(3)]
    lhs = jnp.concatenate(taps, axis=-1)                     # (HW, 9*Cin)
    acc = jnp.dot(lhs, w_flat, preferred_element_type=jnp.float32)
    return _apply_act(acc + b, 'leaky')


# ---------------------------------------------------------------------------
# Fused stage kernel: [n_conv x (conv3x3 + leaky)] + ConvTranspose2d(3,s2,p1,op1)
# The transposed conv is phase-decomposed; phase (r, c) is written to
# o_ref[0, 2*r + c] and interleaved (pixel shuffle) by the caller in XLA.
# ---------------------------------------------------------------------------
def _stage_kernel(*refs, n_conv, H, W, act_out):
    it = iter(refs)
    x_ref = next(it)
    if n_conv:
        cw_ref = next(it)
        cb_ref = next(it)
    uw_ref = next(it)
    ub_ref = next(it)
    o_ref = next(it)

    HW = H * W
    a = x_ref[0]                                             # (HW, C)
    C = a.shape[-1]

    # Hoisted column masks (channel count is constant through the stage:
    # convs are C->C and the upconv consumes C, per the module config).
    colp = jax.lax.broadcasted_iota(jnp.int32, ((H + 2) * W, C), 0) % W
    left_ok = colp > 0
    right_ok = colp < W - 1

    for li in range(n_conv):
        a = _conv3x3_leaky(a, cw_ref[li], cb_ref[li], H, W, left_ok, right_ok)

    # shifted input copies needed by the sub-pixel phases (zero-filled shifts)
    not_last_col = right_ok[W:W + HW]
    x00 = a.astype(jnp.bfloat16)                                       # x[m, n]
    x01 = jnp.where(not_last_col, _shift_up(a, 1), 0.0).astype(jnp.bfloat16)      # x[m, n+1]
    x10 = _shift_up(a, W).astype(jnp.bfloat16)                                    # x[m+1, n]
    x11 = jnp.where(not_last_col, _shift_up(a, W + 1), 0.0).astype(jnp.bfloat16)  # x[m+1, n+1]

    bias = ub_ref[...]                                       # (1, Coutp) f32
    Cin = C

    # Phase-packed weight slab layout (rows, units of Cin):
    #   [t4 | t5, t3 | t7, t1 | t8, t6, t2, t0]   (tap = kh*3 + kw)
    # phase (r, c) -> (row offset, LHS parts in matching K order)
    plan = [
        (0, 0, 0, (x00,)),
        (0, 1, 1, (x00, x01)),
        (1, 0, 3, (x00, x10)),
        (1, 1, 5, (x00, x01, x10, x11)),
    ]
    for r, c, off, parts in plan:
        lhs = parts[0] if len(parts) == 1 else jnp.concatenate(parts, axis=-1)
        wblk = uw_ref[off * Cin:(off + len(parts)) * Cin, :]
        y = jnp.dot(lhs, wblk, preferred_element_type=jnp.float32)
        o_ref[0, 2 * r + c] = _apply_act(y + bias, act_out).astype(o_ref.dtype)


def _run_stage(x_flat, conv_w, conv_b, up_w, up_b, *, H, W, act_out, out_dtype):
    """x_flat: (N, H*W, Cin) -> phases (N, 4, H*W, Coutp) in out_dtype."""
    N, HW, Cin = x_flat.shape
    Cp = up_w.shape[-1]
    n_conv = 0 if conv_w is None else conv_w.shape[0]

    kernel = functools.partial(_stage_kernel, n_conv=n_conv, H=H, W=W,
                               act_out=act_out)

    in_specs = [pl.BlockSpec((1, HW, Cin), lambda n: (n, 0, 0))]
    args = [x_flat]
    if n_conv:
        in_specs += [
            pl.BlockSpec(conv_w.shape, lambda n: (0, 0, 0)),
            pl.BlockSpec(conv_b.shape, lambda n: (0, 0, 0)),
        ]
        args += [conv_w, conv_b]
    in_specs += [
        pl.BlockSpec(up_w.shape, lambda n: (0, 0)),
        pl.BlockSpec(up_b.shape, lambda n: (0, 0)),
    ]
    args += [up_w, up_b]

    return pl.pallas_call(
        kernel,
        out_shape=jax.ShapeDtypeStruct((N, 4, HW, Cp), out_dtype),
        grid=(N,),
        in_specs=in_specs,
        out_specs=pl.BlockSpec((1, 4, HW, Cp), lambda n: (n, 0, 0, 0)),
        compiler_params=pltpu.CompilerParams(
            dimension_semantics=("parallel",),
            vmem_limit_bytes=64 * 1024 * 1024),
    )(*args)


# ---------------------------------------------------------------------------
# XLA glue: pixel shuffle of phases + NCHW boundary transposes.
# ---------------------------------------------------------------------------
def _pixel_shuffle(phases, H, W):
    """(N, 4, H*W, C) phases [phase index = 2*r + c] -> (N, 2H, 2W, C)."""
    N = phases.shape[0]
    C = phases.shape[-1]
    y = phases.reshape(N, 2, 2, H, W, C)
    y = jnp.transpose(y, (0, 3, 1, 4, 2, 5))                 # (N, H, 2, W, 2, C)
    return y.reshape(N, 2 * H, 2 * W, C)


def build_forward(H, W, up_couts, last_activation='sigmoid'):
    """Returns a jitted forward(x_nchw, conv_w, conv_b, up_ws, up_bs) -> NCHW."""
    n_up = len(up_couts)

    def forward(x_nchw, conv_w, conv_b, up_ws, up_bs):
        N = x_nchw.shape[0]
        x = jnp.transpose(x_nchw, (0, 2, 3, 1))              # NHWC
        a = x.reshape(N, H * W, x.shape[-1]).astype(jnp.bfloat16)
        h, w = H, W
        for i in range(n_up):
            is_last = (i == n_up - 1)
            act_out = last_activation if is_last else 'leaky'
            cw = conv_w if i == 0 else None
            cb = conv_b if i == 0 else None
            out_dtype = jnp.float32 if is_last else jnp.bfloat16
            phases = _run_stage(a, cw, cb, up_ws[i], up_bs[i],
                                H=h, W=w, act_out=act_out, out_dtype=out_dtype)
            if up_couts[i] != phases.shape[-1]:
                phases = phases[..., :up_couts[i]]           # drop lane padding
            y = _pixel_shuffle(phases, h, w)                 # (N, 2h, 2w, cout)
            h, w = 2 * h, 2 * w
            a = y.reshape(N, h * w, up_couts[i])
        out_nhwc = a.reshape(N, h, w, up_couts[-1])
        return jnp.transpose(out_nhwc, (0, 3, 1, 2))         # NCHW

    return jax.jit(forward)


# ---------------------------------------------------------------------------
# Parameters: deterministic init (PyTorch shapes) + one-time relayout.
# ---------------------------------------------------------------------------
def init_params(key, num_conv=3, upconv_channels=((128, 'up'), (3, 'up')), in_c=128):
    convs = []
    c = in_c
    for _ in range(num_conv):
        key, k_w, k_b = jax.random.split(key, 3)
        w = 0.05 * jax.random.normal(k_w, (c, c, 3, 3), jnp.float32)     # OIHW
        b = 0.05 * jax.random.normal(k_b, (c,), jnp.float32)
        convs.append((w, b))
    upconvs, modes = [], []
    for (co, mode) in upconv_channels:
        key, k_w, k_b = jax.random.split(key, 3)
        w = 0.05 * jax.random.normal(k_w, (c, co, 3, 3), jnp.float32)    # (Cin,Cout,kh,kw)
        b = 0.05 * jax.random.normal(k_b, (co,), jnp.float32)
        upconvs.append((w, b))
        modes.append(mode)
        c = co
    return convs, upconvs, tuple(modes)


# K-block order packing the per-phase taps contiguously:
#   phase00 -> [t4], phase01 -> [t5, t3], phase10 -> [t7, t1],
#   phase11 -> [t8, t6, t2, t0]    (tap index = kh*3 + kw)
_PHASE_TAP_ORDER = (4, 5, 3, 7, 1, 8, 6, 2, 0)


def prepare_params(convs, upconvs, modes):
    """One-time weight relayout, hoisted out of the forward path."""
    for m in modes:
        if m != 'up':
            # TODO(synk): 'same'-mode ConvTranspose2d (stride=1) stage is not
            # wired into the fused pipeline (default config only uses 'up').
            raise NotImplementedError("only 'up' upconv stages are supported")

    if convs:
        cws = []
        for (w, _) in convs:
            cout, cin = int(w.shape[0]), int(w.shape[1])
            # OIHW -> (kh, kw, Cin, Cout) -> (9*Cin, Cout), K order = (kh,kw,Cin)
            cws.append(jnp.transpose(w, (2, 3, 1, 0)).reshape(9 * cin, cout))
        conv_w = jnp.stack(cws).astype(jnp.bfloat16)                   # (L, 9*Cin, Cout)
        conv_b = jnp.stack([b.reshape(1, -1) for (_, b) in convs]
                           ).astype(jnp.float32)                       # (L, 1, Cout)
    else:
        conv_w, conv_b = None, None

    up_ws, up_bs, up_couts = [], [], []
    for (w, b) in upconvs:
        cin, cout = int(w.shape[0]), int(w.shape[1])
        cp = ((cout + 127) // 128) * 128
        w9 = jnp.transpose(w, (2, 3, 0, 1)).reshape(9, cin, cout)      # tap-major, no flip
        w9 = jnp.stack([w9[t] for t in _PHASE_TAP_ORDER], axis=0)      # phase-packed order
        bb = b
        if cp != cout:
            w9 = jnp.pad(w9, ((0, 0), (0, 0), (0, cp - cout)))
            bb = jnp.pad(bb, (0, cp - cout))
        up_ws.append(w9.reshape(9 * cin, cp).astype(jnp.bfloat16))     # (9*Cin, Cp)
        up_bs.append(bb.reshape(1, cp).astype(jnp.float32))
        up_couts.append(cout)
    return conv_w, conv_b, tuple(up_ws), tuple(up_bs), tuple(up_couts)


# ---------------------------------------------------------------------------
# Pure-XLA reference (exact PyTorch semantics) for in-script validation.
# ---------------------------------------------------------------------------
def reference_forward(x_nchw, convs, upconvs, last_activation='sigmoid'):
    y = x_nchw
    for (w, b) in convs:
        y = jax.lax.conv_general_dilated(
            y, w, window_strides=(1, 1), padding=((1, 1), (1, 1)),
            dimension_numbers=('NCHW', 'OIHW', 'NCHW'),
            precision=jax.lax.Precision.HIGHEST)
        y = y + b[None, :, None, None]
        y = jnp.where(y > 0, y, 0.2 * y)
    n_up = len(upconvs)
    for i, (w, b) in enumerate(upconvs):
        # ConvTranspose2d(k3,s2,p1,op1) == dilated conv with flipped, swapped kernel
        wf = jnp.transpose(w[:, :, ::-1, ::-1], (1, 0, 2, 3))
        y = jax.lax.conv_general_dilated(
            y, wf, window_strides=(1, 1), padding=((1, 2), (1, 2)),
            lhs_dilation=(2, 2),
            dimension_numbers=('NCHW', 'OIHW', 'NCHW'),
            precision=jax.lax.Precision.HIGHEST)
        y = y + b[None, :, None, None]
        if i != n_up - 1:
            y = jnp.where(y > 0, y, 0.2 * y)
        elif last_activation == 'sigmoid':
            y = jax.nn.sigmoid(y)
        elif last_activation == 'tanh':
            y = jnp.tanh(y)
    return y


if __name__ == "__main__":
    key = jax.random.PRNGKey(0)
    k_x, k_p = jax.random.split(key)

    # Module-consistent small shapes: batch=2, in_c=128, spatial 8x8.
    N, C, H, W = 2, 128, 8, 8
    x = jax.random.normal(k_x, (N, C, H, W), jnp.float32)

    convs, upconvs, modes = init_params(k_p)
    conv_w, conv_b, up_ws, up_bs, up_couts = prepare_params(convs, upconvs, modes)

    fwd = build_forward(H, W, up_couts, last_activation='sigmoid')
    out = jax.block_until_ready(fwd(x, conv_w, conv_b, up_ws, up_bs))

    assert out.shape == (N, 3, 4 * H, 4 * W), out.shape          # 8 -> 16 -> 32
    assert bool(jnp.all(jnp.isfinite(out)))
    assert bool(jnp.all((out >= 0.0) & (out <= 1.0)))            # sigmoid range

    # Numerical check vs. pure-XLA reference (bf16 MXU operands -> relaxed tol).
    ref = jax.block_until_ready(reference_forward(x, convs, upconvs, 'sigmoid'))
    max_diff = float(jnp.max(jnp.abs(out - ref)))
    assert max_diff < 5e-2, f"mismatch vs reference: {max_diff}"

    print("KERNEL_OK")
</pallas_src>

<mosaic_0001>
module attributes {stable_mosaic.version = 11 : i64} {
  func.func @_stage_kernel(%arg0: i32, %arg1: memref<1x64x128xbf16, #tpu.memory_space<vmem>>, %arg2: memref<3x1152x128xbf16, #tpu.memory_space<vmem>>, %arg3: memref<3x1x128xf32, #tpu.memory_space<vmem>>, %arg4: memref<1152x128xbf16, #tpu.memory_space<vmem>>, %arg5: memref<1x128xf32, #tpu.memory_space<vmem>>, %arg6: memref<1x4x64x128xbf16, #tpu.memory_space<vmem>>) attributes {dimension_semantics = [#tpu.dimension_semantics<parallel>], iteration_bounds = array<i64: 2>, scalar_prefetch = 0 : i64, scratch_operands = 0 : i64, tpu.core_type = #tpu.core_type<tc>, window_params = [{transform_indices = @transform_0, window_bounds = array<i64: 1, 64, 128>}, {pipeline_mode = #tpu.pipeline_mode<synchronous>, transform_indices = @transform_1, window_bounds = array<i64: 3, 1152, 128>}, {pipeline_mode = #tpu.pipeline_mode<synchronous>, transform_indices = @transform_2, window_bounds = array<i64: 3, 1, 128>}, {pipeline_mode = #tpu.pipeline_mode<synchronous>, transform_indices = @transform_3, window_bounds = array<i64: 1152, 128>}, {pipeline_mode = #tpu.pipeline_mode<synchronous>, transform_indices = @transform_4, window_bounds = array<i64: 1, 128>}, {transform_indices = @transform_5, window_bounds = array<i64: 1, 4, 64, 128>}]} {
    %c0 = arith.constant 0 : index
    %c0_0 = arith.constant 0 : index
    %c0_1 = arith.constant 0 : index
    %0 = vector.load %arg1[%c0, %c0_0, %c0_1] : memref<1x64x128xbf16, #tpu.memory_space<vmem>>, vector<1x64x128xbf16>
    %1 = vector.shape_cast %0 : vector<1x64x128xbf16> to vector<64x128xbf16>
    %2 = tpu.iota {dimensions = array<i32: 0>} : vector<80x128xi32>
    %c8_i32 = arith.constant 8 : i32
    %c0_i32 = arith.constant 0 : i32
    %3 = arith.cmpi eq, %c8_i32, %c0_i32 : i32
    %c1_i32 = arith.constant 1 : i32
    %4 = arith.select %3, %c1_i32, %c8_i32 : i32
    %5 = vector.broadcast %4 : i32 to vector<80x128xi32>
    %6 = arith.remsi %2, %5 : vector<80x128xi32>
    %c0_i32_2 = arith.constant 0 : i32
    %7 = vector.broadcast %c0_i32_2 : i32 to vector<80x128xi32>
    %8 = arith.cmpi ne, %6, %7 : vector<80x128xi32>
    %c0_i32_3 = arith.constant 0 : i32
    %9 = vector.broadcast %c0_i32_3 : i32 to vector<80x128xi32>
    %10 = arith.cmpi slt, %6, %9 : vector<80x128xi32>
    %c0_i32_4 = arith.constant 0 : i32
    %11 = arith.cmpi slt, %4, %c0_i32_4 : i32
    %12 = vector.broadcast %11 : i1 to vector<80x128xi1>
    %13 = vector.broadcast %12 : vector<80x128xi1> to vector<80x128xi1>
    %14 = arith.xori %10, %13 : vector<80x128xi1>
    %15 = arith.andi %14, %8 : vector<80x128xi1>
    %16 = vector.broadcast %4 : i32 to vector<80x128xi32>
    %17 = arith.addi %6, %16 : vector<80x128xi32>
    %18 = arith.select %15, %17, %6 : vector<80x128xi1>, vector<80x128xi32>
    %c0_i32_5 = arith.constant 0 : i32
    %19 = vector.broadcast %c0_i32_5 : i32 to vector<80x128xi32>
    %20 = arith.cmpi sgt, %18, %19 : vector<80x128xi32>
    %c7_i32 = arith.constant 7 : i32
    %21 = vector.broadcast %c7_i32 : i32 to vector<80x128xi32>
    %22 = arith.cmpi slt, %18, %21 : vector<80x128xi32>
    %c0_6 = arith.constant 0 : index
    %c0_7 = arith.constant 0 : index
    %c0_8 = arith.constant 0 : index
    %23 = vector.load %arg2[%c0_6, %c0_7, %c0_8] : memref<3x1152x128xbf16, #tpu.memory_space<vmem>>, vector<1x1152x128xbf16>
    %24 = vector.shape_cast %23 : vector<1x1152x128xbf16> to vector<1152x128xbf16>
    %c0_9 = arith.constant 0 : index
    %c0_10 = arith.constant 0 : index
    %c0_11 = arith.constant 0 : index
    %25 = vector.load %arg3[%c0_9, %c0_10, %c0_11] : memref<3x1x128xf32, #tpu.memory_space<vmem>>, vector<1x1x128xf32>
    %26 = vector.shape_cast %25 : vector<1x1x128xf32> to vector<1x128xf32>
    %cst = arith.constant 0.000000e+00 : bf16
    %27 = vector.broadcast %cst : bf16 to vector<8x128xbf16>
    %28 = tpu.concatenate %27, %1, %27 in 0 : vector<8x128xbf16>, vector<64x128xbf16>, vector<8x128xbf16> -> vector<80x128xbf16>
    %cst_12 = arith.constant 0.000000e+00 : bf16
    %29 = vector.broadcast %cst_12 : bf16 to vector<1x128xbf16>
    %30 = vector.extract_strided_slice %28 {offsets = [0, 0], sizes = [79, 128], strides = [1, 1]} : vector<80x128xbf16> to vector<79x128xbf16>
    %31 = tpu.concatenate %29, %30 in 0 : vector<1x128xbf16>, vector<79x128xbf16> -> vector<80x128xbf16>
    %cst_13 = arith.constant 0.000000e+00 : f32
    %32 = arith.truncf %cst_13 : f32 to bf16
    %33 = vector.broadcast %32 : bf16 to vector<80x128xbf16>
    %34 = arith.select %20, %31, %33 : vector<80x128xi1>, vector<80x128xbf16>
    %cst_14 = arith.constant 0.000000e+00 : bf16
    %35 = vector.broadcast %cst_14 : bf16 to vector<1x128xbf16>
    %36 = vector.extract_strided_slice %28 {offsets = [1, 0], sizes = [79, 128], strides = [1, 1]} : vector<80x128xbf16> to vector<79x128xbf16>
    %37 = tpu.concatenate %36, %35 in 0 : vector<79x128xbf16>, vector<1x128xbf16> -> vector<80x128xbf16>
    %cst_15 = arith.constant 0.000000e+00 : f32
    %38 = arith.truncf %cst_15 : f32 to bf16
    %39 = vector.broadcast %38 : bf16 to vector<80x128xbf16>
    %40 = arith.select %22, %37, %39 : vector<80x128xi1>, vector<80x128xbf16>
    %41 = vector.extract_strided_slice %34 {offsets = [0, 0], sizes = [64, 128], strides = [1, 1]} : vector<80x128xbf16> to vector<64x128xbf16>
    %42 = vector.extract_strided_slice %28 {offsets = [0, 0], sizes = [64, 128], strides = [1, 1]} : vector<80x128xbf16> to vector<64x128xbf16>
    %43 = vector.extract_strided_slice %40 {offsets = [0, 0], sizes = [64, 128], strides = [1, 1]} : vector<80x128xbf16> to vector<64x128xbf16>
    %44 = vector.extract_strided_slice %34 {offsets = [8, 0], sizes = [64, 128], strides = [1, 1]} : vector<80x128xbf16> to vector<64x128xbf16>
    %45 = vector.extract_strided_slice %28 {offsets = [8, 0], sizes = [64, 128], strides = [1, 1]} : vector<80x128xbf16> to vector<64x128xbf16>
    %46 = vector.extract_strided_slice %40 {offsets = [8, 0], sizes = [64, 128], strides = [1, 1]} : vector<80x128xbf16> to vector<64x128xbf16>
    %47 = vector.extract_strided_slice %34 {offsets = [16, 0], sizes = [64, 128], strides = [1, 1]} : vector<80x128xbf16> to vector<64x128xbf16>
    %48 = vector.extract_strided_slice %28 {offsets = [16, 0], sizes = [64, 128], strides = [1, 1]} : vector<80x128xbf16> to vector<64x128xbf16>
    %49 = vector.extract_strided_slice %40 {offsets = [16, 0], sizes = [64, 128], strides = [1, 1]} : vector<80x128xbf16> to vector<64x128xbf16>
    %50 = tpu.concatenate %41, %42, %43, %44, %45, %46, %47, %48, %49 in 1 : vector<64x128xbf16>, vector<64x128xbf16>, vector<64x128xbf16>, vector<64x128xbf16>, vector<64x128xbf16>, vector<64x128xbf16>, vector<64x128xbf16>, vector<64x128xbf16>, vector<64x128xbf16> -> vector<64x1152xbf16>
    %cst_16 = arith.constant dense<0.000000e+00> : vector<64x128xf32>
    %51 = tpu.matmul %50, %24, %cst_16 {dimension_numbers = #tpu.dot_dimension_numbers<[1], [0], [0], [1], [0, 0, 1, 1], [], []>} : vector<64x1152xbf16>, vector<1152x128xbf16>, vector<64x128xf32> -> vector<64x128xf32>
    %52 = vector.broadcast %26 : vector<1x128xf32> to vector<64x128xf32>
    %53 = arith.addf %51, %52 : vector<64x128xf32>
    %cst_17 = arith.constant 0.000000e+00 : f32
    %54 = vector.broadcast %cst_17 : f32 to vector<64x128xf32>
    %55 = arith.cmpf ogt, %53, %54 : vector<64x128xf32>
    %cst_18 = arith.constant 2.000000e-01 : f32
    %56 = vector.broadcast %cst_18 : f32 to vector<64x128xf32>
    %57 = arith.mulf %56, %53 : vector<64x128xf32>
    %58 = arith.select %55, %53, %57 : vector<64x128xi1>, vector<64x128xf32>
    %c1 = arith.constant 1 : index
    %c0_19 = arith.constant 0 : index
    %c0_20 = arith.constant 0 : index
    %59 = vector.load %arg2[%c1, %c0_19, %c0_20] : memref<3x1152x128xbf16, #tpu.memory_space<vmem>>, vector<1x1152x128xbf16>
    %60 = vector.shape_cast %59 : vector<1x1152x128xbf16> to vector<1152x128xbf16>
    %c1_21 = arith.constant 1 : index
    %c0_22 = arith.constant 0 : index
    %c0_23 = arith.constant 0 : index
    %61 = vector.load %arg3[%c1_21, %c0_22, %c0_23] : memref<3x1x128xf32, #tpu.memory_space<vmem>>, vector<1x1x128xf32>
    %62 = vector.shape_cast %61 : vector<1x1x128xf32> to vector<1x128xf32>
    %cst_24 = arith.constant 0.000000e+00 : f32
    %63 = vector.broadcast %cst_24 : f32 to vector<8x128xf32>
    %64 = tpu.concatenate %63, %58, %63 in 0 : vector<8x128xf32>, vector<64x128xf32>, vector<8x128xf32> -> vector<80x128xf32>
    %cst_25 = arith.constant 0.000000e+00 : f32
    %65 = vector.broadcast %cst_25 : f32 to vector<1x128xf32>
    %66 = vector.extract_strided_slice %64 {offsets = [0, 0], sizes = [79, 128], strides = [1, 1]} : vector<80x128xf32> to vector<79x128xf32>
    %67 = tpu.concatenate %65, %66 in 0 : vector<1x128xf32>, vector<79x128xf32> -> vector<80x128xf32>
    %cst_26 = arith.constant 0.000000e+00 : f32
    %68 = vector.broadcast %cst_26 : f32 to vector<80x128xf32>
    %69 = arith.select %20, %67, %68 : vector<80x128xi1>, vector<80x128xf32>
    %cst_27 = arith.constant 0.000000e+00 : f32
    %70 = vector.broadcast %cst_27 : f32 to vector<1x128xf32>
    %71 = vector.extract_strided_slice %64 {offsets = [1, 0], sizes = [79, 128], strides = [1, 1]} : vector<80x128xf32> to vector<79x128xf32>
    %72 = tpu.concatenate %71, %70 in 0 : vector<79x128xf32>, vector<1x128xf32> -> vector<80x128xf32>
    %cst_28 = arith.constant 0.000000e+00 : f32
    %73 = vector.broadcast %cst_28 : f32 to vector<80x128xf32>
    %74 = arith.select %22, %72, %73 : vector<80x128xi1>, vector<80x128xf32>
    %75 = vector.extract_strided_slice %69 {offsets = [0, 0], sizes = [64, 128], strides = [1, 1]} : vector<80x128xf32> to vector<64x128xf32>
    %76 = arith.truncf %75 : vector<64x128xf32> to vector<64x128xbf16>
    %77 = vector.extract_strided_slice %64 {offsets = [0, 0], sizes = [64, 128], strides = [1, 1]} : vector<80x128xf32> to vector<64x128xf32>
    %78 = arith.truncf %77 : vector<64x128xf32> to vector<64x128xbf16>
    %79 = vector.extract_strided_slice %74 {offsets = [0, 0], sizes = [64, 128], strides = [1, 1]} : vector<80x128xf32> to vector<64x128xf32>
    %80 = arith.truncf %79 : vector<64x128xf32> to vector<64x128xbf16>
    %81 = vector.extract_strided_slice %69 {offsets = [8, 0], sizes = [64, 128], strides = [1, 1]} : vector<80x128xf32> to vector<64x128xf32>
    %82 = arith.truncf %81 : vector<64x128xf32> to vector<64x128xbf16>
    %83 = vector.extract_strided_slice %64 {offsets = [8, 0], sizes = [64, 128], strides = [1, 1]} : vector<80x128xf32> to vector<64x128xf32>
    %84 = arith.truncf %83 : vector<64x128xf32> to vector<64x128xbf16>
    %85 = vector.extract_strided_slice %74 {offsets = [8, 0], sizes = [64, 128], strides = [1, 1]} : vector<80x128xf32> to vector<64x128xf32>
    %86 = arith.truncf %85 : vector<64x128xf32> to vector<64x128xbf16>
    %87 = vector.extract_strided_slice %69 {offsets = [16, 0], sizes = [64, 128], strides = [1, 1]} : vector<80x128xf32> to vector<64x128xf32>
    %88 = arith.truncf %87 : vector<64x128xf32> to vector<64x128xbf16>
    %89 = vector.extract_strided_slice %64 {offsets = [16, 0], sizes = [64, 128], strides = [1, 1]} : vector<80x128xf32> to vector<64x128xf32>
    %90 = arith.truncf %89 : vector<64x128xf32> to vector<64x128xbf16>
    %91 = vector.extract_strided_slice %74 {offsets = [16, 0], sizes = [64, 128], strides = [1, 1]} : vector<80x128xf32> to vector<64x128xf32>
    %92 = arith.truncf %91 : vector<64x128xf32> to vector<64x128xbf16>
    %93 = tpu.concatenate %76, %78, %80, %82, %84, %86, %88, %90, %92 in 1 : vector<64x128xbf16>, vector<64x128xbf16>, vector<64x128xbf16>, vector<64x128xbf16>, vector<64x128xbf16>, vector<64x128xbf16>, vector<64x128xbf16>, vector<64x128xbf16>, vector<64x128xbf16> -> vector<64x1152xbf16>
    %cst_29 = arith.constant dense<0.000000e+00> : vector<64x128xf32>
    %94 = tpu.matmul %93, %60, %cst_29 {dimension_numbers = #tpu.dot_dimension_numbers<[1], [0], [0], [1], [0, 0, 1, 1], [], []>} : vector<64x1152xbf16>, vector<1152x128xbf16>, vector<64x128xf32> -> vector<64x128xf32>
    %95 = vector.broadcast %62 : vector<1x128xf32> to vector<64x128xf32>
    %96 = arith.addf %94, %95 : vector<64x128xf32>
    %cst_30 = arith.constant 0.000000e+00 : f32
    %97 = vector.broadcast %cst_30 : f32 to vector<64x128xf32>
    %98 = arith.cmpf ogt, %96, %97 : vector<64x128xf32>
    %cst_31 = arith.constant 2.000000e-01 : f32
    %99 = vector.broadcast %cst_31 : f32 to vector<64x128xf32>
    %100 = arith.mulf %99, %96 : vector<64x128xf32>
    %101 = arith.select %98, %96, %100 : vector<64x128xi1>, vector<64x128xf32>
    %c2 = arith.constant 2 : index
    %c0_32 = arith.constant 0 : index
    %c0_33 = arith.constant 0 : index
    %102 = vector.load %arg2[%c2, %c0_32, %c0_33] : memref<3x1152x128xbf16, #tpu.memory_space<vmem>>, vector<1x1152x128xbf16>
    %103 = vector.shape_cast %102 : vector<1x1152x128xbf16> to vector<1152x128xbf16>
    %c2_34 = arith.constant 2 : index
    %c0_35 = arith.constant 0 : index
    %c0_36 = arith.constant 0 : index
    %104 = vector.load %arg3[%c2_34, %c0_35, %c0_36] : memref<3x1x128xf32, #tpu.memory_space<vmem>>, vector<1x1x128xf32>
    %105 = vector.shape_cast %104 : vector<1x1x128xf32> to vector<1x128xf32>
    %cst_37 = arith.constant 0.000000e+00 : f32
    %106 = vector.broadcast %cst_37 : f32 to vector<8x128xf32>
    %107 = tpu.concatenate %106, %101, %106 in 0 : vector<8x128xf32>, vector<64x128xf32>, vector<8x128xf32> -> vector<80x128xf32>
    %cst_38 = arith.constant 0.000000e+00 : f32
    %108 = vector.broadcast %cst_38 : f32 to vector<1x128xf32>
    %109 = vector.extract_strided_slice %107 {offsets = [0, 0], sizes = [79, 128], strides = [1, 1]} : vector<80x128xf32> to vector<79x128xf32>
    %110 = tpu.concatenate %108, %109 in 0 : vector<1x128xf32>, vector<79x128xf32> -> vector<80x128xf32>
    %cst_39 = arith.constant 0.000000e+00 : f32
    %111 = vector.broadcast %cst_39 : f32 to vector<80x128xf32>
    %112 = arith.select %20, %110, %111 : vector<80x128xi1>, vector<80x128xf32>
    %cst_40 = arith.constant 0.000000e+00 : f32
    %113 = vector.broadcast %cst_40 : f32 to vector<1x128xf32>
    %114 = vector.extract_strided_slice %107 {offsets = [1, 0], sizes = [79, 128], strides = [1, 1]} : vector<80x128xf32> to vector<79x128xf32>
    %115 = tpu.concatenate %114, %113 in 0 : vector<79x128xf32>, vector<1x128xf32> -> vector<80x128xf32>
    %cst_41 = arith.constant 0.000000e+00 : f32
    %116 = vector.broadcast %cst_41 : f32 to vector<80x128xf32>
    %117 = arith.select %22, %115, %116 : vector<80x128xi1>, vector<80x128xf32>
    %118 = vector.extract_strided_slice %112 {offsets = [0, 0], sizes = [64, 128], strides = [1, 1]} : vector<80x128xf32> to vector<64x128xf32>
    %119 = arith.truncf %118 : vector<64x128xf32> to vector<64x128xbf16>
    %120 = vector.extract_strided_slice %107 {offsets = [0, 0], sizes = [64, 128], strides = [1, 1]} : vector<80x128xf32> to vector<64x128xf32>
    %121 = arith.truncf %120 : vector<64x128xf32> to vector<64x128xbf16>
    %122 = vector.extract_strided_slice %117 {offsets = [0, 0], sizes = [64, 128], strides = [1, 1]} : vector<80x128xf32> to vector<64x128xf32>
    %123 = arith.truncf %122 : vector<64x128xf32> to vector<64x128xbf16>
    %124 = vector.extract_strided_slice %112 {offsets = [8, 0], sizes = [64, 128], strides = [1, 1]} : vector<80x128xf32> to vector<64x128xf32>
    %125 = arith.truncf %124 : vector<64x128xf32> to vector<64x128xbf16>
    %126 = vector.extract_strided_slice %107 {offsets = [8, 0], sizes = [64, 128], strides = [1, 1]} : vector<80x128xf32> to vector<64x128xf32>
    %127 = arith.truncf %126 : vector<64x128xf32> to vector<64x128xbf16>
    %128 = vector.extract_strided_slice %117 {offsets = [8, 0], sizes = [64, 128], strides = [1, 1]} : vector<80x128xf32> to vector<64x128xf32>
    %129 = arith.truncf %128 : vector<64x128xf32> to vector<64x128xbf16>
    %130 = vector.extract_strided_slice %112 {offsets = [16, 0], sizes = [64, 128], strides = [1, 1]} : vector<80x128xf32> to vector<64x128xf32>
    %131 = arith.truncf %130 : vector<64x128xf32> to vector<64x128xbf16>
    %132 = vector.extract_strided_slice %107 {offsets = [16, 0], sizes = [64, 128], strides = [1, 1]} : vector<80x128xf32> to vector<64x128xf32>
    %133 = arith.truncf %132 : vector<64x128xf32> to vector<64x128xbf16>
    %134 = vector.extract_strided_slice %117 {offsets = [16, 0], sizes = [64, 128], strides = [1, 1]} : vector<80x128xf32> to vector<64x128xf32>
    %135 = arith.truncf %134 : vector<64x128xf32> to vector<64x128xbf16>
    %136 = tpu.concatenate %119, %121, %123, %125, %127, %129, %131, %133, %135 in 1 : vector<64x128xbf16>, vector<64x128xbf16>, vector<64x128xbf16>, vector<64x128xbf16>, vector<64x128xbf16>, vector<64x128xbf16>, vector<64x128xbf16>, vector<64x128xbf16>, vector<64x128xbf16> -> vector<64x1152xbf16>
    %cst_42 = arith.constant dense<0.000000e+00> : vector<64x128xf32>
    %137 = tpu.matmul %136, %103, %cst_42 {dimension_numbers = #tpu.dot_dimension_numbers<[1], [0], [0], [1], [0, 0, 1, 1], [], []>} : vector<64x1152xbf16>, vector<1152x128xbf16>, vector<64x128xf32> -> vector<64x128xf32>
    %138 = vector.broadcast %105 : vector<1x128xf32> to vector<64x128xf32>
    %139 = arith.addf %137, %138 : vector<64x128xf32>
    %cst_43 = arith.constant 0.000000e+00 : f32
    %140 = vector.broadcast %cst_43 : f32 to vector<64x128xf32>
    %141 = arith.cmpf ogt, %139, %140 : vector<64x128xf32>
    %cst_44 = arith.constant 2.000000e-01 : f32
    %142 = vector.broadcast %cst_44 : f32 to vector<64x128xf32>
    %143 = arith.mulf %142, %139 : vector<64x128xf32>
    %144 = arith.select %141, %139, %143 : vector<64x128xi1>, vector<64x128xf32>
    %145 = vector.extract_strided_slice %22 {offsets = [8, 0], sizes = [64, 128], strides = [1, 1]} : vector<80x128xi1> to vector<64x128xi1>
    %146 = arith.truncf %144 : vector<64x128xf32> to vector<64x128xbf16>
    %cst_45 = arith.constant 0.000000e+00 : f32
    %147 = vector.broadcast %cst_45 : f32 to vector<1x128xf32>
    %148 = vector.extract_strided_slice %144 {offsets = [1, 0], sizes = [63, 128], strides = [1, 1]} : vector<64x128xf32> to vector<63x128xf32>
    %149 = tpu.concatenate %148, %147 in 0 : vector<63x128xf32>, vector<1x128xf32> -> vector<64x128xf32>
    %cst_46 = arith.constant 0.000000e+00 : f32
    %150 = vector.broadcast %cst_46 : f32 to vector<64x128xf32>
    %151 = arith.select %145, %149, %150 : vector<64x128xi1>, vector<64x128xf32>
    %152 = arith.truncf %151 : vector<64x128xf32> to vector<64x128xbf16>
    %cst_47 = arith.constant 0.000000e+00 : f32
    %153 = vector.broadcast %cst_47 : f32 to vector<8x128xf32>
    %154 = vector.extract_strided_slice %144 {offsets = [8, 0], sizes = [56, 128], strides = [1, 1]} : vector<64x128xf32> to vector<56x128xf32>
    %155 = tpu.concatenate %154, %153 in 0 : vector<56x128xf32>, vector<8x128xf32> -> vector<64x128xf32>
    %156 = arith.truncf %155 : vector<64x128xf32> to vector<64x128xbf16>
    %cst_48 = arith.constant 0.000000e+00 : f32
    %157 = vector.broadcast %cst_48 : f32 to vector<9x128xf32>
    %158 = vector.extract_strided_slice %144 {offsets = [9, 0], sizes = [55, 128], strides = [1, 1]} : vector<64x128xf32> to vector<55x128xf32>
    %159 = tpu.concatenate %158, %157 in 0 : vector<55x128xf32>, vector<9x128xf32> -> vector<64x128xf32>
    %cst_49 = arith.constant 0.000000e+00 : f32
    %160 = vector.broadcast %cst_49 : f32 to vector<64x128xf32>
    %161 = arith.select %145, %159, %160 : vector<64x128xi1>, vector<64x128xf32>
    %162 = arith.truncf %161 : vector<64x128xf32> to vector<64x128xbf16>
    %c0_50 = arith.constant 0 : index
    %c0_51 = arith.constant 0 : index
    %163 = vector.load %arg5[%c0_50, %c0_51] : memref<1x128xf32, #tpu.memory_space<vmem>>, vector<1x128xf32>
    %c0_52 = arith.constant 0 : index
    %c0_53 = arith.constant 0 : index
    %164 = vector.load %arg4[%c0_52, %c0_53] : memref<1152x128xbf16, #tpu.memory_space<vmem>>, vector<128x128xbf16>
    %cst_54 = arith.constant dense<0.000000e+00> : vector<64x128xf32>
    %165 = tpu.matmul %146, %164, %cst_54 {dimension_numbers = #tpu.dot_dimension_numbers<[1], [0], [0], [1], [0, 0, 1, 1], [], []>} : vector<64x128xbf16>, vector<128x128xbf16>, vector<64x128xf32> -> vector<64x128xf32>
    %166 = vector.broadcast %163 : vector<1x128xf32> to vector<64x128xf32>
    %167 = arith.addf %165, %166 : vector<64x128xf32>
    %cst_55 = arith.constant 0.000000e+00 : f32
    %168 = vector.broadcast %cst_55 : f32 to vector<64x128xf32>
    %169 = arith.cmpf ogt, %167, %168 : vector<64x128xf32>
    %cst_56 = arith.constant 2.000000e-01 : f32
    %170 = vector.broadcast %cst_56 : f32 to vector<64x128xf32>
    %171 = arith.mulf %170, %167 : vector<64x128xf32>
    %172 = arith.select %169, %167, %171 : vector<64x128xi1>, vector<64x128xf32>
    %173 = arith.truncf %172 : vector<64x128xf32> to vector<64x128xbf16>
    %c0_57 = arith.constant 0 : index
    %c0_58 = arith.constant 0 : index
    %c0_59 = arith.constant 0 : index
    %c0_60 = arith.constant 0 : index
    %174 = vector.load %arg6[%c0_57, %c0_58, %c0_59, %c0_60] : memref<1x4x64x128xbf16, #tpu.memory_space<vmem>>, vector<1x1x64x128xbf16>
    %175 = vector.shape_cast %174 : vector<1x1x64x128xbf16> to vector<64x128xbf16>
    %176 = vector.shape_cast %173 : vector<64x128xbf16> to vector<1x1x64x128xbf16>
    tpu.vector_store %arg6[%c0_57, %c0_58, %c0_59, %c0_60], %176 {strides = array<i32>} : memref<1x4x64x128xbf16, #tpu.memory_space<vmem>>, vector<1x1x64x128xbf16>,
    %177 = tpu.concatenate %146, %152 in 1 : vector<64x128xbf16>, vector<64x128xbf16> -> vector<64x256xbf16>
    %c128 = arith.constant 128 : index
    %c0_61 = arith.constant 0 : index
    %178 = vector.load %arg4[%c128, %c0_61] : memref<1152x128xbf16, #tpu.memory_space<vmem>>, vector<256x128xbf16>
    %cst_62 = arith.constant dense<0.000000e+00> : vector<64x128xf32>
    %179 = tpu.matmul %177, %178, %cst_62 {dimension_numbers = #tpu.dot_dimension_numbers<[1], [0], [0], [1], [0, 0, 1, 1], [], []>} : vector<64x256xbf16>, vector<256x128xbf16>, vector<64x128xf32> -> vector<64x128xf32>
    %180 = vector.broadcast %163 : vector<1x128xf32> to vector<64x128xf32>
    %181 = arith.addf %179, %180 : vector<64x128xf32>
    %cst_63 = arith.constant 0.000000e+00 : f32
    %182 = vector.broadcast %cst_63 : f32 to vector<64x128xf32>
    %183 = arith.cmpf ogt, %181, %182 : vector<64x128xf32>
    %cst_64 = arith.constant 2.000000e-01 : f32
    %184 = vector.broadcast %cst_64 : f32 to vector<64x128xf32>
    %185 = arith.mulf %184, %181 : vector<64x128xf32>
    %186 = arith.select %183, %181, %185 : vector<64x128xi1>, vector<64x128xf32>
    %187 = arith.truncf %186 : vector<64x128xf32> to vector<64x128xbf16>
    %c0_65 = arith.constant 0 : index
    %c1_66 = arith.constant 1 : index
    %c0_67 = arith.constant 0 : index
    %c0_68 = arith.constant 0 : index
    %188 = vector.load %arg6[%c0_65, %c1_66, %c0_67, %c0_68] : memref<1x4x64x128xbf16, #tpu.memory_space<vmem>>, vector<1x1x64x128xbf16>
    %189 = vector.shape_cast %188 : vector<1x1x64x128xbf16> to vector<64x128xbf16>
    %190 = vector.shape_cast %187 : vector<64x128xbf16> to vector<1x1x64x128xbf16>
    tpu.vector_store %arg6[%c0_65, %c1_66, %c0_67, %c0_68], %190 {strides = array<i32>} : memref<1x4x64x128xbf16, #tpu.memory_space<vmem>>, vector<1x1x64x128xbf16>,
    %191 = tpu.concatenate %146, %156 in 1 : vector<64x128xbf16>, vector<64x128xbf16> -> vector<64x256xbf16>
    %c384 = arith.constant 384 : index
    %c0_69 = arith.constant 0 : index
    %192 = vector.load %arg4[%c384, %c0_69] : memref<1152x128xbf16, #tpu.memory_space<vmem>>, vector<256x128xbf16>
    %cst_70 = arith.constant dense<0.000000e+00> : vector<64x128xf32>
    %193 = tpu.matmul %191, %192, %cst_70 {dimension_numbers = #tpu.dot_dimension_numbers<[1], [0], [0], [1], [0, 0, 1, 1], [], []>} : vector<64x256xbf16>, vector<256x128xbf16>, vector<64x128xf32> -> vector<64x128xf32>
    %194 = vector.broadcast %163 : vector<1x128xf32> to vector<64x128xf32>
    %195 = arith.addf %193, %194 : vector<64x128xf32>
    %cst_71 = arith.constant 0.000000e+00 : f32
    %196 = vector.broadcast %cst_71 : f32 to vector<64x128xf32>
    %197 = arith.cmpf ogt, %195, %196 : vector<64x128xf32>
    %cst_72 = arith.constant 2.000000e-01 : f32
    %198 = vector.broadcast %cst_72 : f32 to vector<64x128xf32>
    %199 = arith.mulf %198, %195 : vector<64x128xf32>
    %200 = arith.select %197, %195, %199 : vector<64x128xi1>, vector<64x128xf32>
    %201 = arith.truncf %200 : vector<64x128xf32> to vector<64x128xbf16>
    %c0_73 = arith.constant 0 : index
    %c2_74 = arith.constant 2 : index
    %c0_75 = arith.constant 0 : index
    %c0_76 = arith.constant 0 : index
    %202 = vector.load %arg6[%c0_73, %c2_74, %c0_75, %c0_76] : memref<1x4x64x128xbf16, #tpu.memory_space<vmem>>, vector<1x1x64x128xbf16>
    %203 = vector.shape_cast %202 : vector<1x1x64x128xbf16> to vector<64x128xbf16>
    %204 = vector.shape_cast %201 : vector<64x128xbf16> to vector<1x1x64x128xbf16>
    tpu.vector_store %arg6[%c0_73, %c2_74, %c0_75, %c0_76], %204 {strides = array<i32>} : memref<1x4x64x128xbf16, #tpu.memory_space<vmem>>, vector<1x1x64x128xbf16>,
    %205 = tpu.concatenate %146, %152, %156, %162 in 1 : vector<64x128xbf16>, vector<64x128xbf16>, vector<64x128xbf16>, vector<64x128xbf16> -> vector<64x512xbf16>
    %c640 = arith.constant 640 : index
    %c0_77 = arith.constant 0 : index
    %206 = vector.load %arg4[%c640, %c0_77] : memref<1152x128xbf16, #tpu.memory_space<vmem>>, vector<512x128xbf16>
    %cst_78 = arith.constant dense<0.000000e+00> : vector<64x128xf32>
    %207 = tpu.matmul %205, %206, %cst_78 {dimension_numbers = #tpu.dot_dimension_numbers<[1], [0], [0], [1], [0, 0, 1, 1], [], []>} : vector<64x512xbf16>, vector<512x128xbf16>, vector<64x128xf32> -> vector<64x128xf32>
    %208 = vector.broadcast %163 : vector<1x128xf32> to vector<64x128xf32>
    %209 = arith.addf %207, %208 : vector<64x128xf32>
    %cst_79 = arith.constant 0.000000e+00 : f32
    %210 = vector.broadcast %cst_79 : f32 to vector<64x128xf32>
    %211 = arith.cmpf ogt, %209, %210 : vector<64x128xf32>
    %cst_80 = arith.constant 2.000000e-01 : f32
    %212 = vector.broadcast %cst_80 : f32 to vector<64x128xf32>
    %213 = arith.mulf %212, %209 : vector<64x128xf32>
    %214 = arith.select %211, %209, %213 : vector<64x128xi1>, vector<64x128xf32>
    %215 = arith.truncf %214 : vector<64x128xf32> to vector<64x128xbf16>
    %c0_81 = arith.constant 0 : index
    %c3 = arith.constant 3 : index
    %c0_82 = arith.constant 0 : index
    %c0_83 = arith.constant 0 : index
    %216 = vector.load %arg6[%c0_81, %c3, %c0_82, %c0_83] : memref<1x4x64x128xbf16, #tpu.memory_space<vmem>>, vector<1x1x64x128xbf16>
    %217 = vector.shape_cast %216 : vector<1x1x64x128xbf16> to vector<64x128xbf16>
    %218 = vector.shape_cast %215 : vector<64x128xbf16> to vector<1x1x64x128xbf16>
    tpu.vector_store %arg6[%c0_81, %c3, %c0_82, %c0_83], %218 {strides = array<i32>} : memref<1x4x64x128xbf16, #tpu.memory_space<vmem>>, vector<1x1x64x128xbf16>,
    return
  }
  func.func @transform_0(%arg0: i32) -> (i32, i32, i32) {
    %c0_i32 = arith.constant 0 : i32
    %c0_i32_0 = arith.constant 0 : i32
    %c0_i32_1 = arith.constant 0 : i32
    return %arg0, %c0_i32, %c0_i32_0 : i32, i32, i32
  }
  func.func @transform_1(%arg0: i32) -> (i32, i32, i32) {
    %c0_i32 = arith.constant 0 : i32
    %c0_i32_0 = arith.constant 0 : i32
    %c0_i32_1 = arith.constant 0 : i32
    %c0_i32_2 = arith.constant 0 : i32
    return %c0_i32, %c0_i32_0, %c0_i32_1 : i32, i32, i32
  }
  func.func @transform_2(%arg0: i32) -> (i32, i32, i32) {
    %c0_i32 = arith.constant 0 : i32
    %c0_i32_0 = arith.constant 0 : i32
    %c0_i32_1 = arith.constant 0 : i32
    %c0_i32_2 = arith.constant 0 : i32
    return %c0_i32, %c0_i32_0, %c0_i32_1 : i32, i32, i32
  }
  func.func @transform_3(%arg0: i32) -> (i32, i32) {
    %c0_i32 = arith.constant 0 : i32
    %c0_i32_0 = arith.constant 0 : i32
    %c0_i32_1 = arith.constant 0 : i32
    return %c0_i32, %c0_i32_0 : i32, i32
  }
  func.func @transform_4(%arg0: i32) -> (i32, i32) {
    %c0_i32 = arith.constant 0 : i32
    %c0_i32_0 = arith.constant 0 : i32
    %c0_i32_1 = arith.constant 0 : i32
    return %c0_i32, %c0_i32_0 : i32, i32
  }
  func.func @transform_5(%arg0: i32) -> (i32, i32, i32, i32) {
    %c0_i32 = arith.constant 0 : i32
    %c0_i32_0 = arith.constant 0 : i32
    %c0_i32_1 = arith.constant 0 : i32
    %c0_i32_2 = arith.constant 0 : i32
    return %arg0, %c0_i32, %c0_i32_0, %c0_i32_1 : i32, i32, i32, i32
  }
}

module attributes {stable_mosaic.version = 11 : i64} {
  func.func @_stage_kernel(%arg0: i32, %arg1: memref<1x256x128xbf16, #tpu.memory_space<vmem>>, %arg2: memref<1152x128xbf16, #tpu.memory_space<vmem>>, %arg3: memref<1x128xf32, #tpu.memory_space<vmem>>, %arg4: memref<1x4x256x128xf32, #tpu.memory_space<vmem>>) attributes {dimension_semantics = [#tpu.dimension_semantics<parallel>], iteration_bounds = array<i64: 2>, scalar_prefetch = 0 : i64, scratch_operands = 0 : i64, tpu.core_type = #tpu.core_type<tc>, window_params = [{transform_indices = @transform_0, window_bounds = array<i64: 1, 256, 128>}, {pipeline_mode = #tpu.pipeline_mode<synchronous>, transform_indices = @transform_1, window_bounds = array<i64: 1152, 128>}, {pipeline_mode = #tpu.pipeline_mode<synchronous>, transform_indices = @transform_2, window_bounds = array<i64: 1, 128>}, {transform_indices = @transform_3, window_bounds = array<i64: 1, 4, 256, 128>}]} {
    %c0 = arith.constant 0 : index
    %c0_0 = arith.constant 0 : index
    %c0_1 = arith.constant 0 : index
    %0 = vector.load %arg1[%c0, %c0_0, %c0_1] : memref<1x256x128xbf16, #tpu.memory_space<vmem>>, vector<1x256x128xbf16>
    %1 = vector.shape_cast %0 : vector<1x256x128xbf16> to vector<256x128xbf16>
    %2 = tpu.iota {dimensions = array<i32: 0>} : vector<288x128xi32>
    %c16_i32 = arith.constant 16 : i32
    %c0_i32 = arith.constant 0 : i32
    %3 = arith.cmpi eq, %c16_i32, %c0_i32 : i32
    %c1_i32 = arith.constant 1 : i32
    %4 = arith.select %3, %c1_i32, %c16_i32 : i32
    %5 = vector.broadcast %4 : i32 to vector<288x128xi32>
    %6 = arith.remsi %2, %5 : vector<288x128xi32>
    %c0_i32_2 = arith.constant 0 : i32
    %7 = vector.broadcast %c0_i32_2 : i32 to vector<288x128xi32>
    %8 = arith.cmpi ne, %6, %7 : vector<288x128xi32>
    %c0_i32_3 = arith.constant 0 : i32
    %9 = vector.broadcast %c0_i32_3 : i32 to vector<288x128xi32>
    %10 = arith.cmpi slt, %6, %9 : vector<288x128xi32>
    %c0_i32_4 = arith.constant 0 : i32
    %11 = arith.cmpi slt, %4, %c0_i32_4 : i32
    %12 = vector.broadcast %11 : i1 to vector<288x128xi1>
    %13 = vector.broadcast %12 : vector<288x128xi1> to vector<288x128xi1>
    %14 = arith.xori %10, %13 : vector<288x128xi1>
    %15 = arith.andi %14, %8 : vector<288x128xi1>
    %16 = vector.broadcast %4 : i32 to vector<288x128xi32>
    %17 = arith.addi %6, %16 : vector<288x128xi32>
    %18 = arith.select %15, %17, %6 : vector<288x128xi1>, vector<288x128xi32>
    %c15_i32 = arith.constant 15 : i32
    %19 = vector.broadcast %c15_i32 : i32 to vector<288x128xi32>
    %20 = arith.cmpi slt, %18, %19 : vector<288x128xi32>
    %21 = vector.extract_strided_slice %20 {offsets = [16, 0], sizes = [256, 128], strides = [1, 1]} : vector<288x128xi1> to vector<256x128xi1>
    %cst = arith.constant 0.000000e+00 : bf16
    %22 = vector.broadcast %cst : bf16 to vector<1x128xbf16>
    %23 = vector.extract_strided_slice %1 {offsets = [1, 0], sizes = [255, 128], strides = [1, 1]} : vector<256x128xbf16> to vector<255x128xbf16>
    %24 = tpu.concatenate %23, %22 in 0 : vector<255x128xbf16>, vector<1x128xbf16> -> vector<256x128xbf16>
    %cst_5 = arith.constant 0.000000e+00 : f32
    %25 = arith.truncf %cst_5 : f32 to bf16
    %26 = vector.broadcast %25 : bf16 to vector<256x128xbf16>
    %27 = arith.select %21, %24, %26 : vector<256x128xi1>, vector<256x128xbf16>
    %cst_6 = arith.constant 0.000000e+00 : bf16
    %28 = vector.broadcast %cst_6 : bf16 to vector<16x128xbf16>
    %29 = vector.extract_strided_slice %1 {offsets = [16, 0], sizes = [240, 128], strides = [1, 1]} : vector<256x128xbf16> to vector<240x128xbf16>
    %30 = tpu.concatenate %29, %28 in 0 : vector<240x128xbf16>, vector<16x128xbf16> -> vector<256x128xbf16>
    %cst_7 = arith.constant 0.000000e+00 : bf16
    %31 = vector.broadcast %cst_7 : bf16 to vector<17x128xbf16>
    %32 = vector.extract_strided_slice %1 {offsets = [17, 0], sizes = [239, 128], strides = [1, 1]} : vector<256x128xbf16> to vector<239x128xbf16>
    %33 = tpu.concatenate %32, %31 in 0 : vector<239x128xbf16>, vector<17x128xbf16> -> vector<256x128xbf16>
    %cst_8 = arith.constant 0.000000e+00 : f32
    %34 = arith.truncf %cst_8 : f32 to bf16
    %35 = vector.broadcast %34 : bf16 to vector<256x128xbf16>
    %36 = arith.select %21, %33, %35 : vector<256x128xi1>, vector<256x128xbf16>
    %c0_9 = arith.constant 0 : index
    %c0_10 = arith.constant 0 : index
    %37 = vector.load %arg3[%c0_9, %c0_10] : memref<1x128xf32, #tpu.memory_space<vmem>>, vector<1x128xf32>
    %c0_11 = arith.constant 0 : index
    %c0_12 = arith.constant 0 : index
    %38 = vector.load %arg2[%c0_11, %c0_12] : memref<1152x128xbf16, #tpu.memory_space<vmem>>, vector<128x128xbf16>
    %cst_13 = arith.constant dense<0.000000e+00> : vector<256x128xf32>
    %39 = tpu.matmul %1, %38, %cst_13 {dimension_numbers = #tpu.dot_dimension_numbers<[1], [0], [0], [1], [0, 0, 1, 1], [], []>} : vector<256x128xbf16>, vector<128x128xbf16>, vector<256x128xf32> -> vector<256x128xf32>
    %40 = vector.broadcast %37 : vector<1x128xf32> to vector<256x128xf32>
    %41 = arith.addf %39, %40 : vector<256x128xf32>
    %42 = arith.negf %41 : vector<256x128xf32>
    %43 = math.exp %42 : vector<256x128xf32>
    %cst_14 = arith.constant 1.000000e+00 : f32
    %44 = vector.broadcast %cst_14 : f32 to vector<256x128xf32>
    %45 = arith.addf %44, %43 : vector<256x128xf32>
    %46 = arith.divf %44, %45 : vector<256x128xf32>
    %c0_15 = arith.constant 0 : index
    %c0_16 = arith.constant 0 : index
    %c0_17 = arith.constant 0 : index
    %c0_18 = arith.constant 0 : index
    %47 = vector.load %arg4[%c0_15, %c0_16, %c0_17, %c0_18] : memref<1x4x256x128xf32, #tpu.memory_space<vmem>>, vector<1x1x256x128xf32>
    %48 = vector.shape_cast %47 : vector<1x1x256x128xf32> to vector<256x128xf32>
    %49 = vector.shape_cast %46 : vector<256x128xf32> to vector<1x1x256x128xf32>
    tpu.vector_store %arg4[%c0_15, %c0_16, %c0_17, %c0_18], %49 {strides = array<i32>} : memref<1x4x256x128xf32, #tpu.memory_space<vmem>>, vector<1x1x256x128xf32>,
    %50 = tpu.concatenate %1, %27 in 1 : vector<256x128xbf16>, vector<256x128xbf16> -> vector<256x256xbf16>
    %c128 = arith.constant 128 : index
    %c0_19 = arith.constant 0 : index
    %51 = vector.load %arg2[%c128, %c0_19] : memref<1152x128xbf16, #tpu.memory_space<vmem>>, vector<256x128xbf16>
    %cst_20 = arith.constant dense<0.000000e+00> : vector<256x128xf32>
    %52 = tpu.matmul %50, %51, %cst_20 {dimension_numbers = #tpu.dot_dimension_numbers<[1], [0], [0], [1], [0, 0, 1, 1], [], []>} : vector<256x256xbf16>, vector<256x128xbf16>, vector<256x128xf32> -> vector<256x128xf32>
    %53 = vector.broadcast %37 : vector<1x128xf32> to vector<256x128xf32>
    %54 = arith.addf %52, %53 : vector<256x128xf32>
    %55 = arith.negf %54 : vector<256x128xf32>
    %56 = math.exp %55 : vector<256x128xf32>
    %cst_21 = arith.constant 1.000000e+00 : f32
    %57 = vector.broadcast %cst_21 : f32 to vector<256x128xf32>
    %58 = arith.addf %57, %56 : vector<256x128xf32>
    %59 = arith.divf %57, %58 : vector<256x128xf32>
    %c0_22 = arith.constant 0 : index
    %c1 = arith.constant 1 : index
    %c0_23 = arith.constant 0 : index
    %c0_24 = arith.constant 0 : index
    %60 = vector.load %arg4[%c0_22, %c1, %c0_23, %c0_24] : memref<1x4x256x128xf32, #tpu.memory_space<vmem>>, vector<1x1x256x128xf32>
    %61 = vector.shape_cast %60 : vector<1x1x256x128xf32> to vector<256x128xf32>
    %62 = vector.shape_cast %59 : vector<256x128xf32> to vector<1x1x256x128xf32>
    tpu.vector_store %arg4[%c0_22, %c1, %c0_23, %c0_24], %62 {strides = array<i32>} : memref<1x4x256x128xf32, #tpu.memory_space<vmem>>, vector<1x1x256x128xf32>,
    %63 = tpu.concatenate %1, %30 in 1 : vector<256x128xbf16>, vector<256x128xbf16> -> vector<256x256xbf16>
    %c384 = arith.constant 384 : index
    %c0_25 = arith.constant 0 : index
    %64 = vector.load %arg2[%c384, %c0_25] : memref<1152x128xbf16, #tpu.memory_space<vmem>>, vector<256x128xbf16>
    %cst_26 = arith.constant dense<0.000000e+00> : vector<256x128xf32>
    %65 = tpu.matmul %63, %64, %cst_26 {dimension_numbers = #tpu.dot_dimension_numbers<[1], [0], [0], [1], [0, 0, 1, 1], [], []>} : vector<256x256xbf16>, vector<256x128xbf16>, vector<256x128xf32> -> vector<256x128xf32>
    %66 = vector.broadcast %37 : vector<1x128xf32> to vector<256x128xf32>
    %67 = arith.addf %65, %66 : vector<256x128xf32>
    %68 = arith.negf %67 : vector<256x128xf32>
    %69 = math.exp %68 : vector<256x128xf32>
    %cst_27 = arith.constant 1.000000e+00 : f32
    %70 = vector.broadcast %cst_27 : f32 to vector<256x128xf32>
    %71 = arith.addf %70, %69 : vector<256x128xf32>
    %72 = arith.divf %70, %71 : vector<256x128xf32>
    %c0_28 = arith.constant 0 : index
    %c2 = arith.constant 2 : index
    %c0_29 = arith.constant 0 : index
    %c0_30 = arith.constant 0 : index
    %73 = vector.load %arg4[%c0_28, %c2, %c0_29, %c0_30] : memref<1x4x256x128xf32, #tpu.memory_space<vmem>>, vector<1x1x256x128xf32>
    %74 = vector.shape_cast %73 : vector<1x1x256x128xf32> to vector<256x128xf32>
    %75 = vector.shape_cast %72 : vector<256x128xf32> to vector<1x1x256x128xf32>
    tpu.vector_store %arg4[%c0_28, %c2, %c0_29, %c0_30], %75 {strides = array<i32>} : memref<1x4x256x128xf32, #tpu.memory_space<vmem>>, vector<1x1x256x128xf32>,
    %76 = tpu.concatenate %1, %27, %30, %36 in 1 : vector<256x128xbf16>, vector<256x128xbf16>, vector<256x128xbf16>, vector<256x128xbf16> -> vector<256x512xbf16>
    %c640 = arith.constant 640 : index
    %c0_31 = arith.constant 0 : index
    %77 = vector.load %arg2[%c640, %c0_31] : memref<1152x128xbf16, #tpu.memory_space<vmem>>, vector<512x128xbf16>
    %cst_32 = arith.constant dense<0.000000e+00> : vector<256x128xf32>
    %78 = tpu.matmul %76, %77, %cst_32 {dimension_numbers = #tpu.dot_dimension_numbers<[1], [0], [0], [1], [0, 0, 1, 1], [], []>} : vector<256x512xbf16>, vector<512x128xbf16>, vector<256x128xf32> -> vector<256x128xf32>
    %79 = vector.broadcast %37 : vector<1x128xf32> to vector<256x128xf32>
    %80 = arith.addf %78, %79 : vector<256x128xf32>
    %81 = arith.negf %80 : vector<256x128xf32>
    %82 = math.exp %81 : vector<256x128xf32>
    %cst_33 = arith.constant 1.000000e+00 : f32
    %83 = vector.broadcast %cst_33 : f32 to vector<256x128xf32>
    %84 = arith.addf %83, %82 : vector<256x128xf32>
    %85 = arith.divf %83, %84 : vector<256x128xf32>
    %c0_34 = arith.constant 0 : index
    %c3 = arith.constant 3 : index
    %c0_35 = arith.constant 0 : index
    %c0_36 = arith.constant 0 : index
    %86 = vector.load %arg4[%c0_34, %c3, %c0_35, %c0_36] : memref<1x4x256x128xf32, #tpu.memory_space<vmem>>, vector<1x1x256x128xf32>
    %87 = vector.shape_cast %86 : vector<1x1x256x128xf32> to vector<256x128xf32>
    %88 = vector.shape_cast %85 : vector<256x128xf32> to vector<1x1x256x128xf32>
    tpu.vector_store %arg4[%c0_34, %c3, %c0_35, %c0_36], %88 {strides = array<i32>} : memref<1x4x256x128xf32, #tpu.memory_space<vmem>>, vector<1x1x256x128xf32>,
    return
  }
  func.func @transform_0(%arg0: i32) -> (i32, i32, i32) {
    %c0_i32 = arith.constant 0 : i32
    %c0_i32_0 = arith.constant 0 : i32
    %c0_i32_1 = arith.constant 0 : i32
    return %arg0, %c0_i32, %c0_i32_0 : i32, i32, i32
  }
  func.func @transform_1(%arg0: i32) -> (i32, i32) {
    %c0_i32 = arith.constant 0 : i32
    %c0_i32_0 = arith.constant 0 : i32
    %c0_i32_1 = arith.constant 0 : i32
    return %c0_i32, %c0_i32_0 : i32, i32
  }
  func.func @transform_2(%arg0: i32) -> (i32, i32) {
    %c0_i32 = arith.constant 0 : i32
    %c0_i32_0 = arith.constant 0 : i32
    %c0_i32_1 = arith.constant 0 : i32
    return %c0_i32, %c0_i32_0 : i32, i32
  }
  func.func @transform_3(%arg0: i32) -> (i32, i32, i32, i32) {
    %c0_i32 = arith.constant 0 : i32
    %c0_i32_0 = arith.constant 0 : i32
    %c0_i32_1 = arith.constant 0 : i32
    %c0_i32_2 = arith.constant 0 : i32
    return %arg0, %c0_i32, %c0_i32_0, %c0_i32_1 : i32, i32, i32, i32
  }
}

</mosaic_0001>

<llo_original>
// kernel: forward.3
$region0: #{forward.3}
  #allocation0 [shape = 'u32[]', space=smem, size = 0x4, offset = 0x4, fixed_abs, tag = 'smem constant byte address 0x4 - core index']
  #allocation1 [shape = 'u32[144,128]{1,0:T(1,128)}', space=vmem, size = 0x12000, scoped, tag = 'internal scratch']
  %s0 = inlined_call_operand.hbm [shape: bf16[2,256,128], index: 0, kind: input, shape index: {}]
  %s1 = inlined_call_operand.hbm [shape: bf16[1152,128], index: 1, kind: input, shape index: {}]
  %s2 = inlined_call_operand.hbm [shape: f32[1,128], index: 2, kind: input, shape index: {}]
  %s3 = inlined_call_operand.hbm [shape: f32[2,4,256,128], index: 3, kind: output, shape index: {}]
  %s4 = sld [smem:[#allocation0]]
  $region57: #{forward.3} parent=0
    _
  %s6 = ssub.s32 1, %s4
  %s7 = scalar_select 0, %s6, %s4
  $region1: #{forward.3} parent=0
    #allocation2 [shape = 'u8[131072]{0}', space=vmem, size = 0x20000, scoped, tag = 'input window, operand 0']
    #allocation3 [shape = 's32[2]{0}', space=sflag, size = 0x8, scoped, tag = 'scoped memory for forward.3']
    #allocation4 [shape = 's32[2]{0}', space=sflag, size = 0x8, scoped, tag = 'scoped memory for forward.3']
    #allocation5 [shape = 'u8[294912]{0}', space=vmem, size = 0x48000, scoped, tag = 'input window, operand 1, single buffered']
    #allocation6 [shape = 's32[1]{0}', space=sflag, size = 0x4, scoped, tag = 'scoped memory for forward.3']
    #allocation7 [shape = 'u8[512]{0}', space=vmem, size = 0x400, scoped, tag = 'input window, operand 2, single buffered']
    #allocation8 [shape = 'u8[1048576]{0}', space=vmem, size = 0x100000, scoped, tag = 'output window, operand 0']
    %8 = vsyncpa [#allocation3], 0
    %s9 = scalar_lea.sflag [#allocation3], 1
    %10 = vsyncpa %s9, 0
    %11 = vsyncpa [#allocation6], 0
    %12 = vsyncpa [#allocation4], 0
    %s13 = scalar_lea.sflag [#allocation4], 1
    %14 = vsyncpa %s13, 0
    loop: start=0, step=1, limit=4
    $region2: #{forward.3} parent=1 // loop_pre_header
      _
    $region3: #{forward.3} parent=1 // loop_header
      %s16 = sphi 0, %s20
      %p17 = scmp.ge.s32.totalorder %s16, 4
      %s26 = sphi 0, %s28
      %s29 = sphi 0, %s26
      %s30 = sphi 0, %s29
      %s46 = sphi 0, %s30
      %s50 = sphi 0, %s50
      %s52 = sphi 0, %s50
      %s53 = sphi 0, %s52
      %s67 = sphi 0, %s53
      %s71 = sphi 0, %s71
      %s73 = sphi 0, %s71
      %s74 = sphi 0, %s73
      %s88 = sphi 0, %s74
      %s94 = sphi 0, %s96
      %s97 = sphi 0, %s94
      %s98 = sphi 0, %s97
      %s114 = sphi 0, %s98
    $region4: #{forward.3} parent=1 // loop_header_branch
      %19 = sbr.rel (%p17) target = $region8
    $region5: #{forward.3} parent=1 // loop_body
      %s21 = ssub.s32 %s16, 1
      %s22 = ssub.s32 %s16, 2
      %s23 = sadd.s32 %s16, 1
      %s24 = ssub.s32 %s16, %s23
      %p25 = scmp.eq.s32.totalorder %s24, 0
      %s27 = sadd.s32 %s26, 1
      %s28 = scalar_select %p25, %s26, %s27
      %p31 = pneg %p25
      %p32 = scmp.eq.s32.totalorder %s16, 1
      %p33 = por %p31, %p32
      %p34 = scmp.ne.s32.totalorder %s26, %s29
      %p35 = scmp.eq.s32.totalorder %s16, 0
      %p36 = por %p34, %p35
      %p37 = scmp.ne.s32.totalorder %s26, %s29
      %p38 = scmp.eq.s32.totalorder %s21, 1
      %p39 = por %p37, %p38
      %p40 = scmp.ne.s32.totalorder %s29, %s30
      %p41 = scmp.eq.s32.totalorder %s21, 0
      %p42 = por %p40, %p41
      %p43 = scmp.ne.s32.totalorder %s29, %s30
      %p44 = scmp.eq.s32.totalorder %s22, 1
      %p45 = por %p43, %p44
      %p47 = scmp.ne.s32.totalorder %s30, %s46
      %p48 = scmp.eq.s32.totalorder %s22, 0
      %p49 = por %p47, %p48
      %s51 = sadd.s32 %s50, 1
      %p54 = scmp.eq.s32.totalorder %s16, 1
      %p55 = scmp.ne.s32.totalorder %s50, %s52
      %p56 = scmp.eq.s32.totalorder %s16, 0
      %p57 = por %p55, %p56
      %p58 = scmp.ne.s32.totalorder %s50, %s52
      %p59 = scmp.eq.s32.totalorder %s21, 1
      %p60 = por %p58, %p59
      %p61 = scmp.ne.s32.totalorder %s52, %s53
      %p62 = scmp.eq.s32.totalorder %s21, 0
      %p63 = por %p61, %p62
      %p64 = scmp.ne.s32.totalorder %s52, %s53
      %p65 = scmp.eq.s32.totalorder %s22, 1
      %p66 = por %p64, %p65
      %p68 = scmp.ne.s32.totalorder %s53, %s67
      %p69 = scmp.eq.s32.totalorder %s22, 0
      %p70 = por %p68, %p69
      %s72 = sadd.s32 %s71, 1
      %p75 = scmp.eq.s32.totalorder %s16, 1
      %p76 = scmp.ne.s32.totalorder %s71, %s73
      %p77 = scmp.eq.s32.totalorder %s16, 0
      %p78 = por %p76, %p77
      %p79 = scmp.ne.s32.totalorder %s71, %s73
      %p80 = scmp.eq.s32.totalorder %s21, 1
      %p81 = por %p79, %p80
      %p82 = scmp.ne.s32.totalorder %s73, %s74
      %p83 = scmp.eq.s32.totalorder %s21, 0
      %p84 = por %p82, %p83
      %p85 = scmp.ne.s32.totalorder %s73, %s74
      %p86 = scmp.eq.s32.totalorder %s22, 1
      %p87 = por %p85, %p86
      %p89 = scmp.ne.s32.totalorder %s74, %s88
      %p90 = scmp.eq.s32.totalorder %s22, 0
      %p91 = por %p89, %p90
      %s92 = ssub.s32 %s16, %s23
      %p93 = scmp.eq.s32.totalorder %s92, 0
      %s95 = sadd.s32 %s94, 1
      %s96 = scalar_select %p93, %s94, %s95
      %p99 = pneg %p93
      %p100 = scmp.eq.s32.totalorder %s16, 1
      %p101 = por %p99, %p100
      %p102 = scmp.ne.s32.totalorder %s94, %s97
      %p103 = scmp.eq.s32.totalorder %s16, 0
      %p104 = por %p102, %p103
      %p105 = scmp.ne.s32.totalorder %s94, %s97
      %p106 = scmp.eq.s32.totalorder %s21, 1
      %p107 = por %p105, %p106
      %p108 = scmp.ne.s32.totalorder %s97, %s98
      %p109 = scmp.eq.s32.totalorder %s21, 0
      %p110 = por %p108, %p109
      %p111 = scmp.ne.s32.totalorder %s97, %s98
      %p112 = scmp.eq.s32.totalorder %s22, 1
      %p113 = por %p111, %p112
      %p115 = scmp.ne.s32.totalorder %s98, %s114
      %p116 = scmp.eq.s32.totalorder %s22, 0
      %p117 = por %p115, %p116
      %p118 = scmp.le.s32.totalorder 1, %s16
      %p119 = scmp.lt.s32.totalorder %s16, 3
      %p120 = pnand %p118, %p119
      %p121 = pneg %p120
      // Predicated region
      $region9: #{forward.3} parent=5 // pred_check
        _
      $region10: #{forward.3} parent=5 // pred_check_branch
        %123 = sbr.rel (%p120) target = $region12
      $region11: #{forward.3} parent=5 // pred_region
        %s124 = ssub.s32 %s16, 1
        // Predicated region
        $region13: #{forward.3} parent=11 // pred_check
          %p125 = pneg %p63
        $region14: #{forward.3} parent=11 // pred_check_branch
          %127 = sbr.rel (%p125) target = $region16
        $region15: #{forward.3} parent=11 // pred_region
          %s129 = ssub.s32 9216, 9216
          %130 = vsyncadd [#allocation6], %s129
          %s131 = sshll.u32 [#allocation5], 4
          %s132 = int_to_ptr.vmem [resolvable:$true] %s131
          %137 = dma.hbm_to_vmem [thread:$0]  %s1, 9216, %s132, [#allocation6], 64, 64, 4
        $region16: #{forward.3} parent=11 // pred_fallthru
          _
        // Predicated region
        $region17: #{forward.3} parent=11 // pred_check
          %p138 = pneg %p84
        $region18: #{forward.3} parent=11 // pred_check_branch
          %140 = sbr.rel (%p138) target = $region20
        $region19: #{forward.3} parent=11 // pred_region
          %s142 = ssub.s32 16, 16
          %143 = vsyncadd [#allocation6], %s142
          %s145 = sshll.u32 [#allocation7], 4
          %s146 = int_to_ptr.vmem [resolvable:$true] %s145
          %148 = dma.hbm_to_vmem [thread:$0]  %s2, 16, %s146, [#allocation6]
        $region20: #{forward.3} parent=11 // pred_fallthru
          _
      $region12: #{forward.3} parent=5 // pred_fallthru
        _
      %p149 = scmp.lt.s32.totalorder %s16, 2
      // Predicated region
      $region21: #{forward.3} parent=5 // pred_check
        %p150 = pneg %p149
      $region22: #{forward.3} parent=5 // pred_check_branch
        %152 = sbr.rel (%p150) target = $region24
      $region23: #{forward.3} parent=5 // pred_region
        // Predicated region
        $region25: #{forward.3} parent=23 // pred_check
          %p153 = pneg %p36
        $region26: #{forward.3} parent=23 // pred_check_branch
          %155 = sbr.rel (%p153) target = $region28
        $region27: #{forward.3} parent=23 // pred_region
          %s156 = sand.u32 %s26, 1
          %s157 = scalar_lea.sflag [#allocation3], %s156
          %s158 = sand.u32 %s26, 1
          %s159 = smul.addr %s158, 128
          %s160 = scalar_lea.vmem [#allocation2], %s159
          %s162 = ssub.s32 2048, 2048
          %163 = vsyncadd %s157, %s162
          %s164 = smul.addr %s16, 32
          %s165 = smul.addr %s164, 64
          %s166 = scalar_lea.hbm %s0, %s165
          %s167 = sshll.u32 %s160, 4
          %s168 = int_to_ptr.vmem [resolvable:$true] %s167
          %173 = dma.hbm_to_vmem [thread:$0]  %s166, 2048, %s168, %s157, 64, 64, 4
        $region28: #{forward.3} parent=23 // pred_fallthru
          _
      $region24: #{forward.3} parent=5 // pred_fallthru
        _
      %p174 = scmp.le.s32.totalorder 1, %s16
      %p175 = scmp.lt.s32.totalorder %s16, 3
      %p176 = pnand %p174, %p175
      %p177 = pneg %p176
      // Predicated region
      $region29: #{forward.3} parent=5 // pred_check
        _
      $region30: #{forward.3} parent=5 // pred_check_branch
        %179 = sbr.rel (%p176) target = $region32
      $region31: #{forward.3} parent=5 // pred_region
        %s180 = ssub.s32 %s16, 1
        %s181 = sand.u32 %s29, 1
        %s182 = scalar_lea.sflag [#allocation3], %s181
        %s183 = sand.u32 %s29, 1
        %s184 = smul.addr %s183, 128
        %s185 = scalar_lea.vmem [#allocation2], %s184
        // Predicated region
        $region33: #{forward.3} parent=31 // pred_check
          %p186 = pneg %p42
        $region34: #{forward.3} parent=31 // pred_check_branch
          %188 = sbr.rel (%p186) target = $region36
        $region35: #{forward.3} parent=31 // pred_region
          %189 = dma.done %s182, 2048
        $region36: #{forward.3} parent=31 // pred_fallthru
          _
        // Predicated region
        $region37: #{forward.3} parent=31 // pred_check
          %p190 = pneg %p63
        $region38: #{forward.3} parent=31 // pred_check_branch
          %192 = sbr.rel (%p190) target = $region40
        $region39: #{forward.3} parent=31 // pred_region
          %193 = dma.done [#allocation6], 9216
        $region40: #{forward.3} parent=31 // pred_fallthru
          _
        // Predicated region
        $region41: #{forward.3} parent=31 // pred_check
          %p194 = pneg %p84
        $region42: #{forward.3} parent=31 // pred_check_branch
          %196 = sbr.rel (%p194) target = $region44
        $region43: #{forward.3} parent=31 // pred_region
          %197 = dma.done [#allocation6], 16
        $region44: #{forward.3} parent=31 // pred_fallthru
          _
        %s198 = sand.u32 %s29, 1
        %s199 = scalar_lea.sflag [#allocation3], %s198
        %s200 = sand.u32 %s29, 1
        %s201 = smul.addr %s200, 128
        %s202 = scalar_lea.vmem [#allocation2], %s201
        %p203 = pneg %p42
        %p204 = pneg %p39
        %p205 = pneg %p63
        %p206 = pneg %p60
        %p207 = pneg %p84
        %p208 = pneg %p81
        %p209 = pneg %p110
        %p210 = pneg %p107
        %s211 = sand.u32 %s97, 1
        %s212 = scalar_lea.sflag [#allocation4], %s211
        %s213 = sand.u32 %s97, 1
        %s214 = smul.addr %s213, 1024
        %s215 = scalar_lea.vmem [#allocation8], %s214
        %v219 = vld [vmem:[%s185] sm:$0xf]
        %v220 = vld [vmem:[%s185 + $0x4] sm:$0xf]
        %v221 = vld [vmem:[%s185 + $0x8] sm:$0xf]
        %v222 = vld [vmem:[%s185 + $0xc] sm:$0xf]
        %v223 = vld [vmem:[%s185 + $0x10] sm:$0xf]
        %v224 = vld [vmem:[%s185 + $0x14] sm:$0xf]
        %v225 = vld [vmem:[%s185 + $0x18] sm:$0xf]
        %v226 = vld [vmem:[%s185 + $0x1c] sm:$0xf]
        %v227 = vld [vmem:[%s185 + $0x20] sm:$0xf]
        %v228 = vld [vmem:[%s185 + $0x24] sm:$0xf]
        %v229 = vld [vmem:[%s185 + $0x28] sm:$0xf]
        %v230 = vld [vmem:[%s185 + $0x2c] sm:$0xf]
        %v231 = vld [vmem:[%s185 + $0x30] sm:$0xf]
        %v232 = vld [vmem:[%s185 + $0x34] sm:$0xf]
        %v233 = vld [vmem:[%s185 + $0x38] sm:$0xf]
        %v234 = vld [vmem:[%s185 + $0x3c] sm:$0xf]
        %v235 = vld [vmem:[%s185 + $0x40] sm:$0xf]
        %v236 = vld [vmem:[%s185 + $0x44] sm:$0xf]
        %v237 = vld [vmem:[%s185 + $0x48] sm:$0xf]
        %v238 = vld [vmem:[%s185 + $0x4c] sm:$0xf]
        %v239 = vld [vmem:[%s185 + $0x50] sm:$0xf]
        %v240 = vld [vmem:[%s185 + $0x54] sm:$0xf]
        %v241 = vld [vmem:[%s185 + $0x58] sm:$0xf]
        %v242 = vld [vmem:[%s185 + $0x5c] sm:$0xf]
        %v243 = vld [vmem:[%s185 + $0x60] sm:$0xf]
        %v244 = vld [vmem:[%s185 + $0x64] sm:$0xf]
        %v245 = vld [vmem:[%s185 + $0x68] sm:$0xf]
        %v246 = vld [vmem:[%s185 + $0x6c] sm:$0xf]
        %v247 = vld [vmem:[%s185 + $0x70] sm:$0xf]
        %v248 = vld [vmem:[%s185 + $0x74] sm:$0xf]
        %v249 = vld [vmem:[%s185 + $0x78] sm:$0xf]
        %v250 = vld [vmem:[%s185 + $0x7c] sm:$0xf]
        %v251 = vlaneseq
        %v252 = vshrl.u32 %v251, 7
        %v253 = vadd.s32 %v252, 16
        %v254 = vadd.s32 %v252, 24
        %v255 = vadd.s32 %v252, 32
        %v256 = vadd.s32 %v252, 40
        %v257 = vadd.s32 %v252, 48
        %v258 = vadd.s32 %v252, 56
        %v259 = vadd.s32 %v252, 64
        %v260 = vadd.s32 %v252, 72
        %v261 = vadd.s32 %v252, 80
        %v262 = vadd.s32 %v252, 88
        %v263 = vadd.s32 %v252, 96
        %v264 = vadd.s32 %v252, 104
        %v265 = vadd.s32 %v252, 112
        %v266 = vadd.s32 %v252, 120
        %v267 = vadd.s32 %v252, 128
        %v268 = vadd.s32 %v252, 136
        %v269 = vadd.s32 %v252, 144
        %v270 = vadd.s32 %v252, 152
        %v271 = vadd.s32 %v252, 160
        %v272 = vadd.s32 %v252, 168
        %v273 = vadd.s32 %v252, 176
        %v274 = vadd.s32 %v252, 184
        %v275 = vadd.s32 %v252, 192
        %v276 = vadd.s32 %v252, 200
        %v277 = vadd.s32 %v252, 208
        %v278 = vadd.s32 %v252, 216
        %v279 = vadd.s32 %v252, 224
        %v280 = vadd.s32 %v252, 232
        %v281 = vadd.s32 %v252, 240
        %v282 = vadd.s32 %v252, 248
        %v283 = vadd.s32 %v252, 256
        %v284 = vadd.s32 %v252, 264
        %vm285 = vcmp.lt.s32.totalorder %v253, 0
        %v286 = vsub.s32 0, %v253
        %v287 = vsel %vm285, %v286, %v253
        %v288 = vshrl.u32 %v287, 4
        %v289 = vand.u32 %v287, 15
        %v290 = vsub.s32 0, %v289
        %v291 = vsel %vm285, %v290, %v289
        %vm292 = vcmp.lt.s32.totalorder %v254, 0
        %v293 = vsub.s32 0, %v254
        %v294 = vsel %vm292, %v293, %v254
        %v295 = vshrl.u32 %v294, 4
        %v296 = vand.u32 %v294, 15
        %v297 = vsub.s32 0, %v296
        %v298 = vsel %vm292, %v297, %v296
        %vm299 = vcmp.lt.s32.totalorder %v255, 0
        %v300 = vsub.s32 0, %v255
        %v301 = vsel %vm299, %v300, %v255
        %v302 = vshrl.u32 %v301, 4
        %v303 = vand.u32 %v301, 15
        %v304 = vsub.s32 0, %v303
        %v305 = vsel %vm299, %v304, %v303
        %vm306 = vcmp.lt.s32.totalorder %v256, 0
        %v307 = vsub.s32 0, %v256
        %v308 = vsel %vm306, %v307, %v256
        %v309 = vshrl.u32 %v308, 4
        %v310 = vand.u32 %v308, 15
        %v311 = vsub.s32 0, %v310
        %v312 = vsel %vm306, %v311, %v310
        %vm313 = vcmp.lt.s32.totalorder %v257, 0
        %v314 = vsub.s32 0, %v257
        %v315 = vsel %vm313, %v314, %v257
        %v316 = vshrl.u32 %v315, 4
        %v317 = vand.u32 %v315, 15
        %v318 = vsub.s32 0, %v317
        %v319 = vsel %vm313, %v318, %v317
        %vm320 = vcmp.lt.s32.totalorder %v258, 0
        %v321 = vsub.s32 0, %v258
        %v322 = vsel %vm320, %v321, %v258
        %v323 = vshrl.u32 %v322, 4
        %v324 = vand.u32 %v322, 15
        %v325 = vsub.s32 0, %v324
        %v326 = vsel %vm320, %v325, %v324
        %vm327 = vcmp.lt.s32.totalorder %v259, 0
        %v328 = vsub.s32 0, %v259
        %v329 = vsel %vm327, %v328, %v259
        %v330 = vshrl.u32 %v329, 4
        %v331 = vand.u32 %v329, 15
        %v332 = vsub.s32 0, %v331
        %v333 = vsel %vm327, %v332, %v331
        %vm334 = vcmp.lt.s32.totalorder %v260, 0
        %v335 = vsub.s32 0, %v260
        %v336 = vsel %vm334, %v335, %v260
        %v337 = vshrl.u32 %v336, 4
        %v338 = vand.u32 %v336, 15
        %v339 = vsub.s32 0, %v338
        %v340 = vsel %vm334, %v339, %v338
        %vm341 = vcmp.lt.s32.totalorder %v261, 0
        %v342 = vsub.s32 0, %v261
        %v343 = vsel %vm341, %v342, %v261
        %v344 = vshrl.u32 %v343, 4
        %v345 = vand.u32 %v343, 15
        %v346 = vsub.s32 0, %v345
        %v347 = vsel %vm341, %v346, %v345
        %vm348 = vcmp.lt.s32.totalorder %v262, 0
        %v349 = vsub.s32 0, %v262
        %v350 = vsel %vm348, %v349, %v262
        %v351 = vshrl.u32 %v350, 4
        %v352 = vand.u32 %v350, 15
        %v353 = vsub.s32 0, %v352
        %v354 = vsel %vm348, %v353, %v352
        %vm355 = vcmp.lt.s32.totalorder %v263, 0
        %v356 = vsub.s32 0, %v263
        %v357 = vsel %vm355, %v356, %v263
        %v358 = vshrl.u32 %v357, 4
        %v359 = vand.u32 %v357, 15
        %v360 = vsub.s32 0, %v359
        %v361 = vsel %vm355, %v360, %v359
        %vm362 = vcmp.lt.s32.totalorder %v264, 0
        %v363 = vsub.s32 0, %v264
        %v364 = vsel %vm362, %v363, %v264
        %v365 = vshrl.u32 %v364, 4
        %v366 = vand.u32 %v364, 15
        %v367 = vsub.s32 0, %v366
        %v368 = vsel %vm362, %v367, %v366
        %vm369 = vcmp.lt.s32.totalorder %v265, 0
        %v370 = vsub.s32 0, %v265
        %v371 = vsel %vm369, %v370, %v265
        %v372 = vshrl.u32 %v371, 4
        %v373 = vand.u32 %v371, 15
        %v374 = vsub.s32 0, %v373
        %v375 = vsel %vm369, %v374, %v373
        %vm376 = vcmp.lt.s32.totalorder %v266, 0
        %v377 = vsub.s32 0, %v266
        %v378 = vsel %vm376, %v377, %v266
        %v379 = vshrl.u32 %v378, 4
        %v380 = vand.u32 %v378, 15
        %v381 = vsub.s32 0, %v380
        %v382 = vsel %vm376, %v381, %v380
        %vm383 = vcmp.lt.s32.totalorder %v267, 0
        %v384 = vsub.s32 0, %v267
        %v385 = vsel %vm383, %v384, %v267
        %v386 = vshrl.u32 %v385, 4
        %v387 = vand.u32 %v385, 15
        %v388 = vsub.s32 0, %v387
        %v389 = vsel %vm383, %v388, %v387
        %vm390 = vcmp.lt.s32.totalorder %v268, 0
        %v391 = vsub.s32 0, %v268
        %v392 = vsel %vm390, %v391, %v268
        %v393 = vshrl.u32 %v392, 4
        %v394 = vand.u32 %v392, 15
        %v395 = vsub.s32 0, %v394
        %v396 = vsel %vm390, %v395, %v394
        %vm397 = vcmp.lt.s32.totalorder %v269, 0
        %v398 = vsub.s32 0, %v269
        %v399 = vsel %vm397, %v398, %v269
        %v400 = vshrl.u32 %v399, 4
        %v401 = vand.u32 %v399, 15
        %v402 = vsub.s32 0, %v401
        %v403 = vsel %vm397, %v402, %v401
        %vm404 = vcmp.lt.s32.totalorder %v270, 0
        %v405 = vsub.s32 0, %v270
        %v406 = vsel %vm404, %v405, %v270
        %v407 = vshrl.u32 %v406, 4
        %v408 = vand.u32 %v406, 15
        %v409 = vsub.s32 0, %v408
        %v410 = vsel %vm404, %v409, %v408
        %vm411 = vcmp.lt.s32.totalorder %v271, 0
        %v412 = vsub.s32 0, %v271
        %v413 = vsel %vm411, %v412, %v271
        %v414 = vshrl.u32 %v413, 4
        %v415 = vand.u32 %v413, 15
        %v416 = vsub.s32 0, %v415
        %v417 = vsel %vm411, %v416, %v415
        %vm418 = vcmp.lt.s32.totalorder %v272, 0
        %v419 = vsub.s32 0, %v272
        %v420 = vsel %vm418, %v419, %v272
        %v421 = vshrl.u32 %v420, 4
        %v422 = vand.u32 %v420, 15
        %v423 = vsub.s32 0, %v422
        %v424 = vsel %vm418, %v423, %v422
        %vm425 = vcmp.lt.s32.totalorder %v273, 0
        %v426 = vsub.s32 0, %v273
        %v427 = vsel %vm425, %v426, %v273
        %v428 = vshrl.u32 %v427, 4
        %v429 = vand.u32 %v427, 15
        %v430 = vsub.s32 0, %v429
        %v431 = vsel %vm425, %v430, %v429
        %vm432 = vcmp.lt.s32.totalorder %v274, 0
        %v433 = vsub.s32 0, %v274
        %v434 = vsel %vm432, %v433, %v274
        %v435 = vshrl.u32 %v434, 4
        %v436 = vand.u32 %v434, 15
        %v437 = vsub.s32 0, %v436
        %v438 = vsel %vm432, %v437, %v436
        %vm439 = vcmp.lt.s32.totalorder %v275, 0
        %v440 = vsub.s32 0, %v275
        %v441 = vsel %vm439, %v440, %v275
        %v442 = vshrl.u32 %v441, 4
        %v443 = vand.u32 %v441, 15
        %v444 = vsub.s32 0, %v443
        %v445 = vsel %vm439, %v444, %v443
        %vm446 = vcmp.lt.s32.totalorder %v276, 0
        %v447 = vsub.s32 0, %v276
        %v448 = vsel %vm446, %v447, %v276
        %v449 = vshrl.u32 %v448, 4
        %v450 = vand.u32 %v448, 15
        %v451 = vsub.s32 0, %v450
        %v452 = vsel %vm446, %v451, %v450
        %vm453 = vcmp.lt.s32.totalorder %v277, 0
        %v454 = vsub.s32 0, %v277
        %v455 = vsel %vm453, %v454, %v277
        %v456 = vshrl.u32 %v455, 4
        %v457 = vand.u32 %v455, 15
        %v458 = vsub.s32 0, %v457
        %v459 = vsel %vm453, %v458, %v457
        %vm460 = vcmp.lt.s32.totalorder %v278, 0
        %v461 = vsub.s32 0, %v278
        %v462 = vsel %vm460, %v461, %v278
        %v463 = vshrl.u32 %v462, 4
        %v464 = vand.u32 %v462, 15
        %v465 = vsub.s32 0, %v464
        %v466 = vsel %vm460, %v465, %v464
        %vm467 = vcmp.lt.s32.totalorder %v279, 0
        %v468 = vsub.s32 0, %v279
        %v469 = vsel %vm467, %v468, %v279
        %v470 = vshrl.u32 %v469, 4
        %v471 = vand.u32 %v469, 15
        %v472 = vsub.s32 0, %v471
        %v473 = vsel %vm467, %v472, %v471
        %vm474 = vcmp.lt.s32.totalorder %v280, 0
        %v475 = vsub.s32 0, %v280
        %v476 = vsel %vm474, %v475, %v280
        %v477 = vshrl.u32 %v476, 4
        %v478 = vand.u32 %v476, 15
        %v479 = vsub.s32 0, %v478
        %v480 = vsel %vm474, %v479, %v478
        %vm481 = vcmp.lt.s32.totalorder %v281, 0
        %v482 = vsub.s32 0, %v281
        %v483 = vsel %vm481, %v482, %v281
        %v484 = vshrl.u32 %v483, 4
        %v485 = vand.u32 %v483, 15
        %v486 = vsub.s32 0, %v485
        %v487 = vsel %vm481, %v486, %v485
        %vm488 = vcmp.lt.s32.totalorder %v282, 0
        %v489 = vsub.s32 0, %v282
        %v490 = vsel %vm488, %v489, %v282
        %v491 = vshrl.u32 %v490, 4
        %v492 = vand.u32 %v490, 15
        %v493 = vsub.s32 0, %v492
        %v494 = vsel %vm488, %v493, %v492
        %vm495 = vcmp.lt.s32.totalorder %v283, 0
        %v496 = vsub.s32 0, %v283
        %v497 = vsel %vm495, %v496, %v283
        %v498 = vshrl.u32 %v497, 4
        %v499 = vand.u32 %v497, 15
        %v500 = vsub.s32 0, %v499
        %v501 = vsel %vm495, %v500, %v499
        %vm502 = vcmp.lt.s32.totalorder %v284, 0
        %v503 = vsub.s32 0, %v284
        %v504 = vsel %vm502, %v503, %v284
        %v505 = vshrl.u32 %v504, 4
        %v506 = vand.u32 %v504, 15
        %v507 = vsub.s32 0, %v506
        %v508 = vsel %vm502, %v507, %v506
        %vm509 = vcmp.ne.s32.totalorder %v291, 0
        %vm510 = vcmp.ne.s32.totalorder %v298, 0
        %vm511 = vcmp.ne.s32.totalorder %v305, 0
        %vm512 = vcmp.ne.s32.totalorder %v312, 0
        %vm513 = vcmp.ne.s32.totalorder %v319, 0
        %vm514 = vcmp.ne.s32.totalorder %v326, 0
        %vm515 = vcmp.ne.s32.totalorder %v333, 0
        %vm516 = vcmp.ne.s32.totalorder %v340, 0
        %vm517 = vcmp.ne.s32.totalorder %v347, 0
        %vm518 = vcmp.ne.s32.totalorder %v354, 0
        %vm519 = vcmp.ne.s32.totalorder %v361, 0
        %vm520 = vcmp.ne.s32.totalorder %v368, 0
        %vm521 = vcmp.ne.s32.totalorder %v375, 0
        %vm522 = vcmp.ne.s32.totalorder %v382, 0
        %vm523 = vcmp.ne.s32.totalorder %v389, 0
        %vm524 = vcmp.ne.s32.totalorder %v396, 0
        %vm525 = vcmp.ne.s32.totalorder %v403, 0
        %vm526 = vcmp.ne.s32.totalorder %v410, 0
        %vm527 = vcmp.ne.s32.totalorder %v417, 0
        %vm528 = vcmp.ne.s32.totalorder %v424, 0
        %vm529 = vcmp.ne.s32.totalorder %v431, 0
        %vm530 = vcmp.ne.s32.totalorder %v438, 0
        %vm531 = vcmp.ne.s32.totalorder %v445, 0
        %vm532 = vcmp.ne.s32.totalorder %v452, 0
        %vm533 = vcmp.ne.s32.totalorder %v459, 0
        %vm534 = vcmp.ne.s32.totalorder %v466, 0
        %vm535 = vcmp.ne.s32.totalorder %v473, 0
        %vm536 = vcmp.ne.s32.totalorder %v480, 0
        %vm537 = vcmp.ne.s32.totalorder %v487, 0
        %vm538 = vcmp.ne.s32.totalorder %v494, 0
        %vm539 = vcmp.ne.s32.totalorder %v501, 0
        %vm540 = vcmp.ne.s32.totalorder %v508, 0
        %vm541 = vcmp.lt.s32.totalorder %v291, 0
        %vm542 = vcmp.lt.s32.totalorder %v298, 0
        %vm543 = vcmp.lt.s32.totalorder %v305, 0
        %vm544 = vcmp.lt.s32.totalorder %v312, 0
        %vm545 = vcmp.lt.s32.totalorder %v319, 0
        %vm546 = vcmp.lt.s32.totalorder %v326, 0
        %vm547 = vcmp.lt.s32.totalorder %v333, 0
        %vm548 = vcmp.lt.s32.totalorder %v340, 0
        %vm549 = vcmp.lt.s32.totalorder %v347, 0
        %vm550 = vcmp.lt.s32.totalorder %v354, 0
        %vm551 = vcmp.lt.s32.totalorder %v361, 0
        %vm552 = vcmp.lt.s32.totalorder %v368, 0
        %vm553 = vcmp.lt.s32.totalorder %v375, 0
        %vm554 = vcmp.lt.s32.totalorder %v382, 0
        %vm555 = vcmp.lt.s32.totalorder %v389, 0
        %vm556 = vcmp.lt.s32.totalorder %v396, 0
        %vm557 = vcmp.lt.s32.totalorder %v403, 0
        %vm558 = vcmp.lt.s32.totalorder %v410, 0
        %vm559 = vcmp.lt.s32.totalorder %v417, 0
        %vm560 = vcmp.lt.s32.totalorder %v424, 0
        %vm561 = vcmp.lt.s32.totalorder %v431, 0
        %vm562 = vcmp.lt.s32.totalorder %v438, 0
        %vm563 = vcmp.lt.s32.totalorder %v445, 0
        %vm564 = vcmp.lt.s32.totalorder %v452, 0
        %vm565 = vcmp.lt.s32.totalorder %v459, 0
        %vm566 = vcmp.lt.s32.totalorder %v466, 0
        %vm567 = vcmp.lt.s32.totalorder %v473, 0
        %vm568 = vcmp.lt.s32.totalorder %v480, 0
        %vm569 = vcmp.lt.s32.totalorder %v487, 0
        %vm570 = vcmp.lt.s32.totalorder %v494, 0
        %vm571 = vcmp.lt.s32.totalorder %v501, 0
        %vm572 = vcmp.lt.s32.totalorder %v508, 0
        %vm573 = vmand %vm541, %vm509
        %vm574 = vmand %vm542, %vm510
        %vm575 = vmand %vm543, %vm511
        %vm576 = vmand %vm544, %vm512
        %vm577 = vmand %vm545, %vm513
        %vm578 = vmand %vm546, %vm514
        %vm579 = vmand %vm547, %vm515
        %vm580 = vmand %vm548, %vm516
        %vm581 = vmand %vm549, %vm517
        %vm582 = vmand %vm550, %vm518
        %vm583 = vmand %vm551, %vm519
        %vm584 = vmand %vm552, %vm520
        %vm585 = vmand %vm553, %vm521
        %vm586 = vmand %vm554, %vm522
        %vm587 = vmand %vm555, %vm523
        %vm588 = vmand %vm556, %vm524
        %vm589 = vmand %vm557, %vm525
        %vm590 = vmand %vm558, %vm526
        %vm591 = vmand %vm559, %vm527
        %vm592 = vmand %vm560, %vm528
        %vm593 = vmand %vm561, %vm529
        %vm594 = vmand %vm562, %vm530
        %vm595 = vmand %vm563, %vm531
        %vm596 = vmand %vm564, %vm532
        %vm597 = vmand %vm565, %vm533
        %vm598 = vmand %vm566, %vm534
        %vm599 = vmand %vm567, %vm535
        %vm600 = vmand %vm568, %vm536
        %vm601 = vmand %vm569, %vm537
        %vm602 = vmand %vm570, %vm538
        %vm603 = vmand %vm571, %vm539
        %vm604 = vmand %vm572, %vm540
        %v605 = vadd.s32 %v291, 16
        %v606 = vadd.s32 %v298, 16
        %v607 = vadd.s32 %v305, 16
        %v608 = vadd.s32 %v312, 16
        %v609 = vadd.s32 %v319, 16
        %v610 = vadd.s32 %v326, 16
        %v611 = vadd.s32 %v333, 16
        %v612 = vadd.s32 %v340, 16
        %v613 = vadd.s32 %v347, 16
        %v614 = vadd.s32 %v354, 16
        %v615 = vadd.s32 %v361, 16
        %v616 = vadd.s32 %v368, 16
        %v617 = vadd.s32 %v375, 16
        %v618 = vadd.s32 %v382, 16
        %v619 = vadd.s32 %v389, 16
        %v620 = vadd.s32 %v396, 16
        %v621 = vadd.s32 %v403, 16
        %v622 = vadd.s32 %v410, 16
        %v623 = vadd.s32 %v417, 16
        %v624 = vadd.s32 %v424, 16
        %v625 = vadd.s32 %v431, 16
        %v626 = vadd.s32 %v438, 16
        %v627 = vadd.s32 %v445, 16
        %v628 = vadd.s32 %v452, 16
        %v629 = vadd.s32 %v459, 16
        %v630 = vadd.s32 %v466, 16
        %v631 = vadd.s32 %v473, 16
        %v632 = vadd.s32 %v480, 16
        %v633 = vadd.s32 %v487, 16
        %v634 = vadd.s32 %v494, 16
        %v635 = vadd.s32 %v501, 16
        %v636 = vadd.s32 %v508, 16
        %v637 = vsel %vm573, %v605, %v291
        %v638 = vsel %vm574, %v606, %v298
        %v639 = vsel %vm575, %v607, %v305
        %v640 = vsel %vm576, %v608, %v312
        %v641 = vsel %vm577, %v609, %v319
        %v642 = vsel %vm578, %v610, %v326
        %v643 = vsel %vm579, %v611, %v333
        %v644 = vsel %vm580, %v612, %v340
        %v645 = vsel %vm581, %v613, %v347
        %v646 = vsel %vm582, %v614, %v354
        %v647 = vsel %vm583, %v615, %v361
        %v648 = vsel %vm584, %v616, %v368
        %v649 = vsel %vm585, %v617, %v375
        %v650 = vsel %vm586, %v618, %v382
        %v651 = vsel %vm587, %v619, %v389
        %v652 = vsel %vm588, %v620, %v396
        %v653 = vsel %vm589, %v621, %v403
        %v654 = vsel %vm590, %v622, %v410
        %v655 = vsel %vm591, %v623, %v417
        %v656 = vsel %vm592, %v624, %v424
        %v657 = vsel %vm593, %v625, %v431
        %v658 = vsel %vm594, %v626, %v438
        %v659 = vsel %vm595, %v627, %v445
        %v660 = vsel %vm596, %v628, %v452
        %v661 = vsel %vm597, %v629, %v459
        %v662 = vsel %vm598, %v630, %v466
        %v663 = vsel %vm599, %v631, %v473
        %v664 = vsel %vm600, %v632, %v480
        %v665 = vsel %vm601, %v633, %v487
        %v666 = vsel %vm602, %v634, %v494
        %v667 = vsel %vm603, %v635, %v501
        %v668 = vsel %vm604, %v636, %v508
        %vm669 = vcmp.lt.s32.totalorder %v637, 15
        %vm670 = vcmp.lt.s32.totalorder %v638, 15
        %vm671 = vcmp.lt.s32.totalorder %v639, 15
        %vm672 = vcmp.lt.s32.totalorder %v640, 15
        %vm673 = vcmp.lt.s32.totalorder %v641, 15
        %vm674 = vcmp.lt.s32.totalorder %v642, 15
        %vm675 = vcmp.lt.s32.totalorder %v643, 15
        %vm676 = vcmp.lt.s32.totalorder %v644, 15
        %vm677 = vcmp.lt.s32.totalorder %v645, 15
        %vm678 = vcmp.lt.s32.totalorder %v646, 15
        %vm679 = vcmp.lt.s32.totalorder %v647, 15
        %vm680 = vcmp.lt.s32.totalorder %v648, 15
        %vm681 = vcmp.lt.s32.totalorder %v649, 15
        %vm682 = vcmp.lt.s32.totalorder %v650, 15
        %vm683 = vcmp.lt.s32.totalorder %v651, 15
        %vm684 = vcmp.lt.s32.totalorder %v652, 15
        %vm685 = vcmp.lt.s32.totalorder %v653, 15
        %vm686 = vcmp.lt.s32.totalorder %v654, 15
        %vm687 = vcmp.lt.s32.totalorder %v655, 15
        %vm688 = vcmp.lt.s32.totalorder %v656, 15
        %vm689 = vcmp.lt.s32.totalorder %v657, 15
        %vm690 = vcmp.lt.s32.totalorder %v658, 15
        %vm691 = vcmp.lt.s32.totalorder %v659, 15
        %vm692 = vcmp.lt.s32.totalorder %v660, 15
        %vm693 = vcmp.lt.s32.totalorder %v661, 15
        %vm694 = vcmp.lt.s32.totalorder %v662, 15
        %vm695 = vcmp.lt.s32.totalorder %v663, 15
        %vm696 = vcmp.lt.s32.totalorder %v664, 15
        %vm697 = vcmp.lt.s32.totalorder %v665, 15
        %vm698 = vcmp.lt.s32.totalorder %v666, 15
        %vm699 = vcmp.lt.s32.totalorder %v667, 15
        %vm700 = vcmp.lt.s32.totalorder %v668, 15
        %v733 = vunpack.c.l.b16 %v219
        %v734 = vunpack.c.l.b16 %v220
        %v735 = vunpack.c.l.b16 %v221
        %v736 = vunpack.c.l.b16 %v222
        %v737 = vunpack.c.l.b16 %v223
        %v738 = vunpack.c.l.b16 %v224
        %v739 = vunpack.c.l.b16 %v225
        %v740 = vunpack.c.l.b16 %v226
        %v741 = vunpack.c.l.b16 %v227
        %v742 = vunpack.c.l.b16 %v228
        %v743 = vunpack.c.l.b16 %v229
        %v744 = vunpack.c.l.b16 %v230
        %v745 = vunpack.c.l.b16 %v231
        %v746 = vunpack.c.l.b16 %v232
        %v747 = vunpack.c.l.b16 %v233
        %v748 = vunpack.c.l.b16 %v234
        %v749 = vunpack.c.l.b16 %v235
        %v750 = vunpack.c.l.b16 %v236
        %v751 = vunpack.c.l.b16 %v237
        %v752 = vunpack.c.l.b16 %v238
        %v753 = vunpack.c.l.b16 %v239
        %v754 = vunpack.c.l.b16 %v240
        %v755 = vunpack.c.l.b16 %v241
        %v756 = vunpack.c.l.b16 %v242
        %v757 = vunpack.c.l.b16 %v243
        %v758 = vunpack.c.l.b16 %v244
        %v759 = vunpack.c.l.b16 %v245
        %v760 = vunpack.c.l.b16 %v246
        %v761 = vunpack.c.l.b16 %v247
        %v762 = vunpack.c.l.b16 %v248
        %v763 = vunpack.c.l.b16 %v249
        %v764 = vunpack.c.l.b16 %v250
        %v765 = vpack.c.b16 %v734, %v733
        %v766 = vpack.c.b16 %v736, %v735
        %v767 = vpack.c.b16 %v738, %v737
        %v768 = vpack.c.b16 %v740, %v739
        %v769 = vpack.c.b16 %v742, %v741
        %v770 = vpack.c.b16 %v744, %v743
        %v771 = vpack.c.b16 %v746, %v745
        %v772 = vpack.c.b16 %v748, %v747
        %v773 = vpack.c.b16 %v750, %v749
        %v774 = vpack.c.b16 %v752, %v751
        %v775 = vpack.c.b16 %v754, %v753
        %v776 = vpack.c.b16 %v756, %v755
        %v777 = vpack.c.b16 %v758, %v757
        %v778 = vpack.c.b16 %v760, %v759
        %v779 = vpack.c.b16 %v762, %v761
        %v780 = vpack.c.b16 %v764, %v763
        %vm781 = vsmask.f32 7424
        %v783 = vshrl.u32 %v765, 16
        %v785 = vshll.u32 %v765, 16
        %v787 = vrot.slane %v785, 1
        %v788 = vor.u32 %v783, %v787
        %v790 = vshll.u32 %v766, 16
        %v792 = vrot.slane %v790, 1
        %v793 = vsel %vm781, %v788, %v792
        %v794 = vshrl.u32 %v766, 16
        %v796 = vor.u32 %v794, %v792
        %v798 = vshll.u32 %v767, 16
        %v800 = vrot.slane %v798, 1
        %v801 = vsel %vm781, %v796, %v800
        %v802 = vshrl.u32 %v767, 16
        %v804 = vor.u32 %v802, %v800
        %v806 = vshll.u32 %v768, 16
        %v808 = vrot.slane %v806, 1
        %v809 = vsel %vm781, %v804, %v808
        %v810 = vshrl.u32 %v768, 16
        %v812 = vor.u32 %v810, %v808
        %v814 = vshll.u32 %v769, 16
        %v816 = vrot.slane %v814, 1
        %v817 = vsel %vm781, %v812, %v816
        %v818 = vshrl.u32 %v769, 16
        %v820 = vor.u32 %v818, %v816
        %v822 = vshll.u32 %v770, 16
        %v824 = vrot.slane %v822, 1
        %v825 = vsel %vm781, %v820, %v824
        %v826 = vshrl.u32 %v770, 16
        %v828 = vor.u32 %v826, %v824
        %v830 = vshll.u32 %v771, 16
        %v832 = vrot.slane %v830, 1
        %v833 = vsel %vm781, %v828, %v832
        %v834 = vshrl.u32 %v771, 16
        %v836 = vor.u32 %v834, %v832
        %v838 = vshll.u32 %v772, 16
        %v840 = vrot.slane %v838, 1
        %v841 = vsel %vm781, %v836, %v840
        %v842 = vshrl.u32 %v772, 16
        %v844 = vor.u32 %v842, %v840
        %v846 = vshll.u32 %v773, 16
        %v848 = vrot.slane %v846, 1
        %v849 = vsel %vm781, %v844, %v848
        %v850 = vshrl.u32 %v773, 16
        %v852 = vor.u32 %v850, %v848
        %v854 = vshll.u32 %v774, 16
        %v856 = vrot.slane %v854, 1
        %v857 = vsel %vm781, %v852, %v856
        %v858 = vshrl.u32 %v774, 16
        %v860 = vor.u32 %v858, %v856
        %v862 = vshll.u32 %v775, 16
        %v864 = vrot.slane %v862, 1
        %v865 = vsel %vm781, %v860, %v864
        %v866 = vshrl.u32 %v775, 16
        %v868 = vor.u32 %v866, %v864
        %v870 = vshll.u32 %v776, 16
        %v872 = vrot.slane %v870, 1
        %v873 = vsel %vm781, %v868, %v872
        %v874 = vshrl.u32 %v776, 16
        %v876 = vor.u32 %v874, %v872
        %v878 = vshll.u32 %v777, 16
        %v880 = vrot.slane %v878, 1
        %v881 = vsel %vm781, %v876, %v880
        %v882 = vshrl.u32 %v777, 16
        %v884 = vor.u32 %v882, %v880
        %v886 = vshll.u32 %v778, 16
        %v888 = vrot.slane %v886, 1
        %v889 = vsel %vm781, %v884, %v888
        %v890 = vshrl.u32 %v778, 16
        %v892 = vor.u32 %v890, %v888
        %v894 = vshll.u32 %v779, 16
        %v896 = vrot.slane %v894, 1
        %v897 = vsel %vm781, %v892, %v896
        %v898 = vshrl.u32 %v779, 16
        %v900 = vor.u32 %v898, %v896
        %v902 = vshll.u32 %v780, 16
        %v904 = vrot.slane %v902, 1
        %v905 = vsel %vm781, %v900, %v904
        %v906 = vshrl.u32 %v780, 16
        %v908 = vor.u32 %v906, %v904
        %vm925 = vcmask 1047552
        %vm926 = vmand %vm925, %vm781
        %v927 = vsel %vm926, %v908, 0
        %vm928 = vmpackc.low %vm669, %vm669
        %vm929 = vmpackc.low %vm670, %vm670
        %vm930 = vmpackc.low %vm671, %vm671
        %vm931 = vmpackc.low %vm672, %vm672
        %vm932 = vmpackc.low %vm673, %vm673
        %vm933 = vmpackc.low %vm674, %vm674
        %vm934 = vmpackc.low %vm675, %vm675
        %vm935 = vmpackc.low %vm676, %vm676
        %vm936 = vmpackc.low %vm677, %vm677
        %vm937 = vmpackc.low %vm678, %vm678
        %vm938 = vmpackc.low %vm679, %vm679
        %vm939 = vmpackc.low %vm680, %vm680
        %vm940 = vmpackc.low %vm681, %vm681
        %vm941 = vmpackc.low %vm682, %vm682
        %vm942 = vmpackc.low %vm683, %vm683
        %vm943 = vmpackc.low %vm684, %vm684
        %vm944 = vmpackc.low %vm685, %vm685
        %vm945 = vmpackc.low %vm686, %vm686
        %vm946 = vmpackc.low %vm687, %vm687
        %vm947 = vmpackc.low %vm688, %vm688
        %vm948 = vmpackc.low %vm689, %vm689
        %vm949 = vmpackc.low %vm690, %vm690
        %vm950 = vmpackc.low %vm691, %vm691
        %vm951 = vmpackc.low %vm692, %vm692
        %vm952 = vmpackc.low %vm693, %vm693
        %vm953 = vmpackc.low %vm694, %vm694
        %vm954 = vmpackc.low %vm695, %vm695
        %vm955 = vmpackc.low %vm696, %vm696
        %vm956 = vmpackc.low %vm697, %vm697
        %vm957 = vmpackc.low %vm698, %vm698
        %vm958 = vmpackc.low %vm699, %vm699
        %vm959 = vmpackc.low %vm700, %vm700
        %v960 = vsel %vm928, 65537, 0
        %v961 = vsel %vm929, 65537, 0
        %v962 = vsel %vm930, 65537, 0
        %v963 = vsel %vm931, 65537, 0
        %v964 = vsel %vm932, 65537, 0
        %v965 = vsel %vm933, 65537, 0
        %v966 = vsel %vm934, 65537, 0
        %v967 = vsel %vm935, 65537, 0
        %v968 = vsel %vm936, 65537, 0
        %v969 = vsel %vm937, 65537, 0
        %v970 = vsel %vm938, 65537, 0
        %v971 = vsel %vm939, 65537, 0
        %v972 = vsel %vm940, 65537, 0
        %v973 = vsel %vm941, 65537, 0
        %v974 = vsel %vm942, 65537, 0
        %v975 = vsel %vm943, 65537, 0
        %v976 = vsel %vm944, 65537, 0
        %v977 = vsel %vm945, 65537, 0
        %v978 = vsel %vm946, 65537, 0
        %v979 = vsel %vm947, 65537, 0
        %v980 = vsel %vm948, 65537, 0
        %v981 = vsel %vm949, 65537, 0
        %v982 = vsel %vm950, 65537, 0
        %v983 = vsel %vm951, 65537, 0
        %v984 = vsel %vm952, 65537, 0
        %v985 = vsel %vm953, 65537, 0
        %v986 = vsel %vm954, 65537, 0
        %v987 = vsel %vm955, 65537, 0
        %v988 = vsel %vm956, 65537, 0
        %v989 = vsel %vm957, 65537, 0
        %v990 = vsel %vm958, 65537, 0
        %v991 = vsel %vm959, 65537, 0
        %v992 = vunpack.c.l.b16 %v960
        %v993 = vunpack.c.l.b16 %v961
        %v994 = vunpack.c.l.b16 %v962
        %v995 = vunpack.c.l.b16 %v963
        %v996 = vunpack.c.l.b16 %v964
        %v997 = vunpack.c.l.b16 %v965
        %v998 = vunpack.c.l.b16 %v966
        %v999 = vunpack.c.l.b16 %v967
        %v1000 = vunpack.c.l.b16 %v968
        %v1001 = vunpack.c.l.b16 %v969
        %v1002 = vunpack.c.l.b16 %v970
        %v1003 = vunpack.c.l.b16 %v971
        %v1004 = vunpack.c.l.b16 %v972
        %v1005 = vunpack.c.l.b16 %v973
        %v1006 = vunpack.c.l.b16 %v974
        %v1007 = vunpack.c.l.b16 %v975
        %v1008 = vunpack.c.l.b16 %v976
        %v1009 = vunpack.c.l.b16 %v977
        %v1010 = vunpack.c.l.b16 %v978
        %v1011 = vunpack.c.l.b16 %v979
        %v1012 = vunpack.c.l.b16 %v980
        %v1013 = vunpack.c.l.b16 %v981
        %v1014 = vunpack.c.l.b16 %v982
        %v1015 = vunpack.c.l.b16 %v983
        %v1016 = vunpack.c.l.b16 %v984
        %v1017 = vunpack.c.l.b16 %v985
        %v1018 = vunpack.c.l.b16 %v986
        %v1019 = vunpack.c.l.b16 %v987
        %v1020 = vunpack.c.l.b16 %v988
        %v1021 = vunpack.c.l.b16 %v989
        %v1022 = vunpack.c.l.b16 %v990
        %v1023 = vunpack.c.l.b16 %v991
        %v1024 = vpack.c.b16 %v993, %v992
        %v1025 = vpack.c.b16 %v995, %v994
        %v1026 = vpack.c.b16 %v997, %v996
        %v1027 = vpack.c.b16 %v999, %v998
        %v1028 = vpack.c.b16 %v1001, %v1000
        %v1029 = vpack.c.b16 %v1003, %v1002
        %v1030 = vpack.c.b16 %v1005, %v1004
        %v1031 = vpack.c.b16 %v1007, %v1006
        %v1032 = vpack.c.b16 %v1009, %v1008
        %v1033 = vpack.c.b16 %v1011, %v1010
        %v1034 = vpack.c.b16 %v1013, %v1012
        %v1035 = vpack.c.b16 %v1015, %v1014
        %v1036 = vpack.c.b16 %v1017, %v1016
        %v1037 = vpack.c.b16 %v1019, %v1018
        %v1038 = vpack.c.b16 %v1021, %v1020
        %v1039 = vpack.c.b16 %v1023, %v1022
        %vm1040 = vcmp.ne.s16.totalorder %v1024, 0
        %vm1041 = vcmp.ne.s16.totalorder %v1025, 0
        %vm1042 = vcmp.ne.s16.totalorder %v1026, 0
        %vm1043 = vcmp.ne.s16.totalorder %v1027, 0
        %vm1044 = vcmp.ne.s16.totalorder %v1028, 0
        %vm1045 = vcmp.ne.s16.totalorder %v1029, 0
        %vm1046 = vcmp.ne.s16.totalorder %v1030, 0
        %vm1047 = vcmp.ne.s16.totalorder %v1031, 0
        %vm1048 = vcmp.ne.s16.totalorder %v1032, 0
        %vm1049 = vcmp.ne.s16.totalorder %v1033, 0
        %vm1050 = vcmp.ne.s16.totalorder %v1034, 0
        %vm1051 = vcmp.ne.s16.totalorder %v1035, 0
        %vm1052 = vcmp.ne.s16.totalorder %v1036, 0
        %vm1053 = vcmp.ne.s16.totalorder %v1037, 0
        %vm1054 = vcmp.ne.s16.totalorder %v1038, 0
        %vm1055 = vcmp.ne.s16.totalorder %v1039, 0
        %v1056 = vsel %vm1040, %v793, 0
        %v1057 = vsel %vm1041, %v801, 0
        %v1058 = vsel %vm1042, %v809, 0
        %v1059 = vsel %vm1043, %v817, 0
        %v1060 = vsel %vm1044, %v825, 0
        %v1061 = vsel %vm1045, %v833, 0
        %v1062 = vsel %vm1046, %v841, 0
        %v1063 = vsel %vm1047, %v849, 0
        %v1064 = vsel %vm1048, %v857, 0
        %v1065 = vsel %vm1049, %v865, 0
        %v1066 = vsel %vm1050, %v873, 0
        %v1067 = vsel %vm1051, %v881, 0
        %v1068 = vsel %vm1052, %v889, 0
        %v1069 = vsel %vm1053, %v897, 0
        %v1070 = vsel %vm1054, %v905, 0
        %v1071 = vsel %vm1055, %v927, 0
        %v1087 = vsel %vm1040, %v801, 0
        %v1088 = vsel %vm1041, %v809, 0
        %v1089 = vsel %vm1042, %v817, 0
        %v1090 = vsel %vm1043, %v825, 0
        %v1091 = vsel %vm1044, %v833, 0
        %v1092 = vsel %vm1045, %v841, 0
        %v1093 = vsel %vm1046, %v849, 0
        %v1094 = vsel %vm1047, %v857, 0
        %v1095 = vsel %vm1048, %v865, 0
        %v1096 = vsel %vm1049, %v873, 0
        %v1097 = vsel %vm1050, %v881, 0
        %v1098 = vsel %vm1051, %v889, 0
        %v1099 = vsel %vm1052, %v897, 0
        %v1100 = vsel %vm1053, %v905, 0
        %v1101 = vsel %vm1054, %v927, 0
        %v1102 = vld [vmem:[#allocation7] sm:$0x1]
        %v1103 = vld [vmem:[#allocation5] sm:$0xf]
        %v1104 = vld [vmem:[#allocation5 + $0x4] sm:$0xf]
        %v1105 = vld [vmem:[#allocation5 + $0x8] sm:$0xf]
        %v1106 = vld [vmem:[#allocation5 + $0xc] sm:$0xf]
        %v1107 = vld [vmem:[#allocation5 + $0x10] sm:$0xf]
        %v1108 = vld [vmem:[#allocation5 + $0x14] sm:$0xf]
        %v1109 = vld [vmem:[#allocation5 + $0x18] sm:$0xf]
        %v1110 = vld [vmem:[#allocation5 + $0x1c] sm:$0xf]
        %v1111 = vld [vmem:[#allocation5 + $0x20] sm:$0xf]
        %v1112 = vld [vmem:[#allocation5 + $0x24] sm:$0xf]
        %v1113 = vld [vmem:[#allocation5 + $0x28] sm:$0xf]
        %v1114 = vld [vmem:[#allocation5 + $0x2c] sm:$0xf]
        %v1115 = vld [vmem:[#allocation5 + $0x30] sm:$0xf]
        %v1116 = vld [vmem:[#allocation5 + $0x34] sm:$0xf]
        %v1117 = vld [vmem:[#allocation5 + $0x38] sm:$0xf]
        %v1118 = vld [vmem:[#allocation5 + $0x3c] sm:$0xf]
        %v1120 = vlaneseq
        %v1121 = vshrl.u32 %v1120, 7
        %v1122 = vsub.s32 0, %v1121
        %v1123 = vrot.slane %v1102, %v1122
        %v1142 = vunpack.c.l.b16 %v1103
        %v1143 = vunpack.c.l.b16 %v1104
        %v1144 = vunpack.c.l.b16 %v1105
        %v1145 = vunpack.c.l.b16 %v1106
        %v1146 = vunpack.c.l.b16 %v1107
        %v1147 = vunpack.c.l.b16 %v1108
        %v1148 = vunpack.c.l.b16 %v1109
        %v1149 = vunpack.c.l.b16 %v1110
        %v1150 = vunpack.c.l.b16 %v1111
        %v1151 = vunpack.c.l.b16 %v1112
        %v1152 = vunpack.c.l.b16 %v1113
        %v1153 = vunpack.c.l.b16 %v1114
        %v1154 = vunpack.c.l.b16 %v1115
        %v1155 = vunpack.c.l.b16 %v1116
        %v1156 = vunpack.c.l.b16 %v1117
        %v1157 = vunpack.c.l.b16 %v1118
        %v1158 = vpack.c.b16 %v1143, %v1142
        %v1159 = vpack.c.b16 %v1145, %v1144
        %v1160 = vpack.c.b16 %v1147, %v1146
        %v1161 = vpack.c.b16 %v1149, %v1148
        %v1162 = vpack.c.b16 %v1151, %v1150
        %v1163 = vpack.c.b16 %v1153, %v1152
        %v1164 = vpack.c.b16 %v1155, %v1154
        %v1165 = vpack.c.b16 %v1157, %v1156
        %1174 = vmatprep.subr.bf16.mxu0 0
        %1175 = vmatpush1.bf16.msra.mxu0 %v1158
        %1176 = vmatprep.subr.bf16.mxu0 0
        %1177 = vmatpush1.bf16.msra.mxu0 %v1159
        %1178 = vmatprep.subr.bf16.mxu0 0
        %1179 = vmatpush1.bf16.msra.mxu0 %v1160
        %1180 = vmatprep.subr.bf16.mxu0 0
        %1181 = vmatpush1.bf16.msra.mxu0 %v1161
        %1182 = vmatprep.subr.bf16.mxu0 0
        %1183 = vmatpush1.bf16.msra.mxu0 %v1162
        %1184 = vmatprep.subr.bf16.mxu0 0
        %1185 = vmatpush1.bf16.msra.mxu0 %v1163
        %1186 = vmatprep.subr.bf16.mxu0 0
        %1187 = vmatpush1.bf16.msra.mxu0 %v1164
        %1188 = vmatprep.subr.bf16.mxu0 0
        %1189 = vmatpush1.bf16.msra.mxu0 %v1165
        %1190 = vmatprep.subr.bf16.mxu0 0
        %1191 = vmatpush1.bf16.msra.mxu0 0
        %1192 = vmatprep.subr.bf16.mxu0 0
        %1193 = vmatpush1.bf16.msra.mxu0 0
        %1194 = vmatprep.subr.bf16.mxu0 0
        %1195 = vmatpush1.bf16.msra.mxu0 0
        %1196 = vmatprep.subr.bf16.mxu0 0
        %1197 = vmatpush1.bf16.msra.mxu0 0
        %1198 = vmatprep.subr.bf16.mxu0 0
        %1199 = vmatpush1.bf16.msra.mxu0 0
        %1200 = vmatprep.subr.bf16.mxu0 0
        %1201 = vmatpush1.bf16.msra.mxu0 0
        %1202 = vmatprep.subr.bf16.mxu0 0
        %1203 = vmatpush1.bf16.msra.mxu0 0
        %1204 = vmatprep.subr.bf16.mxu0 0
        %1205 = vmatpush1.bf16.msra.mxu0 0
        %1206 = vmatprep.mubr.bf16.mxu0 0
        %1207 = vmatmul.mubr.bf16.gmra.mrb[0].mxu0 %v765
        %v1208 = vpop.f32.mrb[0].mxu0
        %v1209 = vadd.f32 %v1123, %v1208
        %v1210 = vpop.f32.mrb[0].mxu0
        %v1211 = vpop.f32.mrb[0].mxu0
        %v1212 = vadd.f32 %v1123, %v1211
        %v1213 = vpop.f32.mrb[0].mxu0
        %1214 = vmatprep.mubr.bf16.mxu0 0
        %1215 = vmatmul.mubr.bf16.gmra.mrb[0].mxu0 %v766
        %v1216 = vpop.f32.mrb[0].mxu0
        %v1217 = vadd.f32 %v1123, %v1216
        %v1218 = vpop.f32.mrb[0].mxu0
        %v1219 = vpop.f32.mrb[0].mxu0
        %v1220 = vadd.f32 %v1123, %v1219
        %v1221 = vpop.f32.mrb[0].mxu0
        %1222 = vmatprep.mubr.bf16.mxu0 0
        %1223 = vmatmul.mubr.bf16.gmra.mrb[0].mxu0 %v767
        %v1224 = vpop.f32.mrb[0].mxu0
        %v1225 = vadd.f32 %v1123, %v1224
        %v1226 = vpop.f32.mrb[0].mxu0
        %v1227 = vpop.f32.mrb[0].mxu0
        %v1228 = vadd.f32 %v1123, %v1227
        %v1229 = vpop.f32.mrb[0].mxu0
        %1230 = vmatprep.mubr.bf16.mxu0 0
        %1231 = vmatmul.mubr.bf16.gmra.mrb[0].mxu0 %v768
        %v1232 = vpop.f32.mrb[0].mxu0
        %v1233 = vadd.f32 %v1123, %v1232
        %v1234 = vpop.f32.mrb[0].mxu0
        %v1235 = vpop.f32.mrb[0].mxu0
        %v1236 = vadd.f32 %v1123, %v1235
        %v1237 = vpop.f32.mrb[0].mxu0
        %1238 = vmatprep.mubr.bf16.mxu0 0
        %1239 = vmatmul.mubr.bf16.gmra.mrb[0].mxu0 %v769
        %v1240 = vpop.f32.mrb[0].mxu0
        %v1241 = vadd.f32 %v1123, %v1240
        %v1242 = vpop.f32.mrb[0].mxu0
        %v1243 = vpop.f32.mrb[0].mxu0
        %v1244 = vadd.f32 %v1123, %v1243
        %v1245 = vpop.f32.mrb[0].mxu0
        %1246 = vmatprep.mubr.bf16.mxu0 0
        %1247 = vmatmul.mubr.bf16.gmra.mrb[0].mxu0 %v770
        %v1248 = vpop.f32.mrb[0].mxu0
        %v1249 = vadd.f32 %v1123, %v1248
        %v1250 = vpop.f32.mrb[0].mxu0
        %v1251 = vpop.f32.mrb[0].mxu0
        %v1252 = vadd.f32 %v1123, %v1251
        %v1253 = vpop.f32.mrb[0].mxu0
        %1254 = vmatprep.mubr.bf16.mxu0 0
        %1255 = vmatmul.mubr.bf16.gmra.mrb[0].mxu0 %v771
        %v1256 = vpop.f32.mrb[0].mxu0
        %v1257 = vadd.f32 %v1123, %v1256
        %v1258 = vpop.f32.mrb[0].mxu0
        %v1259 = vpop.f32.mrb[0].mxu0
        %v1260 = vadd.f32 %v1123, %v1259
        %v1261 = vpop.f32.mrb[0].mxu0
        %1262 = vmatprep.mubr.bf16.mxu0 0
        %1263 = vmatmul.mubr.bf16.gmra.mrb[0].mxu0 %v772
        %v1264 = vpop.f32.mrb[0].mxu0
        %v1265 = vadd.f32 %v1123, %v1264
        %v1266 = vpop.f32.mrb[0].mxu0
        %v1267 = vpop.f32.mrb[0].mxu0
        %v1268 = vadd.f32 %v1123, %v1267
        %v1269 = vpop.f32.mrb[0].mxu0
        %1270 = vmatprep.mubr.bf16.mxu0 0
        %1271 = vmatmul.mubr.bf16.gmra.mrb[0].mxu0 %v773
        %v1272 = vpop.f32.mrb[0].mxu0
        %v1273 = vadd.f32 %v1123, %v1272
        %v1274 = vpop.f32.mrb[0].mxu0
        %v1275 = vpop.f32.mrb[0].mxu0
        %v1276 = vadd.f32 %v1123, %v1275
        %v1277 = vpop.f32.mrb[0].mxu0
        %1278 = vmatprep.mubr.bf16.mxu0 0
        %1279 = vmatmul.mubr.bf16.gmra.mrb[0].mxu0 %v774
        %v1280 = vpop.f32.mrb[0].mxu0
        %v1281 = vadd.f32 %v1123, %v1280
        %v1282 = vpop.f32.mrb[0].mxu0
        %v1283 = vpop.f32.mrb[0].mxu0
        %v1284 = vadd.f32 %v1123, %v1283
        %v1285 = vpop.f32.mrb[0].mxu0
        %1286 = vmatprep.mubr.bf16.mxu0 0
        %1287 = vmatmul.mubr.bf16.gmra.mrb[0].mxu0 %v775
        %v1288 = vpop.f32.mrb[0].mxu0
        %v1289 = vadd.f32 %v1123, %v1288
        %v1290 = vpop.f32.mrb[0].mxu0
        %v1291 = vpop.f32.mrb[0].mxu0
        %v1292 = vadd.f32 %v1123, %v1291
        %v1293 = vpop.f32.mrb[0].mxu0
        %1294 = vmatprep.mubr.bf16.mxu0 0
        %1295 = vmatmul.mubr.bf16.gmra.mrb[0].mxu0 %v776
        %v1296 = vpop.f32.mrb[0].mxu0
        %v1297 = vadd.f32 %v1123, %v1296
        %v1298 = vpop.f32.mrb[0].mxu0
        %v1299 = vpop.f32.mrb[0].mxu0
        %v1300 = vadd.f32 %v1123, %v1299
        %v1301 = vpop.f32.mrb[0].mxu0
        %1302 = vmatprep.mubr.bf16.mxu0 0
        %1303 = vmatmul.mubr.bf16.gmra.mrb[0].mxu0 %v777
        %v1304 = vpop.f32.mrb[0].mxu0
        %v1305 = vadd.f32 %v1123, %v1304
        %v1306 = vpop.f32.mrb[0].mxu0
        %v1307 = vpop.f32.mrb[0].mxu0
        %v1308 = vadd.f32 %v1123, %v1307
        %v1309 = vpop.f32.mrb[0].mxu0
        %1310 = vmatprep.mubr.bf16.mxu0 0
        %1311 = vmatmul.mubr.bf16.gmra.mrb[0].mxu0 %v778
        %v1312 = vpop.f32.mrb[0].mxu0
        %v1313 = vadd.f32 %v1123, %v1312
        %v1314 = vpop.f32.mrb[0].mxu0
        %v1315 = vpop.f32.mrb[0].mxu0
        %v1316 = vadd.f32 %v1123, %v1315
        %v1317 = vpop.f32.mrb[0].mxu0
        %1318 = vmatprep.mubr.bf16.mxu0 0
        %1319 = vmatmul.mubr.bf16.gmra.mrb[0].mxu0 %v779
        %v1320 = vpop.f32.mrb[0].mxu0
        %v1321 = vadd.f32 %v1123, %v1320
        %v1322 = vpop.f32.mrb[0].mxu0
        %v1323 = vpop.f32.mrb[0].mxu0
        %v1324 = vadd.f32 %v1123, %v1323
        %v1325 = vpop.f32.mrb[0].mxu0
        %1326 = vmatprep.mubr.bf16.mxu0 0
        %1327 = vmatmul.mubr.bf16.gmra.mrb[0].mxu0 %v780
        %v1328 = vpop.f32.mrb[0].mxu0
        %v1329 = vadd.f32 %v1123, %v1328
        %v1330 = vpop.f32.mrb[0].mxu0
        %v1331 = vpop.f32.mrb[0].mxu0
        %v1332 = vadd.f32 %v1123, %v1331
        %v1333 = vpop.f32.mrb[0].mxu0
        %1334 = vdwg.mxu0
        %v1335 = vxor.u32 %v1209, 2147483648
        %v1336 = vxor.u32 %v1212, 2147483648
        %v1337 = vxor.u32 %v1217, 2147483648
        %v1338 = vxor.u32 %v1220, 2147483648
        %v1339 = vxor.u32 %v1225, 2147483648
        %v1340 = vxor.u32 %v1228, 2147483648
        %v1341 = vxor.u32 %v1233, 2147483648
        %v1342 = vxor.u32 %v1236, 2147483648
        %v1343 = vxor.u32 %v1241, 2147483648
        %v1344 = vxor.u32 %v1244, 2147483648
        %v1345 = vxor.u32 %v1249, 2147483648
        %v1346 = vxor.u32 %v1252, 2147483648
        %v1347 = vxor.u32 %v1257, 2147483648
        %v1348 = vxor.u32 %v1260, 2147483648
        %v1349 = vxor.u32 %v1265, 2147483648
        %v1350 = vxor.u32 %v1268, 2147483648
        %v1351 = vxor.u32 %v1273, 2147483648
        %v1352 = vxor.u32 %v1276, 2147483648
        %v1353 = vxor.u32 %v1281, 2147483648
        %v1354 = vxor.u32 %v1284, 2147483648
        %v1355 = vxor.u32 %v1289, 2147483648
        %v1356 = vxor.u32 %v1292, 2147483648
        %v1357 = vxor.u32 %v1297, 2147483648
        %v1358 = vxor.u32 %v1300, 2147483648
        %v1359 = vxor.u32 %v1305, 2147483648
        %v1360 = vxor.u32 %v1308, 2147483648
        %v1361 = vxor.u32 %v1313, 2147483648
        %v1362 = vxor.u32 %v1316, 2147483648
        %v1363 = vxor.u32 %v1321, 2147483648
        %v1364 = vxor.u32 %v1324, 2147483648
        %v1365 = vxor.u32 %v1329, 2147483648
        %v1366 = vxor.u32 %v1332, 2147483648
        %v1367 = vmul.f32 %v1335, 1.442695
        %v1368 = vpow.pop %v1367
        %v1369 = vmul.f32 %v1336, 1.442695
        %v1370 = vpow.pop %v1369
        %v1371 = vmul.f32 %v1337, 1.442695
        %v1372 = vpow.pop %v1371
        %v1373 = vmul.f32 %v1338, 1.442695
        %v1374 = vpow.pop %v1373
        %v1375 = vmul.f32 %v1339, 1.442695
        %v1376 = vpow.pop %v1375
        %v1377 = vmul.f32 %v1340, 1.442695
        %v1378 = vpow.pop %v1377
        %v1379 = vmul.f32 %v1341, 1.442695
        %v1380 = vpow.pop %v1379
        %v1381 = vmul.f32 %v1342, 1.442695
        %v1382 = vpow.pop %v1381
        %v1383 = vmul.f32 %v1343, 1.442695
        %v1384 = vpow.pop %v1383
        %v1385 = vmul.f32 %v1344, 1.442695
        %v1386 = vpow.pop %v1385
        %v1387 = vmul.f32 %v1345, 1.442695
        %v1388 = vpow.pop %v1387
        %v1389 = vmul.f32 %v1346, 1.442695
        %v1390 = vpow.pop %v1389
        %v1391 = vmul.f32 %v1347, 1.442695
        %v1392 = vpow.pop %v1391
        %v1393 = vmul.f32 %v1348, 1.442695
        %v1394 = vpow.pop %v1393
        %v1395 = vmul.f32 %v1349, 1.442695
        %v1396 = vpow.pop %v1395
        %v1397 = vmul.f32 %v1350, 1.442695
        %v1398 = vpow.pop %v1397
        %v1399 = vmul.f32 %v1351, 1.442695
        %v1400 = vpow.pop %v1399
        %v1401 = vmul.f32 %v1352, 1.442695
        %v1402 = vpow.pop %v1401
        %v1403 = vmul.f32 %v1353, 1.442695
        %v1404 = vpow.pop %v1403
        %v1405 = vmul.f32 %v1354, 1.442695
        %v1406 = vpow.pop %v1405
        %v1407 = vmul.f32 %v1355, 1.442695
        %v1408 = vpow.pop %v1407
        %v1409 = vmul.f32 %v1356, 1.442695
        %v1410 = vpow.pop %v1409
        %v1411 = vmul.f32 %v1357, 1.442695
        %v1412 = vpow.pop %v1411
        %v1413 = vmul.f32 %v1358, 1.442695
        %v1414 = vpow.pop %v1413
        %v1415 = vmul.f32 %v1359, 1.442695
        %v1416 = vpow.pop %v1415
        %v1417 = vmul.f32 %v1360, 1.442695
        %v1418 = vpow.pop %v1417
        %v1419 = vmul.f32 %v1361, 1.442695
        %v1420 = vpow.pop %v1419
        %v1421 = vmul.f32 %v1362, 1.442695
        %v1422 = vpow.pop %v1421
        %v1423 = vmul.f32 %v1363, 1.442695
        %v1424 = vpow.pop %v1423
        %v1425 = vmul.f32 %v1364, 1.442695
        %v1426 = vpow.pop %v1425
        %v1427 = vmul.f32 %v1365, 1.442695
        %v1428 = vpow.pop %v1427
        %v1429 = vmul.f32 %v1366, 1.442695
        %v1430 = vpow.pop %v1429
        %v1431 = vadd.f32 %v1368, 1.0
        %v1432 = vadd.f32 %v1370, 1.0
        %v1433 = vadd.f32 %v1372, 1.0
        %v1434 = vadd.f32 %v1374, 1.0
        %v1435 = vadd.f32 %v1376, 1.0
        %v1436 = vadd.f32 %v1378, 1.0
        %v1437 = vadd.f32 %v1380, 1.0
        %v1438 = vadd.f32 %v1382, 1.0
        %v1439 = vadd.f32 %v1384, 1.0
        %v1440 = vadd.f32 %v1386, 1.0
        %v1441 = vadd.f32 %v1388, 1.0
        %v1442 = vadd.f32 %v1390, 1.0
        %v1443 = vadd.f32 %v1392, 1.0
        %v1444 = vadd.f32 %v1394, 1.0
        %v1445 = vadd.f32 %v1396, 1.0
        %v1446 = vadd.f32 %v1398, 1.0
        %v1447 = vadd.f32 %v1400, 1.0
        %v1448 = vadd.f32 %v1402, 1.0
        %v1449 = vadd.f32 %v1404, 1.0
        %v1450 = vadd.f32 %v1406, 1.0
        %v1451 = vadd.f32 %v1408, 1.0
        %v1452 = vadd.f32 %v1410, 1.0
        %v1453 = vadd.f32 %v1412, 1.0
        %v1454 = vadd.f32 %v1414, 1.0
        %v1455 = vadd.f32 %v1416, 1.0
        %v1456 = vadd.f32 %v1418, 1.0
        %v1457 = vadd.f32 %v1420, 1.0
        %v1458 = vadd.f32 %v1422, 1.0
        %v1459 = vadd.f32 %v1424, 1.0
        %v1460 = vadd.f32 %v1426, 1.0
        %v1461 = vadd.f32 %v1428, 1.0
        %v1462 = vadd.f32 %v1430, 1.0
        %v1463 = vrcp.pop %v1431
        %v1464 = vmul.f32 1.0, %v1463
        %v1465 = vrcp.pop %v1432
        %v1466 = vmul.f32 1.0, %v1465
        %v1467 = vrcp.pop %v1433
        %v1468 = vmul.f32 1.0, %v1467
        %v1469 = vrcp.pop %v1434
        %v1470 = vmul.f32 1.0, %v1469
        %v1471 = vrcp.pop %v1435
        %v1472 = vmul.f32 1.0, %v1471
        %v1473 = vrcp.pop %v1436
        %v1474 = vmul.f32 1.0, %v1473
        %v1475 = vrcp.pop %v1437
        %v1476 = vmul.f32 1.0, %v1475
        %v1477 = vrcp.pop %v1438
        %v1478 = vmul.f32 1.0, %v1477
        %v1479 = vrcp.pop %v1439
        %v1480 = vmul.f32 1.0, %v1479
        %v1481 = vrcp.pop %v1440
        %v1482 = vmul.f32 1.0, %v1481
        %v1483 = vrcp.pop %v1441
        %v1484 = vmul.f32 1.0, %v1483
        %v1485 = vrcp.pop %v1442
        %v1486 = vmul.f32 1.0, %v1485
        %v1487 = vrcp.pop %v1443
        %v1488 = vmul.f32 1.0, %v1487
        %v1489 = vrcp.pop %v1444
        %v1490 = vmul.f32 1.0, %v1489
        %v1491 = vrcp.pop %v1445
        %v1492 = vmul.f32 1.0, %v1491
        %v1493 = vrcp.pop %v1446
        %v1494 = vmul.f32 1.0, %v1493
        %v1495 = vrcp.pop %v1447
        %v1496 = vmul.f32 1.0, %v1495
        %v1497 = vrcp.pop %v1448
        %v1498 = vmul.f32 1.0, %v1497
        %v1499 = vrcp.pop %v1449
        %v1500 = vmul.f32 1.0, %v1499
        %v1501 = vrcp.pop %v1450
        %v1502 = vmul.f32 1.0, %v1501
        %v1503 = vrcp.pop %v1451
        %v1504 = vmul.f32 1.0, %v1503
        %v1505 = vrcp.pop %v1452
        %v1506 = vmul.f32 1.0, %v1505
        %v1507 = vrcp.pop %v1453
        %v1508 = vmul.f32 1.0, %v1507
        %v1509 = vrcp.pop %v1454
        %v1510 = vmul.f32 1.0, %v1509
        %v1511 = vrcp.pop %v1455
        %v1512 = vmul.f32 1.0, %v1511
        %v1513 = vrcp.pop %v1456
        %v1514 = vmul.f32 1.0, %v1513
        %v1515 = vrcp.pop %v1457
        %v1516 = vmul.f32 1.0, %v1515
        %v1517 = vrcp.pop %v1458
        %v1518 = vmul.f32 1.0, %v1517
        %v1519 = vrcp.pop %v1459
        %v1520 = vmul.f32 1.0, %v1519
        %v1521 = vrcp.pop %v1460
        %v1522 = vmul.f32 1.0, %v1521
        %v1523 = vrcp.pop %v1461
        %v1524 = vmul.f32 1.0, %v1523
        %v1525 = vrcp.pop %v1462
        %v1526 = vmul.f32 1.0, %v1525
        %1527 = vst [vmem:[%s215] sm:$0xff] %v1464
        %1528 = vst [vmem:[%s215 + $0x8] sm:$0xff] %v1466
        %1529 = vst [vmem:[%s215 + $0x10] sm:$0xff] %v1468
        %1530 = vst [vmem:[%s215 + $0x18] sm:$0xff] %v1470
        %1531 = vst [vmem:[%s215 + $0x20] sm:$0xff] %v1472
        %1532 = vst [vmem:[%s215 + $0x28] sm:$0xff] %v1474
        %1533 = vst [vmem:[%s215 + $0x30] sm:$0xff] %v1476
        %1534 = vst [vmem:[%s215 + $0x38] sm:$0xff] %v1478
        %1535 = vst [vmem:[%s215 + $0x40] sm:$0xff] %v1480
        %1536 = vst [vmem:[%s215 + $0x48] sm:$0xff] %v1482
        %1537 = vst [vmem:[%s215 + $0x50] sm:$0xff] %v1484
        %1538 = vst [vmem:[%s215 + $0x58] sm:$0xff] %v1486
        %1539 = vst [vmem:[%s215 + $0x60] sm:$0xff] %v1488
        %1540 = vst [vmem:[%s215 + $0x68] sm:$0xff] %v1490
        %1541 = vst [vmem:[%s215 + $0x70] sm:$0xff] %v1492
        %1542 = vst [vmem:[%s215 + $0x78] sm:$0xff] %v1494
        %1543 = vst [vmem:[%s215 + $0x80] sm:$0xff] %v1496
        %1544 = vst [vmem:[%s215 + $0x88] sm:$0xff] %v1498
        %1545 = vst [vmem:[%s215 + $0x90] sm:$0xff] %v1500
        %1546 = vst [vmem:[%s215 + $0x98] sm:$0xff] %v1502
        %1547 = vst [vmem:[%s215 + $0xa0] sm:$0xff] %v1504
        %1548 = vst [vmem:[%s215 + $0xa8] sm:$0xff] %v1506
        %1549 = vst [vmem:[%s215 + $0xb0] sm:$0xff] %v1508
        %1550 = vst [vmem:[%s215 + $0xb8] sm:$0xff] %v1510
        %1551 = vst [vmem:[%s215 + $0xc0] sm:$0xff] %v1512
        %1552 = vst [vmem:[%s215 + $0xc8] sm:$0xff] %v1514
        %1553 = vst [vmem:[%s215 + $0xd0] sm:$0xff] %v1516
        %1554 = vst [vmem:[%s215 + $0xd8] sm:$0xff] %v1518
        %1555 = vst [vmem:[%s215 + $0xe0] sm:$0xff] %v1520
        %1556 = vst [vmem:[%s215 + $0xe8] sm:$0xff] %v1522
        %1557 = vst [vmem:[%s215 + $0xf0] sm:$0xff] %v1524
        %1558 = vst [vmem:[%s215 + $0xf8] sm:$0xff] %v1526
        %v1559 = vld [vmem:[#allocation5 + $0x40] sm:$0xf]
        %v1560 = vld [vmem:[#allocation5 + $0x44] sm:$0xf]
        %v1561 = vld [vmem:[#allocation5 + $0x48] sm:$0xf]
        %v1562 = vld [vmem:[#allocation5 + $0x4c] sm:$0xf]
        %v1563 = vld [vmem:[#allocation5 + $0x50] sm:$0xf]
        %v1564 = vld [vmem:[#allocation5 + $0x54] sm:$0xf]
        %v1565 = vld [vmem:[#allocation5 + $0x58] sm:$0xf]
        %v1566 = vld [vmem:[#allocation5 + $0x5c] sm:$0xf]
        %v1567 = vld [vmem:[#allocation5 + $0x60] sm:$0xf]
        %v1568 = vld [vmem:[#allocation5 + $0x64] sm:$0xf]
        %v1569 = vld [vmem:[#allocation5 + $0x68] sm:$0xf]
        %v1570 = vld [vmem:[#allocation5 + $0x6c] sm:$0xf]
        %v1571 = vld [vmem:[#allocation5 + $0x70] sm:$0xf]
        %v1572 = vld [vmem:[#allocation5 + $0x74] sm:$0xf]
        %v1573 = vld [vmem:[#allocation5 + $0x78] sm:$0xf]
        %v1574 = vld [vmem:[#allocation5 + $0x7c] sm:$0xf]
        %v1575 = vld [vmem:[#allocation5 + $0x80] sm:$0xf]
        %v1576 = vld [vmem:[#allocation5 + $0x84] sm:$0xf]
        %v1577 = vld [vmem:[#allocation5 + $0x88] sm:$0xf]
        %v1578 = vld [vmem:[#allocation5 + $0x8c] sm:$0xf]
        %v1579 = vld [vmem:[#allocation5 + $0x90] sm:$0xf]
        %v1580 = vld [vmem:[#allocation5 + $0x94] sm:$0xf]
        %v1581 = vld [vmem:[#allocation5 + $0x98] sm:$0xf]
        %v1582 = vld [vmem:[#allocation5 + $0x9c] sm:$0xf]
        %v1583 = vld [vmem:[#allocation5 + $0xa0] sm:$0xf]
        %v1584 = vld [vmem:[#allocation5 + $0xa4] sm:$0xf]
        %v1585 = vld [vmem:[#allocation5 + $0xa8] sm:$0xf]
        %v1586 = vld [vmem:[#allocation5 + $0xac] sm:$0xf]
        %v1587 = vld [vmem:[#allocation5 + $0xb0] sm:$0xf]
        %v1588 = vld [vmem:[#allocation5 + $0xb4] sm:$0xf]
        %v1589 = vld [vmem:[#allocation5 + $0xb8] sm:$0xf]
        %v1590 = vld [vmem:[#allocation5 + $0xbc] sm:$0xf]
        %v1623 = vunpack.c.l.b16 %v1559
        %v1624 = vunpack.c.l.b16 %v1560
        %v1625 = vunpack.c.l.b16 %v1561
        %v1626 = vunpack.c.l.b16 %v1562
        %v1627 = vunpack.c.l.b16 %v1563
        %v1628 = vunpack.c.l.b16 %v1564
        %v1629 = vunpack.c.l.b16 %v1565
        %v1630 = vunpack.c.l.b16 %v1566
        %v1631 = vunpack.c.l.b16 %v1567
        %v1632 = vunpack.c.l.b16 %v1568
        %v1633 = vunpack.c.l.b16 %v1569
        %v1634 = vunpack.c.l.b16 %v1570
        %v1635 = vunpack.c.l.b16 %v1571
        %v1636 = vunpack.c.l.b16 %v1572
        %v1637 = vunpack.c.l.b16 %v1573
        %v1638 = vunpack.c.l.b16 %v1574
        %v1639 = vunpack.c.l.b16 %v1575
        %v1640 = vunpack.c.l.b16 %v1576
        %v1641 = vunpack.c.l.b16 %v1577
        %v1642 = vunpack.c.l.b16 %v1578
        %v1643 = vunpack.c.l.b16 %v1579
        %v1644 = vunpack.c.l.b16 %v1580
        %v1645 = vunpack.c.l.b16 %v1581
        %v1646 = vunpack.c.l.b16 %v1582
        %v1647 = vunpack.c.l.b16 %v1583
        %v1648 = vunpack.c.l.b16 %v1584
        %v1649 = vunpack.c.l.b16 %v1585
        %v1650 = vunpack.c.l.b16 %v1586
        %v1651 = vunpack.c.l.b16 %v1587
        %v1652 = vunpack.c.l.b16 %v1588
        %v1653 = vunpack.c.l.b16 %v1589
        %v1654 = vunpack.c.l.b16 %v1590
        %v1655 = vpack.c.b16 %v1624, %v1623
        %v1656 = vpack.c.b16 %v1626, %v1625
        %v1657 = vpack.c.b16 %v1628, %v1627
        %v1658 = vpack.c.b16 %v1630, %v1629
        %v1659 = vpack.c.b16 %v1632, %v1631
        %v1660 = vpack.c.b16 %v1634, %v1633
        %v1661 = vpack.c.b16 %v1636, %v1635
        %v1662 = vpack.c.b16 %v1638, %v1637
        %v1663 = vpack.c.b16 %v1640, %v1639
        %v1664 = vpack.c.b16 %v1642, %v1641
        %v1665 = vpack.c.b16 %v1644, %v1643
        %v1666 = vpack.c.b16 %v1646, %v1645
        %v1667 = vpack.c.b16 %v1648, %v1647
        %v1668 = vpack.c.b16 %v1650, %v1649
        %v1669 = vpack.c.b16 %v1652, %v1651
        %v1670 = vpack.c.b16 %v1654, %v1653
        %1687 = vmatprep.subr.bf16.mxu0 0
        %1688 = vmatpush1.bf16.msra.mxu0 %v1655
        %1689 = vmatprep.subr.bf16.mxu0 0
        %1690 = vmatpush1.bf16.msra.mxu0 %v1656
        %1691 = vmatprep.subr.bf16.mxu0 0
        %1692 = vmatpush1.bf16.msra.mxu0 %v1657
        %1693 = vmatprep.subr.bf16.mxu0 0
        %1694 = vmatpush1.bf16.msra.mxu0 %v1658
        %1695 = vmatprep.subr.bf16.mxu0 0
        %1696 = vmatpush1.bf16.msra.mxu0 %v1659
        %1697 = vmatprep.subr.bf16.mxu0 0
        %1698 = vmatpush1.bf16.msra.mxu0 %v1660
        %1699 = vmatprep.subr.bf16.mxu0 0
        %1700 = vmatpush1.bf16.msra.mxu0 %v1661
        %1701 = vmatprep.subr.bf16.mxu0 0
        %1702 = vmatpush1.bf16.msra.mxu0 %v1662
        %1703 = vmatprep.subr.bf16.mxu0 0
        %1704 = vmatpush1.bf16.msra.mxu0 %v1663
        %1705 = vmatprep.subr.bf16.mxu0 0
        %1706 = vmatpush1.bf16.msra.mxu0 %v1664
        %1707 = vmatprep.subr.bf16.mxu0 0
        %1708 = vmatpush1.bf16.msra.mxu0 %v1665
        %1709 = vmatprep.subr.bf16.mxu0 0
        %1710 = vmatpush1.bf16.msra.mxu0 %v1666
        %1711 = vmatprep.subr.bf16.mxu0 0
        %1712 = vmatpush1.bf16.msra.mxu0 %v1667
        %1713 = vmatprep.subr.bf16.mxu0 0
        %1714 = vmatpush1.bf16.msra.mxu0 %v1668
        %1715 = vmatprep.subr.bf16.mxu0 0
        %1716 = vmatpush1.bf16.msra.mxu0 %v1669
        %1717 = vmatprep.subr.bf16.mxu0 0
        %1718 = vmatpush1.bf16.msra.mxu0 %v1670
        %1719 = vmatprep.mubr.bf16.mxu0 %v1056
        %1720 = vmatmul.mubr.bf16.gmra.mrb[0].mxu0 %v765
        %v1721 = vpop.f32.mrb[0].mxu0
        %v1722 = vadd.f32 %v1123, %v1721
        %v1723 = vpop.f32.mrb[0].mxu0
        %v1724 = vpop.f32.mrb[0].mxu0
        %v1725 = vadd.f32 %v1123, %v1724
        %v1726 = vpop.f32.mrb[0].mxu0
        %1727 = vmatprep.mubr.bf16.mxu0 %v1057
        %1728 = vmatmul.mubr.bf16.gmra.mrb[0].mxu0 %v766
        %v1729 = vpop.f32.mrb[0].mxu0
        %v1730 = vadd.f32 %v1123, %v1729
        %v1731 = vpop.f32.mrb[0].mxu0
        %v1732 = vpop.f32.mrb[0].mxu0
        %v1733 = vadd.f32 %v1123, %v1732
        %v1734 = vpop.f32.mrb[0].mxu0
        %1735 = vmatprep.mubr.bf16.mxu0 %v1058
        %1736 = vmatmul.mubr.bf16.gmra.mrb[0].mxu0 %v767
        %v1737 = vpop.f32.mrb[0].mxu0
        %v1738 = vadd.f32 %v1123, %v1737
        %v1739 = vpop.f32.mrb[0].mxu0
        %v1740 = vpop.f32.mrb[0].mxu0
        %v1741 = vadd.f32 %v1123, %v1740
        %v1742 = vpop.f32.mrb[0].mxu0
        %1743 = vmatprep.mubr.bf16.mxu0 %v1059
        %1744 = vmatmul.mubr.bf16.gmra.mrb[0].mxu0 %v768
        %v1745 = vpop.f32.mrb[0].mxu0
        %v1746 = vadd.f32 %v1123, %v1745
        %v1747 = vpop.f32.mrb[0].mxu0
        %v1748 = vpop.f32.mrb[0].mxu0
        %v1749 = vadd.f32 %v1123, %v1748
        %v1750 = vpop.f32.mrb[0].mxu0
        %1751 = vmatprep.mubr.bf16.mxu0 %v1060
        %1752 = vmatmul.mubr.bf16.gmra.mrb[0].mxu0 %v769
        %v1753 = vpop.f32.mrb[0].mxu0
        %v1754 = vadd.f32 %v1123, %v1753
        %v1755 = vpop.f32.mrb[0].mxu0
        %v1756 = vpop.f32.mrb[0].mxu0
        %v1757 = vadd.f32 %v1123, %v1756
        %v1758 = vpop.f32.mrb[0].mxu0
        %1759 = vmatprep.mubr.bf16.mxu0 %v1061
        %1760 = vmatmul.mubr.bf16.gmra.mrb[0].mxu0 %v770
        %v1761 = vpop.f32.mrb[0].mxu0
        %v1762 = vadd.f32 %v1123, %v1761
        %v1763 = vpop.f32.mrb[0].mxu0
        %v1764 = vpop.f32.mrb[0].mxu0
        %v1765 = vadd.f32 %v1123, %v1764
        %v1766 = vpop.f32.mrb[0].mxu0
        %1767 = vmatprep.mubr.bf16.mxu0 %v1062
        %1768 = vmatmul.mubr.bf16.gmra.mrb[0].mxu0 %v771
        %v1769 = vpop.f32.mrb[0].mxu0
        %v1770 = vadd.f32 %v1123, %v1769
        %v1771 = vpop.f32.mrb[0].mxu0
        %v1772 = vpop.f32.mrb[0].mxu0
        %v1773 = vadd.f32 %v1123, %v1772
        %v1774 = vpop.f32.mrb[0].mxu0
        %1775 = vmatprep.mubr.bf16.mxu0 %v1063
        %1776 = vmatmul.mubr.bf16.gmra.mrb[0].mxu0 %v772
        %v1777 = vpop.f32.mrb[0].mxu0
        %v1778 = vadd.f32 %v1123, %v1777
        %v1779 = vpop.f32.mrb[0].mxu0
        %v1780 = vpop.f32.mrb[0].mxu0
        %v1781 = vadd.f32 %v1123, %v1780
        %v1782 = vpop.f32.mrb[0].mxu0
        %1783 = vmatprep.mubr.bf16.mxu0 %v1064
        %1784 = vmatmul.mubr.bf16.gmra.mrb[0].mxu0 %v773
        %v1785 = vpop.f32.mrb[0].mxu0
        %v1786 = vadd.f32 %v1123, %v1785
        %v1787 = vpop.f32.mrb[0].mxu0
        %v1788 = vpop.f32.mrb[0].mxu0
        %v1789 = vadd.f32 %v1123, %v1788
        %v1790 = vpop.f32.mrb[0].mxu0
        %1791 = vmatprep.mubr.bf16.mxu0 %v1065
        %1792 = vmatmul.mubr.bf16.gmra.mrb[0].mxu0 %v774
        %v1793 = vpop.f32.mrb[0].mxu0
        %v1794 = vadd.f32 %v1123, %v1793
        %v1795 = vpop.f32.mrb[0].mxu0
        %v1796 = vpop.f32.mrb[0].mxu0
        %v1797 = vadd.f32 %v1123, %v1796
        %v1798 = vpop.f32.mrb[0].mxu0
        %1799 = vmatprep.mubr.bf16.mxu0 %v1066
        %1800 = vmatmul.mubr.bf16.gmra.mrb[0].mxu0 %v775
        %v1801 = vpop.f32.mrb[0].mxu0
        %v1802 = vadd.f32 %v1123, %v1801
        %v1803 = vpop.f32.mrb[0].mxu0
        %v1804 = vpop.f32.mrb[0].mxu0
        %v1805 = vadd.f32 %v1123, %v1804
        %v1806 = vpop.f32.mrb[0].mxu0
        %1807 = vmatprep.mubr.bf16.mxu0 %v1067
        %1808 = vmatmul.mubr.bf16.gmra.mrb[0].mxu0 %v776
        %v1809 = vpop.f32.mrb[0].mxu0
        %v1810 = vadd.f32 %v1123, %v1809
        %v1811 = vpop.f32.mrb[0].mxu0
        %v1812 = vpop.f32.mrb[0].mxu0
        %v1813 = vadd.f32 %v1123, %v1812
        %v1814 = vpop.f32.mrb[0].mxu0
        %1815 = vmatprep.mubr.bf16.mxu0 %v1068
        %1816 = vmatmul.mubr.bf16.gmra.mrb[0].mxu0 %v777
        %v1817 = vpop.f32.mrb[0].mxu0
        %v1818 = vadd.f32 %v1123, %v1817
        %v1819 = vpop.f32.mrb[0].mxu0
        %v1820 = vpop.f32.mrb[0].mxu0
        %v1821 = vadd.f32 %v1123, %v1820
        %v1822 = vpop.f32.mrb[0].mxu0
        %1823 = vmatprep.mubr.bf16.mxu0 %v1069
        %1824 = vmatmul.mubr.bf16.gmra.mrb[0].mxu0 %v778
        %v1825 = vpop.f32.mrb[0].mxu0
        %v1826 = vadd.f32 %v1123, %v1825
        %v1827 = vpop.f32.mrb[0].mxu0
        %v1828 = vpop.f32.mrb[0].mxu0
        %v1829 = vadd.f32 %v1123, %v1828
        %v1830 = vpop.f32.mrb[0].mxu0
        %1831 = vmatprep.mubr.bf16.mxu0 %v1070
        %1832 = vmatmul.mubr.bf16.gmra.mrb[0].mxu0 %v779
        %v1833 = vpop.f32.mrb[0].mxu0
        %v1834 = vadd.f32 %v1123, %v1833
        %v1835 = vpop.f32.mrb[0].mxu0
        %v1836 = vpop.f32.mrb[0].mxu0
        %v1837 = vadd.f32 %v1123, %v1836
        %v1838 = vpop.f32.mrb[0].mxu0
        %1839 = vmatprep.mubr.bf16.mxu0 %v1071
        %1840 = vmatmul.mubr.bf16.gmra.mrb[0].mxu0 %v780
        %v1841 = vpop.f32.mrb[0].mxu0
        %v1842 = vadd.f32 %v1123, %v1841
        %v1843 = vpop.f32.mrb[0].mxu0
        %v1844 = vpop.f32.mrb[0].mxu0
        %v1845 = vadd.f32 %v1123, %v1844
        %v1846 = vpop.f32.mrb[0].mxu0
        %1847 = vdwg.mxu0
        %v1848 = vxor.u32 %v1722, 2147483648
        %v1849 = vxor.u32 %v1725, 2147483648
        %v1850 = vxor.u32 %v1730, 2147483648
        %v1851 = vxor.u32 %v1733, 2147483648
        %v1852 = vxor.u32 %v1738, 2147483648
        %v1853 = vxor.u32 %v1741, 2147483648
        %v1854 = vxor.u32 %v1746, 2147483648
        %v1855 = vxor.u32 %v1749, 2147483648
        %v1856 = vxor.u32 %v1754, 2147483648
        %v1857 = vxor.u32 %v1757, 2147483648
        %v1858 = vxor.u32 %v1762, 2147483648
        %v1859 = vxor.u32 %v1765, 2147483648
        %v1860 = vxor.u32 %v1770, 2147483648
        %v1861 = vxor.u32 %v1773, 2147483648
        %v1862 = vxor.u32 %v1778, 2147483648
        %v1863 = vxor.u32 %v1781, 2147483648
        %v1864 = vxor.u32 %v1786, 2147483648
        %v1865 = vxor.u32 %v1789, 2147483648
        %v1866 = vxor.u32 %v1794, 2147483648
        %v1867 = vxor.u32 %v1797, 2147483648
        %v1868 = vxor.u32 %v1802, 2147483648
        %v1869 = vxor.u32 %v1805, 2147483648
        %v1870 = vxor.u32 %v1810, 2147483648
        %v1871 = vxor.u32 %v1813, 2147483648
        %v1872 = vxor.u32 %v1818, 2147483648
        %v1873 = vxor.u32 %v1821, 2147483648
        %v1874 = vxor.u32 %v1826, 2147483648
        %v1875 = vxor.u32 %v1829, 2147483648
        %v1876 = vxor.u32 %v1834, 2147483648
        %v1877 = vxor.u32 %v1837, 2147483648
        %v1878 = vxor.u32 %v1842, 2147483648
        %v1879 = vxor.u32 %v1845, 2147483648
        %v1880 = vmul.f32 %v1848, 1.442695
        %v1881 = vpow.pop %v1880
        %v1882 = vmul.f32 %v1849, 1.442695
        %v1883 = vpow.pop %v1882
        %v1884 = vmul.f32 %v1850, 1.442695
        %v1885 = vpow.pop %v1884
        %v1886 = vmul.f32 %v1851, 1.442695
        %v1887 = vpow.pop %v1886
        %v1888 = vmul.f32 %v1852, 1.442695
        %v1889 = vpow.pop %v1888
        %v1890 = vmul.f32 %v1853, 1.442695
        %v1891 = vpow.pop %v1890
        %v1892 = vmul.f32 %v1854, 1.442695
        %v1893 = vpow.pop %v1892
        %v1894 = vmul.f32 %v1855, 1.442695
        %v1895 = vpow.pop %v1894
        %v1896 = vmul.f32 %v1856, 1.442695
        %v1897 = vpow.pop %v1896
        %v1898 = vmul.f32 %v1857, 1.442695
        %v1899 = vpow.pop %v1898
        %v1900 = vmul.f32 %v1858, 1.442695
        %v1901 = vpow.pop %v1900
        %v1902 = vmul.f32 %v1859, 1.442695
        %v1903 = vpow.pop %v1902
        %v1904 = vmul.f32 %v1860, 1.442695
        %v1905 = vpow.pop %v1904
        %v1906 = vmul.f32 %v1861, 1.442695
        %v1907 = vpow.pop %v1906
        %v1908 = vmul.f32 %v1862, 1.442695
        %v1909 = vpow.pop %v1908
        %v1910 = vmul.f32 %v1863, 1.442695
        %v1911 = vpow.pop %v1910
        %v1912 = vmul.f32 %v1864, 1.442695
        %v1913 = vpow.pop %v1912
        %v1914 = vmul.f32 %v1865, 1.442695
        %v1915 = vpow.pop %v1914
        %v1916 = vmul.f32 %v1866, 1.442695
        %v1917 = vpow.pop %v1916
        %v1918 = vmul.f32 %v1867, 1.442695
        %v1919 = vpow.pop %v1918
        %v1920 = vmul.f32 %v1868, 1.442695
        %v1921 = vpow.pop %v1920
        %v1922 = vmul.f32 %v1869, 1.442695
        %v1923 = vpow.pop %v1922
        %v1924 = vmul.f32 %v1870, 1.442695
        %v1925 = vpow.pop %v1924
        %v1926 = vmul.f32 %v1871, 1.442695
        %v1927 = vpow.pop %v1926
        %v1928 = vmul.f32 %v1872, 1.442695
        %v1929 = vpow.pop %v1928
        %v1930 = vmul.f32 %v1873, 1.442695
        %v1931 = vpow.pop %v1930
        %v1932 = vmul.f32 %v1874, 1.442695
        %v1933 = vpow.pop %v1932
        %v1934 = vmul.f32 %v1875, 1.442695
        %v1935 = vpow.pop %v1934
        %v1936 = vmul.f32 %v1876, 1.442695
        %v1937 = vpow.pop %v1936
        %v1938 = vmul.f32 %v1877, 1.442695
        %v1939 = vpow.pop %v1938
        %v1940 = vmul.f32 %v1878, 1.442695
        %v1941 = vpow.pop %v1940
        %v1942 = vmul.f32 %v1879, 1.442695
        %v1943 = vpow.pop %v1942
        %v1944 = vadd.f32 %v1881, 1.0
        %v1945 = vadd.f32 %v1883, 1.0
        %v1946 = vadd.f32 %v1885, 1.0
        %v1947 = vadd.f32 %v1887, 1.0
        %v1948 = vadd.f32 %v1889, 1.0
        %v1949 = vadd.f32 %v1891, 1.0
        %v1950 = vadd.f32 %v1893, 1.0
        %v1951 = vadd.f32 %v1895, 1.0
        %v1952 = vadd.f32 %v1897, 1.0
        %v1953 = vadd.f32 %v1899, 1.0
        %v1954 = vadd.f32 %v1901, 1.0
        %v1955 = vadd.f32 %v1903, 1.0
        %v1956 = vadd.f32 %v1905, 1.0
        %v1957 = vadd.f32 %v1907, 1.0
        %v1958 = vadd.f32 %v1909, 1.0
        %v1959 = vadd.f32 %v1911, 1.0
        %v1960 = vadd.f32 %v1913, 1.0
        %v1961 = vadd.f32 %v1915, 1.0
        %v1962 = vadd.f32 %v1917, 1.0
        %v1963 = vadd.f32 %v1919, 1.0
        %v1964 = vadd.f32 %v1921, 1.0
        %v1965 = vadd.f32 %v1923, 1.0
        %v1966 = vadd.f32 %v1925, 1.0
        %v1967 = vadd.f32 %v1927, 1.0
        %v1968 = vadd.f32 %v1929, 1.0
        %v1969 = vadd.f32 %v1931, 1.0
        %v1970 = vadd.f32 %v1933, 1.0
        %v1971 = vadd.f32 %v1935, 1.0
        %v1972 = vadd.f32 %v1937, 1.0
        %v1973 = vadd.f32 %v1939, 1.0
        %v1974 = vadd.f32 %v1941, 1.0
        %v1975 = vadd.f32 %v1943, 1.0
        %v1976 = vrcp.pop %v1944
        %v1977 = vmul.f32 1.0, %v1976
        %v1978 = vrcp.pop %v1945
        %v1979 = vmul.f32 1.0, %v1978
        %v1980 = vrcp.pop %v1946
        %v1981 = vmul.f32 1.0, %v1980
        %v1982 = vrcp.pop %v1947
        %v1983 = vmul.f32 1.0, %v1982
        %v1984 = vrcp.pop %v1948
        %v1985 = vmul.f32 1.0, %v1984
        %v1986 = vrcp.pop %v1949
        %v1987 = vmul.f32 1.0, %v1986
        %v1988 = vrcp.pop %v1950
        %v1989 = vmul.f32 1.0, %v1988
        %v1990 = vrcp.pop %v1951
        %v1991 = vmul.f32 1.0, %v1990
        %v1992 = vrcp.pop %v1952
        %v1993 = vmul.f32 1.0, %v1992
        %v1994 = vrcp.pop %v1953
        %v1995 = vmul.f32 1.0, %v1994
        %v1996 = vrcp.pop %v1954
        %v1997 = vmul.f32 1.0, %v1996
        %v1998 = vrcp.pop %v1955
        %v1999 = vmul.f32 1.0, %v1998
        %v2000 = vrcp.pop %v1956
        %v2001 = vmul.f32 1.0, %v2000
        %v2002 = vrcp.pop %v1957
        %v2003 = vmul.f32 1.0, %v2002
        %v2004 = vrcp.pop %v1958
        %v2005 = vmul.f32 1.0, %v2004
        %v2006 = vrcp.pop %v1959
        %v2007 = vmul.f32 1.0, %v2006
        %v2008 = vrcp.pop %v1960
        %v2009 = vmul.f32 1.0, %v2008
        %v2010 = vrcp.pop %v1961
        %v2011 = vmul.f32 1.0, %v2010
        %v2012 = vrcp.pop %v1962
        %v2013 = vmul.f32 1.0, %v2012
        %v2014 = vrcp.pop %v1963
        %v2015 = vmul.f32 1.0, %v2014
        %v2016 = vrcp.pop %v1964
        %v2017 = vmul.f32 1.0, %v2016
        %v2018 = vrcp.pop %v1965
        %v2019 = vmul.f32 1.0, %v2018
        %v2020 = vrcp.pop %v1966
        %v2021 = vmul.f32 1.0, %v2020
        %v2022 = vrcp.pop %v1967
        %v2023 = vmul.f32 1.0, %v2022
        %v2024 = vrcp.pop %v1968
        %v2025 = vmul.f32 1.0, %v2024
        %v2026 = vrcp.pop %v1969
        %v2027 = vmul.f32 1.0, %v2026
        %v2028 = vrcp.pop %v1970
        %v2029 = vmul.f32 1.0, %v2028
        %v2030 = vrcp.pop %v1971
        %v2031 = vmul.f32 1.0, %v2030
        %v2032 = vrcp.pop %v1972
        %v2033 = vmul.f32 1.0, %v2032
        %v2034 = vrcp.pop %v1973
        %v2035 = vmul.f32 1.0, %v2034
        %v2036 = vrcp.pop %v1974
        %v2037 = vmul.f32 1.0, %v2036
        %v2038 = vrcp.pop %v1975
        %v2039 = vmul.f32 1.0, %v2038
        %s2040 = scalar_lea.vmem %s215, 256 [#allocation8]
        %2041 = vst [vmem:[%s2040] sm:$0xff] %v1977
        %2042 = vst [vmem:[%s2040 + $0x8] sm:$0xff] %v1979
        %2043 = vst [vmem:[%s2040 + $0x10] sm:$0xff] %v1981
        %2044 = vst [vmem:[%s2040 + $0x18] sm:$0xff] %v1983
        %2045 = vst [vmem:[%s2040 + $0x20] sm:$0xff] %v1985
        %2046 = vst [vmem:[%s2040 + $0x28] sm:$0xff] %v1987
        %2047 = vst [vmem:[%s2040 + $0x30] sm:$0xff] %v1989
        %2048 = vst [vmem:[%s2040 + $0x38] sm:$0xff] %v1991
        %2049 = vst [vmem:[%s2040 + $0x40] sm:$0xff] %v1993
        %2050 = vst [vmem:[%s2040 + $0x48] sm:$0xff] %v1995
        %2051 = vst [vmem:[%s2040 + $0x50] sm:$0xff] %v1997
        %2052 = vst [vmem:[%s2040 + $0x58] sm:$0xff] %v1999
        %2053 = vst [vmem:[%s2040 + $0x60] sm:$0xff] %v2001
        %2054 = vst [vmem:[%s2040 + $0x68] sm:$0xff] %v2003
        %2055 = vst [vmem:[%s2040 + $0x70] sm:$0xff] %v2005
        %2056 = vst [vmem:[%s2040 + $0x78] sm:$0xff] %v2007
        %2057 = vst [vmem:[%s2040 + $0x80] sm:$0xff] %v2009
        %2058 = vst [vmem:[%s2040 + $0x88] sm:$0xff] %v2011
        %2059 = vst [vmem:[%s2040 + $0x90] sm:$0xff] %v2013
        %2060 = vst [vmem:[%s2040 + $0x98] sm:$0xff] %v2015
        %2061 = vst [vmem:[%s2040 + $0xa0] sm:$0xff] %v2017
        %2062 = vst [vmem:[%s2040 + $0xa8] sm:$0xff] %v2019
        %2063 = vst [vmem:[%s2040 + $0xb0] sm:$0xff] %v2021
        %2064 = vst [vmem:[%s2040 + $0xb8] sm:$0xff] %v2023
        %2065 = vst [vmem:[%s2040 + $0xc0] sm:$0xff] %v2025
        %2066 = vst [vmem:[%s2040 + $0xc8] sm:$0xff] %v2027
        %2067 = vst [vmem:[%s2040 + $0xd0] sm:$0xff] %v2029
        %2068 = vst [vmem:[%s2040 + $0xd8] sm:$0xff] %v2031
        %2069 = vst [vmem:[%s2040 + $0xe0] sm:$0xff] %v2033
        %2070 = vst [vmem:[%s2040 + $0xe8] sm:$0xff] %v2035
        %2071 = vst [vmem:[%s2040 + $0xf0] sm:$0xff] %v2037
        %2072 = vst [vmem:[%s2040 + $0xf8] sm:$0xff] %v2039
        %v2073 = vld [vmem:[#allocation5 + $0xc0] sm:$0xf]
        %v2074 = vld [vmem:[#allocation5 + $0xc4] sm:$0xf]
        %v2075 = vld [vmem:[#allocation5 + $0xc8] sm:$0xf]
        %v2076 = vld [vmem:[#allocation5 + $0xcc] sm:$0xf]
        %v2077 = vld [vmem:[#allocation5 + $0xd0] sm:$0xf]
        %v2078 = vld [vmem:[#allocation5 + $0xd4] sm:$0xf]
        %v2079 = vld [vmem:[#allocation5 + $0xd8] sm:$0xf]
        %v2080 = vld [vmem:[#allocation5 + $0xdc] sm:$0xf]
        %v2081 = vld [vmem:[#allocation5 + $0xe0] sm:$0xf]
        %v2082 = vld [vmem:[#allocation5 + $0xe4] sm:$0xf]
        %v2083 = vld [vmem:[#allocation5 + $0xe8] sm:$0xf]
        %v2084 = vld [vmem:[#allocation5 + $0xec] sm:$0xf]
        %v2085 = vld [vmem:[#allocation5 + $0xf0] sm:$0xf]
        %v2086 = vld [vmem:[#allocation5 + $0xf4] sm:$0xf]
        %v2087 = vld [vmem:[#allocation5 + $0xf8] sm:$0xf]
        %v2088 = vld [vmem:[#allocation5 + $0xfc] sm:$0xf]
        %v2089 = vld [vmem:[#allocation5 + $0x100] sm:$0xf]
        %v2090 = vld [vmem:[#allocation5 + $0x104] sm:$0xf]
        %v2091 = vld [vmem:[#allocation5 + $0x108] sm:$0xf]
        %v2092 = vld [vmem:[#allocation5 + $0x10c] sm:$0xf]
        %v2093 = vld [vmem:[#allocation5 + $0x110] sm:$0xf]
        %v2094 = vld [vmem:[#allocation5 + $0x114] sm:$0xf]
        %v2095 = vld [vmem:[#allocation5 + $0x118] sm:$0xf]
        %v2096 = vld [vmem:[#allocation5 + $0x11c] sm:$0xf]
        %v2097 = vld [vmem:[#allocation5 + $0x120] sm:$0xf]
        %v2098 = vld [vmem:[#allocation5 + $0x124] sm:$0xf]
        %v2099 = vld [vmem:[#allocation5 + $0x128] sm:$0xf]
        %v2100 = vld [vmem:[#allocation5 + $0x12c] sm:$0xf]
        %v2101 = vld [vmem:[#allocation5 + $0x130] sm:$0xf]
        %v2102 = vld [vmem:[#allocation5 + $0x134] sm:$0xf]
        %v2103 = vld [vmem:[#allocation5 + $0x138] sm:$0xf]
        %v2104 = vld [vmem:[#allocation5 + $0x13c] sm:$0xf]
        %v2137 = vunpack.c.l.b16 %v2073
        %v2138 = vunpack.c.l.b16 %v2074
        %v2139 = vunpack.c.l.b16 %v2075
        %v2140 = vunpack.c.l.b16 %v2076
        %v2141 = vunpack.c.l.b16 %v2077
        %v2142 = vunpack.c.l.b16 %v2078
        %v2143 = vunpack.c.l.b16 %v2079
        %v2144 = vunpack.c.l.b16 %v2080
        %v2145 = vunpack.c.l.b16 %v2081
        %v2146 = vunpack.c.l.b16 %v2082
        %v2147 = vunpack.c.l.b16 %v2083
        %v2148 = vunpack.c.l.b16 %v2084
        %v2149 = vunpack.c.l.b16 %v2085
        %v2150 = vunpack.c.l.b16 %v2086
        %v2151 = vunpack.c.l.b16 %v2087
        %v2152 = vunpack.c.l.b16 %v2088
        %v2153 = vunpack.c.l.b16 %v2089
        %v2154 = vunpack.c.l.b16 %v2090
        %v2155 = vunpack.c.l.b16 %v2091
        %v2156 = vunpack.c.l.b16 %v2092
        %v2157 = vunpack.c.l.b16 %v2093
        %v2158 = vunpack.c.l.b16 %v2094
        %v2159 = vunpack.c.l.b16 %v2095
        %v2160 = vunpack.c.l.b16 %v2096
        %v2161 = vunpack.c.l.b16 %v2097
        %v2162 = vunpack.c.l.b16 %v2098
        %v2163 = vunpack.c.l.b16 %v2099
        %v2164 = vunpack.c.l.b16 %v2100
        %v2165 = vunpack.c.l.b16 %v2101
        %v2166 = vunpack.c.l.b16 %v2102
        %v2167 = vunpack.c.l.b16 %v2103
        %v2168 = vunpack.c.l.b16 %v2104
        %v2169 = vpack.c.b16 %v2138, %v2137
        %v2170 = vpack.c.b16 %v2140, %v2139
        %v2171 = vpack.c.b16 %v2142, %v2141
        %v2172 = vpack.c.b16 %v2144, %v2143
        %v2173 = vpack.c.b16 %v2146, %v2145
        %v2174 = vpack.c.b16 %v2148, %v2147
        %v2175 = vpack.c.b16 %v2150, %v2149
        %v2176 = vpack.c.b16 %v2152, %v2151
        %v2177 = vpack.c.b16 %v2154, %v2153
        %v2178 = vpack.c.b16 %v2156, %v2155
        %v2179 = vpack.c.b16 %v2158, %v2157
        %v2180 = vpack.c.b16 %v2160, %v2159
        %v2181 = vpack.c.b16 %v2162, %v2161
        %v2182 = vpack.c.b16 %v2164, %v2163
        %v2183 = vpack.c.b16 %v2166, %v2165
        %v2184 = vpack.c.b16 %v2168, %v2167
        %2201 = vmatprep.subr.bf16.mxu0 0
        %2202 = vmatpush1.bf16.msra.mxu0 %v2169
        %2203 = vmatprep.subr.bf16.mxu0 0
        %2204 = vmatpush1.bf16.msra.mxu0 %v2170
        %2205 = vmatprep.subr.bf16.mxu0 0
        %2206 = vmatpush1.bf16.msra.mxu0 %v2171
        %2207 = vmatprep.subr.bf16.mxu0 0
        %2208 = vmatpush1.bf16.msra.mxu0 %v2172
        %2209 = vmatprep.subr.bf16.mxu0 0
        %2210 = vmatpush1.bf16.msra.mxu0 %v2173
        %2211 = vmatprep.subr.bf16.mxu0 0
        %2212 = vmatpush1.bf16.msra.mxu0 %v2174
        %2213 = vmatprep.subr.bf16.mxu0 0
        %2214 = vmatpush1.bf16.msra.mxu0 %v2175
        %2215 = vmatprep.subr.bf16.mxu0 0
        %2216 = vmatpush1.bf16.msra.mxu0 %v2176
        %2217 = vmatprep.subr.bf16.mxu0 0
        %2218 = vmatpush1.bf16.msra.mxu0 %v2177
        %2219 = vmatprep.subr.bf16.mxu0 0
        %2220 = vmatpush1.bf16.msra.mxu0 %v2178
        %2221 = vmatprep.subr.bf16.mxu0 0
        %2222 = vmatpush1.bf16.msra.mxu0 %v2179
        %2223 = vmatprep.subr.bf16.mxu0 0
        %2224 = vmatpush1.bf16.msra.mxu0 %v2180
        %2225 = vmatprep.subr.bf16.mxu0 0
        %2226 = vmatpush1.bf16.msra.mxu0 %v2181
        %2227 = vmatprep.subr.bf16.mxu0 0
        %2228 = vmatpush1.bf16.msra.mxu0 %v2182
        %2229 = vmatprep.subr.bf16.mxu0 0
        %2230 = vmatpush1.bf16.msra.mxu0 %v2183
        %2231 = vmatprep.subr.bf16.mxu0 0
        %2232 = vmatpush1.bf16.msra.mxu0 %v2184
        %2233 = vmatprep.mubr.bf16.mxu0 %v766
        %2234 = vmatmul.mubr.bf16.gmra.mrb[0].mxu0 %v765
        %v2235 = vpop.f32.mrb[0].mxu0
        %v2236 = vadd.f32 %v1123, %v2235
        %v2237 = vpop.f32.mrb[0].mxu0
        %v2238 = vpop.f32.mrb[0].mxu0
        %v2239 = vadd.f32 %v1123, %v2238
        %v2240 = vpop.f32.mrb[0].mxu0
        %2241 = vmatprep.mubr.bf16.mxu0 %v767
        %2242 = vmatmul.mubr.bf16.gmra.mrb[0].mxu0 %v766
        %v2243 = vpop.f32.mrb[0].mxu0
        %v2244 = vadd.f32 %v1123, %v2243
        %v2245 = vpop.f32.mrb[0].mxu0
        %v2246 = vpop.f32.mrb[0].mxu0
        %v2247 = vadd.f32 %v1123, %v2246
        %v2248 = vpop.f32.mrb[0].mxu0
        %2249 = vmatprep.mubr.bf16.mxu0 %v768
        %2250 = vmatmul.mubr.bf16.gmra.mrb[0].mxu0 %v767
        %v2251 = vpop.f32.mrb[0].mxu0
        %v2252 = vadd.f32 %v1123, %v2251
        %v2253 = vpop.f32.mrb[0].mxu0
        %v2254 = vpop.f32.mrb[0].mxu0
        %v2255 = vadd.f32 %v1123, %v2254
        %v2256 = vpop.f32.mrb[0].mxu0
        %2257 = vmatprep.mubr.bf16.mxu0 %v769
        %2258 = vmatmul.mubr.bf16.gmra.mrb[0].mxu0 %v768
        %v2259 = vpop.f32.mrb[0].mxu0
        %v2260 = vadd.f32 %v1123, %v2259
        %v2261 = vpop.f32.mrb[0].mxu0
        %v2262 = vpop.f32.mrb[0].mxu0
        %v2263 = vadd.f32 %v1123, %v2262
        %v2264 = vpop.f32.mrb[0].mxu0
        %2265 = vmatprep.mubr.bf16.mxu0 %v770
        %2266 = vmatmul.mubr.bf16.gmra.mrb[0].mxu0 %v769
        %v2267 = vpop.f32.mrb[0].mxu0
        %v2268 = vadd.f32 %v1123, %v2267
        %v2269 = vpop.f32.mrb[0].mxu0
        %v2270 = vpop.f32.mrb[0].mxu0
        %v2271 = vadd.f32 %v1123, %v2270
        %v2272 = vpop.f32.mrb[0].mxu0
        %2273 = vmatprep.mubr.bf16.mxu0 %v771
        %2274 = vmatmul.mubr.bf16.gmra.mrb[0].mxu0 %v770
        %v2275 = vpop.f32.mrb[0].mxu0
        %v2276 = vadd.f32 %v1123, %v2275
        %v2277 = vpop.f32.mrb[0].mxu0
        %v2278 = vpop.f32.mrb[0].mxu0
        %v2279 = vadd.f32 %v1123, %v2278
        %v2280 = vpop.f32.mrb[0].mxu0
        %2281 = vmatprep.mubr.bf16.mxu0 %v772
        %2282 = vmatmul.mubr.bf16.gmra.mrb[0].mxu0 %v771
        %v2283 = vpop.f32.mrb[0].mxu0
        %v2284 = vadd.f32 %v1123, %v2283
        %v2285 = vpop.f32.mrb[0].mxu0
        %v2286 = vpop.f32.mrb[0].mxu0
        %v2287 = vadd.f32 %v1123, %v2286
        %v2288 = vpop.f32.mrb[0].mxu0
        %2289 = vmatprep.mubr.bf16.mxu0 %v773
        %2290 = vmatmul.mubr.bf16.gmra.mrb[0].mxu0 %v772
        %v2291 = vpop.f32.mrb[0].mxu0
        %v2292 = vadd.f32 %v1123, %v2291
        %v2293 = vpop.f32.mrb[0].mxu0
        %v2294 = vpop.f32.mrb[0].mxu0
        %v2295 = vadd.f32 %v1123, %v2294
        %v2296 = vpop.f32.mrb[0].mxu0
        %2297 = vmatprep.mubr.bf16.mxu0 %v774
        %2298 = vmatmul.mubr.bf16.gmra.mrb[0].mxu0 %v773
        %v2299 = vpop.f32.mrb[0].mxu0
        %v2300 = vadd.f32 %v1123, %v2299
        %v2301 = vpop.f32.mrb[0].mxu0
        %v2302 = vpop.f32.mrb[0].mxu0
        %v2303 = vadd.f32 %v1123, %v2302
        %v2304 = vpop.f32.mrb[0].mxu0
        %2305 = vmatprep.mubr.bf16.mxu0 %v775
        %2306 = vmatmul.mubr.bf16.gmra.mrb[0].mxu0 %v774
        %v2307 = vpop.f32.mrb[0].mxu0
        %v2308 = vadd.f32 %v1123, %v2307
        %v2309 = vpop.f32.mrb[0].mxu0
        %v2310 = vpop.f32.mrb[0].mxu0
        %v2311 = vadd.f32 %v1123, %v2310
        %v2312 = vpop.f32.mrb[0].mxu0
        %2313 = vmatprep.mubr.bf16.mxu0 %v776
        %2314 = vmatmul.mubr.bf16.gmra.mrb[0].mxu0 %v775
        %v2315 = vpop.f32.mrb[0].mxu0
        %v2316 = vadd.f32 %v1123, %v2315
        %v2317 = vpop.f32.mrb[0].mxu0
        %v2318 = vpop.f32.mrb[0].mxu0
        %v2319 = vadd.f32 %v1123, %v2318
        %v2320 = vpop.f32.mrb[0].mxu0
        %2321 = vmatprep.mubr.bf16.mxu0 %v777
        %2322 = vmatmul.mubr.bf16.gmra.mrb[0].mxu0 %v776
        %v2323 = vpop.f32.mrb[0].mxu0
        %v2324 = vadd.f32 %v1123, %v2323
        %v2325 = vpop.f32.mrb[0].mxu0
        %v2326 = vpop.f32.mrb[0].mxu0
        %v2327 = vadd.f32 %v1123, %v2326
        %v2328 = vpop.f32.mrb[0].mxu0
        %2329 = vmatprep.mubr.bf16.mxu0 %v778
        %2330 = vmatmul.mubr.bf16.gmra.mrb[0].mxu0 %v777
        %v2331 = vpop.f32.mrb[0].mxu0
        %v2332 = vadd.f32 %v1123, %v2331
        %v2333 = vpop.f32.mrb[0].mxu0
        %v2334 = vpop.f32.mrb[0].mxu0
        %v2335 = vadd.f32 %v1123, %v2334
        %v2336 = vpop.f32.mrb[0].mxu0
        %2337 = vmatprep.mubr.bf16.mxu0 %v779
        %2338 = vmatmul.mubr.bf16.gmra.mrb[0].mxu0 %v778
        %v2339 = vpop.f32.mrb[0].mxu0
        %v2340 = vadd.f32 %v1123, %v2339
        %v2341 = vpop.f32.mrb[0].mxu0
        %v2342 = vpop.f32.mrb[0].mxu0
        %v2343 = vadd.f32 %v1123, %v2342
        %v2344 = vpop.f32.mrb[0].mxu0
        %2345 = vmatprep.mubr.bf16.mxu0 %v780
        %2346 = vmatmul.mubr.bf16.gmra.mrb[0].mxu0 %v779
        %v2347 = vpop.f32.mrb[0].mxu0
        %v2348 = vadd.f32 %v1123, %v2347
        %v2349 = vpop.f32.mrb[0].mxu0
        %v2350 = vpop.f32.mrb[0].mxu0
        %v2351 = vadd.f32 %v1123, %v2350
        %v2352 = vpop.f32.mrb[0].mxu0
        %2353 = vmatprep.mubr.bf16.mxu0 0
        %2354 = vmatmul.mubr.bf16.gmra.mrb[0].mxu0 %v780
        %v2355 = vpop.f32.mrb[0].mxu0
        %v2356 = vadd.f32 %v1123, %v2355
        %v2357 = vpop.f32.mrb[0].mxu0
        %v2358 = vpop.f32.mrb[0].mxu0
        %v2359 = vadd.f32 %v1123, %v2358
        %v2360 = vpop.f32.mrb[0].mxu0
        %2361 = vdwg.mxu0
        %v2362 = vxor.u32 %v2236, 2147483648
        %v2363 = vxor.u32 %v2239, 2147483648
        %v2364 = vxor.u32 %v2244, 2147483648
        %v2365 = vxor.u32 %v2247, 2147483648
        %v2366 = vxor.u32 %v2252, 2147483648
        %v2367 = vxor.u32 %v2255, 2147483648
        %v2368 = vxor.u32 %v2260, 2147483648
        %v2369 = vxor.u32 %v2263, 2147483648
        %v2370 = vxor.u32 %v2268, 2147483648
        %v2371 = vxor.u32 %v2271, 2147483648
        %v2372 = vxor.u32 %v2276, 2147483648
        %v2373 = vxor.u32 %v2279, 2147483648
        %v2374 = vxor.u32 %v2284, 2147483648
        %v2375 = vxor.u32 %v2287, 2147483648
        %v2376 = vxor.u32 %v2292, 2147483648
        %v2377 = vxor.u32 %v2295, 2147483648
        %v2378 = vxor.u32 %v2300, 2147483648
        %v2379 = vxor.u32 %v2303, 2147483648
        %v2380 = vxor.u32 %v2308, 2147483648
        %v2381 = vxor.u32 %v2311, 2147483648
        %v2382 = vxor.u32 %v2316, 2147483648
        %v2383 = vxor.u32 %v2319, 2147483648
        %v2384 = vxor.u32 %v2324, 2147483648
        %v2385 = vxor.u32 %v2327, 2147483648
        %v2386 = vxor.u32 %v2332, 2147483648
        %v2387 = vxor.u32 %v2335, 2147483648
        %v2388 = vxor.u32 %v2340, 2147483648
        %v2389 = vxor.u32 %v2343, 2147483648
        %v2390 = vxor.u32 %v2348, 2147483648
        %v2391 = vxor.u32 %v2351, 2147483648
        %v2392 = vxor.u32 %v2356, 2147483648
        %v2393 = vxor.u32 %v2359, 2147483648
        %v2394 = vmul.f32 %v2362, 1.442695
        %v2395 = vpow.pop %v2394
        %v2396 = vmul.f32 %v2363, 1.442695
        %v2397 = vpow.pop %v2396
        %v2398 = vmul.f32 %v2364, 1.442695
        %v2399 = vpow.pop %v2398
        %v2400 = vmul.f32 %v2365, 1.442695
        %v2401 = vpow.pop %v2400
        %v2402 = vmul.f32 %v2366, 1.442695
        %v2403 = vpow.pop %v2402
        %v2404 = vmul.f32 %v2367, 1.442695
        %v2405 = vpow.pop %v2404
        %v2406 = vmul.f32 %v2368, 1.442695
        %v2407 = vpow.pop %v2406
        %v2408 = vmul.f32 %v2369, 1.442695
        %v2409 = vpow.pop %v2408
        %v2410 = vmul.f32 %v2370, 1.442695
        %v2411 = vpow.pop %v2410
        %v2412 = vmul.f32 %v2371, 1.442695
        %v2413 = vpow.pop %v2412
        %v2414 = vmul.f32 %v2372, 1.442695
        %v2415 = vpow.pop %v2414
        %v2416 = vmul.f32 %v2373, 1.442695
        %v2417 = vpow.pop %v2416
        %v2418 = vmul.f32 %v2374, 1.442695
        %v2419 = vpow.pop %v2418
        %v2420 = vmul.f32 %v2375, 1.442695
        %v2421 = vpow.pop %v2420
        %v2422 = vmul.f32 %v2376, 1.442695
        %v2423 = vpow.pop %v2422
        %v2424 = vmul.f32 %v2377, 1.442695
        %v2425 = vpow.pop %v2424
        %v2426 = vmul.f32 %v2378, 1.442695
        %v2427 = vpow.pop %v2426
        %v2428 = vmul.f32 %v2379, 1.442695
        %v2429 = vpow.pop %v2428
        %v2430 = vmul.f32 %v2380, 1.442695
        %v2431 = vpow.pop %v2430
        %v2432 = vmul.f32 %v2381, 1.442695
        %v2433 = vpow.pop %v2432
        %v2434 = vmul.f32 %v2382, 1.442695
        %v2435 = vpow.pop %v2434
        %v2436 = vmul.f32 %v2383, 1.442695
        %v2437 = vpow.pop %v2436
        %v2438 = vmul.f32 %v2384, 1.442695
        %v2439 = vpow.pop %v2438
        %v2440 = vmul.f32 %v2385, 1.442695
        %v2441 = vpow.pop %v2440
        %v2442 = vmul.f32 %v2386, 1.442695
        %v2443 = vpow.pop %v2442
        %v2444 = vmul.f32 %v2387, 1.442695
        %v2445 = vpow.pop %v2444
        %v2446 = vmul.f32 %v2388, 1.442695
        %v2447 = vpow.pop %v2446
        %v2448 = vmul.f32 %v2389, 1.442695
        %v2449 = vpow.pop %v2448
        %v2450 = vmul.f32 %v2390, 1.442695
        %v2451 = vpow.pop %v2450
        %v2452 = vmul.f32 %v2391, 1.442695
        %v2453 = vpow.pop %v2452
        %v2454 = vmul.f32 %v2392, 1.442695
        %v2455 = vpow.pop %v2454
        %v2456 = vmul.f32 %v2393, 1.442695
        %v2457 = vpow.pop %v2456
        %v2458 = vadd.f32 %v2395, 1.0
        %v2459 = vadd.f32 %v2397, 1.0
        %v2460 = vadd.f32 %v2399, 1.0
        %v2461 = vadd.f32 %v2401, 1.0
        %v2462 = vadd.f32 %v2403, 1.0
        %v2463 = vadd.f32 %v2405, 1.0
        %v2464 = vadd.f32 %v2407, 1.0
        %v2465 = vadd.f32 %v2409, 1.0
        %v2466 = vadd.f32 %v2411, 1.0
        %v2467 = vadd.f32 %v2413, 1.0
        %v2468 = vadd.f32 %v2415, 1.0
        %v2469 = vadd.f32 %v2417, 1.0
        %v2470 = vadd.f32 %v2419, 1.0
        %v2471 = vadd.f32 %v2421, 1.0
        %v2472 = vadd.f32 %v2423, 1.0
        %v2473 = vadd.f32 %v2425, 1.0
        %v2474 = vadd.f32 %v2427, 1.0
        %v2475 = vadd.f32 %v2429, 1.0
        %v2476 = vadd.f32 %v2431, 1.0
        %v2477 = vadd.f32 %v2433, 1.0
        %v2478 = vadd.f32 %v2435, 1.0
        %v2479 = vadd.f32 %v2437, 1.0
        %v2480 = vadd.f32 %v2439, 1.0
        %v2481 = vadd.f32 %v2441, 1.0
        %v2482 = vadd.f32 %v2443, 1.0
        %v2483 = vadd.f32 %v2445, 1.0
        %v2484 = vadd.f32 %v2447, 1.0
        %v2485 = vadd.f32 %v2449, 1.0
        %v2486 = vadd.f32 %v2451, 1.0
        %v2487 = vadd.f32 %v2453, 1.0
        %v2488 = vadd.f32 %v2455, 1.0
        %v2489 = vadd.f32 %v2457, 1.0
        %v2490 = vrcp.pop %v2458
        %v2491 = vmul.f32 1.0, %v2490
        %v2492 = vrcp.pop %v2459
        %v2493 = vmul.f32 1.0, %v2492
        %v2494 = vrcp.pop %v2460
        %v2495 = vmul.f32 1.0, %v2494
        %v2496 = vrcp.pop %v2461
        %v2497 = vmul.f32 1.0, %v2496
        %v2498 = vrcp.pop %v2462
        %v2499 = vmul.f32 1.0, %v2498
        %v2500 = vrcp.pop %v2463
        %v2501 = vmul.f32 1.0, %v2500
        %v2502 = vrcp.pop %v2464
        %v2503 = vmul.f32 1.0, %v2502
        %v2504 = vrcp.pop %v2465
        %v2505 = vmul.f32 1.0, %v2504
        %v2506 = vrcp.pop %v2466
        %v2507 = vmul.f32 1.0, %v2506
        %v2508 = vrcp.pop %v2467
        %v2509 = vmul.f32 1.0, %v2508
        %v2510 = vrcp.pop %v2468
        %v2511 = vmul.f32 1.0, %v2510
        %v2512 = vrcp.pop %v2469
        %v2513 = vmul.f32 1.0, %v2512
        %v2514 = vrcp.pop %v2470
        %v2515 = vmul.f32 1.0, %v2514
        %v2516 = vrcp.pop %v2471
        %v2517 = vmul.f32 1.0, %v2516
        %v2518 = vrcp.pop %v2472
        %v2519 = vmul.f32 1.0, %v2518
        %v2520 = vrcp.pop %v2473
        %v2521 = vmul.f32 1.0, %v2520
        %v2522 = vrcp.pop %v2474
        %v2523 = vmul.f32 1.0, %v2522
        %v2524 = vrcp.pop %v2475
        %v2525 = vmul.f32 1.0, %v2524
        %v2526 = vrcp.pop %v2476
        %v2527 = vmul.f32 1.0, %v2526
        %v2528 = vrcp.pop %v2477
        %v2529 = vmul.f32 1.0, %v2528
        %v2530 = vrcp.pop %v2478
        %v2531 = vmul.f32 1.0, %v2530
        %v2532 = vrcp.pop %v2479
        %v2533 = vmul.f32 1.0, %v2532
        %v2534 = vrcp.pop %v2480
        %v2535 = vmul.f32 1.0, %v2534
        %v2536 = vrcp.pop %v2481
        %v2537 = vmul.f32 1.0, %v2536
        %v2538 = vrcp.pop %v2482
        %v2539 = vmul.f32 1.0, %v2538
        %v2540 = vrcp.pop %v2483
        %v2541 = vmul.f32 1.0, %v2540
        %v2542 = vrcp.pop %v2484
        %v2543 = vmul.f32 1.0, %v2542
        %v2544 = vrcp.pop %v2485
        %v2545 = vmul.f32 1.0, %v2544
        %v2546 = vrcp.pop %v2486
        %v2547 = vmul.f32 1.0, %v2546
        %v2548 = vrcp.pop %v2487
        %v2549 = vmul.f32 1.0, %v2548
        %v2550 = vrcp.pop %v2488
        %v2551 = vmul.f32 1.0, %v2550
        %v2552 = vrcp.pop %v2489
        %v2553 = vmul.f32 1.0, %v2552
        %s2554 = scalar_lea.vmem %s215, 512 [#allocation8]
        %2555 = vst [vmem:[%s2554] sm:$0xff] %v2491
        %2556 = vst [vmem:[%s2554 + $0x8] sm:$0xff] %v2493
        %2557 = vst [vmem:[%s2554 + $0x10] sm:$0xff] %v2495
        %2558 = vst [vmem:[%s2554 + $0x18] sm:$0xff] %v2497
        %2559 = vst [vmem:[%s2554 + $0x20] sm:$0xff] %v2499
        %2560 = vst [vmem:[%s2554 + $0x28] sm:$0xff] %v2501
        %2561 = vst [vmem:[%s2554 + $0x30] sm:$0xff] %v2503
        %2562 = vst [vmem:[%s2554 + $0x38] sm:$0xff] %v2505
        %2563 = vst [vmem:[%s2554 + $0x40] sm:$0xff] %v2507
        %2564 = vst [vmem:[%s2554 + $0x48] sm:$0xff] %v2509
        %2565 = vst [vmem:[%s2554 + $0x50] sm:$0xff] %v2511
        %2566 = vst [vmem:[%s2554 + $0x58] sm:$0xff] %v2513
        %2567 = vst [vmem:[%s2554 + $0x60] sm:$0xff] %v2515
        %2568 = vst [vmem:[%s2554 + $0x68] sm:$0xff] %v2517
        %2569 = vst [vmem:[%s2554 + $0x70] sm:$0xff] %v2519
        %2570 = vst [vmem:[%s2554 + $0x78] sm:$0xff] %v2521
        %2571 = vst [vmem:[%s2554 + $0x80] sm:$0xff] %v2523
        %2572 = vst [vmem:[%s2554 + $0x88] sm:$0xff] %v2525
        %2573 = vst [vmem:[%s2554 + $0x90] sm:$0xff] %v2527
        %2574 = vst [vmem:[%s2554 + $0x98] sm:$0xff] %v2529
        %2575 = vst [vmem:[%s2554 + $0xa0] sm:$0xff] %v2531
        %2576 = vst [vmem:[%s2554 + $0xa8] sm:$0xff] %v2533
        %2577 = vst [vmem:[%s2554 + $0xb0] sm:$0xff] %v2535
        %2578 = vst [vmem:[%s2554 + $0xb8] sm:$0xff] %v2537
        %2579 = vst [vmem:[%s2554 + $0xc0] sm:$0xff] %v2539
        %2580 = vst [vmem:[%s2554 + $0xc8] sm:$0xff] %v2541
        %2581 = vst [vmem:[%s2554 + $0xd0] sm:$0xff] %v2543
        %2582 = vst [vmem:[%s2554 + $0xd8] sm:$0xff] %v2545
        %2583 = vst [vmem:[%s2554 + $0xe0] sm:$0xff] %v2547
        %2584 = vst [vmem:[%s2554 + $0xe8] sm:$0xff] %v2549
        %2585 = vst [vmem:[%s2554 + $0xf0] sm:$0xff] %v2551
        %2586 = vst [vmem:[%s2554 + $0xf8] sm:$0xff] %v2553
        %v2587 = vld [vmem:[#allocation5 + $0x140] sm:$0xf]
        %v2588 = vld [vmem:[#allocation5 + $0x144] sm:$0xf]
        %v2589 = vld [vmem:[#allocation5 + $0x148] sm:$0xf]
        %v2590 = vld [vmem:[#allocation5 + $0x14c] sm:$0xf]
        %v2591 = vld [vmem:[#allocation5 + $0x150] sm:$0xf]
        %v2592 = vld [vmem:[#allocation5 + $0x154] sm:$0xf]
        %v2593 = vld [vmem:[#allocation5 + $0x158] sm:$0xf]
        %v2594 = vld [vmem:[#allocation5 + $0x15c] sm:$0xf]
        %v2595 = vld [vmem:[#allocation5 + $0x160] sm:$0xf]
        %v2596 = vld [vmem:[#allocation5 + $0x164] sm:$0xf]
        %v2597 = vld [vmem:[#allocation5 + $0x168] sm:$0xf]
        %v2598 = vld [vmem:[#allocation5 + $0x16c] sm:$0xf]
        %v2599 = vld [vmem:[#allocation5 + $0x170] sm:$0xf]
        %v2600 = vld [vmem:[#allocation5 + $0x174] sm:$0xf]
        %v2601 = vld [vmem:[#allocation5 + $0x178] sm:$0xf]
        %v2602 = vld [vmem:[#allocation5 + $0x17c] sm:$0xf]
        %v2603 = vld [vmem:[#allocation5 + $0x180] sm:$0xf]
        %v2604 = vld [vmem:[#allocation5 + $0x184] sm:$0xf]
        %v2605 = vld [vmem:[#allocation5 + $0x188] sm:$0xf]
        %v2606 = vld [vmem:[#allocation5 + $0x18c] sm:$0xf]
        %v2607 = vld [vmem:[#allocation5 + $0x190] sm:$0xf]
        %v2608 = vld [vmem:[#allocation5 + $0x194] sm:$0xf]
        %v2609 = vld [vmem:[#allocation5 + $0x198] sm:$0xf]
        %v2610 = vld [vmem:[#allocation5 + $0x19c] sm:$0xf]
        %v2611 = vld [vmem:[#allocation5 + $0x1a0] sm:$0xf]
        %v2612 = vld [vmem:[#allocation5 + $0x1a4] sm:$0xf]
        %v2613 = vld [vmem:[#allocation5 + $0x1a8] sm:$0xf]
        %v2614 = vld [vmem:[#allocation5 + $0x1ac] sm:$0xf]
        %v2615 = vld [vmem:[#allocation5 + $0x1b0] sm:$0xf]
        %v2616 = vld [vmem:[#allocation5 + $0x1b4] sm:$0xf]
        %v2617 = vld [vmem:[#allocation5 + $0x1b8] sm:$0xf]
        %v2618 = vld [vmem:[#allocation5 + $0x1bc] sm:$0xf]
        %v2619 = vld [vmem:[#allocation5 + $0x1c0] sm:$0xf]
        %v2620 = vld [vmem:[#allocation5 + $0x1c4] sm:$0xf]
        %v2621 = vld [vmem:[#allocation5 + $0x1c8] sm:$0xf]
        %v2622 = vld [vmem:[#allocation5 + $0x1cc] sm:$0xf]
        %v2623 = vld [vmem:[#allocation5 + $0x1d0] sm:$0xf]
        %v2624 = vld [vmem:[#allocation5 + $0x1d4] sm:$0xf]
        %v2625 = vld [vmem:[#allocation5 + $0x1d8] sm:$0xf]
        %v2626 = vld [vmem:[#allocation5 + $0x1dc] sm:$0xf]
        %v2627 = vld [vmem:[#allocation5 + $0x1e0] sm:$0xf]
        %v2628 = vld [vmem:[#allocation5 + $0x1e4] sm:$0xf]
        %v2629 = vld [vmem:[#allocation5 + $0x1e8] sm:$0xf]
        %v2630 = vld [vmem:[#allocation5 + $0x1ec] sm:$0xf]
        %v2631 = vld [vmem:[#allocation5 + $0x1f0] sm:$0xf]
        %v2632 = vld [vmem:[#allocation5 + $0x1f4] sm:$0xf]
        %v2633 = vld [vmem:[#allocation5 + $0x1f8] sm:$0xf]
        %v2634 = vld [vmem:[#allocation5 + $0x1fc] sm:$0xf]
        %v2635 = vld [vmem:[#allocation5 + $0x200] sm:$0xf]
        %v2636 = vld [vmem:[#allocation5 + $0x204] sm:$0xf]
        %v2637 = vld [vmem:[#allocation5 + $0x208] sm:$0xf]
        %v2638 = vld [vmem:[#allocation5 + $0x20c] sm:$0xf]
        %v2639 = vld [vmem:[#allocation5 + $0x210] sm:$0xf]
        %v2640 = vld [vmem:[#allocation5 + $0x214] sm:$0xf]
        %v2641 = vld [vmem:[#allocation5 + $0x218] sm:$0xf]
        %v2642 = vld [vmem:[#allocation5 + $0x21c] sm:$0xf]
        %v2643 = vld [vmem:[#allocation5 + $0x220] sm:$0xf]
        %v2644 = vld [vmem:[#allocation5 + $0x224] sm:$0xf]
        %v2645 = vld [vmem:[#allocation5 + $0x228] sm:$0xf]
        %v2646 = vld [vmem:[#allocation5 + $0x22c] sm:$0xf]
        %v2647 = vld [vmem:[#allocation5 + $0x230] sm:$0xf]
        %v2648 = vld [vmem:[#allocation5 + $0x234] sm:$0xf]
        %v2649 = vld [vmem:[#allocation5 + $0x238] sm:$0xf]
        %v2650 = vld [vmem:[#allocation5 + $0x23c] sm:$0xf]
        %v2715 = vunpack.c.l.b16 %v2587
        %v2716 = vunpack.c.l.b16 %v2588
        %v2717 = vunpack.c.l.b16 %v2589
        %v2718 = vunpack.c.l.b16 %v2590
        %v2719 = vunpack.c.l.b16 %v2591
        %v2720 = vunpack.c.l.b16 %v2592
        %v2721 = vunpack.c.l.b16 %v2593
        %v2722 = vunpack.c.l.b16 %v2594
        %v2723 = vunpack.c.l.b16 %v2595
        %v2724 = vunpack.c.l.b16 %v2596
        %v2725 = vunpack.c.l.b16 %v2597
        %v2726 = vunpack.c.l.b16 %v2598
        %v2727 = vunpack.c.l.b16 %v2599
        %v2728 = vunpack.c.l.b16 %v2600
        %v2729 = vunpack.c.l.b16 %v2601
        %v2730 = vunpack.c.l.b16 %v2602
        %v2731 = vunpack.c.l.b16 %v2603
        %v2732 = vunpack.c.l.b16 %v2604
        %v2733 = vunpack.c.l.b16 %v2605
        %v2734 = vunpack.c.l.b16 %v2606
        %v2735 = vunpack.c.l.b16 %v2607
        %v2736 = vunpack.c.l.b16 %v2608
        %v2737 = vunpack.c.l.b16 %v2609
        %v2738 = vunpack.c.l.b16 %v2610
        %v2739 = vunpack.c.l.b16 %v2611
        %v2740 = vunpack.c.l.b16 %v2612
        %v2741 = vunpack.c.l.b16 %v2613
        %v2742 = vunpack.c.l.b16 %v2614
        %v2743 = vunpack.c.l.b16 %v2615
        %v2744 = vunpack.c.l.b16 %v2616
        %v2745 = vunpack.c.l.b16 %v2617
        %v2746 = vunpack.c.l.b16 %v2618
        %v2747 = vunpack.c.l.b16 %v2619
        %v2748 = vunpack.c.l.b16 %v2620
        %v2749 = vunpack.c.l.b16 %v2621
        %v2750 = vunpack.c.l.b16 %v2622
        %v2751 = vunpack.c.l.b16 %v2623
        %v2752 = vunpack.c.l.b16 %v2624
        %v2753 = vunpack.c.l.b16 %v2625
        %v2754 = vunpack.c.l.b16 %v2626
        %v2755 = vunpack.c.l.b16 %v2627
        %v2756 = vunpack.c.l.b16 %v2628
        %v2757 = vunpack.c.l.b16 %v2629
        %v2758 = vunpack.c.l.b16 %v2630
        %v2759 = vunpack.c.l.b16 %v2631
        %v2760 = vunpack.c.l.b16 %v2632
        %v2761 = vunpack.c.l.b16 %v2633
        %v2762 = vunpack.c.l.b16 %v2634
        %v2763 = vunpack.c.l.b16 %v2635
        %v2764 = vunpack.c.l.b16 %v2636
        %v2765 = vunpack.c.l.b16 %v2637
        %v2766 = vunpack.c.l.b16 %v2638
        %v2767 = vunpack.c.l.b16 %v2639
        %v2768 = vunpack.c.l.b16 %v2640
        %v2769 = vunpack.c.l.b16 %v2641
        %v2770 = vunpack.c.l.b16 %v2642
        %v2771 = vunpack.c.l.b16 %v2643
        %v2772 = vunpack.c.l.b16 %v2644
        %v2773 = vunpack.c.l.b16 %v2645
        %v2774 = vunpack.c.l.b16 %v2646
        %v2775 = vunpack.c.l.b16 %v2647
        %v2776 = vunpack.c.l.b16 %v2648
        %v2777 = vunpack.c.l.b16 %v2649
        %v2778 = vunpack.c.l.b16 %v2650
        %v2779 = vpack.c.b16 %v2716, %v2715
        %v2780 = vpack.c.b16 %v2718, %v2717
        %v2781 = vpack.c.b16 %v2720, %v2719
        %v2782 = vpack.c.b16 %v2722, %v2721
        %v2783 = vpack.c.b16 %v2724, %v2723
        %v2784 = vpack.c.b16 %v2726, %v2725
        %v2785 = vpack.c.b16 %v2728, %v2727
        %v2786 = vpack.c.b16 %v2730, %v2729
        %v2787 = vpack.c.b16 %v2732, %v2731
        %v2788 = vpack.c.b16 %v2734, %v2733
        %v2789 = vpack.c.b16 %v2736, %v2735
        %v2790 = vpack.c.b16 %v2738, %v2737
        %v2791 = vpack.c.b16 %v2740, %v2739
        %v2792 = vpack.c.b16 %v2742, %v2741
        %v2793 = vpack.c.b16 %v2744, %v2743
        %v2794 = vpack.c.b16 %v2746, %v2745
        %v2795 = vpack.c.b16 %v2748, %v2747
        %v2796 = vpack.c.b16 %v2750, %v2749
        %v2797 = vpack.c.b16 %v2752, %v2751
        %v2798 = vpack.c.b16 %v2754, %v2753
        %v2799 = vpack.c.b16 %v2756, %v2755
        %v2800 = vpack.c.b16 %v2758, %v2757
        %v2801 = vpack.c.b16 %v2760, %v2759
        %v2802 = vpack.c.b16 %v2762, %v2761
        %v2803 = vpack.c.b16 %v2764, %v2763
        %v2804 = vpack.c.b16 %v2766, %v2765
        %v2805 = vpack.c.b16 %v2768, %v2767
        %v2806 = vpack.c.b16 %v2770, %v2769
        %v2807 = vpack.c.b16 %v2772, %v2771
        %v2808 = vpack.c.b16 %v2774, %v2773
        %v2809 = vpack.c.b16 %v2776, %v2775
        %v2810 = vpack.c.b16 %v2778, %v2777
        %2843 = vmatprep.subr.bf16.mxu0 0
        %2844 = vmatpush1.bf16.msra.mxu0 %v2779
        %2845 = vmatprep.subr.bf16.mxu0 0
        %2846 = vmatpush1.bf16.msra.mxu0 %v2780
        %2847 = vmatprep.subr.bf16.mxu0 0
        %2848 = vmatpush1.bf16.msra.mxu0 %v2781
        %2849 = vmatprep.subr.bf16.mxu0 0
        %2850 = vmatpush1.bf16.msra.mxu0 %v2782
        %2851 = vmatprep.subr.bf16.mxu0 0
        %2852 = vmatpush1.bf16.msra.mxu0 %v2783
        %2853 = vmatprep.subr.bf16.mxu0 0
        %2854 = vmatpush1.bf16.msra.mxu0 %v2784
        %2855 = vmatprep.subr.bf16.mxu0 0
        %2856 = vmatpush1.bf16.msra.mxu0 %v2785
        %2857 = vmatprep.subr.bf16.mxu0 0
        %2858 = vmatpush1.bf16.msra.mxu0 %v2786
        %2859 = vmatprep.subr.bf16.mxu0 0
        %2860 = vmatpush1.bf16.msra.mxu0 %v2787
        %2861 = vmatprep.subr.bf16.mxu0 0
        %2862 = vmatpush1.bf16.msra.mxu0 %v2788
        %2863 = vmatprep.subr.bf16.mxu0 0
        %2864 = vmatpush1.bf16.msra.mxu0 %v2789
        %2865 = vmatprep.subr.bf16.mxu0 0
        %2866 = vmatpush1.bf16.msra.mxu0 %v2790
        %2867 = vmatprep.subr.bf16.mxu0 0
        %2868 = vmatpush1.bf16.msra.mxu0 %v2791
        %2869 = vmatprep.subr.bf16.mxu0 0
        %2870 = vmatpush1.bf16.msra.mxu0 %v2792
        %2871 = vmatprep.subr.bf16.mxu0 0
        %2872 = vmatpush1.bf16.msra.mxu0 %v2793
        %2873 = vmatprep.subr.bf16.mxu0 0
        %2874 = vmatpush1.bf16.msra.mxu0 %v2794
        %2875 = vmatprep.mubr.bf16.mxu0 %v1056
        %2876 = vmatmul.mubr.bf16.gmra.mrb[0].mxu0 %v765
        %v2877 = vpop.f32.mrb[0].mxu0
        %v2878 = vadd.f32 %v1123, %v2877
        %v2879 = vpop.f32.mrb[0].mxu0
        %v2880 = vpop.f32.mrb[0].mxu0
        %v2881 = vadd.f32 %v1123, %v2880
        %v2882 = vpop.f32.mrb[0].mxu0
        %2883 = vmatprep.mubr.bf16.mxu0 %v1057
        %2884 = vmatmul.mubr.bf16.gmra.mrb[0].mxu0 %v766
        %v2885 = vpop.f32.mrb[0].mxu0
        %v2886 = vadd.f32 %v1123, %v2885
        %v2887 = vpop.f32.mrb[0].mxu0
        %v2888 = vpop.f32.mrb[0].mxu0
        %v2889 = vadd.f32 %v1123, %v2888
        %v2890 = vpop.f32.mrb[0].mxu0
        %2891 = vmatprep.mubr.bf16.mxu0 %v1058
        %2892 = vmatmul.mubr.bf16.gmra.mrb[0].mxu0 %v767
        %v2893 = vpop.f32.mrb[0].mxu0
        %v2894 = vadd.f32 %v1123, %v2893
        %v2895 = vpop.f32.mrb[0].mxu0
        %v2896 = vpop.f32.mrb[0].mxu0
        %v2897 = vadd.f32 %v1123, %v2896
        %v2898 = vpop.f32.mrb[0].mxu0
        %2899 = vmatprep.mubr.bf16.mxu0 %v1059
        %2900 = vmatmul.mubr.bf16.gmra.mrb[0].mxu0 %v768
        %v2901 = vpop.f32.mrb[0].mxu0
        %v2902 = vadd.f32 %v1123, %v2901
        %v2903 = vpop.f32.mrb[0].mxu0
        %v2904 = vpop.f32.mrb[0].mxu0
        %v2905 = vadd.f32 %v1123, %v2904
        %v2906 = vpop.f32.mrb[0].mxu0
        %2907 = vmatprep.mubr.bf16.mxu0 %v1060
        %2908 = vmatmul.mubr.bf16.gmra.mrb[0].mxu0 %v769
        %v2909 = vpop.f32.mrb[0].mxu0
        %v2910 = vadd.f32 %v1123, %v2909
        %v2911 = vpop.f32.mrb[0].mxu0
        %v2912 = vpop.f32.mrb[0].mxu0
        %v2913 = vadd.f32 %v1123, %v2912
        %v2914 = vpop.f32.mrb[0].mxu0
        %2915 = vmatprep.mubr.bf16.mxu0 %v1061
        %2916 = vmatmul.mubr.bf16.gmra.mrb[0].mxu0 %v770
        %v2917 = vpop.f32.mrb[0].mxu0
        %v2918 = vadd.f32 %v1123, %v2917
        %v2919 = vpop.f32.mrb[0].mxu0
        %v2920 = vpop.f32.mrb[0].mxu0
        %v2921 = vadd.f32 %v1123, %v2920
        %v2922 = vpop.f32.mrb[0].mxu0
        %2923 = vmatprep.mubr.bf16.mxu0 %v1062
        %2924 = vmatmul.mubr.bf16.gmra.mrb[0].mxu0 %v771
        %v2925 = vpop.f32.mrb[0].mxu0
        %v2926 = vadd.f32 %v1123, %v2925
        %v2927 = vpop.f32.mrb[0].mxu0
        %v2928 = vpop.f32.mrb[0].mxu0
        %v2929 = vadd.f32 %v1123, %v2928
        %v2930 = vpop.f32.mrb[0].mxu0
        %2931 = vmatprep.mubr.bf16.mxu0 %v1063
        %2932 = vmatmul.mubr.bf16.gmra.mrb[0].mxu0 %v772
        %v2933 = vpop.f32.mrb[0].mxu0
        %v2934 = vadd.f32 %v1123, %v2933
        %v2935 = vpop.f32.mrb[0].mxu0
        %v2936 = vpop.f32.mrb[0].mxu0
        %v2937 = vadd.f32 %v1123, %v2936
        %v2938 = vpop.f32.mrb[0].mxu0
        %2939 = vmatprep.mubr.bf16.mxu0 %v1064
        %2940 = vmatmul.mubr.bf16.gmra.mrb[0].mxu0 %v773
        %v2941 = vpop.f32.mrb[0].mxu0
        %v2942 = vadd.f32 %v1123, %v2941
        %v2943 = vpop.f32.mrb[0].mxu0
        %v2944 = vpop.f32.mrb[0].mxu0
        %v2945 = vadd.f32 %v1123, %v2944
        %v2946 = vpop.f32.mrb[0].mxu0
        %2947 = vmatprep.mubr.bf16.mxu0 %v1065
        %2948 = vmatmul.mubr.bf16.gmra.mrb[0].mxu0 %v774
        %v2949 = vpop.f32.mrb[0].mxu0
        %v2950 = vadd.f32 %v1123, %v2949
        %v2951 = vpop.f32.mrb[0].mxu0
        %v2952 = vpop.f32.mrb[0].mxu0
        %v2953 = vadd.f32 %v1123, %v2952
        %v2954 = vpop.f32.mrb[0].mxu0
        %2955 = vmatprep.mubr.bf16.mxu0 %v1066
        %2956 = vmatmul.mubr.bf16.gmra.mrb[0].mxu0 %v775
        %v2957 = vpop.f32.mrb[0].mxu0
        %v2958 = vadd.f32 %v1123, %v2957
        %v2959 = vpop.f32.mrb[0].mxu0
        %v2960 = vpop.f32.mrb[0].mxu0
        %v2961 = vadd.f32 %v1123, %v2960
        %v2962 = vpop.f32.mrb[0].mxu0
        %2963 = vmatprep.mubr.bf16.mxu0 %v1067
        %2964 = vmatmul.mubr.bf16.gmra.mrb[0].mxu0 %v776
        %v2965 = vpop.f32.mrb[0].mxu0
        %v2966 = vadd.f32 %v1123, %v2965
        %v2967 = vpop.f32.mrb[0].mxu0
        %v2968 = vpop.f32.mrb[0].mxu0
        %v2969 = vadd.f32 %v1123, %v2968
        %v2970 = vpop.f32.mrb[0].mxu0
        %2971 = vmatprep.mubr.bf16.mxu0 %v1068
        %2972 = vmatmul.mubr.bf16.gmra.mrb[0].mxu0 %v777
        %v2973 = vpop.f32.mrb[0].mxu0
        %v2974 = vadd.f32 %v1123, %v2973
        %v2975 = vpop.f32.mrb[0].mxu0
        %v2976 = vpop.f32.mrb[0].mxu0
        %v2977 = vadd.f32 %v1123, %v2976
        %v2978 = vpop.f32.mrb[0].mxu0
        %2979 = vmatprep.mubr.bf16.mxu0 %v1069
        %2980 = vmatmul.mubr.bf16.gmra.mrb[0].mxu0 %v778
        %v2981 = vpop.f32.mrb[0].mxu0
        %v2982 = vadd.f32 %v1123, %v2981
        %v2983 = vpop.f32.mrb[0].mxu0
        %v2984 = vpop.f32.mrb[0].mxu0
        %v2985 = vadd.f32 %v1123, %v2984
        %v2986 = vpop.f32.mrb[0].mxu0
        %2987 = vmatprep.mubr.bf16.mxu0 %v1070
        %2988 = vmatmul.mubr.bf16.gmra.mrb[0].mxu0 %v779
        %v2989 = vpop.f32.mrb[0].mxu0
        %v2990 = vadd.f32 %v1123, %v2989
        %v2991 = vpop.f32.mrb[0].mxu0
        %v2992 = vpop.f32.mrb[0].mxu0
        %v2993 = vadd.f32 %v1123, %v2992
        %v2994 = vpop.f32.mrb[0].mxu0
        %2995 = vmatprep.mubr.bf16.mxu0 %v1071
        %2996 = vmatmul.mubr.bf16.gmra.mrb[0].mxu0 %v780
        %v2997 = vpop.f32.mrb[0].mxu0
        %v2998 = vadd.f32 %v1123, %v2997
        %v2999 = vpop.f32.mrb[0].mxu0
        %v3000 = vpop.f32.mrb[0].mxu0
        %v3001 = vadd.f32 %v1123, %v3000
        %v3002 = vpop.f32.mrb[0].mxu0
        %3003 = vdwg.mxu0
        %3004 = vmatprep.subr.bf16.mxu0 0
        %3005 = vmatpush1.bf16.msra.mxu0 %v2795
        %3006 = vmatprep.subr.bf16.mxu0 0
        %3007 = vmatpush1.bf16.msra.mxu0 %v2796
        %3008 = vmatprep.subr.bf16.mxu0 0
        %3009 = vmatpush1.bf16.msra.mxu0 %v2797
        %3010 = vmatprep.subr.bf16.mxu0 0
        %3011 = vmatpush1.bf16.msra.mxu0 %v2798
        %3012 = vmatprep.subr.bf16.mxu0 0
        %3013 = vmatpush1.bf16.msra.mxu0 %v2799
        %3014 = vmatprep.subr.bf16.mxu0 0
        %3015 = vmatpush1.bf16.msra.mxu0 %v2800
        %3016 = vmatprep.subr.bf16.mxu0 0
        %3017 = vmatpush1.bf16.msra.mxu0 %v2801
        %3018 = vmatprep.subr.bf16.mxu0 0
        %3019 = vmatpush1.bf16.msra.mxu0 %v2802
        %3020 = vmatprep.subr.bf16.mxu0 0
        %3021 = vmatpush1.bf16.msra.mxu0 %v2803
        %3022 = vmatprep.subr.bf16.mxu0 0
        %3023 = vmatpush1.bf16.msra.mxu0 %v2804
        %3024 = vmatprep.subr.bf16.mxu0 0
        %3025 = vmatpush1.bf16.msra.mxu0 %v2805
        %3026 = vmatprep.subr.bf16.mxu0 0
        %3027 = vmatpush1.bf16.msra.mxu0 %v2806
        %3028 = vmatprep.subr.bf16.mxu0 0
        %3029 = vmatpush1.bf16.msra.mxu0 %v2807
        %3030 = vmatprep.subr.bf16.mxu0 0
        %3031 = vmatpush1.bf16.msra.mxu0 %v2808
        %3032 = vmatprep.subr.bf16.mxu0 0
        %3033 = vmatpush1.bf16.msra.mxu0 %v2809
        %3034 = vmatprep.subr.bf16.mxu0 0
        %3035 = vmatpush1.bf16.msra.mxu0 %v2810
        %3036 = vmatprep.mubr.bf16.mxu0 %v1087
        %3037 = vmatmul.mubr.bf16.gmra.mrb[0].mxu0 %v766
        %v3038 = vpop.f32.mrb[0].mxu0
        %v3039 = vadd.f32 %v2878, %v3038
        %v3040 = vpop.f32.mrb[0].mxu0
        %v3041 = vpop.f32.mrb[0].mxu0
        %v3042 = vadd.f32 %v2881, %v3041
        %v3043 = vpop.f32.mrb[0].mxu0
        %3044 = vmatprep.mubr.bf16.mxu0 %v1088
        %3045 = vmatmul.mubr.bf16.gmra.mrb[0].mxu0 %v767
        %v3046 = vpop.f32.mrb[0].mxu0
        %v3047 = vadd.f32 %v2886, %v3046
        %v3048 = vpop.f32.mrb[0].mxu0
        %v3049 = vpop.f32.mrb[0].mxu0
        %v3050 = vadd.f32 %v2889, %v3049
        %v3051 = vpop.f32.mrb[0].mxu0
        %3052 = vmatprep.mubr.bf16.mxu0 %v1089
        %3053 = vmatmul.mubr.bf16.gmra.mrb[0].mxu0 %v768
        %v3054 = vpop.f32.mrb[0].mxu0
        %v3055 = vadd.f32 %v2894, %v3054
        %v3056 = vpop.f32.mrb[0].mxu0
        %v3057 = vpop.f32.mrb[0].mxu0
        %v3058 = vadd.f32 %v2897, %v3057
        %v3059 = vpop.f32.mrb[0].mxu0
        %3060 = vmatprep.mubr.bf16.mxu0 %v1090
        %3061 = vmatmul.mubr.bf16.gmra.mrb[0].mxu0 %v769
        %v3062 = vpop.f32.mrb[0].mxu0
        %v3063 = vadd.f32 %v2902, %v3062
        %v3064 = vpop.f32.mrb[0].mxu0
        %v3065 = vpop.f32.mrb[0].mxu0
        %v3066 = vadd.f32 %v2905, %v3065
        %v3067 = vpop.f32.mrb[0].mxu0
        %3068 = vmatprep.mubr.bf16.mxu0 %v1091
        %3069 = vmatmul.mubr.bf16.gmra.mrb[0].mxu0 %v770
        %v3070 = vpop.f32.mrb[0].mxu0
        %v3071 = vadd.f32 %v2910, %v3070
        %v3072 = vpop.f32.mrb[0].mxu0
        %v3073 = vpop.f32.mrb[0].mxu0
        %v3074 = vadd.f32 %v2913, %v3073
        %v3075 = vpop.f32.mrb[0].mxu0
        %3076 = vmatprep.mubr.bf16.mxu0 %v1092
        %3077 = vmatmul.mubr.bf16.gmra.mrb[0].mxu0 %v771
        %v3078 = vpop.f32.mrb[0].mxu0
        %v3079 = vadd.f32 %v2918, %v3078
        %v3080 = vpop.f32.mrb[0].mxu0
        %v3081 = vpop.f32.mrb[0].mxu0
        %v3082 = vadd.f32 %v2921, %v3081
        %v3083 = vpop.f32.mrb[0].mxu0
        %3084 = vmatprep.mubr.bf16.mxu0 %v1093
        %3085 = vmatmul.mubr.bf16.gmra.mrb[0].mxu0 %v772
        %v3086 = vpop.f32.mrb[0].mxu0
        %v3087 = vadd.f32 %v2926, %v3086
        %v3088 = vpop.f32.mrb[0].mxu0
        %v3089 = vpop.f32.mrb[0].mxu0
        %v3090 = vadd.f32 %v2929, %v3089
        %v3091 = vpop.f32.mrb[0].mxu0
        %3092 = vmatprep.mubr.bf16.mxu0 %v1094
        %3093 = vmatmul.mubr.bf16.gmra.mrb[0].mxu0 %v773
        %v3094 = vpop.f32.mrb[0].mxu0
        %v3095 = vadd.f32 %v2934, %v3094
        %v3096 = vpop.f32.mrb[0].mxu0
        %v3097 = vpop.f32.mrb[0].mxu0
        %v3098 = vadd.f32 %v2937, %v3097
        %v3099 = vpop.f32.mrb[0].mxu0
        %3100 = vmatprep.mubr.bf16.mxu0 %v1095
        %3101 = vmatmul.mubr.bf16.gmra.mrb[0].mxu0 %v774
        %v3102 = vpop.f32.mrb[0].mxu0
        %v3103 = vadd.f32 %v2942, %v3102
        %v3104 = vpop.f32.mrb[0].mxu0
        %v3105 = vpop.f32.mrb[0].mxu0
        %v3106 = vadd.f32 %v2945, %v3105
        %v3107 = vpop.f32.mrb[0].mxu0
        %3108 = vmatprep.mubr.bf16.mxu0 %v1096
        %3109 = vmatmul.mubr.bf16.gmra.mrb[0].mxu0 %v775
        %v3110 = vpop.f32.mrb[0].mxu0
        %v3111 = vadd.f32 %v2950, %v3110
        %v3112 = vpop.f32.mrb[0].mxu0
        %v3113 = vpop.f32.mrb[0].mxu0
        %v3114 = vadd.f32 %v2953, %v3113
        %v3115 = vpop.f32.mrb[0].mxu0
        %3116 = vmatprep.mubr.bf16.mxu0 %v1097
        %3117 = vmatmul.mubr.bf16.gmra.mrb[0].mxu0 %v776
        %v3118 = vpop.f32.mrb[0].mxu0
        %v3119 = vadd.f32 %v2958, %v3118
        %v3120 = vpop.f32.mrb[0].mxu0
        %v3121 = vpop.f32.mrb[0].mxu0
        %v3122 = vadd.f32 %v2961, %v3121
        %v3123 = vpop.f32.mrb[0].mxu0
        %3124 = vmatprep.mubr.bf16.mxu0 %v1098
        %3125 = vmatmul.mubr.bf16.gmra.mrb[0].mxu0 %v777
        %v3126 = vpop.f32.mrb[0].mxu0
        %v3127 = vadd.f32 %v2966, %v3126
        %v3128 = vpop.f32.mrb[0].mxu0
        %v3129 = vpop.f32.mrb[0].mxu0
        %v3130 = vadd.f32 %v2969, %v3129
        %v3131 = vpop.f32.mrb[0].mxu0
        %3132 = vmatprep.mubr.bf16.mxu0 %v1099
        %3133 = vmatmul.mubr.bf16.gmra.mrb[0].mxu0 %v778
        %v3134 = vpop.f32.mrb[0].mxu0
        %v3135 = vadd.f32 %v2974, %v3134
        %v3136 = vpop.f32.mrb[0].mxu0
        %v3137 = vpop.f32.mrb[0].mxu0
        %v3138 = vadd.f32 %v2977, %v3137
        %v3139 = vpop.f32.mrb[0].mxu0
        %3140 = vmatprep.mubr.bf16.mxu0 %v1100
        %3141 = vmatmul.mubr.bf16.gmra.mrb[0].mxu0 %v779
        %v3142 = vpop.f32.mrb[0].mxu0
        %v3143 = vadd.f32 %v2982, %v3142
        %v3144 = vpop.f32.mrb[0].mxu0
        %v3145 = vpop.f32.mrb[0].mxu0
        %v3146 = vadd.f32 %v2985, %v3145
        %v3147 = vpop.f32.mrb[0].mxu0
        %3148 = vmatprep.mubr.bf16.mxu0 %v1101
        %3149 = vmatmul.mubr.bf16.gmra.mrb[0].mxu0 %v780
        %v3150 = vpop.f32.mrb[0].mxu0
        %v3151 = vadd.f32 %v2990, %v3150
        %v3152 = vpop.f32.mrb[0].mxu0
        %v3153 = vpop.f32.mrb[0].mxu0
        %v3154 = vadd.f32 %v2993, %v3153
        %v3155 = vpop.f32.mrb[0].mxu0
        %3156 = vmatprep.mubr.bf16.mxu0 0
        %3157 = vmatmul.mubr.bf16.gmra.mrb[0].mxu0 0
        %v3158 = vpop.f32.mrb[0].mxu0
        %v3159 = vadd.f32 %v2998, %v3158
        %v3160 = vpop.f32.mrb[0].mxu0
        %v3161 = vpop.f32.mrb[0].mxu0
        %v3162 = vadd.f32 %v3001, %v3161
        %v3163 = vpop.f32.mrb[0].mxu0
        %3164 = vdwg.mxu0
        %v3165 = vxor.u32 %v3039, 2147483648
        %v3166 = vxor.u32 %v3042, 2147483648
        %v3167 = vxor.u32 %v3047, 2147483648
        %v3168 = vxor.u32 %v3050, 2147483648
        %v3169 = vxor.u32 %v3055, 2147483648
        %v3170 = vxor.u32 %v3058, 2147483648
        %v3171 = vxor.u32 %v3063, 2147483648
        %v3172 = vxor.u32 %v3066, 2147483648
        %v3173 = vxor.u32 %v3071, 2147483648
        %v3174 = vxor.u32 %v3074, 2147483648
        %v3175 = vxor.u32 %v3079, 2147483648
        %v3176 = vxor.u32 %v3082, 2147483648
        %v3177 = vxor.u32 %v3087, 2147483648
        %v3178 = vxor.u32 %v3090, 2147483648
        %v3179 = vxor.u32 %v3095, 2147483648
        %v3180 = vxor.u32 %v3098, 2147483648
        %v3181 = vxor.u32 %v3103, 2147483648
        %v3182 = vxor.u32 %v3106, 2147483648
        %v3183 = vxor.u32 %v3111, 2147483648
        %v3184 = vxor.u32 %v3114, 2147483648
        %v3185 = vxor.u32 %v3119, 2147483648
        %v3186 = vxor.u32 %v3122, 2147483648
        %v3187 = vxor.u32 %v3127, 2147483648
        %v3188 = vxor.u32 %v3130, 2147483648
        %v3189 = vxor.u32 %v3135, 2147483648
        %v3190 = vxor.u32 %v3138, 2147483648
        %v3191 = vxor.u32 %v3143, 2147483648
        %v3192 = vxor.u32 %v3146, 2147483648
        %v3193 = vxor.u32 %v3151, 2147483648
        %v3194 = vxor.u32 %v3154, 2147483648
        %v3195 = vxor.u32 %v3159, 2147483648
        %v3196 = vxor.u32 %v3162, 2147483648
        %v3197 = vmul.f32 %v3165, 1.442695
        %v3198 = vpow.pop %v3197
        %v3199 = vmul.f32 %v3166, 1.442695
        %v3200 = vpow.pop %v3199
        %v3201 = vmul.f32 %v3167, 1.442695
        %v3202 = vpow.pop %v3201
        %v3203 = vmul.f32 %v3168, 1.442695
        %v3204 = vpow.pop %v3203
        %v3205 = vmul.f32 %v3169, 1.442695
        %v3206 = vpow.pop %v3205
        %v3207 = vmul.f32 %v3170, 1.442695
        %v3208 = vpow.pop %v3207
        %v3209 = vmul.f32 %v3171, 1.442695
        %v3210 = vpow.pop %v3209
        %v3211 = vmul.f32 %v3172, 1.442695
        %v3212 = vpow.pop %v3211
        %v3213 = vmul.f32 %v3173, 1.442695
        %v3214 = vpow.pop %v3213
        %v3215 = vmul.f32 %v3174, 1.442695
        %v3216 = vpow.pop %v3215
        %v3217 = vmul.f32 %v3175, 1.442695
        %v3218 = vpow.pop %v3217
        %v3219 = vmul.f32 %v3176, 1.442695
        %v3220 = vpow.pop %v3219
        %v3221 = vmul.f32 %v3177, 1.442695
        %v3222 = vpow.pop %v3221
        %v3223 = vmul.f32 %v3178, 1.442695
        %v3224 = vpow.pop %v3223
        %v3225 = vmul.f32 %v3179, 1.442695
        %v3226 = vpow.pop %v3225
        %v3227 = vmul.f32 %v3180, 1.442695
        %v3228 = vpow.pop %v3227
        %v3229 = vmul.f32 %v3181, 1.442695
        %v3230 = vpow.pop %v3229
        %v3231 = vmul.f32 %v3182, 1.442695
        %v3232 = vpow.pop %v3231
        %v3233 = vmul.f32 %v3183, 1.442695
        %v3234 = vpow.pop %v3233
        %v3235 = vmul.f32 %v3184, 1.442695
        %v3236 = vpow.pop %v3235
        %v3237 = vmul.f32 %v3185, 1.442695
        %v3238 = vpow.pop %v3237
        %v3239 = vmul.f32 %v3186, 1.442695
        %v3240 = vpow.pop %v3239
        %v3241 = vmul.f32 %v3187, 1.442695
        %v3242 = vpow.pop %v3241
        %v3243 = vmul.f32 %v3188, 1.442695
        %v3244 = vpow.pop %v3243
        %v3245 = vmul.f32 %v3189, 1.442695
        %v3246 = vpow.pop %v3245
        %v3247 = vmul.f32 %v3190, 1.442695
        %v3248 = vpow.pop %v3247
        %v3249 = vmul.f32 %v3191, 1.442695
        %v3250 = vpow.pop %v3249
        %v3251 = vmul.f32 %v3192, 1.442695
        %v3252 = vpow.pop %v3251
        %v3253 = vmul.f32 %v3193, 1.442695
        %v3254 = vpow.pop %v3253
        %v3255 = vmul.f32 %v3194, 1.442695
        %v3256 = vpow.pop %v3255
        %v3257 = vmul.f32 %v3195, 1.442695
        %v3258 = vpow.pop %v3257
        %v3259 = vmul.f32 %v3196, 1.442695
        %v3260 = vpow.pop %v3259
        %v3261 = vadd.f32 %v3198, 1.0
        %v3262 = vadd.f32 %v3200, 1.0
        %v3263 = vadd.f32 %v3202, 1.0
        %v3264 = vadd.f32 %v3204, 1.0
        %v3265 = vadd.f32 %v3206, 1.0
        %v3266 = vadd.f32 %v3208, 1.0
        %v3267 = vadd.f32 %v3210, 1.0
        %v3268 = vadd.f32 %v3212, 1.0
        %v3269 = vadd.f32 %v3214, 1.0
        %v3270 = vadd.f32 %v3216, 1.0
        %v3271 = vadd.f32 %v3218, 1.0
        %v3272 = vadd.f32 %v3220, 1.0
        %v3273 = vadd.f32 %v3222, 1.0
        %v3274 = vadd.f32 %v3224, 1.0
        %v3275 = vadd.f32 %v3226, 1.0
        %v3276 = vadd.f32 %v3228, 1.0
        %v3277 = vadd.f32 %v3230, 1.0
        %v3278 = vadd.f32 %v3232, 1.0
        %v3279 = vadd.f32 %v3234, 1.0
        %v3280 = vadd.f32 %v3236, 1.0
        %v3281 = vadd.f32 %v3238, 1.0
        %v3282 = vadd.f32 %v3240, 1.0
        %v3283 = vadd.f32 %v3242, 1.0
        %v3284 = vadd.f32 %v3244, 1.0
        %v3285 = vadd.f32 %v3246, 1.0
        %v3286 = vadd.f32 %v3248, 1.0
        %v3287 = vadd.f32 %v3250, 1.0
        %v3288 = vadd.f32 %v3252, 1.0
        %v3289 = vadd.f32 %v3254, 1.0
        %v3290 = vadd.f32 %v3256, 1.0
        %v3291 = vadd.f32 %v3258, 1.0
        %v3292 = vadd.f32 %v3260, 1.0
        %v3293 = vrcp.pop %v3261
        %v3294 = vmul.f32 1.0, %v3293
        %v3295 = vrcp.pop %v3262
        %v3296 = vmul.f32 1.0, %v3295
        %v3297 = vrcp.pop %v3263
        %v3298 = vmul.f32 1.0, %v3297
        %v3299 = vrcp.pop %v3264
        %v3300 = vmul.f32 1.0, %v3299
        %v3301 = vrcp.pop %v3265
        %v3302 = vmul.f32 1.0, %v3301
        %v3303 = vrcp.pop %v3266
        %v3304 = vmul.f32 1.0, %v3303
        %v3305 = vrcp.pop %v3267
        %v3306 = vmul.f32 1.0, %v3305
        %v3307 = vrcp.pop %v3268
        %v3308 = vmul.f32 1.0, %v3307
        %v3309 = vrcp.pop %v3269
        %v3310 = vmul.f32 1.0, %v3309
        %v3311 = vrcp.pop %v3270
        %v3312 = vmul.f32 1.0, %v3311
        %v3313 = vrcp.pop %v3271
        %v3314 = vmul.f32 1.0, %v3313
        %v3315 = vrcp.pop %v3272
        %v3316 = vmul.f32 1.0, %v3315
        %v3317 = vrcp.pop %v3273
        %v3318 = vmul.f32 1.0, %v3317
        %v3319 = vrcp.pop %v3274
        %v3320 = vmul.f32 1.0, %v3319
        %v3321 = vrcp.pop %v3275
        %v3322 = vmul.f32 1.0, %v3321
        %v3323 = vrcp.pop %v3276
        %v3324 = vmul.f32 1.0, %v3323
        %v3325 = vrcp.pop %v3277
        %v3326 = vmul.f32 1.0, %v3325
        %v3327 = vrcp.pop %v3278
        %v3328 = vmul.f32 1.0, %v3327
        %v3329 = vrcp.pop %v3279
        %v3330 = vmul.f32 1.0, %v3329
        %v3331 = vrcp.pop %v3280
        %v3332 = vmul.f32 1.0, %v3331
        %v3333 = vrcp.pop %v3281
        %v3334 = vmul.f32 1.0, %v3333
        %v3335 = vrcp.pop %v3282
        %v3336 = vmul.f32 1.0, %v3335
        %v3337 = vrcp.pop %v3283
        %v3338 = vmul.f32 1.0, %v3337
        %v3339 = vrcp.pop %v3284
        %v3340 = vmul.f32 1.0, %v3339
        %v3341 = vrcp.pop %v3285
        %v3342 = vmul.f32 1.0, %v3341
        %v3343 = vrcp.pop %v3286
        %v3344 = vmul.f32 1.0, %v3343
        %v3345 = vrcp.pop %v3287
        %v3346 = vmul.f32 1.0, %v3345
        %v3347 = vrcp.pop %v3288
        %v3348 = vmul.f32 1.0, %v3347
        %v3349 = vrcp.pop %v3289
        %v3350 = vmul.f32 1.0, %v3349
        %v3351 = vrcp.pop %v3290
        %v3352 = vmul.f32 1.0, %v3351
        %v3353 = vrcp.pop %v3291
        %v3354 = vmul.f32 1.0, %v3353
        %v3355 = vrcp.pop %v3292
        %v3356 = vmul.f32 1.0, %v3355
        %s3357 = scalar_lea.vmem %s215, 768 [#allocation8]
        %3358 = vst [vmem:[%s3357] sm:$0xff] %v3294
        %3359 = vst [vmem:[%s3357 + $0x8] sm:$0xff] %v3296
        %3360 = vst [vmem:[%s3357 + $0x10] sm:$0xff] %v3298
        %3361 = vst [vmem:[%s3357 + $0x18] sm:$0xff] %v3300
        %3362 = vst [vmem:[%s3357 + $0x20] sm:$0xff] %v3302
        %3363 = vst [vmem:[%s3357 + $0x28] sm:$0xff] %v3304
        %3364 = vst [vmem:[%s3357 + $0x30] sm:$0xff] %v3306
        %3365 = vst [vmem:[%s3357 + $0x38] sm:$0xff] %v3308
        %3366 = vst [vmem:[%s3357 + $0x40] sm:$0xff] %v3310
        %3367 = vst [vmem:[%s3357 + $0x48] sm:$0xff] %v3312
        %3368 = vst [vmem:[%s3357 + $0x50] sm:$0xff] %v3314
        %3369 = vst [vmem:[%s3357 + $0x58] sm:$0xff] %v3316
        %3370 = vst [vmem:[%s3357 + $0x60] sm:$0xff] %v3318
        %3371 = vst [vmem:[%s3357 + $0x68] sm:$0xff] %v3320
        %3372 = vst [vmem:[%s3357 + $0x70] sm:$0xff] %v3322
        %3373 = vst [vmem:[%s3357 + $0x78] sm:$0xff] %v3324
        %3374 = vst [vmem:[%s3357 + $0x80] sm:$0xff] %v3326
        %3375 = vst [vmem:[%s3357 + $0x88] sm:$0xff] %v3328
        %3376 = vst [vmem:[%s3357 + $0x90] sm:$0xff] %v3330
        %3377 = vst [vmem:[%s3357 + $0x98] sm:$0xff] %v3332
        %3378 = vst [vmem:[%s3357 + $0xa0] sm:$0xff] %v3334
        %3379 = vst [vmem:[%s3357 + $0xa8] sm:$0xff] %v3336
        %3380 = vst [vmem:[%s3357 + $0xb0] sm:$0xff] %v3338
        %3381 = vst [vmem:[%s3357 + $0xb8] sm:$0xff] %v3340
        %3382 = vst [vmem:[%s3357 + $0xc0] sm:$0xff] %v3342
        %3383 = vst [vmem:[%s3357 + $0xc8] sm:$0xff] %v3344
        %3384 = vst [vmem:[%s3357 + $0xd0] sm:$0xff] %v3346
        %3385 = vst [vmem:[%s3357 + $0xd8] sm:$0xff] %v3348
        %3386 = vst [vmem:[%s3357 + $0xe0] sm:$0xff] %v3350
        %3387 = vst [vmem:[%s3357 + $0xe8] sm:$0xff] %v3352
        %3388 = vst [vmem:[%s3357 + $0xf0] sm:$0xff] %v3354
        %3389 = vst [vmem:[%s3357 + $0xf8] sm:$0xff] %v3356
        %s3390 = sand.u32 %s97, 1
        %s3391 = scalar_lea.sflag [#allocation4], %s3390
        %s3392 = sand.u32 %s97, 1
        %s3393 = smul.addr %s3392, 1024
        %s3394 = scalar_lea.vmem [#allocation8], %s3393
        // Predicated region
        $region45: #{forward.3} parent=31 // pred_check
          %p3395 = pneg %p107
        $region46: #{forward.3} parent=31 // pred_check_branch
          %3397 = sbr.rel (%p3395) target = $region48
        $region47: #{forward.3} parent=31 // pred_region
          %s3399 = ssub.s32 16384, 16384
          %3400 = vsyncadd %s3391, %s3399
          %s3401 = smul.addr %s21, 128
          %s3402 = smul.addr %s3401, 128
          %s3403 = scalar_lea.hbm %s3, %s3402
          %s3404 = sshll.u32 %s3394, 4
          %s3405 = int_to_ptr.vmem [resolvable:$true] %s3404
          %3410 = dma.vmem_to_hbm [thread:$0]  %s3405, 16384, %s3403, %s3391, 128, 128, 8
        $region48: #{forward.3} parent=31 // pred_fallthru
          _
      $region32: #{forward.3} parent=5 // pred_fallthru
        _
      %p3411 = scmp.le.s32.totalorder 2, %s16
      // Predicated region
      $region49: #{forward.3} parent=5 // pred_check
        %p3412 = pneg %p3411
      $region50: #{forward.3} parent=5 // pred_check_branch
        %3414 = sbr.rel (%p3412) target = $region52
      $region51: #{forward.3} parent=5 // pred_region
        %s3415 = ssub.s32 %s16, 2
        // Predicated region
        $region53: #{forward.3} parent=51 // pred_check
          %p3416 = pneg %p113
        $region54: #{forward.3} parent=51 // pred_check_branch
          %3418 = sbr.rel (%p3416) target = $region56
        $region55: #{forward.3} parent=51 // pred_region
          %s3419 = sand.u32 %s98, 1
          %s3420 = scalar_lea.sflag [#allocation4], %s3419
          %s3421 = sand.u32 %s98, 1
          %s3422 = smul.addr %s3421, 1024
          %s3423 = scalar_lea.vmem [#allocation8], %s3422
          %3424 = dma.done %s3420, 16384
        $region56: #{forward.3} parent=51 // pred_fallthru
          _
      $region52: #{forward.3} parent=5 // pred_fallthru
        _
    $region6: #{forward.3} parent=1 // loop_footer
      %s20 = sadd.s32 1, %s16
    $region7: #{forward.3} parent=1 // loop_footer_branch
      %15 = sbr.rel target = $region3
    $region8: #{forward.3} parent=1 // loop_exit
      _
    %3425 = vsyncpa [#allocation3], 1
    %s3426 = scalar_lea.sflag [#allocation3], 1
    %3427 = vsyncpa %s3426, 1
    %3428 = vsyncpa [#allocation6], 1
    %3429 = vsyncpa [#allocation4], 1
    %s3430 = scalar_lea.sflag [#allocation4], 1
    %3431 = vsyncpa %s3430, 1

// kernel: forward.2
$region0: #{forward.2}
  #allocation0 [shape = 'u32[]', space=smem, size = 0x4, offset = 0x4, fixed_abs, tag = 'smem constant byte address 0x4 - core index']
  #allocation1 [shape = 'u32[144,128]{1,0:T(1,128)}', space=vmem, size = 0x12000, scoped, tag = 'internal scratch']
  %s0 = inlined_call_operand.hbm [shape: bf16[2,64,128], index: 0, kind: input, shape index: {}]
  %s1 = inlined_call_operand.hbm [shape: bf16[3,1152,128], index: 1, kind: input, shape index: {}]
  %s2 = inlined_call_operand.hbm [shape: f32[3,1,128], index: 2, kind: input, shape index: {}]
  %s3 = inlined_call_operand.hbm [shape: bf16[1152,128], index: 3, kind: input, shape index: {}]
  %s4 = inlined_call_operand.hbm [shape: f32[1,128], index: 4, kind: input, shape index: {}]
  %s5 = inlined_call_operand.hbm [shape: bf16[2,4,64,128], index: 5, kind: output, shape index: {}]
  %s6 = sld [smem:[#allocation0]]
  $region73: #{forward.2} parent=0
    _
  %s8 = ssub.s32 1, %s6
  %s9 = scalar_select 0, %s8, %s6
  $region1: #{forward.2} parent=0
    #allocation2 [shape = 'u8[32768]{0}', space=vmem, size = 0x8000, scoped, tag = 'input window, operand 0']
    #allocation3 [shape = 's32[2]{0}', space=sflag, size = 0x8, scoped, tag = 'scoped memory for forward.2']
    #allocation4 [shape = 's32[2]{0}', space=sflag, size = 0x8, scoped, tag = 'scoped memory for forward.2']
    #allocation5 [shape = 'u8[884736]{0}', space=vmem, size = 0xd8000, scoped, tag = 'input window, operand 1, single buffered']
    #allocation6 [shape = 's32[1]{0}', space=sflag, size = 0x4, scoped, tag = 'scoped memory for forward.2']
    #allocation7 [shape = 'u8[1536]{0}', space=vmem, size = 0x800, scoped, tag = 'input window, operand 2, single buffered']
    #allocation8 [shape = 'u8[294912]{0}', space=vmem, size = 0x48000, scoped, tag = 'input window, operand 3, single buffered']
    #allocation9 [shape = 's32[1]{0}', space=sflag, size = 0x4, scoped, tag = 'scoped memory for forward.2']
    #allocation10 [shape = 'u8[512]{0}', space=vmem, size = 0x400, scoped, tag = 'input window, operand 4, single buffered']
    #allocation11 [shape = 'u8[131072]{0}', space=vmem, size = 0x20000, scoped, tag = 'output window, operand 0']
    %10 = vsyncpa [#allocation3], 0
    %s11 = scalar_lea.sflag [#allocation3], 1
    %12 = vsyncpa %s11, 0
    %13 = vsyncpa [#allocation6], 0
    %14 = vsyncpa [#allocation9], 0
    %15 = vsyncpa [#allocation4], 0
    %s16 = scalar_lea.sflag [#allocation4], 1
    %17 = vsyncpa %s16, 0
    loop: start=0, step=1, limit=4
    $region2: #{forward.2} parent=1 // loop_pre_header
      _
    $region3: #{forward.2} parent=1 // loop_header
      %s19 = sphi 0, %s23
      %p20 = scmp.ge.s32.totalorder %s19, 4
      %s29 = sphi 0, %s31
      %s32 = sphi 0, %s29
      %s33 = sphi 0, %s32
      %s49 = sphi 0, %s33
      %s53 = sphi 0, %s53
      %s55 = sphi 0, %s53
      %s56 = sphi 0, %s55
      %s70 = sphi 0, %s56
      %s74 = sphi 0, %s74
      %s76 = sphi 0, %s74
      %s77 = sphi 0, %s76
      %s91 = sphi 0, %s77
      %s95 = sphi 0, %s95
      %s97 = sphi 0, %s95
      %s98 = sphi 0, %s97
      %s112 = sphi 0, %s98
      %s116 = sphi 0, %s116
      %s118 = sphi 0, %s116
      %s119 = sphi 0, %s118
      %s133 = sphi 0, %s119
      %s139 = sphi 0, %s141
      %s142 = sphi 0, %s139
      %s143 = sphi 0, %s142
      %s159 = sphi 0, %s143
    $region4: #{forward.2} parent=1 // loop_header_branch
      %22 = sbr.rel (%p20) target = $region8
    $region5: #{forward.2} parent=1 // loop_body
      %s24 = ssub.s32 %s19, 1
      %s25 = ssub.s32 %s19, 2
      %s26 = sadd.s32 %s19, 1
      %s27 = ssub.s32 %s19, %s26
      %p28 = scmp.eq.s32.totalorder %s27, 0
      %s30 = sadd.s32 %s29, 1
      %s31 = scalar_select %p28, %s29, %s30
      %p34 = pneg %p28
      %p35 = scmp.eq.s32.totalorder %s19, 1
      %p36 = por %p34, %p35
      %p37 = scmp.ne.s32.totalorder %s29, %s32
      %p38 = scmp.eq.s32.totalorder %s19, 0
      %p39 = por %p37, %p38
      %p40 = scmp.ne.s32.totalorder %s29, %s32
      %p41 = scmp.eq.s32.totalorder %s24, 1
      %p42 = por %p40, %p41
      %p43 = scmp.ne.s32.totalorder %s32, %s33
      %p44 = scmp.eq.s32.totalorder %s24, 0
      %p45 = por %p43, %p44
      %p46 = scmp.ne.s32.totalorder %s32, %s33
      %p47 = scmp.eq.s32.totalorder %s25, 1
      %p48 = por %p46, %p47
      %p50 = scmp.ne.s32.totalorder %s33, %s49
      %p51 = scmp.eq.s32.totalorder %s25, 0
      %p52 = por %p50, %p51
      %s54 = sadd.s32 %s53, 1
      %p57 = scmp.eq.s32.totalorder %s19, 1
      %p58 = scmp.ne.s32.totalorder %s53, %s55
      %p59 = scmp.eq.s32.totalorder %s19, 0
      %p60 = por %p58, %p59
      %p61 = scmp.ne.s32.totalorder %s53, %s55
      %p62 = scmp.eq.s32.totalorder %s24, 1
      %p63 = por %p61, %p62
      %p64 = scmp.ne.s32.totalorder %s55, %s56
      %p65 = scmp.eq.s32.totalorder %s24, 0
      %p66 = por %p64, %p65
      %p67 = scmp.ne.s32.totalorder %s55, %s56
      %p68 = scmp.eq.s32.totalorder %s25, 1
      %p69 = por %p67, %p68
      %p71 = scmp.ne.s32.totalorder %s56, %s70
      %p72 = scmp.eq.s32.totalorder %s25, 0
      %p73 = por %p71, %p72
      %s75 = sadd.s32 %s74, 1
      %p78 = scmp.eq.s32.totalorder %s19, 1
      %p79 = scmp.ne.s32.totalorder %s74, %s76
      %p80 = scmp.eq.s32.totalorder %s19, 0
      %p81 = por %p79, %p80
      %p82 = scmp.ne.s32.totalorder %s74, %s76
      %p83 = scmp.eq.s32.totalorder %s24, 1
      %p84 = por %p82, %p83
      %p85 = scmp.ne.s32.totalorder %s76, %s77
      %p86 = scmp.eq.s32.totalorder %s24, 0
      %p87 = por %p85, %p86
      %p88 = scmp.ne.s32.totalorder %s76, %s77
      %p89 = scmp.eq.s32.totalorder %s25, 1
      %p90 = por %p88, %p89
      %p92 = scmp.ne.s32.totalorder %s77, %s91
      %p93 = scmp.eq.s32.totalorder %s25, 0
      %p94 = por %p92, %p93
      %s96 = sadd.s32 %s95, 1
      %p99 = scmp.eq.s32.totalorder %s19, 1
      %p100 = scmp.ne.s32.totalorder %s95, %s97
      %p101 = scmp.eq.s32.totalorder %s19, 0
      %p102 = por %p100, %p101
      %p103 = scmp.ne.s32.totalorder %s95, %s97
      %p104 = scmp.eq.s32.totalorder %s24, 1
      %p105 = por %p103, %p104
      %p106 = scmp.ne.s32.totalorder %s97, %s98
      %p107 = scmp.eq.s32.totalorder %s24, 0
      %p108 = por %p106, %p107
      %p109 = scmp.ne.s32.totalorder %s97, %s98
      %p110 = scmp.eq.s32.totalorder %s25, 1
      %p111 = por %p109, %p110
      %p113 = scmp.ne.s32.totalorder %s98, %s112
      %p114 = scmp.eq.s32.totalorder %s25, 0
      %p115 = por %p113, %p114
      %s117 = sadd.s32 %s116, 1
      %p120 = scmp.eq.s32.totalorder %s19, 1
      %p121 = scmp.ne.s32.totalorder %s116, %s118
      %p122 = scmp.eq.s32.totalorder %s19, 0
      %p123 = por %p121, %p122
      %p124 = scmp.ne.s32.totalorder %s116, %s118
      %p125 = scmp.eq.s32.totalorder %s24, 1
      %p126 = por %p124, %p125
      %p127 = scmp.ne.s32.totalorder %s118, %s119
      %p128 = scmp.eq.s32.totalorder %s24, 0
      %p129 = por %p127, %p128
      %p130 = scmp.ne.s32.totalorder %s118, %s119
      %p131 = scmp.eq.s32.totalorder %s25, 1
      %p132 = por %p130, %p131
      %p134 = scmp.ne.s32.totalorder %s119, %s133
      %p135 = scmp.eq.s32.totalorder %s25, 0
      %p136 = por %p134, %p135
      %s137 = ssub.s32 %s19, %s26
      %p138 = scmp.eq.s32.totalorder %s137, 0
      %s140 = sadd.s32 %s139, 1
      %s141 = scalar_select %p138, %s139, %s140
      %p144 = pneg %p138
      %p145 = scmp.eq.s32.totalorder %s19, 1
      %p146 = por %p144, %p145
      %p147 = scmp.ne.s32.totalorder %s139, %s142
      %p148 = scmp.eq.s32.totalorder %s19, 0
      %p149 = por %p147, %p148
      %p150 = scmp.ne.s32.totalorder %s139, %s142
      %p151 = scmp.eq.s32.totalorder %s24, 1
      %p152 = por %p150, %p151
      %p153 = scmp.ne.s32.totalorder %s142, %s143
      %p154 = scmp.eq.s32.totalorder %s24, 0
      %p155 = por %p153, %p154
      %p156 = scmp.ne.s32.totalorder %s142, %s143
      %p157 = scmp.eq.s32.totalorder %s25, 1
      %p158 = por %p156, %p157
      %p160 = scmp.ne.s32.totalorder %s143, %s159
      %p161 = scmp.eq.s32.totalorder %s25, 0
      %p162 = por %p160, %p161
      %p163 = scmp.le.s32.totalorder 1, %s19
      %p164 = scmp.lt.s32.totalorder %s19, 3
      %p165 = pnand %p163, %p164
      %p166 = pneg %p165
      // Predicated region
      $region9: #{forward.2} parent=5 // pred_check
        _
      $region10: #{forward.2} parent=5 // pred_check_branch
        %168 = sbr.rel (%p165) target = $region12
      $region11: #{forward.2} parent=5 // pred_region
        %s169 = ssub.s32 %s19, 1
        // Predicated region
        $region13: #{forward.2} parent=11 // pred_check
          %p170 = pneg %p66
        $region14: #{forward.2} parent=11 // pred_check_branch
          %172 = sbr.rel (%p170) target = $region16
        $region15: #{forward.2} parent=11 // pred_region
          %s174 = ssub.s32 27648, 27648
          %175 = vsyncadd [#allocation6], %s174
          %s176 = sshll.u32 [#allocation5], 4
          %s177 = int_to_ptr.vmem [resolvable:$true] %s176
          %182 = dma.hbm_to_vmem [thread:$0]  %s1, 27648, %s177, [#allocation6], 64, 64, 4
        $region16: #{forward.2} parent=11 // pred_fallthru
          _
        // Predicated region
        $region17: #{forward.2} parent=11 // pred_check
          %p183 = pneg %p87
        $region18: #{forward.2} parent=11 // pred_check_branch
          %185 = sbr.rel (%p183) target = $region20
        $region19: #{forward.2} parent=11 // pred_region
          %s187 = ssub.s32 48, 48
          %188 = vsyncadd [#allocation6], %s187
          %s189 = sshll.u32 [#allocation7], 4
          %s190 = int_to_ptr.vmem [resolvable:$true] %s189
          %195 = dma.hbm_to_vmem [thread:$0]  %s2, 48, %s190, [#allocation6], 16, 16, 1
        $region20: #{forward.2} parent=11 // pred_fallthru
          _
        // Predicated region
        $region21: #{forward.2} parent=11 // pred_check
          %p196 = pneg %p108
        $region22: #{forward.2} parent=11 // pred_check_branch
          %198 = sbr.rel (%p196) target = $region24
        $region23: #{forward.2} parent=11 // pred_region
          %s200 = ssub.s32 9216, 9216
          %201 = vsyncadd [#allocation9], %s200
          %s202 = sshll.u32 [#allocation8], 4
          %s203 = int_to_ptr.vmem [resolvable:$true] %s202
          %208 = dma.hbm_to_vmem [thread:$0]  %s3, 9216, %s203, [#allocation9], 64, 64, 4
        $region24: #{forward.2} parent=11 // pred_fallthru
          _
        // Predicated region
        $region25: #{forward.2} parent=11 // pred_check
          %p209 = pneg %p129
        $region26: #{forward.2} parent=11 // pred_check_branch
          %211 = sbr.rel (%p209) target = $region28
        $region27: #{forward.2} parent=11 // pred_region
          %s213 = ssub.s32 16, 16
          %214 = vsyncadd [#allocation9], %s213
          %s216 = sshll.u32 [#allocation10], 4
          %s217 = int_to_ptr.vmem [resolvable:$true] %s216
          %219 = dma.hbm_to_vmem [thread:$0]  %s4, 16, %s217, [#allocation9]
        $region28: #{forward.2} parent=11 // pred_fallthru
          _
      $region12: #{forward.2} parent=5 // pred_fallthru
        _
      %p220 = scmp.lt.s32.totalorder %s19, 2
      // Predicated region
      $region29: #{forward.2} parent=5 // pred_check
        %p221 = pneg %p220
      $region30: #{forward.2} parent=5 // pred_check_branch
        %223 = sbr.rel (%p221) target = $region32
      $region31: #{forward.2} parent=5 // pred_region
        // Predicated region
        $region33: #{forward.2} parent=31 // pred_check
          %p224 = pneg %p39
        $region34: #{forward.2} parent=31 // pred_check_branch
          %226 = sbr.rel (%p224) target = $region36
        $region35: #{forward.2} parent=31 // pred_region
          %s227 = sand.u32 %s29, 1
          %s228 = scalar_lea.sflag [#allocation3], %s227
          %s229 = sand.u32 %s29, 1
          %s230 = smul.addr %s229, 32
          %s231 = scalar_lea.vmem [#allocation2], %s230
          %s233 = ssub.s32 512, 512
          %234 = vsyncadd %s228, %s233
          %s235 = smul.addr %s19, 8
          %s236 = smul.addr %s235, 64
          %s237 = scalar_lea.hbm %s0, %s236
          %s238 = sshll.u32 %s231, 4
          %s239 = int_to_ptr.vmem [resolvable:$true] %s238
          %244 = dma.hbm_to_vmem [thread:$0]  %s237, 512, %s239, %s228, 64, 64, 4
        $region36: #{forward.2} parent=31 // pred_fallthru
          _
      $region32: #{forward.2} parent=5 // pred_fallthru
        _
      %p245 = scmp.le.s32.totalorder 1, %s19
      %p246 = scmp.lt.s32.totalorder %s19, 3
      %p247 = pnand %p245, %p246
      %p248 = pneg %p247
      // Predicated region
      $region37: #{forward.2} parent=5 // pred_check
        _
      $region38: #{forward.2} parent=5 // pred_check_branch
        %250 = sbr.rel (%p247) target = $region40
      $region39: #{forward.2} parent=5 // pred_region
        %s251 = ssub.s32 %s19, 1
        %s252 = sand.u32 %s32, 1
        %s253 = scalar_lea.sflag [#allocation3], %s252
        %s254 = sand.u32 %s32, 1
        %s255 = smul.addr %s254, 32
        %s256 = scalar_lea.vmem [#allocation2], %s255
        // Predicated region
        $region41: #{forward.2} parent=39 // pred_check
          %p257 = pneg %p45
        $region42: #{forward.2} parent=39 // pred_check_branch
          %259 = sbr.rel (%p257) target = $region44
        $region43: #{forward.2} parent=39 // pred_region
          %260 = dma.done %s253, 512
        $region44: #{forward.2} parent=39 // pred_fallthru
          _
        // Predicated region
        $region45: #{forward.2} parent=39 // pred_check
          %p261 = pneg %p66
        $region46: #{forward.2} parent=39 // pred_check_branch
          %263 = sbr.rel (%p261) target = $region48
        $region47: #{forward.2} parent=39 // pred_region
          %264 = dma.done [#allocation6], 27648
        $region48: #{forward.2} parent=39 // pred_fallthru
          _
        // Predicated region
        $region49: #{forward.2} parent=39 // pred_check
          %p265 = pneg %p87
        $region50: #{forward.2} parent=39 // pred_check_branch
          %267 = sbr.rel (%p265) target = $region52
        $region51: #{forward.2} parent=39 // pred_region
          %268 = dma.done [#allocation6], 48
        $region52: #{forward.2} parent=39 // pred_fallthru
          _
        // Predicated region
        $region53: #{forward.2} parent=39 // pred_check
          %p269 = pneg %p108
        $region54: #{forward.2} parent=39 // pred_check_branch
          %271 = sbr.rel (%p269) target = $region56
        $region55: #{forward.2} parent=39 // pred_region
          %272 = dma.done [#allocation9], 9216
        $region56: #{forward.2} parent=39 // pred_fallthru
          _
        // Predicated region
        $region57: #{forward.2} parent=39 // pred_check
          %p273 = pneg %p129
        $region58: #{forward.2} parent=39 // pred_check_branch
          %275 = sbr.rel (%p273) target = $region60
        $region59: #{forward.2} parent=39 // pred_region
          %276 = dma.done [#allocation9], 16
        $region60: #{forward.2} parent=39 // pred_fallthru
          _
        %s277 = sand.u32 %s32, 1
        %s278 = scalar_lea.sflag [#allocation3], %s277
        %s279 = sand.u32 %s32, 1
        %s280 = smul.addr %s279, 32
        %s281 = scalar_lea.vmem [#allocation2], %s280
        %p282 = pneg %p45
        %p283 = pneg %p42
        %p284 = pneg %p66
        %p285 = pneg %p63
        %p286 = pneg %p87
        %p287 = pneg %p84
        %p288 = pneg %p108
        %p289 = pneg %p105
        %p290 = pneg %p129
        %p291 = pneg %p126
        %p292 = pneg %p155
        %p293 = pneg %p152
        %s294 = sand.u32 %s142, 1
        %s295 = scalar_lea.sflag [#allocation4], %s294
        %s296 = sand.u32 %s142, 1
        %s297 = smul.addr %s296, 128
        %s298 = scalar_lea.vmem [#allocation11], %s297
        %v302 = vld [vmem:[%s256] sm:$0xf]
        %v303 = vld [vmem:[%s256 + $0x4] sm:$0xf]
        %v304 = vld [vmem:[%s256 + $0x8] sm:$0xf]
        %v305 = vld [vmem:[%s256 + $0xc] sm:$0xf]
        %v306 = vld [vmem:[%s256 + $0x10] sm:$0xf]
        %v307 = vld [vmem:[%s256 + $0x14] sm:$0xf]
        %v308 = vld [vmem:[%s256 + $0x18] sm:$0xf]
        %v309 = vld [vmem:[%s256 + $0x1c] sm:$0xf]
        %v310 = vlaneseq
        %v311 = vshrl.u32 %v310, 7
        %v312 = vadd.s32 %v311, 8
        %v313 = vadd.s32 %v311, 16
        %v314 = vadd.s32 %v311, 24
        %v315 = vadd.s32 %v311, 32
        %v316 = vadd.s32 %v311, 40
        %v317 = vadd.s32 %v311, 48
        %v318 = vadd.s32 %v311, 56
        %v319 = vadd.s32 %v311, 64
        %v320 = vadd.s32 %v311, 72
        %vm321 = vcmp.lt.s32.totalorder %v311, 0
        %v322 = vsub.s32 0, %v311
        %v323 = vsel %vm321, %v322, %v311
        %v324 = vshrl.u32 %v323, 3
        %v325 = vand.u32 %v323, 7
        %v326 = vsub.s32 0, %v325
        %v327 = vsel %vm321, %v326, %v325
        %vm328 = vcmp.lt.s32.totalorder %v312, 0
        %v329 = vsub.s32 0, %v312
        %v330 = vsel %vm328, %v329, %v312
        %v331 = vshrl.u32 %v330, 3
        %v332 = vand.u32 %v330, 7
        %v333 = vsub.s32 0, %v332
        %v334 = vsel %vm328, %v333, %v332
        %vm335 = vcmp.lt.s32.totalorder %v313, 0
        %v336 = vsub.s32 0, %v313
        %v337 = vsel %vm335, %v336, %v313
        %v338 = vshrl.u32 %v337, 3
        %v339 = vand.u32 %v337, 7
        %v340 = vsub.s32 0, %v339
        %v341 = vsel %vm335, %v340, %v339
        %vm342 = vcmp.lt.s32.totalorder %v314, 0
        %v343 = vsub.s32 0, %v314
        %v344 = vsel %vm342, %v343, %v314
        %v345 = vshrl.u32 %v344, 3
        %v346 = vand.u32 %v344, 7
        %v347 = vsub.s32 0, %v346
        %v348 = vsel %vm342, %v347, %v346
        %vm349 = vcmp.lt.s32.totalorder %v315, 0
        %v350 = vsub.s32 0, %v315
        %v351 = vsel %vm349, %v350, %v315
        %v352 = vshrl.u32 %v351, 3
        %v353 = vand.u32 %v351, 7
        %v354 = vsub.s32 0, %v353
        %v355 = vsel %vm349, %v354, %v353
        %vm356 = vcmp.lt.s32.totalorder %v316, 0
        %v357 = vsub.s32 0, %v316
        %v358 = vsel %vm356, %v357, %v316
        %v359 = vshrl.u32 %v358, 3
        %v360 = vand.u32 %v358, 7
        %v361 = vsub.s32 0, %v360
        %v362 = vsel %vm356, %v361, %v360
        %vm363 = vcmp.lt.s32.totalorder %v317, 0
        %v364 = vsub.s32 0, %v317
        %v365 = vsel %vm363, %v364, %v317
        %v366 = vshrl.u32 %v365, 3
        %v367 = vand.u32 %v365, 7
        %v368 = vsub.s32 0, %v367
        %v369 = vsel %vm363, %v368, %v367
        %vm370 = vcmp.lt.s32.totalorder %v318, 0
        %v371 = vsub.s32 0, %v318
        %v372 = vsel %vm370, %v371, %v318
        %v373 = vshrl.u32 %v372, 3
        %v374 = vand.u32 %v372, 7
        %v375 = vsub.s32 0, %v374
        %v376 = vsel %vm370, %v375, %v374
        %vm377 = vcmp.lt.s32.totalorder %v319, 0
        %v378 = vsub.s32 0, %v319
        %v379 = vsel %vm377, %v378, %v319
        %v380 = vshrl.u32 %v379, 3
        %v381 = vand.u32 %v379, 7
        %v382 = vsub.s32 0, %v381
        %v383 = vsel %vm377, %v382, %v381
        %vm384 = vcmp.lt.s32.totalorder %v320, 0
        %v385 = vsub.s32 0, %v320
        %v386 = vsel %vm384, %v385, %v320
        %v387 = vshrl.u32 %v386, 3
        %v388 = vand.u32 %v386, 7
        %v389 = vsub.s32 0, %v388
        %v390 = vsel %vm384, %v389, %v388
        %vm391 = vcmp.ne.s32.totalorder %v327, 0
        %vm392 = vcmp.ne.s32.totalorder %v334, 0
        %vm393 = vcmp.ne.s32.totalorder %v341, 0
        %vm394 = vcmp.ne.s32.totalorder %v348, 0
        %vm395 = vcmp.ne.s32.totalorder %v355, 0
        %vm396 = vcmp.ne.s32.totalorder %v362, 0
        %vm397 = vcmp.ne.s32.totalorder %v369, 0
        %vm398 = vcmp.ne.s32.totalorder %v376, 0
        %vm399 = vcmp.ne.s32.totalorder %v383, 0
        %vm400 = vcmp.ne.s32.totalorder %v390, 0
        %vm401 = vcmp.lt.s32.totalorder %v327, 0
        %vm402 = vcmp.lt.s32.totalorder %v334, 0
        %vm403 = vcmp.lt.s32.totalorder %v341, 0
        %vm404 = vcmp.lt.s32.totalorder %v348, 0
        %vm405 = vcmp.lt.s32.totalorder %v355, 0
        %vm406 = vcmp.lt.s32.totalorder %v362, 0
        %vm407 = vcmp.lt.s32.totalorder %v369, 0
        %vm408 = vcmp.lt.s32.totalorder %v376, 0
        %vm409 = vcmp.lt.s32.totalorder %v383, 0
        %vm410 = vcmp.lt.s32.totalorder %v390, 0
        %vm411 = vmand %vm401, %vm391
        %vm412 = vmand %vm402, %vm392
        %vm413 = vmand %vm403, %vm393
        %vm414 = vmand %vm404, %vm394
        %vm415 = vmand %vm405, %vm395
        %vm416 = vmand %vm406, %vm396
        %vm417 = vmand %vm407, %vm397
        %vm418 = vmand %vm408, %vm398
        %vm419 = vmand %vm409, %vm399
        %vm420 = vmand %vm410, %vm400
        %v421 = vadd.s32 %v327, 8
        %v422 = vadd.s32 %v334, 8
        %v423 = vadd.s32 %v341, 8
        %v424 = vadd.s32 %v348, 8
        %v425 = vadd.s32 %v355, 8
        %v426 = vadd.s32 %v362, 8
        %v427 = vadd.s32 %v369, 8
        %v428 = vadd.s32 %v376, 8
        %v429 = vadd.s32 %v383, 8
        %v430 = vadd.s32 %v390, 8
        %v431 = vsel %vm411, %v421, %v327
        %v432 = vsel %vm412, %v422, %v334
        %v433 = vsel %vm413, %v423, %v341
        %v434 = vsel %vm414, %v424, %v348
        %v435 = vsel %vm415, %v425, %v355
        %v436 = vsel %vm416, %v426, %v362
        %v437 = vsel %vm417, %v427, %v369
        %v438 = vsel %vm418, %v428, %v376
        %v439 = vsel %vm419, %v429, %v383
        %v440 = vsel %vm420, %v430, %v390
        %vm441 = vcmp.gt.s32.totalorder %v431, 0
        %vm442 = vcmp.gt.s32.totalorder %v432, 0
        %vm443 = vcmp.gt.s32.totalorder %v433, 0
        %vm444 = vcmp.gt.s32.totalorder %v434, 0
        %vm445 = vcmp.gt.s32.totalorder %v435, 0
        %vm446 = vcmp.gt.s32.totalorder %v436, 0
        %vm447 = vcmp.gt.s32.totalorder %v437, 0
        %vm448 = vcmp.gt.s32.totalorder %v438, 0
        %vm449 = vcmp.gt.s32.totalorder %v439, 0
        %vm450 = vcmp.gt.s32.totalorder %v440, 0
        %vm451 = vcmp.lt.s32.totalorder %v431, 7
        %vm452 = vcmp.lt.s32.totalorder %v432, 7
        %vm453 = vcmp.lt.s32.totalorder %v433, 7
        %vm454 = vcmp.lt.s32.totalorder %v434, 7
        %vm455 = vcmp.lt.s32.totalorder %v435, 7
        %vm456 = vcmp.lt.s32.totalorder %v436, 7
        %vm457 = vcmp.lt.s32.totalorder %v437, 7
        %vm458 = vcmp.lt.s32.totalorder %v438, 7
        %vm459 = vcmp.lt.s32.totalorder %v439, 7
        %vm460 = vcmp.lt.s32.totalorder %v440, 7
        %v461 = vld [vmem:[#allocation5] sm:$0xf]
        %v462 = vld [vmem:[#allocation5 + $0x4] sm:$0xf]
        %v463 = vld [vmem:[#allocation5 + $0x8] sm:$0xf]
        %v464 = vld [vmem:[#allocation5 + $0xc] sm:$0xf]
        %v465 = vld [vmem:[#allocation5 + $0x10] sm:$0xf]
        %v466 = vld [vmem:[#allocation5 + $0x14] sm:$0xf]
        %v467 = vld [vmem:[#allocation5 + $0x18] sm:$0xf]
        %v468 = vld [vmem:[#allocation5 + $0x1c] sm:$0xf]
        %v469 = vld [vmem:[#allocation5 + $0x20] sm:$0xf]
        %v470 = vld [vmem:[#allocation5 + $0x24] sm:$0xf]
        %v471 = vld [vmem:[#allocation5 + $0x28] sm:$0xf]
        %v472 = vld [vmem:[#allocation5 + $0x2c] sm:$0xf]
        %v473 = vld [vmem:[#allocation5 + $0x30] sm:$0xf]
        %v474 = vld [vmem:[#allocation5 + $0x34] sm:$0xf]
        %v475 = vld [vmem:[#allocation5 + $0x38] sm:$0xf]
        %v476 = vld [vmem:[#allocation5 + $0x3c] sm:$0xf]
        %v477 = vld [vmem:[#allocation5 + $0x40] sm:$0xf]
        %v478 = vld [vmem:[#allocation5 + $0x44] sm:$0xf]
        %v479 = vld [vmem:[#allocation5 + $0x48] sm:$0xf]
        %v480 = vld [vmem:[#allocation5 + $0x4c] sm:$0xf]
        %v481 = vld [vmem:[#allocation5 + $0x50] sm:$0xf]
        %v482 = vld [vmem:[#allocation5 + $0x54] sm:$0xf]
        %v483 = vld [vmem:[#allocation5 + $0x58] sm:$0xf]
        %v484 = vld [vmem:[#allocation5 + $0x5c] sm:$0xf]
        %v485 = vld [vmem:[#allocation5 + $0x60] sm:$0xf]
        %v486 = vld [vmem:[#allocation5 + $0x64] sm:$0xf]
        %v487 = vld [vmem:[#allocation5 + $0x68] sm:$0xf]
        %v488 = vld [vmem:[#allocation5 + $0x6c] sm:$0xf]
        %v489 = vld [vmem:[#allocation5 + $0x70] sm:$0xf]
        %v490 = vld [vmem:[#allocation5 + $0x74] sm:$0xf]
        %v491 = vld [vmem:[#allocation5 + $0x78] sm:$0xf]
        %v492 = vld [vmem:[#allocation5 + $0x7c] sm:$0xf]
        %v493 = vld [vmem:[#allocation5 + $0x80] sm:$0xf]
        %v494 = vld [vmem:[#allocation5 + $0x84] sm:$0xf]
        %v495 = vld [vmem:[#allocation5 + $0x88] sm:$0xf]
        %v496 = vld [vmem:[#allocation5 + $0x8c] sm:$0xf]
        %v497 = vld [vmem:[#allocation5 + $0x90] sm:$0xf]
        %v498 = vld [vmem:[#allocation5 + $0x94] sm:$0xf]
        %v499 = vld [vmem:[#allocation5 + $0x98] sm:$0xf]
        %v500 = vld [vmem:[#allocation5 + $0x9c] sm:$0xf]
        %v501 = vld [vmem:[#allocation5 + $0xa0] sm:$0xf]
        %v502 = vld [vmem:[#allocation5 + $0xa4] sm:$0xf]
        %v503 = vld [vmem:[#allocation5 + $0xa8] sm:$0xf]
        %v504 = vld [vmem:[#allocation5 + $0xac] sm:$0xf]
        %v505 = vld [vmem:[#allocation5 + $0xb0] sm:$0xf]
        %v506 = vld [vmem:[#allocation5 + $0xb4] sm:$0xf]
        %v507 = vld [vmem:[#allocation5 + $0xb8] sm:$0xf]
        %v508 = vld [vmem:[#allocation5 + $0xbc] sm:$0xf]
        %v509 = vld [vmem:[#allocation5 + $0xc0] sm:$0xf]
        %v510 = vld [vmem:[#allocation5 + $0xc4] sm:$0xf]
        %v511 = vld [vmem:[#allocation5 + $0xc8] sm:$0xf]
        %v512 = vld [vmem:[#allocation5 + $0xcc] sm:$0xf]
        %v513 = vld [vmem:[#allocation5 + $0xd0] sm:$0xf]
        %v514 = vld [vmem:[#allocation5 + $0xd4] sm:$0xf]
        %v515 = vld [vmem:[#allocation5 + $0xd8] sm:$0xf]
        %v516 = vld [vmem:[#allocation5 + $0xdc] sm:$0xf]
        %v517 = vld [vmem:[#allocation5 + $0xe0] sm:$0xf]
        %v518 = vld [vmem:[#allocation5 + $0xe4] sm:$0xf]
        %v519 = vld [vmem:[#allocation5 + $0xe8] sm:$0xf]
        %v520 = vld [vmem:[#allocation5 + $0xec] sm:$0xf]
        %v521 = vld [vmem:[#allocation5 + $0xf0] sm:$0xf]
        %v522 = vld [vmem:[#allocation5 + $0xf4] sm:$0xf]
        %v523 = vld [vmem:[#allocation5 + $0xf8] sm:$0xf]
        %v524 = vld [vmem:[#allocation5 + $0xfc] sm:$0xf]
        %v525 = vld [vmem:[#allocation5 + $0x100] sm:$0xf]
        %v526 = vld [vmem:[#allocation5 + $0x104] sm:$0xf]
        %v527 = vld [vmem:[#allocation5 + $0x108] sm:$0xf]
        %v528 = vld [vmem:[#allocation5 + $0x10c] sm:$0xf]
        %v529 = vld [vmem:[#allocation5 + $0x110] sm:$0xf]
        %v530 = vld [vmem:[#allocation5 + $0x114] sm:$0xf]
        %v531 = vld [vmem:[#allocation5 + $0x118] sm:$0xf]
        %v532 = vld [vmem:[#allocation5 + $0x11c] sm:$0xf]
        %v533 = vld [vmem:[#allocation5 + $0x120] sm:$0xf]
        %v534 = vld [vmem:[#allocation5 + $0x124] sm:$0xf]
        %v535 = vld [vmem:[#allocation5 + $0x128] sm:$0xf]
        %v536 = vld [vmem:[#allocation5 + $0x12c] sm:$0xf]
        %v537 = vld [vmem:[#allocation5 + $0x130] sm:$0xf]
        %v538 = vld [vmem:[#allocation5 + $0x134] sm:$0xf]
        %v539 = vld [vmem:[#allocation5 + $0x138] sm:$0xf]
        %v540 = vld [vmem:[#allocation5 + $0x13c] sm:$0xf]
        %v541 = vld [vmem:[#allocation5 + $0x140] sm:$0xf]
        %v542 = vld [vmem:[#allocation5 + $0x144] sm:$0xf]
        %v543 = vld [vmem:[#allocation5 + $0x148] sm:$0xf]
        %v544 = vld [vmem:[#allocation5 + $0x14c] sm:$0xf]
        %v545 = vld [vmem:[#allocation5 + $0x150] sm:$0xf]
        %v546 = vld [vmem:[#allocation5 + $0x154] sm:$0xf]
        %v547 = vld [vmem:[#allocation5 + $0x158] sm:$0xf]
        %v548 = vld [vmem:[#allocation5 + $0x15c] sm:$0xf]
        %v549 = vld [vmem:[#allocation5 + $0x160] sm:$0xf]
        %v550 = vld [vmem:[#allocation5 + $0x164] sm:$0xf]
        %v551 = vld [vmem:[#allocation5 + $0x168] sm:$0xf]
        %v552 = vld [vmem:[#allocation5 + $0x16c] sm:$0xf]
        %v553 = vld [vmem:[#allocation5 + $0x170] sm:$0xf]
        %v554 = vld [vmem:[#allocation5 + $0x174] sm:$0xf]
        %v555 = vld [vmem:[#allocation5 + $0x178] sm:$0xf]
        %v556 = vld [vmem:[#allocation5 + $0x17c] sm:$0xf]
        %v557 = vld [vmem:[#allocation5 + $0x180] sm:$0xf]
        %v558 = vld [vmem:[#allocation5 + $0x184] sm:$0xf]
        %v559 = vld [vmem:[#allocation5 + $0x188] sm:$0xf]
        %v560 = vld [vmem:[#allocation5 + $0x18c] sm:$0xf]
        %v561 = vld [vmem:[#allocation5 + $0x190] sm:$0xf]
        %v562 = vld [vmem:[#allocation5 + $0x194] sm:$0xf]
        %v563 = vld [vmem:[#allocation5 + $0x198] sm:$0xf]
        %v564 = vld [vmem:[#allocation5 + $0x19c] sm:$0xf]
        %v565 = vld [vmem:[#allocation5 + $0x1a0] sm:$0xf]
        %v566 = vld [vmem:[#allocation5 + $0x1a4] sm:$0xf]
        %v567 = vld [vmem:[#allocation5 + $0x1a8] sm:$0xf]
        %v568 = vld [vmem:[#allocation5 + $0x1ac] sm:$0xf]
        %v569 = vld [vmem:[#allocation5 + $0x1b0] sm:$0xf]
        %v570 = vld [vmem:[#allocation5 + $0x1b4] sm:$0xf]
        %v571 = vld [vmem:[#allocation5 + $0x1b8] sm:$0xf]
        %v572 = vld [vmem:[#allocation5 + $0x1bc] sm:$0xf]
        %v573 = vld [vmem:[#allocation5 + $0x1c0] sm:$0xf]
        %v574 = vld [vmem:[#allocation5 + $0x1c4] sm:$0xf]
        %v575 = vld [vmem:[#allocation5 + $0x1c8] sm:$0xf]
        %v576 = vld [vmem:[#allocation5 + $0x1cc] sm:$0xf]
        %v577 = vld [vmem:[#allocation5 + $0x1d0] sm:$0xf]
        %v578 = vld [vmem:[#allocation5 + $0x1d4] sm:$0xf]
        %v579 = vld [vmem:[#allocation5 + $0x1d8] sm:$0xf]
        %v580 = vld [vmem:[#allocation5 + $0x1dc] sm:$0xf]
        %v581 = vld [vmem:[#allocation5 + $0x1e0] sm:$0xf]
        %v582 = vld [vmem:[#allocation5 + $0x1e4] sm:$0xf]
        %v583 = vld [vmem:[#allocation5 + $0x1e8] sm:$0xf]
        %v584 = vld [vmem:[#allocation5 + $0x1ec] sm:$0xf]
        %v585 = vld [vmem:[#allocation5 + $0x1f0] sm:$0xf]
        %v586 = vld [vmem:[#allocation5 + $0x1f4] sm:$0xf]
        %v587 = vld [vmem:[#allocation5 + $0x1f8] sm:$0xf]
        %v588 = vld [vmem:[#allocation5 + $0x1fc] sm:$0xf]
        %v589 = vld [vmem:[#allocation5 + $0x200] sm:$0xf]
        %v590 = vld [vmem:[#allocation5 + $0x204] sm:$0xf]
        %v591 = vld [vmem:[#allocation5 + $0x208] sm:$0xf]
        %v592 = vld [vmem:[#allocation5 + $0x20c] sm:$0xf]
        %v593 = vld [vmem:[#allocation5 + $0x210] sm:$0xf]
        %v594 = vld [vmem:[#allocation5 + $0x214] sm:$0xf]
        %v595 = vld [vmem:[#allocation5 + $0x218] sm:$0xf]
        %v596 = vld [vmem:[#allocation5 + $0x21c] sm:$0xf]
        %v597 = vld [vmem:[#allocation5 + $0x220] sm:$0xf]
        %v598 = vld [vmem:[#allocation5 + $0x224] sm:$0xf]
        %v599 = vld [vmem:[#allocation5 + $0x228] sm:$0xf]
        %v600 = vld [vmem:[#allocation5 + $0x22c] sm:$0xf]
        %v601 = vld [vmem:[#allocation5 + $0x230] sm:$0xf]
        %v602 = vld [vmem:[#allocation5 + $0x234] sm:$0xf]
        %v603 = vld [vmem:[#allocation5 + $0x238] sm:$0xf]
        %v604 = vld [vmem:[#allocation5 + $0x23c] sm:$0xf]
        %v605 = vld [vmem:[#allocation7] sm:$0x1]
        %v614 = vunpack.c.l.b16 %v302
        %v615 = vunpack.c.l.b16 %v303
        %v616 = vunpack.c.l.b16 %v304
        %v617 = vunpack.c.l.b16 %v305
        %v618 = vunpack.c.l.b16 %v306
        %v619 = vunpack.c.l.b16 %v307
        %v620 = vunpack.c.l.b16 %v308
        %v621 = vunpack.c.l.b16 %v309
        %v622 = vpack.c.b16 %v614, %v614
        %v623 = vpack.c.b16 %v616, %v615
        %v624 = vpack.c.b16 %v618, %v617
        %v625 = vpack.c.b16 %v620, %v619
        %v626 = vpack.c.b16 %v621, %v621
        %vm630 = vcmask 1043456
        %v633 = vsel %vm630, 0, %v622
        %v636 = vsel %vm630, %v626, 0
        %vm638 = vsmask.f32 256
        %v639 = vshrl.u32 %v633, 16
        %v641 = vrot.slane %v639, 7
        %v642 = vshll.u32 %v633, 16
        %v644 = vor.u32 %v641, %v642
        %v646 = vshrl.u32 %v623, 16
        %v648 = vrot.slane %v646, 7
        %v649 = vshll.u32 %v623, 16
        %v651 = vor.u32 %v648, %v649
        %v652 = vsel %vm638, %v641, %v651
        %v654 = vshrl.u32 %v624, 16
        %v656 = vrot.slane %v654, 7
        %v657 = vshll.u32 %v624, 16
        %v659 = vor.u32 %v656, %v657
        %v660 = vsel %vm638, %v648, %v659
        %v662 = vshrl.u32 %v625, 16
        %v664 = vrot.slane %v662, 7
        %v665 = vshll.u32 %v625, 16
        %v667 = vor.u32 %v664, %v665
        %v668 = vsel %vm638, %v656, %v667
        %v669 = vshrl.u32 %v636, 16
        %v671 = vrot.slane %v669, 7
        %v672 = vshll.u32 %v636, 16
        %v674 = vor.u32 %v671, %v672
        %v675 = vsel %vm638, %v664, %v674
        %vm681 = vcmask 1040384
        %vm682 = vmand %vm681, %vm638
        %v683 = vsel %vm682, 0, %v644
        %vm684 = vmpackc.low %vm441, %vm441
        %vm685 = vmpackc.low %vm442, %vm442
        %vm686 = vmpackc.low %vm443, %vm443
        %vm687 = vmpackc.low %vm444, %vm444
        %vm688 = vmpackc.low %vm445, %vm445
        %vm689 = vmpackc.low %vm446, %vm446
        %vm690 = vmpackc.low %vm447, %vm447
        %vm691 = vmpackc.low %vm448, %vm448
        %vm692 = vmpackc.low %vm449, %vm449
        %vm693 = vmpackc.low %vm450, %vm450
        %v694 = vsel %vm684, 65537, 0
        %v695 = vsel %vm685, 65537, 0
        %v696 = vsel %vm686, 65537, 0
        %v697 = vsel %vm687, 65537, 0
        %v698 = vsel %vm688, 65537, 0
        %v699 = vsel %vm689, 65537, 0
        %v700 = vsel %vm690, 65537, 0
        %v701 = vsel %vm691, 65537, 0
        %v702 = vsel %vm692, 65537, 0
        %v703 = vsel %vm693, 65537, 0
        %v704 = vunpack.c.l.b16 %v694
        %v705 = vunpack.c.l.b16 %v695
        %v706 = vunpack.c.l.b16 %v696
        %v707 = vunpack.c.l.b16 %v697
        %v708 = vunpack.c.l.b16 %v698
        %v709 = vunpack.c.l.b16 %v699
        %v710 = vunpack.c.l.b16 %v700
        %v711 = vunpack.c.l.b16 %v701
        %v712 = vunpack.c.l.b16 %v702
        %v713 = vunpack.c.l.b16 %v703
        %v714 = vpack.c.b16 %v705, %v704
        %v715 = vpack.c.b16 %v707, %v706
        %v716 = vpack.c.b16 %v709, %v708
        %v717 = vpack.c.b16 %v711, %v710
        %v718 = vpack.c.b16 %v713, %v712
        %vm719 = vcmp.ne.s16.totalorder %v714, 0
        %vm720 = vcmp.ne.s16.totalorder %v715, 0
        %vm721 = vcmp.ne.s16.totalorder %v716, 0
        %vm722 = vcmp.ne.s16.totalorder %v717, 0
        %vm723 = vcmp.ne.s16.totalorder %v718, 0
        %v724 = vsel %vm719, %v683, 0
        %v725 = vsel %vm720, %v652, 0
        %v726 = vsel %vm721, %v660, 0
        %v727 = vsel %vm722, %v668, 0
        %v728 = vsel %vm723, %v675, 0
        %vm729 = vsmask.f32 7424
        %v730 = vrot.slane %v642, 1
        %v731 = vor.u32 %v639, %v730
        %v732 = vrot.slane %v649, 1
        %v733 = vsel %vm729, %v731, %v732
        %v734 = vor.u32 %v646, %v732
        %v735 = vrot.slane %v657, 1
        %v736 = vsel %vm729, %v734, %v735
        %v737 = vor.u32 %v654, %v735
        %v738 = vrot.slane %v665, 1
        %v739 = vsel %vm729, %v737, %v738
        %v740 = vor.u32 %v662, %v738
        %v741 = vrot.slane %v672, 1
        %v742 = vsel %vm729, %v740, %v741
        %v743 = vor.u32 %v669, %v741
        %vm749 = vcmask 1047552
        %vm750 = vmand %vm749, %vm729
        %v751 = vsel %vm750, %v743, 0
        %vm752 = vmpackc.low %vm451, %vm451
        %vm753 = vmpackc.low %vm452, %vm452
        %vm754 = vmpackc.low %vm453, %vm453
        %vm755 = vmpackc.low %vm454, %vm454
        %vm756 = vmpackc.low %vm455, %vm455
        %vm757 = vmpackc.low %vm456, %vm456
        %vm758 = vmpackc.low %vm457, %vm457
        %vm759 = vmpackc.low %vm458, %vm458
        %vm760 = vmpackc.low %vm459, %vm459
        %vm761 = vmpackc.low %vm460, %vm460
        %v762 = vsel %vm752, 65537, 0
        %v763 = vsel %vm753, 65537, 0
        %v764 = vsel %vm754, 65537, 0
        %v765 = vsel %vm755, 65537, 0
        %v766 = vsel %vm756, 65537, 0
        %v767 = vsel %vm757, 65537, 0
        %v768 = vsel %vm758, 65537, 0
        %v769 = vsel %vm759, 65537, 0
        %v770 = vsel %vm760, 65537, 0
        %v771 = vsel %vm761, 65537, 0
        %v772 = vunpack.c.l.b16 %v762
        %v773 = vunpack.c.l.b16 %v763
        %v774 = vunpack.c.l.b16 %v764
        %v775 = vunpack.c.l.b16 %v765
        %v776 = vunpack.c.l.b16 %v766
        %v777 = vunpack.c.l.b16 %v767
        %v778 = vunpack.c.l.b16 %v768
        %v779 = vunpack.c.l.b16 %v769
        %v780 = vunpack.c.l.b16 %v770
        %v781 = vunpack.c.l.b16 %v771
        %v782 = vpack.c.b16 %v773, %v772
        %v783 = vpack.c.b16 %v775, %v774
        %v784 = vpack.c.b16 %v777, %v776
        %v785 = vpack.c.b16 %v779, %v778
        %v786 = vpack.c.b16 %v781, %v780
        %vm787 = vcmp.ne.s16.totalorder %v782, 0
        %vm788 = vcmp.ne.s16.totalorder %v783, 0
        %vm789 = vcmp.ne.s16.totalorder %v784, 0
        %vm790 = vcmp.ne.s16.totalorder %v785, 0
        %vm791 = vcmp.ne.s16.totalorder %v786, 0
        %v792 = vsel %vm787, %v733, 0
        %v793 = vsel %vm788, %v736, 0
        %v794 = vsel %vm789, %v739, 0
        %v795 = vsel %vm790, %v742, 0
        %v796 = vsel %vm791, %v751, 0
        %vm802 = vcmask 1043456
        %v803 = vrot.slane %v724, 4
        %v804 = vrot.slane %v725, 4
        %v805 = vsel %vm802, %v803, %v804
        %v806 = vrot.slane %v726, 4
        %v807 = vsel %vm802, %v804, %v806
        %v808 = vrot.slane %v727, 4
        %v809 = vsel %vm802, %v806, %v808
        %v810 = vrot.slane %v728, 4
        %v811 = vsel %vm802, %v808, %v810
        %v818 = vrot.slane %v633, 4
        %v819 = vrot.slane %v623, 4
        %v820 = vsel %vm802, %v818, %v819
        %v821 = vrot.slane %v624, 4
        %v822 = vsel %vm802, %v819, %v821
        %v823 = vrot.slane %v625, 4
        %v824 = vsel %vm802, %v821, %v823
        %v825 = vrot.slane %v636, 4
        %v826 = vsel %vm802, %v823, %v825
        %v836 = vrot.slane %v792, 4
        %v837 = vrot.slane %v793, 4
        %v838 = vsel %vm802, %v836, %v837
        %v839 = vrot.slane %v794, 4
        %v840 = vsel %vm802, %v837, %v839
        %v841 = vrot.slane %v795, 4
        %v842 = vsel %vm802, %v839, %v841
        %v843 = vrot.slane %v796, 4
        %v844 = vsel %vm802, %v841, %v843
        %v850 = vlaneseq
        %v851 = vshrl.u32 %v850, 7
        %v852 = vsub.s32 0, %v851
        %v853 = vrot.slane %v605, %v852
        %v999 = vunpack.c.l.b16 %v461
        %v1000 = vunpack.c.l.b16 %v462
        %v1001 = vunpack.c.l.b16 %v463
        %v1002 = vunpack.c.l.b16 %v464
        %v1003 = vunpack.c.l.b16 %v465
        %v1004 = vunpack.c.l.b16 %v466
        %v1005 = vunpack.c.l.b16 %v467
        %v1006 = vunpack.c.l.b16 %v468
        %v1007 = vunpack.c.l.b16 %v469
        %v1008 = vunpack.c.l.b16 %v470
        %v1009 = vunpack.c.l.b16 %v471
        %v1010 = vunpack.c.l.b16 %v472
        %v1011 = vunpack.c.l.b16 %v473
        %v1012 = vunpack.c.l.b16 %v474
        %v1013 = vunpack.c.l.b16 %v475
        %v1014 = vunpack.c.l.b16 %v476
        %v1015 = vunpack.c.l.b16 %v477
        %v1016 = vunpack.c.l.b16 %v478
        %v1017 = vunpack.c.l.b16 %v479
        %v1018 = vunpack.c.l.b16 %v480
        %v1019 = vunpack.c.l.b16 %v481
        %v1020 = vunpack.c.l.b16 %v482
        %v1021 = vunpack.c.l.b16 %v483
        %v1022 = vunpack.c.l.b16 %v484
        %v1023 = vunpack.c.l.b16 %v485
        %v1024 = vunpack.c.l.b16 %v486
        %v1025 = vunpack.c.l.b16 %v487
        %v1026 = vunpack.c.l.b16 %v488
        %v1027 = vunpack.c.l.b16 %v489
        %v1028 = vunpack.c.l.b16 %v490
        %v1029 = vunpack.c.l.b16 %v491
        %v1030 = vunpack.c.l.b16 %v492
        %v1031 = vunpack.c.l.b16 %v493
        %v1032 = vunpack.c.l.b16 %v494
        %v1033 = vunpack.c.l.b16 %v495
        %v1034 = vunpack.c.l.b16 %v496
        %v1035 = vunpack.c.l.b16 %v497
        %v1036 = vunpack.c.l.b16 %v498
        %v1037 = vunpack.c.l.b16 %v499
        %v1038 = vunpack.c.l.b16 %v500
        %v1039 = vunpack.c.l.b16 %v501
        %v1040 = vunpack.c.l.b16 %v502
        %v1041 = vunpack.c.l.b16 %v503
        %v1042 = vunpack.c.l.b16 %v504
        %v1043 = vunpack.c.l.b16 %v505
        %v1044 = vunpack.c.l.b16 %v506
        %v1045 = vunpack.c.l.b16 %v507
        %v1046 = vunpack.c.l.b16 %v508
        %v1047 = vunpack.c.l.b16 %v509
        %v1048 = vunpack.c.l.b16 %v510
        %v1049 = vunpack.c.l.b16 %v511
        %v1050 = vunpack.c.l.b16 %v512
        %v1051 = vunpack.c.l.b16 %v513
        %v1052 = vunpack.c.l.b16 %v514
        %v1053 = vunpack.c.l.b16 %v515
        %v1054 = vunpack.c.l.b16 %v516
        %v1055 = vunpack.c.l.b16 %v517
        %v1056 = vunpack.c.l.b16 %v518
        %v1057 = vunpack.c.l.b16 %v519
        %v1058 = vunpack.c.l.b16 %v520
        %v1059 = vunpack.c.l.b16 %v521
        %v1060 = vunpack.c.l.b16 %v522
        %v1061 = vunpack.c.l.b16 %v523
        %v1062 = vunpack.c.l.b16 %v524
        %v1063 = vunpack.c.l.b16 %v525
        %v1064 = vunpack.c.l.b16 %v526
        %v1065 = vunpack.c.l.b16 %v527
        %v1066 = vunpack.c.l.b16 %v528
        %v1067 = vunpack.c.l.b16 %v529
        %v1068 = vunpack.c.l.b16 %v530
        %v1069 = vunpack.c.l.b16 %v531
        %v1070 = vunpack.c.l.b16 %v532
        %v1071 = vunpack.c.l.b16 %v533
        %v1072 = vunpack.c.l.b16 %v534
        %v1073 = vunpack.c.l.b16 %v535
        %v1074 = vunpack.c.l.b16 %v536
        %v1075 = vunpack.c.l.b16 %v537
        %v1076 = vunpack.c.l.b16 %v538
        %v1077 = vunpack.c.l.b16 %v539
        %v1078 = vunpack.c.l.b16 %v540
        %v1079 = vunpack.c.l.b16 %v541
        %v1080 = vunpack.c.l.b16 %v542
        %v1081 = vunpack.c.l.b16 %v543
        %v1082 = vunpack.c.l.b16 %v544
        %v1083 = vunpack.c.l.b16 %v545
        %v1084 = vunpack.c.l.b16 %v546
        %v1085 = vunpack.c.l.b16 %v547
        %v1086 = vunpack.c.l.b16 %v548
        %v1087 = vunpack.c.l.b16 %v549
        %v1088 = vunpack.c.l.b16 %v550
        %v1089 = vunpack.c.l.b16 %v551
        %v1090 = vunpack.c.l.b16 %v552
        %v1091 = vunpack.c.l.b16 %v553
        %v1092 = vunpack.c.l.b16 %v554
        %v1093 = vunpack.c.l.b16 %v555
        %v1094 = vunpack.c.l.b16 %v556
        %v1095 = vunpack.c.l.b16 %v557
        %v1096 = vunpack.c.l.b16 %v558
        %v1097 = vunpack.c.l.b16 %v559
        %v1098 = vunpack.c.l.b16 %v560
        %v1099 = vunpack.c.l.b16 %v561
        %v1100 = vunpack.c.l.b16 %v562
        %v1101 = vunpack.c.l.b16 %v563
        %v1102 = vunpack.c.l.b16 %v564
        %v1103 = vunpack.c.l.b16 %v565
        %v1104 = vunpack.c.l.b16 %v566
        %v1105 = vunpack.c.l.b16 %v567
        %v1106 = vunpack.c.l.b16 %v568
        %v1107 = vunpack.c.l.b16 %v569
        %v1108 = vunpack.c.l.b16 %v570
        %v1109 = vunpack.c.l.b16 %v571
        %v1110 = vunpack.c.l.b16 %v572
        %v1111 = vunpack.c.l.b16 %v573
        %v1112 = vunpack.c.l.b16 %v574
        %v1113 = vunpack.c.l.b16 %v575
        %v1114 = vunpack.c.l.b16 %v576
        %v1115 = vunpack.c.l.b16 %v577
        %v1116 = vunpack.c.l.b16 %v578
        %v1117 = vunpack.c.l.b16 %v579
        %v1118 = vunpack.c.l.b16 %v580
        %v1119 = vunpack.c.l.b16 %v581
        %v1120 = vunpack.c.l.b16 %v582
        %v1121 = vunpack.c.l.b16 %v583
        %v1122 = vunpack.c.l.b16 %v584
        %v1123 = vunpack.c.l.b16 %v585
        %v1124 = vunpack.c.l.b16 %v586
        %v1125 = vunpack.c.l.b16 %v587
        %v1126 = vunpack.c.l.b16 %v588
        %v1127 = vunpack.c.l.b16 %v589
        %v1128 = vunpack.c.l.b16 %v590
        %v1129 = vunpack.c.l.b16 %v591
        %v1130 = vunpack.c.l.b16 %v592
        %v1131 = vunpack.c.l.b16 %v593
        %v1132 = vunpack.c.l.b16 %v594
        %v1133 = vunpack.c.l.b16 %v595
        %v1134 = vunpack.c.l.b16 %v596
        %v1135 = vunpack.c.l.b16 %v597
        %v1136 = vunpack.c.l.b16 %v598
        %v1137 = vunpack.c.l.b16 %v599
        %v1138 = vunpack.c.l.b16 %v600
        %v1139 = vunpack.c.l.b16 %v601
        %v1140 = vunpack.c.l.b16 %v602
        %v1141 = vunpack.c.l.b16 %v603
        %v1142 = vunpack.c.l.b16 %v604
        %v1143 = vpack.c.b16 %v1000, %v999
        %v1144 = vpack.c.b16 %v1002, %v1001
        %v1145 = vpack.c.b16 %v1004, %v1003
        %v1146 = vpack.c.b16 %v1006, %v1005
        %v1147 = vpack.c.b16 %v1008, %v1007
        %v1148 = vpack.c.b16 %v1010, %v1009
        %v1149 = vpack.c.b16 %v1012, %v1011
        %v1150 = vpack.c.b16 %v1014, %v1013
        %v1151 = vpack.c.b16 %v1016, %v1015
        %v1152 = vpack.c.b16 %v1018, %v1017
        %v1153 = vpack.c.b16 %v1020, %v1019
        %v1154 = vpack.c.b16 %v1022, %v1021
        %v1155 = vpack.c.b16 %v1024, %v1023
        %v1156 = vpack.c.b16 %v1026, %v1025
        %v1157 = vpack.c.b16 %v1028, %v1027
        %v1158 = vpack.c.b16 %v1030, %v1029
        %v1159 = vpack.c.b16 %v1032, %v1031
        %v1160 = vpack.c.b16 %v1034, %v1033
        %v1161 = vpack.c.b16 %v1036, %v1035
        %v1162 = vpack.c.b16 %v1038, %v1037
        %v1163 = vpack.c.b16 %v1040, %v1039
        %v1164 = vpack.c.b16 %v1042, %v1041
        %v1165 = vpack.c.b16 %v1044, %v1043
        %v1166 = vpack.c.b16 %v1046, %v1045
        %v1167 = vpack.c.b16 %v1048, %v1047
        %v1168 = vpack.c.b16 %v1050, %v1049
        %v1169 = vpack.c.b16 %v1052, %v1051
        %v1170 = vpack.c.b16 %v1054, %v1053
        %v1171 = vpack.c.b16 %v1056, %v1055
        %v1172 = vpack.c.b16 %v1058, %v1057
        %v1173 = vpack.c.b16 %v1060, %v1059
        %v1174 = vpack.c.b16 %v1062, %v1061
        %v1175 = vpack.c.b16 %v1064, %v1063
        %v1176 = vpack.c.b16 %v1066, %v1065
        %v1177 = vpack.c.b16 %v1068, %v1067
        %v1178 = vpack.c.b16 %v1070, %v1069
        %v1179 = vpack.c.b16 %v1072, %v1071
        %v1180 = vpack.c.b16 %v1074, %v1073
        %v1181 = vpack.c.b16 %v1076, %v1075
        %v1182 = vpack.c.b16 %v1078, %v1077
        %v1183 = vpack.c.b16 %v1080, %v1079
        %v1184 = vpack.c.b16 %v1082, %v1081
        %v1185 = vpack.c.b16 %v1084, %v1083
        %v1186 = vpack.c.b16 %v1086, %v1085
        %v1187 = vpack.c.b16 %v1088, %v1087
        %v1188 = vpack.c.b16 %v1090, %v1089
        %v1189 = vpack.c.b16 %v1092, %v1091
        %v1190 = vpack.c.b16 %v1094, %v1093
        %v1191 = vpack.c.b16 %v1096, %v1095
        %v1192 = vpack.c.b16 %v1098, %v1097
        %v1193 = vpack.c.b16 %v1100, %v1099
        %v1194 = vpack.c.b16 %v1102, %v1101
        %v1195 = vpack.c.b16 %v1104, %v1103
        %v1196 = vpack.c.b16 %v1106, %v1105
        %v1197 = vpack.c.b16 %v1108, %v1107
        %v1198 = vpack.c.b16 %v1110, %v1109
        %v1199 = vpack.c.b16 %v1112, %v1111
        %v1200 = vpack.c.b16 %v1114, %v1113
        %v1201 = vpack.c.b16 %v1116, %v1115
        %v1202 = vpack.c.b16 %v1118, %v1117
        %v1203 = vpack.c.b16 %v1120, %v1119
        %v1204 = vpack.c.b16 %v1122, %v1121
        %v1205 = vpack.c.b16 %v1124, %v1123
        %v1206 = vpack.c.b16 %v1126, %v1125
        %v1207 = vpack.c.b16 %v1128, %v1127
        %v1208 = vpack.c.b16 %v1130, %v1129
        %v1209 = vpack.c.b16 %v1132, %v1131
        %v1210 = vpack.c.b16 %v1134, %v1133
        %v1211 = vpack.c.b16 %v1136, %v1135
        %v1212 = vpack.c.b16 %v1138, %v1137
        %v1213 = vpack.c.b16 %v1140, %v1139
        %v1214 = vpack.c.b16 %v1142, %v1141
        %1287 = vmatprep.subr.bf16.mxu0 0
        %1288 = vmatpush1.bf16.msra.mxu0 %v1143
        %1289 = vmatprep.subr.bf16.mxu0 0
        %1290 = vmatpush1.bf16.msra.mxu0 %v1144
        %1291 = vmatprep.subr.bf16.mxu0 0
        %1292 = vmatpush1.bf16.msra.mxu0 %v1145
        %1293 = vmatprep.subr.bf16.mxu0 0
        %1294 = vmatpush1.bf16.msra.mxu0 %v1146
        %1295 = vmatprep.subr.bf16.mxu0 0
        %1296 = vmatpush1.bf16.msra.mxu0 %v1147
        %1297 = vmatprep.subr.bf16.mxu0 0
        %1298 = vmatpush1.bf16.msra.mxu0 %v1148
        %1299 = vmatprep.subr.bf16.mxu0 0
        %1300 = vmatpush1.bf16.msra.mxu0 %v1149
        %1301 = vmatprep.subr.bf16.mxu0 0
        %1302 = vmatpush1.bf16.msra.mxu0 %v1150
        %1303 = vmatprep.subr.bf16.mxu0 0
        %1304 = vmatpush1.bf16.msra.mxu0 %v1151
        %1305 = vmatprep.subr.bf16.mxu0 0
        %1306 = vmatpush1.bf16.msra.mxu0 %v1152
        %1307 = vmatprep.subr.bf16.mxu0 0
        %1308 = vmatpush1.bf16.msra.mxu0 %v1153
        %1309 = vmatprep.subr.bf16.mxu0 0
        %1310 = vmatpush1.bf16.msra.mxu0 %v1154
        %1311 = vmatprep.subr.bf16.mxu0 0
        %1312 = vmatpush1.bf16.msra.mxu0 %v1155
        %1313 = vmatprep.subr.bf16.mxu0 0
        %1314 = vmatpush1.bf16.msra.mxu0 %v1156
        %1315 = vmatprep.subr.bf16.mxu0 0
        %1316 = vmatpush1.bf16.msra.mxu0 %v1157
        %1317 = vmatprep.subr.bf16.mxu0 0
        %1318 = vmatpush1.bf16.msra.mxu0 %v1158
        %1319 = vmatprep.mubr.bf16.mxu0 %v633
        %1320 = vmatmul.mubr.bf16.gmra.mrb[0].mxu0 %v724
        %v1321 = vpop.f32.mrb[0].mxu0
        %v1322 = vadd.f32 %v853, %v1321
        %v1323 = vpop.f32.mrb[0].mxu0
        %v1324 = vpop.f32.mrb[0].mxu0
        %v1325 = vadd.f32 %v853, %v1324
        %v1326 = vpop.f32.mrb[0].mxu0
        %1327 = vmatprep.mubr.bf16.mxu0 %v623
        %1328 = vmatmul.mubr.bf16.gmra.mrb[0].mxu0 %v725
        %v1329 = vpop.f32.mrb[0].mxu0
        %v1330 = vadd.f32 %v853, %v1329
        %v1331 = vpop.f32.mrb[0].mxu0
        %v1332 = vpop.f32.mrb[0].mxu0
        %v1333 = vadd.f32 %v853, %v1332
        %v1334 = vpop.f32.mrb[0].mxu0
        %1335 = vmatprep.mubr.bf16.mxu0 %v624
        %1336 = vmatmul.mubr.bf16.gmra.mrb[0].mxu0 %v726
        %v1337 = vpop.f32.mrb[0].mxu0
        %v1338 = vadd.f32 %v853, %v1337
        %v1339 = vpop.f32.mrb[0].mxu0
        %v1340 = vpop.f32.mrb[0].mxu0
        %v1341 = vadd.f32 %v853, %v1340
        %v1342 = vpop.f32.mrb[0].mxu0
        %1343 = vmatprep.mubr.bf16.mxu0 %v625
        %1344 = vmatmul.mubr.bf16.gmra.mrb[0].mxu0 %v727
        %v1345 = vpop.f32.mrb[0].mxu0
        %v1346 = vadd.f32 %v853, %v1345
        %v1347 = vpop.f32.mrb[0].mxu0
        %v1348 = vpop.f32.mrb[0].mxu0
        %v1349 = vadd.f32 %v853, %v1348
        %v1350 = vpop.f32.mrb[0].mxu0
        %1351 = vdwg.mxu0
        %1352 = vmatprep.subr.bf16.mxu0 0
        %1353 = vmatpush1.bf16.msra.mxu0 %v1159
        %1354 = vmatprep.subr.bf16.mxu0 0
        %1355 = vmatpush1.bf16.msra.mxu0 %v1160
        %1356 = vmatprep.subr.bf16.mxu0 0
        %1357 = vmatpush1.bf16.msra.mxu0 %v1161
        %1358 = vmatprep.subr.bf16.mxu0 0
        %1359 = vmatpush1.bf16.msra.mxu0 %v1162
        %1360 = vmatprep.subr.bf16.mxu0 0
        %1361 = vmatpush1.bf16.msra.mxu0 %v1163
        %1362 = vmatprep.subr.bf16.mxu0 0
        %1363 = vmatpush1.bf16.msra.mxu0 %v1164
        %1364 = vmatprep.subr.bf16.mxu0 0
        %1365 = vmatpush1.bf16.msra.mxu0 %v1165
        %1366 = vmatprep.subr.bf16.mxu0 0
        %1367 = vmatpush1.bf16.msra.mxu0 %v1166
        %1368 = vmatprep.subr.bf16.mxu0 0
        %1369 = vmatpush1.bf16.msra.mxu0 %v1167
        %1370 = vmatprep.subr.bf16.mxu0 0
        %1371 = vmatpush1.bf16.msra.mxu0 %v1168
        %1372 = vmatprep.subr.bf16.mxu0 0
        %1373 = vmatpush1.bf16.msra.mxu0 %v1169
        %1374 = vmatprep.subr.bf16.mxu0 0
        %1375 = vmatpush1.bf16.msra.mxu0 %v1170
        %1376 = vmatprep.subr.bf16.mxu0 0
        %1377 = vmatpush1.bf16.msra.mxu0 %v1171
        %1378 = vmatprep.subr.bf16.mxu0 0
        %1379 = vmatpush1.bf16.msra.mxu0 %v1172
        %1380 = vmatprep.subr.bf16.mxu0 0
        %1381 = vmatpush1.bf16.msra.mxu0 %v1173
        %1382 = vmatprep.subr.bf16.mxu0 0
        %1383 = vmatpush1.bf16.msra.mxu0 %v1174
        %1384 = vmatprep.mubr.bf16.mxu0 %v805
        %1385 = vmatmul.mubr.bf16.gmra.mrb[0].mxu0 %v792
        %v1386 = vpop.f32.mrb[0].mxu0
        %v1387 = vadd.f32 %v1322, %v1386
        %v1388 = vpop.f32.mrb[0].mxu0
        %v1389 = vpop.f32.mrb[0].mxu0
        %v1390 = vadd.f32 %v1325, %v1389
        %v1391 = vpop.f32.mrb[0].mxu0
        %1392 = vmatprep.mubr.bf16.mxu0 %v807
        %1393 = vmatmul.mubr.bf16.gmra.mrb[0].mxu0 %v793
        %v1394 = vpop.f32.mrb[0].mxu0
        %v1395 = vadd.f32 %v1330, %v1394
        %v1396 = vpop.f32.mrb[0].mxu0
        %v1397 = vpop.f32.mrb[0].mxu0
        %v1398 = vadd.f32 %v1333, %v1397
        %v1399 = vpop.f32.mrb[0].mxu0
        %1400 = vmatprep.mubr.bf16.mxu0 %v809
        %1401 = vmatmul.mubr.bf16.gmra.mrb[0].mxu0 %v794
        %v1402 = vpop.f32.mrb[0].mxu0
        %v1403 = vadd.f32 %v1338, %v1402
        %v1404 = vpop.f32.mrb[0].mxu0
        %v1405 = vpop.f32.mrb[0].mxu0
        %v1406 = vadd.f32 %v1341, %v1405
        %v1407 = vpop.f32.mrb[0].mxu0
        %1408 = vmatprep.mubr.bf16.mxu0 %v811
        %1409 = vmatmul.mubr.bf16.gmra.mrb[0].mxu0 %v795
        %v1410 = vpop.f32.mrb[0].mxu0
        %v1411 = vadd.f32 %v1346, %v1410
        %v1412 = vpop.f32.mrb[0].mxu0
        %v1413 = vpop.f32.mrb[0].mxu0
        %v1414 = vadd.f32 %v1349, %v1413
        %v1415 = vpop.f32.mrb[0].mxu0
        %1416 = vdwg.mxu0
        %1417 = vmatprep.subr.bf16.mxu0 0
        %1418 = vmatpush1.bf16.msra.mxu0 %v1175
        %1419 = vmatprep.subr.bf16.mxu0 0
        %1420 = vmatpush1.bf16.msra.mxu0 %v1176
        %1421 = vmatprep.subr.bf16.mxu0 0
        %1422 = vmatpush1.bf16.msra.mxu0 %v1177
        %1423 = vmatprep.subr.bf16.mxu0 0
        %1424 = vmatpush1.bf16.msra.mxu0 %v1178
        %1425 = vmatprep.subr.bf16.mxu0 0
        %1426 = vmatpush1.bf16.msra.mxu0 %v1179
        %1427 = vmatprep.subr.bf16.mxu0 0
        %1428 = vmatpush1.bf16.msra.mxu0 %v1180
        %1429 = vmatprep.subr.bf16.mxu0 0
        %1430 = vmatpush1.bf16.msra.mxu0 %v1181
        %1431 = vmatprep.subr.bf16.mxu0 0
        %1432 = vmatpush1.bf16.msra.mxu0 %v1182
        %1433 = vmatprep.subr.bf16.mxu0 0
        %1434 = vmatpush1.bf16.msra.mxu0 %v1183
        %1435 = vmatprep.subr.bf16.mxu0 0
        %1436 = vmatpush1.bf16.msra.mxu0 %v1184
        %1437 = vmatprep.subr.bf16.mxu0 0
        %1438 = vmatpush1.bf16.msra.mxu0 %v1185
        %1439 = vmatprep.subr.bf16.mxu0 0
        %1440 = vmatpush1.bf16.msra.mxu0 %v1186
        %1441 = vmatprep.subr.bf16.mxu0 0
        %1442 = vmatpush1.bf16.msra.mxu0 %v1187
        %1443 = vmatprep.subr.bf16.mxu0 0
        %1444 = vmatpush1.bf16.msra.mxu0 %v1188
        %1445 = vmatprep.subr.bf16.mxu0 0
        %1446 = vmatpush1.bf16.msra.mxu0 %v1189
        %1447 = vmatprep.subr.bf16.mxu0 0
        %1448 = vmatpush1.bf16.msra.mxu0 %v1190
        %1449 = vmatprep.mubr.bf16.mxu0 %v838
        %1450 = vmatmul.mubr.bf16.gmra.mrb[0].mxu0 %v820
        %v1451 = vpop.f32.mrb[0].mxu0
        %v1452 = vadd.f32 %v1387, %v1451
        %v1453 = vpop.f32.mrb[0].mxu0
        %v1454 = vpop.f32.mrb[0].mxu0
        %v1455 = vadd.f32 %v1390, %v1454
        %v1456 = vpop.f32.mrb[0].mxu0
        %1457 = vmatprep.mubr.bf16.mxu0 %v840
        %1458 = vmatmul.mubr.bf16.gmra.mrb[0].mxu0 %v822
        %v1459 = vpop.f32.mrb[0].mxu0
        %v1460 = vadd.f32 %v1395, %v1459
        %v1461 = vpop.f32.mrb[0].mxu0
        %v1462 = vpop.f32.mrb[0].mxu0
        %v1463 = vadd.f32 %v1398, %v1462
        %v1464 = vpop.f32.mrb[0].mxu0
        %1465 = vmatprep.mubr.bf16.mxu0 %v842
        %1466 = vmatmul.mubr.bf16.gmra.mrb[0].mxu0 %v824
        %v1467 = vpop.f32.mrb[0].mxu0
        %v1468 = vadd.f32 %v1403, %v1467
        %v1469 = vpop.f32.mrb[0].mxu0
        %v1470 = vpop.f32.mrb[0].mxu0
        %v1471 = vadd.f32 %v1406, %v1470
        %v1472 = vpop.f32.mrb[0].mxu0
        %1473 = vmatprep.mubr.bf16.mxu0 %v844
        %1474 = vmatmul.mubr.bf16.gmra.mrb[0].mxu0 %v826
        %v1475 = vpop.f32.mrb[0].mxu0
        %v1476 = vadd.f32 %v1411, %v1475
        %v1477 = vpop.f32.mrb[0].mxu0
        %v1478 = vpop.f32.mrb[0].mxu0
        %v1479 = vadd.f32 %v1414, %v1478
        %v1480 = vpop.f32.mrb[0].mxu0
        %1481 = vdwg.mxu0
        %1482 = vmatprep.subr.bf16.mxu0 0
        %1483 = vmatpush1.bf16.msra.mxu0 %v1191
        %1484 = vmatprep.subr.bf16.mxu0 0
        %1485 = vmatpush1.bf16.msra.mxu0 %v1192
        %1486 = vmatprep.subr.bf16.mxu0 0
        %1487 = vmatpush1.bf16.msra.mxu0 %v1193
        %1488 = vmatprep.subr.bf16.mxu0 0
        %1489 = vmatpush1.bf16.msra.mxu0 %v1194
        %1490 = vmatprep.subr.bf16.mxu0 0
        %1491 = vmatpush1.bf16.msra.mxu0 %v1195
        %1492 = vmatprep.subr.bf16.mxu0 0
        %1493 = vmatpush1.bf16.msra.mxu0 %v1196
        %1494 = vmatprep.subr.bf16.mxu0 0
        %1495 = vmatpush1.bf16.msra.mxu0 %v1197
        %1496 = vmatprep.subr.bf16.mxu0 0
        %1497 = vmatpush1.bf16.msra.mxu0 %v1198
        %1498 = vmatprep.subr.bf16.mxu0 0
        %1499 = vmatpush1.bf16.msra.mxu0 %v1199
        %1500 = vmatprep.subr.bf16.mxu0 0
        %1501 = vmatpush1.bf16.msra.mxu0 %v1200
        %1502 = vmatprep.subr.bf16.mxu0 0
        %1503 = vmatpush1.bf16.msra.mxu0 %v1201
        %1504 = vmatprep.subr.bf16.mxu0 0
        %1505 = vmatpush1.bf16.msra.mxu0 %v1202
        %1506 = vmatprep.subr.bf16.mxu0 0
        %1507 = vmatpush1.bf16.msra.mxu0 %v1203
        %1508 = vmatprep.subr.bf16.mxu0 0
        %1509 = vmatpush1.bf16.msra.mxu0 %v1204
        %1510 = vmatprep.subr.bf16.mxu0 0
        %1511 = vmatpush1.bf16.msra.mxu0 %v1205
        %1512 = vmatprep.subr.bf16.mxu0 0
        %1513 = vmatpush1.bf16.msra.mxu0 %v1206
        %1514 = vmatprep.mubr.bf16.mxu0 %v623
        %1515 = vmatmul.mubr.bf16.gmra.mrb[0].mxu0 %v725
        %v1516 = vpop.f32.mrb[0].mxu0
        %v1517 = vadd.f32 %v1452, %v1516
        %v1518 = vpop.f32.mrb[0].mxu0
        %v1519 = vpop.f32.mrb[0].mxu0
        %v1520 = vadd.f32 %v1455, %v1519
        %v1521 = vpop.f32.mrb[0].mxu0
        %1522 = vmatprep.mubr.bf16.mxu0 %v624
        %1523 = vmatmul.mubr.bf16.gmra.mrb[0].mxu0 %v726
        %v1524 = vpop.f32.mrb[0].mxu0
        %v1525 = vadd.f32 %v1460, %v1524
        %v1526 = vpop.f32.mrb[0].mxu0
        %v1527 = vpop.f32.mrb[0].mxu0
        %v1528 = vadd.f32 %v1463, %v1527
        %v1529 = vpop.f32.mrb[0].mxu0
        %1530 = vmatprep.mubr.bf16.mxu0 %v625
        %1531 = vmatmul.mubr.bf16.gmra.mrb[0].mxu0 %v727
        %v1532 = vpop.f32.mrb[0].mxu0
        %v1533 = vadd.f32 %v1468, %v1532
        %v1534 = vpop.f32.mrb[0].mxu0
        %v1535 = vpop.f32.mrb[0].mxu0
        %v1536 = vadd.f32 %v1471, %v1535
        %v1537 = vpop.f32.mrb[0].mxu0
        %1538 = vmatprep.mubr.bf16.mxu0 %v636
        %1539 = vmatmul.mubr.bf16.gmra.mrb[0].mxu0 %v728
        %v1540 = vpop.f32.mrb[0].mxu0
        %v1541 = vadd.f32 %v1476, %v1540
        %v1542 = vpop.f32.mrb[0].mxu0
        %v1543 = vpop.f32.mrb[0].mxu0
        %v1544 = vadd.f32 %v1479, %v1543
        %v1545 = vpop.f32.mrb[0].mxu0
        %1546 = vdwg.mxu0
        %1547 = vmatprep.subr.bf16.mxu0 0
        %1548 = vmatpush1.bf16.msra.mxu0 %v1207
        %1549 = vmatprep.subr.bf16.mxu0 0
        %1550 = vmatpush1.bf16.msra.mxu0 %v1208
        %1551 = vmatprep.subr.bf16.mxu0 0
        %1552 = vmatpush1.bf16.msra.mxu0 %v1209
        %1553 = vmatprep.subr.bf16.mxu0 0
        %1554 = vmatpush1.bf16.msra.mxu0 %v1210
        %1555 = vmatprep.subr.bf16.mxu0 0
        %1556 = vmatpush1.bf16.msra.mxu0 %v1211
        %1557 = vmatprep.subr.bf16.mxu0 0
        %1558 = vmatpush1.bf16.msra.mxu0 %v1212
        %1559 = vmatprep.subr.bf16.mxu0 0
        %1560 = vmatpush1.bf16.msra.mxu0 %v1213
        %1561 = vmatprep.subr.bf16.mxu0 0
        %1562 = vmatpush1.bf16.msra.mxu0 %v1214
        %1563 = vmatprep.subr.bf16.mxu0 0
        %1564 = vmatpush1.bf16.msra.mxu0 0
        %1565 = vmatprep.subr.bf16.mxu0 0
        %1566 = vmatpush1.bf16.msra.mxu0 0
        %1567 = vmatprep.subr.bf16.mxu0 0
        %1568 = vmatpush1.bf16.msra.mxu0 0
        %1569 = vmatprep.subr.bf16.mxu0 0
        %1570 = vmatpush1.bf16.msra.mxu0 0
        %1571 = vmatprep.subr.bf16.mxu0 0
        %1572 = vmatpush1.bf16.msra.mxu0 0
        %1573 = vmatprep.subr.bf16.mxu0 0
        %1574 = vmatpush1.bf16.msra.mxu0 0
        %1575 = vmatprep.subr.bf16.mxu0 0
        %1576 = vmatpush1.bf16.msra.mxu0 0
        %1577 = vmatprep.subr.bf16.mxu0 0
        %1578 = vmatpush1.bf16.msra.mxu0 0
        %1579 = vmatprep.mubr.bf16.mxu0 0
        %1580 = vmatmul.mubr.bf16.gmra.mrb[0].mxu0 %v793
        %v1581 = vpop.f32.mrb[0].mxu0
        %v1582 = vadd.f32 %v1517, %v1581
        %v1583 = vpop.f32.mrb[0].mxu0
        %v1584 = vpop.f32.mrb[0].mxu0
        %v1585 = vadd.f32 %v1520, %v1584
        %v1586 = vpop.f32.mrb[0].mxu0
        %1587 = vmatprep.mubr.bf16.mxu0 0
        %1588 = vmatmul.mubr.bf16.gmra.mrb[0].mxu0 %v794
        %v1589 = vpop.f32.mrb[0].mxu0
        %v1590 = vadd.f32 %v1525, %v1589
        %v1591 = vpop.f32.mrb[0].mxu0
        %v1592 = vpop.f32.mrb[0].mxu0
        %v1593 = vadd.f32 %v1528, %v1592
        %v1594 = vpop.f32.mrb[0].mxu0
        %1595 = vmatprep.mubr.bf16.mxu0 0
        %1596 = vmatmul.mubr.bf16.gmra.mrb[0].mxu0 %v795
        %v1597 = vpop.f32.mrb[0].mxu0
        %v1598 = vadd.f32 %v1533, %v1597
        %v1599 = vpop.f32.mrb[0].mxu0
        %v1600 = vpop.f32.mrb[0].mxu0
        %v1601 = vadd.f32 %v1536, %v1600
        %v1602 = vpop.f32.mrb[0].mxu0
        %1603 = vmatprep.mubr.bf16.mxu0 0
        %1604 = vmatmul.mubr.bf16.gmra.mrb[0].mxu0 %v796
        %v1605 = vpop.f32.mrb[0].mxu0
        %v1606 = vadd.f32 %v1541, %v1605
        %v1607 = vpop.f32.mrb[0].mxu0
        %v1608 = vpop.f32.mrb[0].mxu0
        %v1609 = vadd.f32 %v1544, %v1608
        %v1610 = vpop.f32.mrb[0].mxu0
        %1611 = vdwg.mxu0
        %vm1612 = vcmp.gt.f32.partialorder %v1582, 0.0
        %vm1613 = vcmp.gt.f32.partialorder %v1585, 0.0
        %vm1614 = vcmp.gt.f32.partialorder %v1590, 0.0
        %vm1615 = vcmp.gt.f32.partialorder %v1593, 0.0
        %vm1616 = vcmp.gt.f32.partialorder %v1598, 0.0
        %vm1617 = vcmp.gt.f32.partialorder %v1601, 0.0
        %vm1618 = vcmp.gt.f32.partialorder %v1606, 0.0
        %vm1619 = vcmp.gt.f32.partialorder %v1609, 0.0
        %v1620 = vmul.f32 %v1582, 0.2
        %v1621 = vmul.f32 %v1585, 0.2
        %v1622 = vmul.f32 %v1590, 0.2
        %v1623 = vmul.f32 %v1593, 0.2
        %v1624 = vmul.f32 %v1598, 0.2
        %v1625 = vmul.f32 %v1601, 0.2
        %v1626 = vmul.f32 %v1606, 0.2
        %v1627 = vmul.f32 %v1609, 0.2
        %v1628 = vsel %vm1612, %v1582, %v1620
        %v1629 = vsel %vm1613, %v1585, %v1621
        %v1630 = vsel %vm1614, %v1590, %v1622
        %v1631 = vsel %vm1615, %v1593, %v1623
        %v1632 = vsel %vm1616, %v1598, %v1624
        %v1633 = vsel %vm1617, %v1601, %v1625
        %v1634 = vsel %vm1618, %v1606, %v1626
        %v1635 = vsel %vm1619, %v1609, %v1627
        %s1636 = scalar_lea.vmem [#allocation5], 576
        %v1637 = vld [vmem:[%s1636] sm:$0xf]
        %v1638 = vld [vmem:[%s1636 + $0x4] sm:$0xf]
        %v1639 = vld [vmem:[%s1636 + $0x8] sm:$0xf]
        %v1640 = vld [vmem:[%s1636 + $0xc] sm:$0xf]
        %v1641 = vld [vmem:[%s1636 + $0x10] sm:$0xf]
        %v1642 = vld [vmem:[%s1636 + $0x14] sm:$0xf]
        %v1643 = vld [vmem:[%s1636 + $0x18] sm:$0xf]
        %v1644 = vld [vmem:[%s1636 + $0x1c] sm:$0xf]
        %v1645 = vld [vmem:[%s1636 + $0x20] sm:$0xf]
        %v1646 = vld [vmem:[%s1636 + $0x24] sm:$0xf]
        %v1647 = vld [vmem:[%s1636 + $0x28] sm:$0xf]
        %v1648 = vld [vmem:[%s1636 + $0x2c] sm:$0xf]
        %v1649 = vld [vmem:[%s1636 + $0x30] sm:$0xf]
        %v1650 = vld [vmem:[%s1636 + $0x34] sm:$0xf]
        %v1651 = vld [vmem:[%s1636 + $0x38] sm:$0xf]
        %v1652 = vld [vmem:[%s1636 + $0x3c] sm:$0xf]
        %v1653 = vld [vmem:[%s1636 + $0x40] sm:$0xf]
        %v1654 = vld [vmem:[%s1636 + $0x44] sm:$0xf]
        %v1655 = vld [vmem:[%s1636 + $0x48] sm:$0xf]
        %v1656 = vld [vmem:[%s1636 + $0x4c] sm:$0xf]
        %v1657 = vld [vmem:[%s1636 + $0x50] sm:$0xf]
        %v1658 = vld [vmem:[%s1636 + $0x54] sm:$0xf]
        %v1659 = vld [vmem:[%s1636 + $0x58] sm:$0xf]
        %v1660 = vld [vmem:[%s1636 + $0x5c] sm:$0xf]
        %v1661 = vld [vmem:[%s1636 + $0x60] sm:$0xf]
        %v1662 = vld [vmem:[%s1636 + $0x64] sm:$0xf]
        %v1663 = vld [vmem:[%s1636 + $0x68] sm:$0xf]
        %v1664 = vld [vmem:[%s1636 + $0x6c] sm:$0xf]
        %v1665 = vld [vmem:[%s1636 + $0x70] sm:$0xf]
        %v1666 = vld [vmem:[%s1636 + $0x74] sm:$0xf]
        %v1667 = vld [vmem:[%s1636 + $0x78] sm:$0xf]
        %v1668 = vld [vmem:[%s1636 + $0x7c] sm:$0xf]
        %v1669 = vld [vmem:[%s1636 + $0x80] sm:$0xf]
        %v1670 = vld [vmem:[%s1636 + $0x84] sm:$0xf]
        %v1671 = vld [vmem:[%s1636 + $0x88] sm:$0xf]
        %v1672 = vld [vmem:[%s1636 + $0x8c] sm:$0xf]
        %v1673 = vld [vmem:[%s1636 + $0x90] sm:$0xf]
        %v1674 = vld [vmem:[%s1636 + $0x94] sm:$0xf]
        %v1675 = vld [vmem:[%s1636 + $0x98] sm:$0xf]
        %v1676 = vld [vmem:[%s1636 + $0x9c] sm:$0xf]
        %v1677 = vld [vmem:[%s1636 + $0xa0] sm:$0xf]
        %v1678 = vld [vmem:[%s1636 + $0xa4] sm:$0xf]
        %v1679 = vld [vmem:[%s1636 + $0xa8] sm:$0xf]
        %v1680 = vld [vmem:[%s1636 + $0xac] sm:$0xf]
        %v1681 = vld [vmem:[%s1636 + $0xb0] sm:$0xf]
        %v1682 = vld [vmem:[%s1636 + $0xb4] sm:$0xf]
        %v1683 = vld [vmem:[%s1636 + $0xb8] sm:$0xf]
        %v1684 = vld [vmem:[%s1636 + $0xbc] sm:$0xf]
        %v1685 = vld [vmem:[%s1636 + $0xc0] sm:$0xf]
        %v1686 = vld [vmem:[%s1636 + $0xc4] sm:$0xf]
        %v1687 = vld [vmem:[%s1636 + $0xc8] sm:$0xf]
        %v1688 = vld [vmem:[%s1636 + $0xcc] sm:$0xf]
        %v1689 = vld [vmem:[%s1636 + $0xd0] sm:$0xf]
        %v1690 = vld [vmem:[%s1636 + $0xd4] sm:$0xf]
        %v1691 = vld [vmem:[%s1636 + $0xd8] sm:$0xf]
        %v1692 = vld [vmem:[%s1636 + $0xdc] sm:$0xf]
        %v1693 = vld [vmem:[%s1636 + $0xe0] sm:$0xf]
        %v1694 = vld [vmem:[%s1636 + $0xe4] sm:$0xf]
        %v1695 = vld [vmem:[%s1636 + $0xe8] sm:$0xf]
        %v1696 = vld [vmem:[%s1636 + $0xec] sm:$0xf]
        %v1697 = vld [vmem:[%s1636 + $0xf0] sm:$0xf]
        %v1698 = vld [vmem:[%s1636 + $0xf4] sm:$0xf]
        %v1699 = vld [vmem:[%s1636 + $0xf8] sm:$0xf]
        %v1700 = vld [vmem:[%s1636 + $0xfc] sm:$0xf]
        %v1701 = vld [vmem:[%s1636 + $0x100] sm:$0xf]
        %v1702 = vld [vmem:[%s1636 + $0x104] sm:$0xf]
        %v1703 = vld [vmem:[%s1636 + $0x108] sm:$0xf]
        %v1704 = vld [vmem:[%s1636 + $0x10c] sm:$0xf]
        %v1705 = vld [vmem:[%s1636 + $0x110] sm:$0xf]
        %v1706 = vld [vmem:[%s1636 + $0x114] sm:$0xf]
        %v1707 = vld [vmem:[%s1636 + $0x118] sm:$0xf]
        %v1708 = vld [vmem:[%s1636 + $0x11c] sm:$0xf]
        %v1709 = vld [vmem:[%s1636 + $0x120] sm:$0xf]
        %v1710 = vld [vmem:[%s1636 + $0x124] sm:$0xf]
        %v1711 = vld [vmem:[%s1636 + $0x128] sm:$0xf]
        %v1712 = vld [vmem:[%s1636 + $0x12c] sm:$0xf]
        %v1713 = vld [vmem:[%s1636 + $0x130] sm:$0xf]
        %v1714 = vld [vmem:[%s1636 + $0x134] sm:$0xf]
        %v1715 = vld [vmem:[%s1636 + $0x138] sm:$0xf]
        %v1716 = vld [vmem:[%s1636 + $0x13c] sm:$0xf]
        %v1717 = vld [vmem:[%s1636 + $0x140] sm:$0xf]
        %v1718 = vld [vmem:[%s1636 + $0x144] sm:$0xf]
        %v1719 = vld [vmem:[%s1636 + $0x148] sm:$0xf]
        %v1720 = vld [vmem:[%s1636 + $0x14c] sm:$0xf]
        %v1721 = vld [vmem:[%s1636 + $0x150] sm:$0xf]
        %v1722 = vld [vmem:[%s1636 + $0x154] sm:$0xf]
        %v1723 = vld [vmem:[%s1636 + $0x158] sm:$0xf]
        %v1724 = vld [vmem:[%s1636 + $0x15c] sm:$0xf]
        %v1725 = vld [vmem:[%s1636 + $0x160] sm:$0xf]
        %v1726 = vld [vmem:[%s1636 + $0x164] sm:$0xf]
        %v1727 = vld [vmem:[%s1636 + $0x168] sm:$0xf]
        %v1728 = vld [vmem:[%s1636 + $0x16c] sm:$0xf]
        %v1729 = vld [vmem:[%s1636 + $0x170] sm:$0xf]
        %v1730 = vld [vmem:[%s1636 + $0x174] sm:$0xf]
        %v1731 = vld [vmem:[%s1636 + $0x178] sm:$0xf]
        %v1732 = vld [vmem:[%s1636 + $0x17c] sm:$0xf]
        %v1733 = vld [vmem:[%s1636 + $0x180] sm:$0xf]
        %v1734 = vld [vmem:[%s1636 + $0x184] sm:$0xf]
        %v1735 = vld [vmem:[%s1636 + $0x188] sm:$0xf]
        %v1736 = vld [vmem:[%s1636 + $0x18c] sm:$0xf]
        %v1737 = vld [vmem:[%s1636 + $0x190] sm:$0xf]
        %v1738 = vld [vmem:[%s1636 + $0x194] sm:$0xf]
        %v1739 = vld [vmem:[%s1636 + $0x198] sm:$0xf]
        %v1740 = vld [vmem:[%s1636 + $0x19c] sm:$0xf]
        %v1741 = vld [vmem:[%s1636 + $0x1a0] sm:$0xf]
        %v1742 = vld [vmem:[%s1636 + $0x1a4] sm:$0xf]
        %v1743 = vld [vmem:[%s1636 + $0x1a8] sm:$0xf]
        %v1744 = vld [vmem:[%s1636 + $0x1ac] sm:$0xf]
        %v1745 = vld [vmem:[%s1636 + $0x1b0] sm:$0xf]
        %v1746 = vld [vmem:[%s1636 + $0x1b4] sm:$0xf]
        %v1747 = vld [vmem:[%s1636 + $0x1b8] sm:$0xf]
        %v1748 = vld [vmem:[%s1636 + $0x1bc] sm:$0xf]
        %v1749 = vld [vmem:[%s1636 + $0x1c0] sm:$0xf]
        %v1750 = vld [vmem:[%s1636 + $0x1c4] sm:$0xf]
        %v1751 = vld [vmem:[%s1636 + $0x1c8] sm:$0xf]
        %v1752 = vld [vmem:[%s1636 + $0x1cc] sm:$0xf]
        %v1753 = vld [vmem:[%s1636 + $0x1d0] sm:$0xf]
        %v1754 = vld [vmem:[%s1636 + $0x1d4] sm:$0xf]
        %v1755 = vld [vmem:[%s1636 + $0x1d8] sm:$0xf]
        %v1756 = vld [vmem:[%s1636 + $0x1dc] sm:$0xf]
        %v1757 = vld [vmem:[%s1636 + $0x1e0] sm:$0xf]
        %v1758 = vld [vmem:[%s1636 + $0x1e4] sm:$0xf]
        %v1759 = vld [vmem:[%s1636 + $0x1e8] sm:$0xf]
        %v1760 = vld [vmem:[%s1636 + $0x1ec] sm:$0xf]
        %v1761 = vld [vmem:[%s1636 + $0x1f0] sm:$0xf]
        %v1762 = vld [vmem:[%s1636 + $0x1f4] sm:$0xf]
        %v1763 = vld [vmem:[%s1636 + $0x1f8] sm:$0xf]
        %v1764 = vld [vmem:[%s1636 + $0x1fc] sm:$0xf]
        %v1765 = vld [vmem:[%s1636 + $0x200] sm:$0xf]
        %v1766 = vld [vmem:[%s1636 + $0x204] sm:$0xf]
        %v1767 = vld [vmem:[%s1636 + $0x208] sm:$0xf]
        %v1768 = vld [vmem:[%s1636 + $0x20c] sm:$0xf]
        %v1769 = vld [vmem:[%s1636 + $0x210] sm:$0xf]
        %v1770 = vld [vmem:[%s1636 + $0x214] sm:$0xf]
        %v1771 = vld [vmem:[%s1636 + $0x218] sm:$0xf]
        %v1772 = vld [vmem:[%s1636 + $0x21c] sm:$0xf]
        %v1773 = vld [vmem:[%s1636 + $0x220] sm:$0xf]
        %v1774 = vld [vmem:[%s1636 + $0x224] sm:$0xf]
        %v1775 = vld [vmem:[%s1636 + $0x228] sm:$0xf]
        %v1776 = vld [vmem:[%s1636 + $0x22c] sm:$0xf]
        %v1777 = vld [vmem:[%s1636 + $0x230] sm:$0xf]
        %v1778 = vld [vmem:[%s1636 + $0x234] sm:$0xf]
        %v1779 = vld [vmem:[%s1636 + $0x238] sm:$0xf]
        %v1780 = vld [vmem:[%s1636 + $0x23c] sm:$0xf]
        %s1781 = scalar_lea.vmem [#allocation7], 1
        %v1782 = vld [vmem:[%s1781] sm:$0x1]
        %vm1792 = vcmask 1040384
        %v1793 = vrot.slane 0.0, 7
        %v1794 = vrot.slane %v1628, 7
        %v1795 = vsel %vm1792, %v1793, %v1794
        %v1796 = vrot.slane %v1629, 7
        %v1797 = vsel %vm1792, %v1794, %v1796
        %v1798 = vrot.slane %v1630, 7
        %v1799 = vsel %vm1792, %v1796, %v1798
        %v1800 = vrot.slane %v1631, 7
        %v1801 = vsel %vm1792, %v1798, %v1800
        %v1802 = vrot.slane %v1632, 7
        %v1803 = vsel %vm1792, %v1800, %v1802
        %v1804 = vrot.slane %v1633, 7
        %v1805 = vsel %vm1792, %v1802, %v1804
        %v1806 = vrot.slane %v1634, 7
        %v1807 = vsel %vm1792, %v1804, %v1806
        %v1808 = vrot.slane %v1635, 7
        %v1809 = vsel %vm1792, %v1806, %v1808
        %v1810 = vsel %vm1792, %v1808, %v1793
        %v1821 = vsel %vm1792, 0.0, %v1793
        %v1822 = vsel %vm441, %v1821, 0.0
        %v1823 = vsel %vm442, %v1795, 0.0
        %v1824 = vsel %vm443, %v1797, 0.0
        %v1825 = vsel %vm444, %v1799, 0.0
        %v1826 = vsel %vm445, %v1801, 0.0
        %v1827 = vsel %vm446, %v1803, 0.0
        %v1828 = vsel %vm447, %v1805, 0.0
        %v1829 = vsel %vm448, %v1807, 0.0
        %v1830 = vsel %vm449, %v1809, 0.0
        %v1831 = vsel %vm450, %v1810, 0.0
        %vm1832 = vcmask 1046528
        %v1833 = vrot.slane 0.0, 1
        %v1834 = vrot.slane %v1628, 1
        %v1835 = vsel %vm1832, %v1833, %v1834
        %v1836 = vrot.slane %v1629, 1
        %v1837 = vsel %vm1832, %v1834, %v1836
        %v1838 = vrot.slane %v1630, 1
        %v1839 = vsel %vm1832, %v1836, %v1838
        %v1840 = vrot.slane %v1631, 1
        %v1841 = vsel %vm1832, %v1838, %v1840
        %v1842 = vrot.slane %v1632, 1
        %v1843 = vsel %vm1832, %v1840, %v1842
        %v1844 = vrot.slane %v1633, 1
        %v1845 = vsel %vm1832, %v1842, %v1844
        %v1846 = vrot.slane %v1634, 1
        %v1847 = vsel %vm1832, %v1844, %v1846
        %v1848 = vrot.slane %v1635, 1
        %v1849 = vsel %vm1832, %v1846, %v1848
        %v1850 = vsel %vm1832, %v1848, %v1833
        %v1861 = vsel %vm1832, %v1833, 0.0
        %v1862 = vsel %vm451, %v1835, 0.0
        %v1863 = vsel %vm452, %v1837, 0.0
        %v1864 = vsel %vm453, %v1839, 0.0
        %v1865 = vsel %vm454, %v1841, 0.0
        %v1866 = vsel %vm455, %v1843, 0.0
        %v1867 = vsel %vm456, %v1845, 0.0
        %v1868 = vsel %vm457, %v1847, 0.0
        %v1869 = vsel %vm458, %v1849, 0.0
        %v1870 = vsel %vm459, %v1850, 0.0
        %v1871 = vsel %vm460, %v1861, 0.0
        %v1872 = vpack.c.bf16 %v1823, %v1822
        %v1873 = vpack.c.bf16 %v1825, %v1824
        %v1874 = vpack.c.bf16 %v1827, %v1826
        %v1875 = vpack.c.bf16 %v1829, %v1828
        %v1876 = vpack.c.bf16 %v1628, 0.0
        %v1877 = vpack.c.bf16 %v1630, %v1629
        %v1878 = vpack.c.bf16 %v1632, %v1631
        %v1879 = vpack.c.bf16 %v1634, %v1633
        %v1880 = vpack.c.bf16 %v1863, %v1862
        %v1881 = vpack.c.bf16 %v1865, %v1864
        %v1882 = vpack.c.bf16 %v1867, %v1866
        %v1883 = vpack.c.bf16 %v1869, %v1868
        %v1884 = vpack.c.bf16 %v1824, %v1823
        %v1885 = vpack.c.bf16 %v1826, %v1825
        %v1886 = vpack.c.bf16 %v1828, %v1827
        %v1887 = vpack.c.bf16 %v1830, %v1829
        %v1888 = vpack.c.bf16 %v1629, %v1628
        %v1889 = vpack.c.bf16 %v1631, %v1630
        %v1890 = vpack.c.bf16 %v1633, %v1632
        %v1891 = vpack.c.bf16 %v1635, %v1634
        %v1892 = vpack.c.bf16 %v1864, %v1863
        %v1893 = vpack.c.bf16 %v1866, %v1865
        %v1894 = vpack.c.bf16 %v1868, %v1867
        %v1895 = vpack.c.bf16 %v1870, %v1869
        %v1896 = vpack.c.bf16 %v1831, %v1830
        %v1897 = vpack.c.bf16 0.0, %v1635
        %v1898 = vpack.c.bf16 %v1871, %v1870
        %v1900 = vlaneseq
        %v1901 = vshrl.u32 %v1900, 7
        %v1902 = vsub.s32 0, %v1901
        %v1903 = vrot.slane %v1782, %v1902
        %v2049 = vunpack.c.l.b16 %v1637
        %v2050 = vunpack.c.l.b16 %v1638
        %v2051 = vunpack.c.l.b16 %v1639
        %v2052 = vunpack.c.l.b16 %v1640
        %v2053 = vunpack.c.l.b16 %v1641
        %v2054 = vunpack.c.l.b16 %v1642
        %v2055 = vunpack.c.l.b16 %v1643
        %v2056 = vunpack.c.l.b16 %v1644
        %v2057 = vunpack.c.l.b16 %v1645
        %v2058 = vunpack.c.l.b16 %v1646
        %v2059 = vunpack.c.l.b16 %v1647
        %v2060 = vunpack.c.l.b16 %v1648
        %v2061 = vunpack.c.l.b16 %v1649
        %v2062 = vunpack.c.l.b16 %v1650
        %v2063 = vunpack.c.l.b16 %v1651
        %v2064 = vunpack.c.l.b16 %v1652
        %v2065 = vunpack.c.l.b16 %v1653
        %v2066 = vunpack.c.l.b16 %v1654
        %v2067 = vunpack.c.l.b16 %v1655
        %v2068 = vunpack.c.l.b16 %v1656
        %v2069 = vunpack.c.l.b16 %v1657
        %v2070 = vunpack.c.l.b16 %v1658
        %v2071 = vunpack.c.l.b16 %v1659
        %v2072 = vunpack.c.l.b16 %v1660
        %v2073 = vunpack.c.l.b16 %v1661
        %v2074 = vunpack.c.l.b16 %v1662
        %v2075 = vunpack.c.l.b16 %v1663
        %v2076 = vunpack.c.l.b16 %v1664
        %v2077 = vunpack.c.l.b16 %v1665
        %v2078 = vunpack.c.l.b16 %v1666
        %v2079 = vunpack.c.l.b16 %v1667
        %v2080 = vunpack.c.l.b16 %v1668
        %v2081 = vunpack.c.l.b16 %v1669
        %v2082 = vunpack.c.l.b16 %v1670
        %v2083 = vunpack.c.l.b16 %v1671
        %v2084 = vunpack.c.l.b16 %v1672
        %v2085 = vunpack.c.l.b16 %v1673
        %v2086 = vunpack.c.l.b16 %v1674
        %v2087 = vunpack.c.l.b16 %v1675
        %v2088 = vunpack.c.l.b16 %v1676
        %v2089 = vunpack.c.l.b16 %v1677
        %v2090 = vunpack.c.l.b16 %v1678
        %v2091 = vunpack.c.l.b16 %v1679
        %v2092 = vunpack.c.l.b16 %v1680
        %v2093 = vunpack.c.l.b16 %v1681
        %v2094 = vunpack.c.l.b16 %v1682
        %v2095 = vunpack.c.l.b16 %v1683
        %v2096 = vunpack.c.l.b16 %v1684
        %v2097 = vunpack.c.l.b16 %v1685
        %v2098 = vunpack.c.l.b16 %v1686
        %v2099 = vunpack.c.l.b16 %v1687
        %v2100 = vunpack.c.l.b16 %v1688
        %v2101 = vunpack.c.l.b16 %v1689
        %v2102 = vunpack.c.l.b16 %v1690
        %v2103 = vunpack.c.l.b16 %v1691
        %v2104 = vunpack.c.l.b16 %v1692
        %v2105 = vunpack.c.l.b16 %v1693
        %v2106 = vunpack.c.l.b16 %v1694
        %v2107 = vunpack.c.l.b16 %v1695
        %v2108 = vunpack.c.l.b16 %v1696
        %v2109 = vunpack.c.l.b16 %v1697
        %v2110 = vunpack.c.l.b16 %v1698
        %v2111 = vunpack.c.l.b16 %v1699
        %v2112 = vunpack.c.l.b16 %v1700
        %v2113 = vunpack.c.l.b16 %v1701
        %v2114 = vunpack.c.l.b16 %v1702
        %v2115 = vunpack.c.l.b16 %v1703
        %v2116 = vunpack.c.l.b16 %v1704
        %v2117 = vunpack.c.l.b16 %v1705
        %v2118 = vunpack.c.l.b16 %v1706
        %v2119 = vunpack.c.l.b16 %v1707
        %v2120 = vunpack.c.l.b16 %v1708
        %v2121 = vunpack.c.l.b16 %v1709
        %v2122 = vunpack.c.l.b16 %v1710
        %v2123 = vunpack.c.l.b16 %v1711
        %v2124 = vunpack.c.l.b16 %v1712
        %v2125 = vunpack.c.l.b16 %v1713
        %v2126 = vunpack.c.l.b16 %v1714
        %v2127 = vunpack.c.l.b16 %v1715
        %v2128 = vunpack.c.l.b16 %v1716
        %v2129 = vunpack.c.l.b16 %v1717
        %v2130 = vunpack.c.l.b16 %v1718
        %v2131 = vunpack.c.l.b16 %v1719
        %v2132 = vunpack.c.l.b16 %v1720
        %v2133 = vunpack.c.l.b16 %v1721
        %v2134 = vunpack.c.l.b16 %v1722
        %v2135 = vunpack.c.l.b16 %v1723
        %v2136 = vunpack.c.l.b16 %v1724
        %v2137 = vunpack.c.l.b16 %v1725
        %v2138 = vunpack.c.l.b16 %v1726
        %v2139 = vunpack.c.l.b16 %v1727
        %v2140 = vunpack.c.l.b16 %v1728
        %v2141 = vunpack.c.l.b16 %v1729
        %v2142 = vunpack.c.l.b16 %v1730
        %v2143 = vunpack.c.l.b16 %v1731
        %v2144 = vunpack.c.l.b16 %v1732
        %v2145 = vunpack.c.l.b16 %v1733
        %v2146 = vunpack.c.l.b16 %v1734
        %v2147 = vunpack.c.l.b16 %v1735
        %v2148 = vunpack.c.l.b16 %v1736
        %v2149 = vunpack.c.l.b16 %v1737
        %v2150 = vunpack.c.l.b16 %v1738
        %v2151 = vunpack.c.l.b16 %v1739
        %v2152 = vunpack.c.l.b16 %v1740
        %v2153 = vunpack.c.l.b16 %v1741
        %v2154 = vunpack.c.l.b16 %v1742
        %v2155 = vunpack.c.l.b16 %v1743
        %v2156 = vunpack.c.l.b16 %v1744
        %v2157 = vunpack.c.l.b16 %v1745
        %v2158 = vunpack.c.l.b16 %v1746
        %v2159 = vunpack.c.l.b16 %v1747
        %v2160 = vunpack.c.l.b16 %v1748
        %v2161 = vunpack.c.l.b16 %v1749
        %v2162 = vunpack.c.l.b16 %v1750
        %v2163 = vunpack.c.l.b16 %v1751
        %v2164 = vunpack.c.l.b16 %v1752
        %v2165 = vunpack.c.l.b16 %v1753
        %v2166 = vunpack.c.l.b16 %v1754
        %v2167 = vunpack.c.l.b16 %v1755
        %v2168 = vunpack.c.l.b16 %v1756
        %v2169 = vunpack.c.l.b16 %v1757
        %v2170 = vunpack.c.l.b16 %v1758
        %v2171 = vunpack.c.l.b16 %v1759
        %v2172 = vunpack.c.l.b16 %v1760
        %v2173 = vunpack.c.l.b16 %v1761
        %v2174 = vunpack.c.l.b16 %v1762
        %v2175 = vunpack.c.l.b16 %v1763
        %v2176 = vunpack.c.l.b16 %v1764
        %v2177 = vunpack.c.l.b16 %v1765
        %v2178 = vunpack.c.l.b16 %v1766
        %v2179 = vunpack.c.l.b16 %v1767
        %v2180 = vunpack.c.l.b16 %v1768
        %v2181 = vunpack.c.l.b16 %v1769
        %v2182 = vunpack.c.l.b16 %v1770
        %v2183 = vunpack.c.l.b16 %v1771
        %v2184 = vunpack.c.l.b16 %v1772
        %v2185 = vunpack.c.l.b16 %v1773
        %v2186 = vunpack.c.l.b16 %v1774
        %v2187 = vunpack.c.l.b16 %v1775
        %v2188 = vunpack.c.l.b16 %v1776
        %v2189 = vunpack.c.l.b16 %v1777
        %v2190 = vunpack.c.l.b16 %v1778
        %v2191 = vunpack.c.l.b16 %v1779
        %v2192 = vunpack.c.l.b16 %v1780
        %v2193 = vpack.c.b16 %v2050, %v2049
        %v2194 = vpack.c.b16 %v2052, %v2051
        %v2195 = vpack.c.b16 %v2054, %v2053
        %v2196 = vpack.c.b16 %v2056, %v2055
        %v2197 = vpack.c.b16 %v2058, %v2057
        %v2198 = vpack.c.b16 %v2060, %v2059
        %v2199 = vpack.c.b16 %v2062, %v2061
        %v2200 = vpack.c.b16 %v2064, %v2063
        %v2201 = vpack.c.b16 %v2066, %v2065
        %v2202 = vpack.c.b16 %v2068, %v2067
        %v2203 = vpack.c.b16 %v2070, %v2069
        %v2204 = vpack.c.b16 %v2072, %v2071
        %v2205 = vpack.c.b16 %v2074, %v2073
        %v2206 = vpack.c.b16 %v2076, %v2075
        %v2207 = vpack.c.b16 %v2078, %v2077
        %v2208 = vpack.c.b16 %v2080, %v2079
        %v2209 = vpack.c.b16 %v2082, %v2081
        %v2210 = vpack.c.b16 %v2084, %v2083
        %v2211 = vpack.c.b16 %v2086, %v2085
        %v2212 = vpack.c.b16 %v2088, %v2087
        %v2213 = vpack.c.b16 %v2090, %v2089
        %v2214 = vpack.c.b16 %v2092, %v2091
        %v2215 = vpack.c.b16 %v2094, %v2093
        %v2216 = vpack.c.b16 %v2096, %v2095
        %v2217 = vpack.c.b16 %v2098, %v2097
        %v2218 = vpack.c.b16 %v2100, %v2099
        %v2219 = vpack.c.b16 %v2102, %v2101
        %v2220 = vpack.c.b16 %v2104, %v2103
        %v2221 = vpack.c.b16 %v2106, %v2105
        %v2222 = vpack.c.b16 %v2108, %v2107
        %v2223 = vpack.c.b16 %v2110, %v2109
        %v2224 = vpack.c.b16 %v2112, %v2111
        %v2225 = vpack.c.b16 %v2114, %v2113
        %v2226 = vpack.c.b16 %v2116, %v2115
        %v2227 = vpack.c.b16 %v2118, %v2117
        %v2228 = vpack.c.b16 %v2120, %v2119
        %v2229 = vpack.c.b16 %v2122, %v2121
        %v2230 = vpack.c.b16 %v2124, %v2123
        %v2231 = vpack.c.b16 %v2126, %v2125
        %v2232 = vpack.c.b16 %v2128, %v2127
        %v2233 = vpack.c.b16 %v2130, %v2129
        %v2234 = vpack.c.b16 %v2132, %v2131
        %v2235 = vpack.c.b16 %v2134, %v2133
        %v2236 = vpack.c.b16 %v2136, %v2135
        %v2237 = vpack.c.b16 %v2138, %v2137
        %v2238 = vpack.c.b16 %v2140, %v2139
        %v2239 = vpack.c.b16 %v2142, %v2141
        %v2240 = vpack.c.b16 %v2144, %v2143
        %v2241 = vpack.c.b16 %v2146, %v2145
        %v2242 = vpack.c.b16 %v2148, %v2147
        %v2243 = vpack.c.b16 %v2150, %v2149
        %v2244 = vpack.c.b16 %v2152, %v2151
        %v2245 = vpack.c.b16 %v2154, %v2153
        %v2246 = vpack.c.b16 %v2156, %v2155
        %v2247 = vpack.c.b16 %v2158, %v2157
        %v2248 = vpack.c.b16 %v2160, %v2159
        %v2249 = vpack.c.b16 %v2162, %v2161
        %v2250 = vpack.c.b16 %v2164, %v2163
        %v2251 = vpack.c.b16 %v2166, %v2165
        %v2252 = vpack.c.b16 %v2168, %v2167
        %v2253 = vpack.c.b16 %v2170, %v2169
        %v2254 = vpack.c.b16 %v2172, %v2171
        %v2255 = vpack.c.b16 %v2174, %v2173
        %v2256 = vpack.c.b16 %v2176, %v2175
        %v2257 = vpack.c.b16 %v2178, %v2177
        %v2258 = vpack.c.b16 %v2180, %v2179
        %v2259 = vpack.c.b16 %v2182, %v2181
        %v2260 = vpack.c.b16 %v2184, %v2183
        %v2261 = vpack.c.b16 %v2186, %v2185
        %v2262 = vpack.c.b16 %v2188, %v2187
        %v2263 = vpack.c.b16 %v2190, %v2189
        %v2264 = vpack.c.b16 %v2192, %v2191
        %2337 = vmatprep.subr.bf16.mxu0 0
        %2338 = vmatpush1.bf16.msra.mxu0 %v2193
        %2339 = vmatprep.subr.bf16.mxu0 0
        %2340 = vmatpush1.bf16.msra.mxu0 %v2194
        %2341 = vmatprep.subr.bf16.mxu0 0
        %2342 = vmatpush1.bf16.msra.mxu0 %v2195
        %2343 = vmatprep.subr.bf16.mxu0 0
        %2344 = vmatpush1.bf16.msra.mxu0 %v2196
        %2345 = vmatprep.subr.bf16.mxu0 0
        %2346 = vmatpush1.bf16.msra.mxu0 %v2197
        %2347 = vmatprep.subr.bf16.mxu0 0
        %2348 = vmatpush1.bf16.msra.mxu0 %v2198
        %2349 = vmatprep.subr.bf16.mxu0 0
        %2350 = vmatpush1.bf16.msra.mxu0 %v2199
        %2351 = vmatprep.subr.bf16.mxu0 0
        %2352 = vmatpush1.bf16.msra.mxu0 %v2200
        %2353 = vmatprep.subr.bf16.mxu0 0
        %2354 = vmatpush1.bf16.msra.mxu0 %v2201
        %2355 = vmatprep.subr.bf16.mxu0 0
        %2356 = vmatpush1.bf16.msra.mxu0 %v2202
        %2357 = vmatprep.subr.bf16.mxu0 0
        %2358 = vmatpush1.bf16.msra.mxu0 %v2203
        %2359 = vmatprep.subr.bf16.mxu0 0
        %2360 = vmatpush1.bf16.msra.mxu0 %v2204
        %2361 = vmatprep.subr.bf16.mxu0 0
        %2362 = vmatpush1.bf16.msra.mxu0 %v2205
        %2363 = vmatprep.subr.bf16.mxu0 0
        %2364 = vmatpush1.bf16.msra.mxu0 %v2206
        %2365 = vmatprep.subr.bf16.mxu0 0
        %2366 = vmatpush1.bf16.msra.mxu0 %v2207
        %2367 = vmatprep.subr.bf16.mxu0 0
        %2368 = vmatpush1.bf16.msra.mxu0 %v2208
        %2369 = vmatprep.mubr.bf16.mxu0 %v1876
        %2370 = vmatmul.mubr.bf16.gmra.mrb[0].mxu0 %v1872
        %v2371 = vpop.f32.mrb[0].mxu0
        %v2372 = vadd.f32 %v1903, %v2371
        %v2373 = vpop.f32.mrb[0].mxu0
        %v2374 = vpop.f32.mrb[0].mxu0
        %v2375 = vadd.f32 %v1903, %v2374
        %v2376 = vpop.f32.mrb[0].mxu0
        %2377 = vmatprep.mubr.bf16.mxu0 %v1877
        %2378 = vmatmul.mubr.bf16.gmra.mrb[0].mxu0 %v1873
        %v2379 = vpop.f32.mrb[0].mxu0
        %v2380 = vadd.f32 %v1903, %v2379
        %v2381 = vpop.f32.mrb[0].mxu0
        %v2382 = vpop.f32.mrb[0].mxu0
        %v2383 = vadd.f32 %v1903, %v2382
        %v2384 = vpop.f32.mrb[0].mxu0
        %2385 = vmatprep.mubr.bf16.mxu0 %v1878
        %2386 = vmatmul.mubr.bf16.gmra.mrb[0].mxu0 %v1874
        %v2387 = vpop.f32.mrb[0].mxu0
        %v2388 = vadd.f32 %v1903, %v2387
        %v2389 = vpop.f32.mrb[0].mxu0
        %v2390 = vpop.f32.mrb[0].mxu0
        %v2391 = vadd.f32 %v1903, %v2390
        %v2392 = vpop.f32.mrb[0].mxu0
        %2393 = vmatprep.mubr.bf16.mxu0 %v1879
        %2394 = vmatmul.mubr.bf16.gmra.mrb[0].mxu0 %v1875
        %v2395 = vpop.f32.mrb[0].mxu0
        %v2396 = vadd.f32 %v1903, %v2395
        %v2397 = vpop.f32.mrb[0].mxu0
        %v2398 = vpop.f32.mrb[0].mxu0
        %v2399 = vadd.f32 %v1903, %v2398
        %v2400 = vpop.f32.mrb[0].mxu0
        %2401 = vdwg.mxu0
        %2402 = vmatprep.subr.bf16.mxu0 0
        %2403 = vmatpush1.bf16.msra.mxu0 %v2209
        %2404 = vmatprep.subr.bf16.mxu0 0
        %2405 = vmatpush1.bf16.msra.mxu0 %v2210
        %2406 = vmatprep.subr.bf16.mxu0 0
        %2407 = vmatpush1.bf16.msra.mxu0 %v2211
        %2408 = vmatprep.subr.bf16.mxu0 0
        %2409 = vmatpush1.bf16.msra.mxu0 %v2212
        %2410 = vmatprep.subr.bf16.mxu0 0
        %2411 = vmatpush1.bf16.msra.mxu0 %v2213
        %2412 = vmatprep.subr.bf16.mxu0 0
        %2413 = vmatpush1.bf16.msra.mxu0 %v2214
        %2414 = vmatprep.subr.bf16.mxu0 0
        %2415 = vmatpush1.bf16.msra.mxu0 %v2215
        %2416 = vmatprep.subr.bf16.mxu0 0
        %2417 = vmatpush1.bf16.msra.mxu0 %v2216
        %2418 = vmatprep.subr.bf16.mxu0 0
        %2419 = vmatpush1.bf16.msra.mxu0 %v2217
        %2420 = vmatprep.subr.bf16.mxu0 0
        %2421 = vmatpush1.bf16.msra.mxu0 %v2218
        %2422 = vmatprep.subr.bf16.mxu0 0
        %2423 = vmatpush1.bf16.msra.mxu0 %v2219
        %2424 = vmatprep.subr.bf16.mxu0 0
        %2425 = vmatpush1.bf16.msra.mxu0 %v2220
        %2426 = vmatprep.subr.bf16.mxu0 0
        %2427 = vmatpush1.bf16.msra.mxu0 %v2221
        %2428 = vmatprep.subr.bf16.mxu0 0
        %2429 = vmatpush1.bf16.msra.mxu0 %v2222
        %2430 = vmatprep.subr.bf16.mxu0 0
        %2431 = vmatpush1.bf16.msra.mxu0 %v2223
        %2432 = vmatprep.subr.bf16.mxu0 0
        %2433 = vmatpush1.bf16.msra.mxu0 %v2224
        %2434 = vmatprep.mubr.bf16.mxu0 %v1884
        %2435 = vmatmul.mubr.bf16.gmra.mrb[0].mxu0 %v1880
        %v2436 = vpop.f32.mrb[0].mxu0
        %v2437 = vadd.f32 %v2372, %v2436
        %v2438 = vpop.f32.mrb[0].mxu0
        %v2439 = vpop.f32.mrb[0].mxu0
        %v2440 = vadd.f32 %v2375, %v2439
        %v2441 = vpop.f32.mrb[0].mxu0
        %2442 = vmatprep.mubr.bf16.mxu0 %v1885
        %2443 = vmatmul.mubr.bf16.gmra.mrb[0].mxu0 %v1881
        %v2444 = vpop.f32.mrb[0].mxu0
        %v2445 = vadd.f32 %v2380, %v2444
        %v2446 = vpop.f32.mrb[0].mxu0
        %v2447 = vpop.f32.mrb[0].mxu0
        %v2448 = vadd.f32 %v2383, %v2447
        %v2449 = vpop.f32.mrb[0].mxu0
        %2450 = vmatprep.mubr.bf16.mxu0 %v1886
        %2451 = vmatmul.mubr.bf16.gmra.mrb[0].mxu0 %v1882
        %v2452 = vpop.f32.mrb[0].mxu0
        %v2453 = vadd.f32 %v2388, %v2452
        %v2454 = vpop.f32.mrb[0].mxu0
        %v2455 = vpop.f32.mrb[0].mxu0
        %v2456 = vadd.f32 %v2391, %v2455
        %v2457 = vpop.f32.mrb[0].mxu0
        %2458 = vmatprep.mubr.bf16.mxu0 %v1887
        %2459 = vmatmul.mubr.bf16.gmra.mrb[0].mxu0 %v1883
        %v2460 = vpop.f32.mrb[0].mxu0
        %v2461 = vadd.f32 %v2396, %v2460
        %v2462 = vpop.f32.mrb[0].mxu0
        %v2463 = vpop.f32.mrb[0].mxu0
        %v2464 = vadd.f32 %v2399, %v2463
        %v2465 = vpop.f32.mrb[0].mxu0
        %2466 = vdwg.mxu0
        %2467 = vmatprep.subr.bf16.mxu0 0
        %2468 = vmatpush1.bf16.msra.mxu0 %v2225
        %2469 = vmatprep.subr.bf16.mxu0 0
        %2470 = vmatpush1.bf16.msra.mxu0 %v2226
        %2471 = vmatprep.subr.bf16.mxu0 0
        %2472 = vmatpush1.bf16.msra.mxu0 %v2227
        %2473 = vmatprep.subr.bf16.mxu0 0
        %2474 = vmatpush1.bf16.msra.mxu0 %v2228
        %2475 = vmatprep.subr.bf16.mxu0 0
        %2476 = vmatpush1.bf16.msra.mxu0 %v2229
        %2477 = vmatprep.subr.bf16.mxu0 0
        %2478 = vmatpush1.bf16.msra.mxu0 %v2230
        %2479 = vmatprep.subr.bf16.mxu0 0
        %2480 = vmatpush1.bf16.msra.mxu0 %v2231
        %2481 = vmatprep.subr.bf16.mxu0 0
        %2482 = vmatpush1.bf16.msra.mxu0 %v2232
        %2483 = vmatprep.subr.bf16.mxu0 0
        %2484 = vmatpush1.bf16.msra.mxu0 %v2233
        %2485 = vmatprep.subr.bf16.mxu0 0
        %2486 = vmatpush1.bf16.msra.mxu0 %v2234
        %2487 = vmatprep.subr.bf16.mxu0 0
        %2488 = vmatpush1.bf16.msra.mxu0 %v2235
        %2489 = vmatprep.subr.bf16.mxu0 0
        %2490 = vmatpush1.bf16.msra.mxu0 %v2236
        %2491 = vmatprep.subr.bf16.mxu0 0
        %2492 = vmatpush1.bf16.msra.mxu0 %v2237
        %2493 = vmatprep.subr.bf16.mxu0 0
        %2494 = vmatpush1.bf16.msra.mxu0 %v2238
        %2495 = vmatprep.subr.bf16.mxu0 0
        %2496 = vmatpush1.bf16.msra.mxu0 %v2239
        %2497 = vmatprep.subr.bf16.mxu0 0
        %2498 = vmatpush1.bf16.msra.mxu0 %v2240
        %2499 = vmatprep.mubr.bf16.mxu0 %v1892
        %2500 = vmatmul.mubr.bf16.gmra.mrb[0].mxu0 %v1888
        %v2501 = vpop.f32.mrb[0].mxu0
        %v2502 = vadd.f32 %v2437, %v2501
        %v2503 = vpop.f32.mrb[0].mxu0
        %v2504 = vpop.f32.mrb[0].mxu0
        %v2505 = vadd.f32 %v2440, %v2504
        %v2506 = vpop.f32.mrb[0].mxu0
        %2507 = vmatprep.mubr.bf16.mxu0 %v1893
        %2508 = vmatmul.mubr.bf16.gmra.mrb[0].mxu0 %v1889
        %v2509 = vpop.f32.mrb[0].mxu0
        %v2510 = vadd.f32 %v2445, %v2509
        %v2511 = vpop.f32.mrb[0].mxu0
        %v2512 = vpop.f32.mrb[0].mxu0
        %v2513 = vadd.f32 %v2448, %v2512
        %v2514 = vpop.f32.mrb[0].mxu0
        %2515 = vmatprep.mubr.bf16.mxu0 %v1894
        %2516 = vmatmul.mubr.bf16.gmra.mrb[0].mxu0 %v1890
        %v2517 = vpop.f32.mrb[0].mxu0
        %v2518 = vadd.f32 %v2453, %v2517
        %v2519 = vpop.f32.mrb[0].mxu0
        %v2520 = vpop.f32.mrb[0].mxu0
        %v2521 = vadd.f32 %v2456, %v2520
        %v2522 = vpop.f32.mrb[0].mxu0
        %2523 = vmatprep.mubr.bf16.mxu0 %v1895
        %2524 = vmatmul.mubr.bf16.gmra.mrb[0].mxu0 %v1891
        %v2525 = vpop.f32.mrb[0].mxu0
        %v2526 = vadd.f32 %v2461, %v2525
        %v2527 = vpop.f32.mrb[0].mxu0
        %v2528 = vpop.f32.mrb[0].mxu0
        %v2529 = vadd.f32 %v2464, %v2528
        %v2530 = vpop.f32.mrb[0].mxu0
        %2531 = vdwg.mxu0
        %2532 = vmatprep.subr.bf16.mxu0 0
        %2533 = vmatpush1.bf16.msra.mxu0 %v2241
        %2534 = vmatprep.subr.bf16.mxu0 0
        %2535 = vmatpush1.bf16.msra.mxu0 %v2242
        %2536 = vmatprep.subr.bf16.mxu0 0
        %2537 = vmatpush1.bf16.msra.mxu0 %v2243
        %2538 = vmatprep.subr.bf16.mxu0 0
        %2539 = vmatpush1.bf16.msra.mxu0 %v2244
        %2540 = vmatprep.subr.bf16.mxu0 0
        %2541 = vmatpush1.bf16.msra.mxu0 %v2245
        %2542 = vmatprep.subr.bf16.mxu0 0
        %2543 = vmatpush1.bf16.msra.mxu0 %v2246
        %2544 = vmatprep.subr.bf16.mxu0 0
        %2545 = vmatpush1.bf16.msra.mxu0 %v2247
        %2546 = vmatprep.subr.bf16.mxu0 0
        %2547 = vmatpush1.bf16.msra.mxu0 %v2248
        %2548 = vmatprep.subr.bf16.mxu0 0
        %2549 = vmatpush1.bf16.msra.mxu0 %v2249
        %2550 = vmatprep.subr.bf16.mxu0 0
        %2551 = vmatpush1.bf16.msra.mxu0 %v2250
        %2552 = vmatprep.subr.bf16.mxu0 0
        %2553 = vmatpush1.bf16.msra.mxu0 %v2251
        %2554 = vmatprep.subr.bf16.mxu0 0
        %2555 = vmatpush1.bf16.msra.mxu0 %v2252
        %2556 = vmatprep.subr.bf16.mxu0 0
        %2557 = vmatpush1.bf16.msra.mxu0 %v2253
        %2558 = vmatprep.subr.bf16.mxu0 0
        %2559 = vmatpush1.bf16.msra.mxu0 %v2254
        %2560 = vmatprep.subr.bf16.mxu0 0
        %2561 = vmatpush1.bf16.msra.mxu0 %v2255
        %2562 = vmatprep.subr.bf16.mxu0 0
        %2563 = vmatpush1.bf16.msra.mxu0 %v2256
        %2564 = vmatprep.mubr.bf16.mxu0 %v1877
        %2565 = vmatmul.mubr.bf16.gmra.mrb[0].mxu0 %v1873
        %v2566 = vpop.f32.mrb[0].mxu0
        %v2567 = vadd.f32 %v2502, %v2566
        %v2568 = vpop.f32.mrb[0].mxu0
        %v2569 = vpop.f32.mrb[0].mxu0
        %v2570 = vadd.f32 %v2505, %v2569
        %v2571 = vpop.f32.mrb[0].mxu0
        %2572 = vmatprep.mubr.bf16.mxu0 %v1878
        %2573 = vmatmul.mubr.bf16.gmra.mrb[0].mxu0 %v1874
        %v2574 = vpop.f32.mrb[0].mxu0
        %v2575 = vadd.f32 %v2510, %v2574
        %v2576 = vpop.f32.mrb[0].mxu0
        %v2577 = vpop.f32.mrb[0].mxu0
        %v2578 = vadd.f32 %v2513, %v2577
        %v2579 = vpop.f32.mrb[0].mxu0
        %2580 = vmatprep.mubr.bf16.mxu0 %v1879
        %2581 = vmatmul.mubr.bf16.gmra.mrb[0].mxu0 %v1875
        %v2582 = vpop.f32.mrb[0].mxu0
        %v2583 = vadd.f32 %v2518, %v2582
        %v2584 = vpop.f32.mrb[0].mxu0
        %v2585 = vpop.f32.mrb[0].mxu0
        %v2586 = vadd.f32 %v2521, %v2585
        %v2587 = vpop.f32.mrb[0].mxu0
        %2588 = vmatprep.mubr.bf16.mxu0 %v1897
        %2589 = vmatmul.mubr.bf16.gmra.mrb[0].mxu0 %v1896
        %v2590 = vpop.f32.mrb[0].mxu0
        %v2591 = vadd.f32 %v2526, %v2590
        %v2592 = vpop.f32.mrb[0].mxu0
        %v2593 = vpop.f32.mrb[0].mxu0
        %v2594 = vadd.f32 %v2529, %v2593
        %v2595 = vpop.f32.mrb[0].mxu0
        %2596 = vdwg.mxu0
        %2597 = vmatprep.subr.bf16.mxu0 0
        %2598 = vmatpush1.bf16.msra.mxu0 %v2257
        %2599 = vmatprep.subr.bf16.mxu0 0
        %2600 = vmatpush1.bf16.msra.mxu0 %v2258
        %2601 = vmatprep.subr.bf16.mxu0 0
        %2602 = vmatpush1.bf16.msra.mxu0 %v2259
        %2603 = vmatprep.subr.bf16.mxu0 0
        %2604 = vmatpush1.bf16.msra.mxu0 %v2260
        %2605 = vmatprep.subr.bf16.mxu0 0
        %2606 = vmatpush1.bf16.msra.mxu0 %v2261
        %2607 = vmatprep.subr.bf16.mxu0 0
        %2608 = vmatpush1.bf16.msra.mxu0 %v2262
        %2609 = vmatprep.subr.bf16.mxu0 0
        %2610 = vmatpush1.bf16.msra.mxu0 %v2263
        %2611 = vmatprep.subr.bf16.mxu0 0
        %2612 = vmatpush1.bf16.msra.mxu0 %v2264
        %2613 = vmatprep.subr.bf16.mxu0 0
        %2614 = vmatpush1.bf16.msra.mxu0 0
        %2615 = vmatprep.subr.bf16.mxu0 0
        %2616 = vmatpush1.bf16.msra.mxu0 0
        %2617 = vmatprep.subr.bf16.mxu0 0
        %2618 = vmatpush1.bf16.msra.mxu0 0
        %2619 = vmatprep.subr.bf16.mxu0 0
        %2620 = vmatpush1.bf16.msra.mxu0 0
        %2621 = vmatprep.subr.bf16.mxu0 0
        %2622 = vmatpush1.bf16.msra.mxu0 0
        %2623 = vmatprep.subr.bf16.mxu0 0
        %2624 = vmatpush1.bf16.msra.mxu0 0
        %2625 = vmatprep.subr.bf16.mxu0 0
        %2626 = vmatpush1.bf16.msra.mxu0 0
        %2627 = vmatprep.subr.bf16.mxu0 0
        %2628 = vmatpush1.bf16.msra.mxu0 0
        %2629 = vmatprep.mubr.bf16.mxu0 0
        %2630 = vmatmul.mubr.bf16.gmra.mrb[0].mxu0 %v1881
        %v2631 = vpop.f32.mrb[0].mxu0
        %v2632 = vadd.f32 %v2567, %v2631
        %v2633 = vpop.f32.mrb[0].mxu0
        %v2634 = vpop.f32.mrb[0].mxu0
        %v2635 = vadd.f32 %v2570, %v2634
        %v2636 = vpop.f32.mrb[0].mxu0
        %2637 = vmatprep.mubr.bf16.mxu0 0
        %2638 = vmatmul.mubr.bf16.gmra.mrb[0].mxu0 %v1882
        %v2639 = vpop.f32.mrb[0].mxu0
        %v2640 = vadd.f32 %v2575, %v2639
        %v2641 = vpop.f32.mrb[0].mxu0
        %v2642 = vpop.f32.mrb[0].mxu0
        %v2643 = vadd.f32 %v2578, %v2642
        %v2644 = vpop.f32.mrb[0].mxu0
        %2645 = vmatprep.mubr.bf16.mxu0 0
        %2646 = vmatmul.mubr.bf16.gmra.mrb[0].mxu0 %v1883
        %v2647 = vpop.f32.mrb[0].mxu0
        %v2648 = vadd.f32 %v2583, %v2647
        %v2649 = vpop.f32.mrb[0].mxu0
        %v2650 = vpop.f32.mrb[0].mxu0
        %v2651 = vadd.f32 %v2586, %v2650
        %v2652 = vpop.f32.mrb[0].mxu0
        %2653 = vmatprep.mubr.bf16.mxu0 0
        %2654 = vmatmul.mubr.bf16.gmra.mrb[0].mxu0 %v1898
        %v2655 = vpop.f32.mrb[0].mxu0
        %v2656 = vadd.f32 %v2591, %v2655
        %v2657 = vpop.f32.mrb[0].mxu0
        %v2658 = vpop.f32.mrb[0].mxu0
        %v2659 = vadd.f32 %v2594, %v2658
        %v2660 = vpop.f32.mrb[0].mxu0
        %2661 = vdwg.mxu0
        %vm2662 = vcmp.gt.f32.partialorder %v2632, 0.0
        %vm2663 = vcmp.gt.f32.partialorder %v2635, 0.0
        %vm2664 = vcmp.gt.f32.partialorder %v2640, 0.0
        %vm2665 = vcmp.gt.f32.partialorder %v2643, 0.0
        %vm2666 = vcmp.gt.f32.partialorder %v2648, 0.0
        %vm2667 = vcmp.gt.f32.partialorder %v2651, 0.0
        %vm2668 = vcmp.gt.f32.partialorder %v2656, 0.0
        %vm2669 = vcmp.gt.f32.partialorder %v2659, 0.0
        %v2670 = vmul.f32 %v2632, 0.2
        %v2671 = vmul.f32 %v2635, 0.2
        %v2672 = vmul.f32 %v2640, 0.2
        %v2673 = vmul.f32 %v2643, 0.2
        %v2674 = vmul.f32 %v2648, 0.2
        %v2675 = vmul.f32 %v2651, 0.2
        %v2676 = vmul.f32 %v2656, 0.2
        %v2677 = vmul.f32 %v2659, 0.2
        %v2678 = vsel %vm2662, %v2632, %v2670
        %v2679 = vsel %vm2663, %v2635, %v2671
        %v2680 = vsel %vm2664, %v2640, %v2672
        %v2681 = vsel %vm2665, %v2643, %v2673
        %v2682 = vsel %vm2666, %v2648, %v2674
        %v2683 = vsel %vm2667, %v2651, %v2675
        %v2684 = vsel %vm2668, %v2656, %v2676
        %v2685 = vsel %vm2669, %v2659, %v2677
        %s2686 = scalar_lea.vmem [#allocation5], 1152
        %v2687 = vld [vmem:[%s2686] sm:$0xf]
        %v2688 = vld [vmem:[%s2686 + $0x4] sm:$0xf]
        %v2689 = vld [vmem:[%s2686 + $0x8] sm:$0xf]
        %v2690 = vld [vmem:[%s2686 + $0xc] sm:$0xf]
        %v2691 = vld [vmem:[%s2686 + $0x10] sm:$0xf]
        %v2692 = vld [vmem:[%s2686 + $0x14] sm:$0xf]
        %v2693 = vld [vmem:[%s2686 + $0x18] sm:$0xf]
        %v2694 = vld [vmem:[%s2686 + $0x1c] sm:$0xf]
        %v2695 = vld [vmem:[%s2686 + $0x20] sm:$0xf]
        %v2696 = vld [vmem:[%s2686 + $0x24] sm:$0xf]
        %v2697 = vld [vmem:[%s2686 + $0x28] sm:$0xf]
        %v2698 = vld [vmem:[%s2686 + $0x2c] sm:$0xf]
        %v2699 = vld [vmem:[%s2686 + $0x30] sm:$0xf]
        %v2700 = vld [vmem:[%s2686 + $0x34] sm:$0xf]
        %v2701 = vld [vmem:[%s2686 + $0x38] sm:$0xf]
        %v2702 = vld [vmem:[%s2686 + $0x3c] sm:$0xf]
        %v2703 = vld [vmem:[%s2686 + $0x40] sm:$0xf]
        %v2704 = vld [vmem:[%s2686 + $0x44] sm:$0xf]
        %v2705 = vld [vmem:[%s2686 + $0x48] sm:$0xf]
        %v2706 = vld [vmem:[%s2686 + $0x4c] sm:$0xf]
        %v2707 = vld [vmem:[%s2686 + $0x50] sm:$0xf]
        %v2708 = vld [vmem:[%s2686 + $0x54] sm:$0xf]
        %v2709 = vld [vmem:[%s2686 + $0x58] sm:$0xf]
        %v2710 = vld [vmem:[%s2686 + $0x5c] sm:$0xf]
        %v2711 = vld [vmem:[%s2686 + $0x60] sm:$0xf]
        %v2712 = vld [vmem:[%s2686 + $0x64] sm:$0xf]
        %v2713 = vld [vmem:[%s2686 + $0x68] sm:$0xf]
        %v2714 = vld [vmem:[%s2686 + $0x6c] sm:$0xf]
        %v2715 = vld [vmem:[%s2686 + $0x70] sm:$0xf]
        %v2716 = vld [vmem:[%s2686 + $0x74] sm:$0xf]
        %v2717 = vld [vmem:[%s2686 + $0x78] sm:$0xf]
        %v2718 = vld [vmem:[%s2686 + $0x7c] sm:$0xf]
        %v2719 = vld [vmem:[%s2686 + $0x80] sm:$0xf]
        %v2720 = vld [vmem:[%s2686 + $0x84] sm:$0xf]
        %v2721 = vld [vmem:[%s2686 + $0x88] sm:$0xf]
        %v2722 = vld [vmem:[%s2686 + $0x8c] sm:$0xf]
        %v2723 = vld [vmem:[%s2686 + $0x90] sm:$0xf]
        %v2724 = vld [vmem:[%s2686 + $0x94] sm:$0xf]
        %v2725 = vld [vmem:[%s2686 + $0x98] sm:$0xf]
        %v2726 = vld [vmem:[%s2686 + $0x9c] sm:$0xf]
        %v2727 = vld [vmem:[%s2686 + $0xa0] sm:$0xf]
        %v2728 = vld [vmem:[%s2686 + $0xa4] sm:$0xf]
        %v2729 = vld [vmem:[%s2686 + $0xa8] sm:$0xf]
        %v2730 = vld [vmem:[%s2686 + $0xac] sm:$0xf]
        %v2731 = vld [vmem:[%s2686 + $0xb0] sm:$0xf]
        %v2732 = vld [vmem:[%s2686 + $0xb4] sm:$0xf]
        %v2733 = vld [vmem:[%s2686 + $0xb8] sm:$0xf]
        %v2734 = vld [vmem:[%s2686 + $0xbc] sm:$0xf]
        %v2735 = vld [vmem:[%s2686 + $0xc0] sm:$0xf]
        %v2736 = vld [vmem:[%s2686 + $0xc4] sm:$0xf]
        %v2737 = vld [vmem:[%s2686 + $0xc8] sm:$0xf]
        %v2738 = vld [vmem:[%s2686 + $0xcc] sm:$0xf]
        %v2739 = vld [vmem:[%s2686 + $0xd0] sm:$0xf]
        %v2740 = vld [vmem:[%s2686 + $0xd4] sm:$0xf]
        %v2741 = vld [vmem:[%s2686 + $0xd8] sm:$0xf]
        %v2742 = vld [vmem:[%s2686 + $0xdc] sm:$0xf]
        %v2743 = vld [vmem:[%s2686 + $0xe0] sm:$0xf]
        %v2744 = vld [vmem:[%s2686 + $0xe4] sm:$0xf]
        %v2745 = vld [vmem:[%s2686 + $0xe8] sm:$0xf]
        %v2746 = vld [vmem:[%s2686 + $0xec] sm:$0xf]
        %v2747 = vld [vmem:[%s2686 + $0xf0] sm:$0xf]
        %v2748 = vld [vmem:[%s2686 + $0xf4] sm:$0xf]
        %v2749 = vld [vmem:[%s2686 + $0xf8] sm:$0xf]
        %v2750 = vld [vmem:[%s2686 + $0xfc] sm:$0xf]
        %v2751 = vld [vmem:[%s2686 + $0x100] sm:$0xf]
        %v2752 = vld [vmem:[%s2686 + $0x104] sm:$0xf]
        %v2753 = vld [vmem:[%s2686 + $0x108] sm:$0xf]
        %v2754 = vld [vmem:[%s2686 + $0x10c] sm:$0xf]
        %v2755 = vld [vmem:[%s2686 + $0x110] sm:$0xf]
        %v2756 = vld [vmem:[%s2686 + $0x114] sm:$0xf]
        %v2757 = vld [vmem:[%s2686 + $0x118] sm:$0xf]
        %v2758 = vld [vmem:[%s2686 + $0x11c] sm:$0xf]
        %v2759 = vld [vmem:[%s2686 + $0x120] sm:$0xf]
        %v2760 = vld [vmem:[%s2686 + $0x124] sm:$0xf]
        %v2761 = vld [vmem:[%s2686 + $0x128] sm:$0xf]
        %v2762 = vld [vmem:[%s2686 + $0x12c] sm:$0xf]
        %v2763 = vld [vmem:[%s2686 + $0x130] sm:$0xf]
        %v2764 = vld [vmem:[%s2686 + $0x134] sm:$0xf]
        %v2765 = vld [vmem:[%s2686 + $0x138] sm:$0xf]
        %v2766 = vld [vmem:[%s2686 + $0x13c] sm:$0xf]
        %v2767 = vld [vmem:[%s2686 + $0x140] sm:$0xf]
        %v2768 = vld [vmem:[%s2686 + $0x144] sm:$0xf]
        %v2769 = vld [vmem:[%s2686 + $0x148] sm:$0xf]
        %v2770 = vld [vmem:[%s2686 + $0x14c] sm:$0xf]
        %v2771 = vld [vmem:[%s2686 + $0x150] sm:$0xf]
        %v2772 = vld [vmem:[%s2686 + $0x154] sm:$0xf]
        %v2773 = vld [vmem:[%s2686 + $0x158] sm:$0xf]
        %v2774 = vld [vmem:[%s2686 + $0x15c] sm:$0xf]
        %v2775 = vld [vmem:[%s2686 + $0x160] sm:$0xf]
        %v2776 = vld [vmem:[%s2686 + $0x164] sm:$0xf]
        %v2777 = vld [vmem:[%s2686 + $0x168] sm:$0xf]
        %v2778 = vld [vmem:[%s2686 + $0x16c] sm:$0xf]
        %v2779 = vld [vmem:[%s2686 + $0x170] sm:$0xf]
        %v2780 = vld [vmem:[%s2686 + $0x174] sm:$0xf]
        %v2781 = vld [vmem:[%s2686 + $0x178] sm:$0xf]
        %v2782 = vld [vmem:[%s2686 + $0x17c] sm:$0xf]
        %v2783 = vld [vmem:[%s2686 + $0x180] sm:$0xf]
        %v2784 = vld [vmem:[%s2686 + $0x184] sm:$0xf]
        %v2785 = vld [vmem:[%s2686 + $0x188] sm:$0xf]
        %v2786 = vld [vmem:[%s2686 + $0x18c] sm:$0xf]
        %v2787 = vld [vmem:[%s2686 + $0x190] sm:$0xf]
        %v2788 = vld [vmem:[%s2686 + $0x194] sm:$0xf]
        %v2789 = vld [vmem:[%s2686 + $0x198] sm:$0xf]
        %v2790 = vld [vmem:[%s2686 + $0x19c] sm:$0xf]
        %v2791 = vld [vmem:[%s2686 + $0x1a0] sm:$0xf]
        %v2792 = vld [vmem:[%s2686 + $0x1a4] sm:$0xf]
        %v2793 = vld [vmem:[%s2686 + $0x1a8] sm:$0xf]
        %v2794 = vld [vmem:[%s2686 + $0x1ac] sm:$0xf]
        %v2795 = vld [vmem:[%s2686 + $0x1b0] sm:$0xf]
        %v2796 = vld [vmem:[%s2686 + $0x1b4] sm:$0xf]
        %v2797 = vld [vmem:[%s2686 + $0x1b8] sm:$0xf]
        %v2798 = vld [vmem:[%s2686 + $0x1bc] sm:$0xf]
        %v2799 = vld [vmem:[%s2686 + $0x1c0] sm:$0xf]
        %v2800 = vld [vmem:[%s2686 + $0x1c4] sm:$0xf]
        %v2801 = vld [vmem:[%s2686 + $0x1c8] sm:$0xf]
        %v2802 = vld [vmem:[%s2686 + $0x1cc] sm:$0xf]
        %v2803 = vld [vmem:[%s2686 + $0x1d0] sm:$0xf]
        %v2804 = vld [vmem:[%s2686 + $0x1d4] sm:$0xf]
        %v2805 = vld [vmem:[%s2686 + $0x1d8] sm:$0xf]
        %v2806 = vld [vmem:[%s2686 + $0x1dc] sm:$0xf]
        %v2807 = vld [vmem:[%s2686 + $0x1e0] sm:$0xf]
        %v2808 = vld [vmem:[%s2686 + $0x1e4] sm:$0xf]
        %v2809 = vld [vmem:[%s2686 + $0x1e8] sm:$0xf]
        %v2810 = vld [vmem:[%s2686 + $0x1ec] sm:$0xf]
        %v2811 = vld [vmem:[%s2686 + $0x1f0] sm:$0xf]
        %v2812 = vld [vmem:[%s2686 + $0x1f4] sm:$0xf]
        %v2813 = vld [vmem:[%s2686 + $0x1f8] sm:$0xf]
        %v2814 = vld [vmem:[%s2686 + $0x1fc] sm:$0xf]
        %v2815 = vld [vmem:[%s2686 + $0x200] sm:$0xf]
        %v2816 = vld [vmem:[%s2686 + $0x204] sm:$0xf]
        %v2817 = vld [vmem:[%s2686 + $0x208] sm:$0xf]
        %v2818 = vld [vmem:[%s2686 + $0x20c] sm:$0xf]
        %v2819 = vld [vmem:[%s2686 + $0x210] sm:$0xf]
        %v2820 = vld [vmem:[%s2686 + $0x214] sm:$0xf]
        %v2821 = vld [vmem:[%s2686 + $0x218] sm:$0xf]
        %v2822 = vld [vmem:[%s2686 + $0x21c] sm:$0xf]
        %v2823 = vld [vmem:[%s2686 + $0x220] sm:$0xf]
        %v2824 = vld [vmem:[%s2686 + $0x224] sm:$0xf]
        %v2825 = vld [vmem:[%s2686 + $0x228] sm:$0xf]
        %v2826 = vld [vmem:[%s2686 + $0x22c] sm:$0xf]
        %v2827 = vld [vmem:[%s2686 + $0x230] sm:$0xf]
        %v2828 = vld [vmem:[%s2686 + $0x234] sm:$0xf]
        %v2829 = vld [vmem:[%s2686 + $0x238] sm:$0xf]
        %v2830 = vld [vmem:[%s2686 + $0x23c] sm:$0xf]
        %s2831 = scalar_lea.vmem [#allocation7], 2
        %v2832 = vld [vmem:[%s2831] sm:$0x1]
        %v2841 = vrot.slane %v2678, 7
        %v2842 = vsel %vm1792, %v1793, %v2841
        %v2843 = vrot.slane %v2679, 7
        %v2844 = vsel %vm1792, %v2841, %v2843
        %v2845 = vrot.slane %v2680, 7
        %v2846 = vsel %vm1792, %v2843, %v2845
        %v2847 = vrot.slane %v2681, 7
        %v2848 = vsel %vm1792, %v2845, %v2847
        %v2849 = vrot.slane %v2682, 7
        %v2850 = vsel %vm1792, %v2847, %v2849
        %v2851 = vrot.slane %v2683, 7
        %v2852 = vsel %vm1792, %v2849, %v2851
        %v2853 = vrot.slane %v2684, 7
        %v2854 = vsel %vm1792, %v2851, %v2853
        %v2855 = vrot.slane %v2685, 7
        %v2856 = vsel %vm1792, %v2853, %v2855
        %v2857 = vsel %vm1792, %v2855, %v1793
        %v2867 = vsel %vm442, %v2842, 0.0
        %v2868 = vsel %vm443, %v2844, 0.0
        %v2869 = vsel %vm444, %v2846, 0.0
        %v2870 = vsel %vm445, %v2848, 0.0
        %v2871 = vsel %vm446, %v2850, 0.0
        %v2872 = vsel %vm447, %v2852, 0.0
        %v2873 = vsel %vm448, %v2854, 0.0
        %v2874 = vsel %vm449, %v2856, 0.0
        %v2875 = vsel %vm450, %v2857, 0.0
        %v2876 = vrot.slane %v2678, 1
        %v2877 = vsel %vm1832, %v1833, %v2876
        %v2878 = vrot.slane %v2679, 1
        %v2879 = vsel %vm1832, %v2876, %v2878
        %v2880 = vrot.slane %v2680, 1
        %v2881 = vsel %vm1832, %v2878, %v2880
        %v2882 = vrot.slane %v2681, 1
        %v2883 = vsel %vm1832, %v2880, %v2882
        %v2884 = vrot.slane %v2682, 1
        %v2885 = vsel %vm1832, %v2882, %v2884
        %v2886 = vrot.slane %v2683, 1
        %v2887 = vsel %vm1832, %v2884, %v2886
        %v2888 = vrot.slane %v2684, 1
        %v2889 = vsel %vm1832, %v2886, %v2888
        %v2890 = vrot.slane %v2685, 1
        %v2891 = vsel %vm1832, %v2888, %v2890
        %v2892 = vsel %vm1832, %v2890, %v1833
        %v2902 = vsel %vm451, %v2877, 0.0
        %v2903 = vsel %vm452, %v2879, 0.0
        %v2904 = vsel %vm453, %v2881, 0.0
        %v2905 = vsel %vm454, %v2883, 0.0
        %v2906 = vsel %vm455, %v2885, 0.0
        %v2907 = vsel %vm456, %v2887, 0.0
        %v2908 = vsel %vm457, %v2889, 0.0
        %v2909 = vsel %vm458, %v2891, 0.0
        %v2910 = vsel %vm459, %v2892, 0.0
        %v2911 = vpack.c.bf16 %v2867, %v1822
        %v2912 = vpack.c.bf16 %v2869, %v2868
        %v2913 = vpack.c.bf16 %v2871, %v2870
        %v2914 = vpack.c.bf16 %v2873, %v2872
        %v2915 = vpack.c.bf16 %v2678, 0.0
        %v2916 = vpack.c.bf16 %v2680, %v2679
        %v2917 = vpack.c.bf16 %v2682, %v2681
        %v2918 = vpack.c.bf16 %v2684, %v2683
        %v2919 = vpack.c.bf16 %v2903, %v2902
        %v2920 = vpack.c.bf16 %v2905, %v2904
        %v2921 = vpack.c.bf16 %v2907, %v2906
        %v2922 = vpack.c.bf16 %v2909, %v2908
        %v2923 = vpack.c.bf16 %v2868, %v2867
        %v2924 = vpack.c.bf16 %v2870, %v2869
        %v2925 = vpack.c.bf16 %v2872, %v2871
        %v2926 = vpack.c.bf16 %v2874, %v2873
        %v2927 = vpack.c.bf16 %v2679, %v2678
        %v2928 = vpack.c.bf16 %v2681, %v2680
        %v2929 = vpack.c.bf16 %v2683, %v2682
        %v2930 = vpack.c.bf16 %v2685, %v2684
        %v2931 = vpack.c.bf16 %v2904, %v2903
        %v2932 = vpack.c.bf16 %v2906, %v2905
        %v2933 = vpack.c.bf16 %v2908, %v2907
        %v2934 = vpack.c.bf16 %v2910, %v2909
        %v2935 = vpack.c.bf16 %v2875, %v2874
        %v2936 = vpack.c.bf16 0.0, %v2685
        %v2937 = vpack.c.bf16 %v1871, %v2910
        %v2939 = vlaneseq
        %v2940 = vshrl.u32 %v2939, 7
        %v2941 = vsub.s32 0, %v2940
        %v2942 = vrot.slane %v2832, %v2941
        %v3088 = vunpack.c.l.b16 %v2687
        %v3089 = vunpack.c.l.b16 %v2688
        %v3090 = vunpack.c.l.b16 %v2689
        %v3091 = vunpack.c.l.b16 %v2690
        %v3092 = vunpack.c.l.b16 %v2691
        %v3093 = vunpack.c.l.b16 %v2692
        %v3094 = vunpack.c.l.b16 %v2693
        %v3095 = vunpack.c.l.b16 %v2694
        %v3096 = vunpack.c.l.b16 %v2695
        %v3097 = vunpack.c.l.b16 %v2696
        %v3098 = vunpack.c.l.b16 %v2697
        %v3099 = vunpack.c.l.b16 %v2698
        %v3100 = vunpack.c.l.b16 %v2699
        %v3101 = vunpack.c.l.b16 %v2700
        %v3102 = vunpack.c.l.b16 %v2701
        %v3103 = vunpack.c.l.b16 %v2702
        %v3104 = vunpack.c.l.b16 %v2703
        %v3105 = vunpack.c.l.b16 %v2704
        %v3106 = vunpack.c.l.b16 %v2705
        %v3107 = vunpack.c.l.b16 %v2706
        %v3108 = vunpack.c.l.b16 %v2707
        %v3109 = vunpack.c.l.b16 %v2708
        %v3110 = vunpack.c.l.b16 %v2709
        %v3111 = vunpack.c.l.b16 %v2710
        %v3112 = vunpack.c.l.b16 %v2711
        %v3113 = vunpack.c.l.b16 %v2712
        %v3114 = vunpack.c.l.b16 %v2713
        %v3115 = vunpack.c.l.b16 %v2714
        %v3116 = vunpack.c.l.b16 %v2715
        %v3117 = vunpack.c.l.b16 %v2716
        %v3118 = vunpack.c.l.b16 %v2717
        %v3119 = vunpack.c.l.b16 %v2718
        %v3120 = vunpack.c.l.b16 %v2719
        %v3121 = vunpack.c.l.b16 %v2720
        %v3122 = vunpack.c.l.b16 %v2721
        %v3123 = vunpack.c.l.b16 %v2722
        %v3124 = vunpack.c.l.b16 %v2723
        %v3125 = vunpack.c.l.b16 %v2724
        %v3126 = vunpack.c.l.b16 %v2725
        %v3127 = vunpack.c.l.b16 %v2726
        %v3128 = vunpack.c.l.b16 %v2727
        %v3129 = vunpack.c.l.b16 %v2728
        %v3130 = vunpack.c.l.b16 %v2729
        %v3131 = vunpack.c.l.b16 %v2730
        %v3132 = vunpack.c.l.b16 %v2731
        %v3133 = vunpack.c.l.b16 %v2732
        %v3134 = vunpack.c.l.b16 %v2733
        %v3135 = vunpack.c.l.b16 %v2734
        %v3136 = vunpack.c.l.b16 %v2735
        %v3137 = vunpack.c.l.b16 %v2736
        %v3138 = vunpack.c.l.b16 %v2737
        %v3139 = vunpack.c.l.b16 %v2738
        %v3140 = vunpack.c.l.b16 %v2739
        %v3141 = vunpack.c.l.b16 %v2740
        %v3142 = vunpack.c.l.b16 %v2741
        %v3143 = vunpack.c.l.b16 %v2742
        %v3144 = vunpack.c.l.b16 %v2743
        %v3145 = vunpack.c.l.b16 %v2744
        %v3146 = vunpack.c.l.b16 %v2745
        %v3147 = vunpack.c.l.b16 %v2746
        %v3148 = vunpack.c.l.b16 %v2747
        %v3149 = vunpack.c.l.b16 %v2748
        %v3150 = vunpack.c.l.b16 %v2749
        %v3151 = vunpack.c.l.b16 %v2750
        %v3152 = vunpack.c.l.b16 %v2751
        %v3153 = vunpack.c.l.b16 %v2752
        %v3154 = vunpack.c.l.b16 %v2753
        %v3155 = vunpack.c.l.b16 %v2754
        %v3156 = vunpack.c.l.b16 %v2755
        %v3157 = vunpack.c.l.b16 %v2756
        %v3158 = vunpack.c.l.b16 %v2757
        %v3159 = vunpack.c.l.b16 %v2758
        %v3160 = vunpack.c.l.b16 %v2759
        %v3161 = vunpack.c.l.b16 %v2760
        %v3162 = vunpack.c.l.b16 %v2761
        %v3163 = vunpack.c.l.b16 %v2762
        %v3164 = vunpack.c.l.b16 %v2763
        %v3165 = vunpack.c.l.b16 %v2764
        %v3166 = vunpack.c.l.b16 %v2765
        %v3167 = vunpack.c.l.b16 %v2766
        %v3168 = vunpack.c.l.b16 %v2767
        %v3169 = vunpack.c.l.b16 %v2768
        %v3170 = vunpack.c.l.b16 %v2769
        %v3171 = vunpack.c.l.b16 %v2770
        %v3172 = vunpack.c.l.b16 %v2771
        %v3173 = vunpack.c.l.b16 %v2772
        %v3174 = vunpack.c.l.b16 %v2773
        %v3175 = vunpack.c.l.b16 %v2774
        %v3176 = vunpack.c.l.b16 %v2775
        %v3177 = vunpack.c.l.b16 %v2776
        %v3178 = vunpack.c.l.b16 %v2777
        %v3179 = vunpack.c.l.b16 %v2778
        %v3180 = vunpack.c.l.b16 %v2779
        %v3181 = vunpack.c.l.b16 %v2780
        %v3182 = vunpack.c.l.b16 %v2781
        %v3183 = vunpack.c.l.b16 %v2782
        %v3184 = vunpack.c.l.b16 %v2783
        %v3185 = vunpack.c.l.b16 %v2784
        %v3186 = vunpack.c.l.b16 %v2785
        %v3187 = vunpack.c.l.b16 %v2786
        %v3188 = vunpack.c.l.b16 %v2787
        %v3189 = vunpack.c.l.b16 %v2788
        %v3190 = vunpack.c.l.b16 %v2789
        %v3191 = vunpack.c.l.b16 %v2790
        %v3192 = vunpack.c.l.b16 %v2791
        %v3193 = vunpack.c.l.b16 %v2792
        %v3194 = vunpack.c.l.b16 %v2793
        %v3195 = vunpack.c.l.b16 %v2794
        %v3196 = vunpack.c.l.b16 %v2795
        %v3197 = vunpack.c.l.b16 %v2796
        %v3198 = vunpack.c.l.b16 %v2797
        %v3199 = vunpack.c.l.b16 %v2798
        %v3200 = vunpack.c.l.b16 %v2799
        %v3201 = vunpack.c.l.b16 %v2800
        %v3202 = vunpack.c.l.b16 %v2801
        %v3203 = vunpack.c.l.b16 %v2802
        %v3204 = vunpack.c.l.b16 %v2803
        %v3205 = vunpack.c.l.b16 %v2804
        %v3206 = vunpack.c.l.b16 %v2805
        %v3207 = vunpack.c.l.b16 %v2806
        %v3208 = vunpack.c.l.b16 %v2807
        %v3209 = vunpack.c.l.b16 %v2808
        %v3210 = vunpack.c.l.b16 %v2809
        %v3211 = vunpack.c.l.b16 %v2810
        %v3212 = vunpack.c.l.b16 %v2811
        %v3213 = vunpack.c.l.b16 %v2812
        %v3214 = vunpack.c.l.b16 %v2813
        %v3215 = vunpack.c.l.b16 %v2814
        %v3216 = vunpack.c.l.b16 %v2815
        %v3217 = vunpack.c.l.b16 %v2816
        %v3218 = vunpack.c.l.b16 %v2817
        %v3219 = vunpack.c.l.b16 %v2818
        %v3220 = vunpack.c.l.b16 %v2819
        %v3221 = vunpack.c.l.b16 %v2820
        %v3222 = vunpack.c.l.b16 %v2821
        %v3223 = vunpack.c.l.b16 %v2822
        %v3224 = vunpack.c.l.b16 %v2823
        %v3225 = vunpack.c.l.b16 %v2824
        %v3226 = vunpack.c.l.b16 %v2825
        %v3227 = vunpack.c.l.b16 %v2826
        %v3228 = vunpack.c.l.b16 %v2827
        %v3229 = vunpack.c.l.b16 %v2828
        %v3230 = vunpack.c.l.b16 %v2829
        %v3231 = vunpack.c.l.b16 %v2830
        %v3232 = vpack.c.b16 %v3089, %v3088
        %v3233 = vpack.c.b16 %v3091, %v3090
        %v3234 = vpack.c.b16 %v3093, %v3092
        %v3235 = vpack.c.b16 %v3095, %v3094
        %v3236 = vpack.c.b16 %v3097, %v3096
        %v3237 = vpack.c.b16 %v3099, %v3098
        %v3238 = vpack.c.b16 %v3101, %v3100
        %v3239 = vpack.c.b16 %v3103, %v3102
        %v3240 = vpack.c.b16 %v3105, %v3104
        %v3241 = vpack.c.b16 %v3107, %v3106
        %v3242 = vpack.c.b16 %v3109, %v3108
        %v3243 = vpack.c.b16 %v3111, %v3110
        %v3244 = vpack.c.b16 %v3113, %v3112
        %v3245 = vpack.c.b16 %v3115, %v3114
        %v3246 = vpack.c.b16 %v3117, %v3116
        %v3247 = vpack.c.b16 %v3119, %v3118
        %v3248 = vpack.c.b16 %v3121, %v3120
        %v3249 = vpack.c.b16 %v3123, %v3122
        %v3250 = vpack.c.b16 %v3125, %v3124
        %v3251 = vpack.c.b16 %v3127, %v3126
        %v3252 = vpack.c.b16 %v3129, %v3128
        %v3253 = vpack.c.b16 %v3131, %v3130
        %v3254 = vpack.c.b16 %v3133, %v3132
        %v3255 = vpack.c.b16 %v3135, %v3134
        %v3256 = vpack.c.b16 %v3137, %v3136
        %v3257 = vpack.c.b16 %v3139, %v3138
        %v3258 = vpack.c.b16 %v3141, %v3140
        %v3259 = vpack.c.b16 %v3143, %v3142
        %v3260 = vpack.c.b16 %v3145, %v3144
        %v3261 = vpack.c.b16 %v3147, %v3146
        %v3262 = vpack.c.b16 %v3149, %v3148
        %v3263 = vpack.c.b16 %v3151, %v3150
        %v3264 = vpack.c.b16 %v3153, %v3152
        %v3265 = vpack.c.b16 %v3155, %v3154
        %v3266 = vpack.c.b16 %v3157, %v3156
        %v3267 = vpack.c.b16 %v3159, %v3158
        %v3268 = vpack.c.b16 %v3161, %v3160
        %v3269 = vpack.c.b16 %v3163, %v3162
        %v3270 = vpack.c.b16 %v3165, %v3164
        %v3271 = vpack.c.b16 %v3167, %v3166
        %v3272 = vpack.c.b16 %v3169, %v3168
        %v3273 = vpack.c.b16 %v3171, %v3170
        %v3274 = vpack.c.b16 %v3173, %v3172
        %v3275 = vpack.c.b16 %v3175, %v3174
        %v3276 = vpack.c.b16 %v3177, %v3176
        %v3277 = vpack.c.b16 %v3179, %v3178
        %v3278 = vpack.c.b16 %v3181, %v3180
        %v3279 = vpack.c.b16 %v3183, %v3182
        %v3280 = vpack.c.b16 %v3185, %v3184
        %v3281 = vpack.c.b16 %v3187, %v3186
        %v3282 = vpack.c.b16 %v3189, %v3188
        %v3283 = vpack.c.b16 %v3191, %v3190
        %v3284 = vpack.c.b16 %v3193, %v3192
        %v3285 = vpack.c.b16 %v3195, %v3194
        %v3286 = vpack.c.b16 %v3197, %v3196
        %v3287 = vpack.c.b16 %v3199, %v3198
        %v3288 = vpack.c.b16 %v3201, %v3200
        %v3289 = vpack.c.b16 %v3203, %v3202
        %v3290 = vpack.c.b16 %v3205, %v3204
        %v3291 = vpack.c.b16 %v3207, %v3206
        %v3292 = vpack.c.b16 %v3209, %v3208
        %v3293 = vpack.c.b16 %v3211, %v3210
        %v3294 = vpack.c.b16 %v3213, %v3212
        %v3295 = vpack.c.b16 %v3215, %v3214
        %v3296 = vpack.c.b16 %v3217, %v3216
        %v3297 = vpack.c.b16 %v3219, %v3218
        %v3298 = vpack.c.b16 %v3221, %v3220
        %v3299 = vpack.c.b16 %v3223, %v3222
        %v3300 = vpack.c.b16 %v3225, %v3224
        %v3301 = vpack.c.b16 %v3227, %v3226
        %v3302 = vpack.c.b16 %v3229, %v3228
        %v3303 = vpack.c.b16 %v3231, %v3230
        %3376 = vmatprep.subr.bf16.mxu0 0
        %3377 = vmatpush1.bf16.msra.mxu0 %v3232
        %3378 = vmatprep.subr.bf16.mxu0 0
        %3379 = vmatpush1.bf16.msra.mxu0 %v3233
        %3380 = vmatprep.subr.bf16.mxu0 0
        %3381 = vmatpush1.bf16.msra.mxu0 %v3234
        %3382 = vmatprep.subr.bf16.mxu0 0
        %3383 = vmatpush1.bf16.msra.mxu0 %v3235
        %3384 = vmatprep.subr.bf16.mxu0 0
        %3385 = vmatpush1.bf16.msra.mxu0 %v3236
        %3386 = vmatprep.subr.bf16.mxu0 0
        %3387 = vmatpush1.bf16.msra.mxu0 %v3237
        %3388 = vmatprep.subr.bf16.mxu0 0
        %3389 = vmatpush1.bf16.msra.mxu0 %v3238
        %3390 = vmatprep.subr.bf16.mxu0 0
        %3391 = vmatpush1.bf16.msra.mxu0 %v3239
        %3392 = vmatprep.subr.bf16.mxu0 0
        %3393 = vmatpush1.bf16.msra.mxu0 %v3240
        %3394 = vmatprep.subr.bf16.mxu0 0
        %3395 = vmatpush1.bf16.msra.mxu0 %v3241
        %3396 = vmatprep.subr.bf16.mxu0 0
        %3397 = vmatpush1.bf16.msra.mxu0 %v3242
        %3398 = vmatprep.subr.bf16.mxu0 0
        %3399 = vmatpush1.bf16.msra.mxu0 %v3243
        %3400 = vmatprep.subr.bf16.mxu0 0
        %3401 = vmatpush1.bf16.msra.mxu0 %v3244
        %3402 = vmatprep.subr.bf16.mxu0 0
        %3403 = vmatpush1.bf16.msra.mxu0 %v3245
        %3404 = vmatprep.subr.bf16.mxu0 0
        %3405 = vmatpush1.bf16.msra.mxu0 %v3246
        %3406 = vmatprep.subr.bf16.mxu0 0
        %3407 = vmatpush1.bf16.msra.mxu0 %v3247
        %3408 = vmatprep.mubr.bf16.mxu0 %v2915
        %3409 = vmatmul.mubr.bf16.gmra.mrb[0].mxu0 %v2911
        %v3410 = vpop.f32.mrb[0].mxu0
        %v3411 = vadd.f32 %v2942, %v3410
        %v3412 = vpop.f32.mrb[0].mxu0
        %v3413 = vpop.f32.mrb[0].mxu0
        %v3414 = vadd.f32 %v2942, %v3413
        %v3415 = vpop.f32.mrb[0].mxu0
        %3416 = vmatprep.mubr.bf16.mxu0 %v2916
        %3417 = vmatmul.mubr.bf16.gmra.mrb[0].mxu0 %v2912
        %v3418 = vpop.f32.mrb[0].mxu0
        %v3419 = vadd.f32 %v2942, %v3418
        %v3420 = vpop.f32.mrb[0].mxu0
        %v3421 = vpop.f32.mrb[0].mxu0
        %v3422 = vadd.f32 %v2942, %v3421
        %v3423 = vpop.f32.mrb[0].mxu0
        %3424 = vmatprep.mubr.bf16.mxu0 %v2917
        %3425 = vmatmul.mubr.bf16.gmra.mrb[0].mxu0 %v2913
        %v3426 = vpop.f32.mrb[0].mxu0
        %v3427 = vadd.f32 %v2942, %v3426
        %v3428 = vpop.f32.mrb[0].mxu0
        %v3429 = vpop.f32.mrb[0].mxu0
        %v3430 = vadd.f32 %v2942, %v3429
        %v3431 = vpop.f32.mrb[0].mxu0
        %3432 = vmatprep.mubr.bf16.mxu0 %v2918
        %3433 = vmatmul.mubr.bf16.gmra.mrb[0].mxu0 %v2914
        %v3434 = vpop.f32.mrb[0].mxu0
        %v3435 = vadd.f32 %v2942, %v3434
        %v3436 = vpop.f32.mrb[0].mxu0
        %v3437 = vpop.f32.mrb[0].mxu0
        %v3438 = vadd.f32 %v2942, %v3437
        %v3439 = vpop.f32.mrb[0].mxu0
        %3440 = vdwg.mxu0
        %3441 = vmatprep.subr.bf16.mxu0 0
        %3442 = vmatpush1.bf16.msra.mxu0 %v3248
        %3443 = vmatprep.subr.bf16.mxu0 0
        %3444 = vmatpush1.bf16.msra.mxu0 %v3249
        %3445 = vmatprep.subr.bf16.mxu0 0
        %3446 = vmatpush1.bf16.msra.mxu0 %v3250
        %3447 = vmatprep.subr.bf16.mxu0 0
        %3448 = vmatpush1.bf16.msra.mxu0 %v3251
        %3449 = vmatprep.subr.bf16.mxu0 0
        %3450 = vmatpush1.bf16.msra.mxu0 %v3252
        %3451 = vmatprep.subr.bf16.mxu0 0
        %3452 = vmatpush1.bf16.msra.mxu0 %v3253
        %3453 = vmatprep.subr.bf16.mxu0 0
        %3454 = vmatpush1.bf16.msra.mxu0 %v3254
        %3455 = vmatprep.subr.bf16.mxu0 0
        %3456 = vmatpush1.bf16.msra.mxu0 %v3255
        %3457 = vmatprep.subr.bf16.mxu0 0
        %3458 = vmatpush1.bf16.msra.mxu0 %v3256
        %3459 = vmatprep.subr.bf16.mxu0 0
        %3460 = vmatpush1.bf16.msra.mxu0 %v3257
        %3461 = vmatprep.subr.bf16.mxu0 0
        %3462 = vmatpush1.bf16.msra.mxu0 %v3258
        %3463 = vmatprep.subr.bf16.mxu0 0
        %3464 = vmatpush1.bf16.msra.mxu0 %v3259
        %3465 = vmatprep.subr.bf16.mxu0 0
        %3466 = vmatpush1.bf16.msra.mxu0 %v3260
        %3467 = vmatprep.subr.bf16.mxu0 0
        %3468 = vmatpush1.bf16.msra.mxu0 %v3261
        %3469 = vmatprep.subr.bf16.mxu0 0
        %3470 = vmatpush1.bf16.msra.mxu0 %v3262
        %3471 = vmatprep.subr.bf16.mxu0 0
        %3472 = vmatpush1.bf16.msra.mxu0 %v3263
        %3473 = vmatprep.mubr.bf16.mxu0 %v2923
        %3474 = vmatmul.mubr.bf16.gmra.mrb[0].mxu0 %v2919
        %v3475 = vpop.f32.mrb[0].mxu0
        %v3476 = vadd.f32 %v3411, %v3475
        %v3477 = vpop.f32.mrb[0].mxu0
        %v3478 = vpop.f32.mrb[0].mxu0
        %v3479 = vadd.f32 %v3414, %v3478
        %v3480 = vpop.f32.mrb[0].mxu0
        %3481 = vmatprep.mubr.bf16.mxu0 %v2924
        %3482 = vmatmul.mubr.bf16.gmra.mrb[0].mxu0 %v2920
        %v3483 = vpop.f32.mrb[0].mxu0
        %v3484 = vadd.f32 %v3419, %v3483
        %v3485 = vpop.f32.mrb[0].mxu0
        %v3486 = vpop.f32.mrb[0].mxu0
        %v3487 = vadd.f32 %v3422, %v3486
        %v3488 = vpop.f32.mrb[0].mxu0
        %3489 = vmatprep.mubr.bf16.mxu0 %v2925
        %3490 = vmatmul.mubr.bf16.gmra.mrb[0].mxu0 %v2921
        %v3491 = vpop.f32.mrb[0].mxu0
        %v3492 = vadd.f32 %v3427, %v3491
        %v3493 = vpop.f32.mrb[0].mxu0
        %v3494 = vpop.f32.mrb[0].mxu0
        %v3495 = vadd.f32 %v3430, %v3494
        %v3496 = vpop.f32.mrb[0].mxu0
        %3497 = vmatprep.mubr.bf16.mxu0 %v2926
        %3498 = vmatmul.mubr.bf16.gmra.mrb[0].mxu0 %v2922
        %v3499 = vpop.f32.mrb[0].mxu0
        %v3500 = vadd.f32 %v3435, %v3499
        %v3501 = vpop.f32.mrb[0].mxu0
        %v3502 = vpop.f32.mrb[0].mxu0
        %v3503 = vadd.f32 %v3438, %v3502
        %v3504 = vpop.f32.mrb[0].mxu0
        %3505 = vdwg.mxu0
        %3506 = vmatprep.subr.bf16.mxu0 0
        %3507 = vmatpush1.bf16.msra.mxu0 %v3264
        %3508 = vmatprep.subr.bf16.mxu0 0
        %3509 = vmatpush1.bf16.msra.mxu0 %v3265
        %3510 = vmatprep.subr.bf16.mxu0 0
        %3511 = vmatpush1.bf16.msra.mxu0 %v3266
        %3512 = vmatprep.subr.bf16.mxu0 0
        %3513 = vmatpush1.bf16.msra.mxu0 %v3267
        %3514 = vmatprep.subr.bf16.mxu0 0
        %3515 = vmatpush1.bf16.msra.mxu0 %v3268
        %3516 = vmatprep.subr.bf16.mxu0 0
        %3517 = vmatpush1.bf16.msra.mxu0 %v3269
        %3518 = vmatprep.subr.bf16.mxu0 0
        %3519 = vmatpush1.bf16.msra.mxu0 %v3270
        %3520 = vmatprep.subr.bf16.mxu0 0
        %3521 = vmatpush1.bf16.msra.mxu0 %v3271
        %3522 = vmatprep.subr.bf16.mxu0 0
        %3523 = vmatpush1.bf16.msra.mxu0 %v3272
        %3524 = vmatprep.subr.bf16.mxu0 0
        %3525 = vmatpush1.bf16.msra.mxu0 %v3273
        %3526 = vmatprep.subr.bf16.mxu0 0
        %3527 = vmatpush1.bf16.msra.mxu0 %v3274
        %3528 = vmatprep.subr.bf16.mxu0 0
        %3529 = vmatpush1.bf16.msra.mxu0 %v3275
        %3530 = vmatprep.subr.bf16.mxu0 0
        %3531 = vmatpush1.bf16.msra.mxu0 %v3276
        %3532 = vmatprep.subr.bf16.mxu0 0
        %3533 = vmatpush1.bf16.msra.mxu0 %v3277
        %3534 = vmatprep.subr.bf16.mxu0 0
        %3535 = vmatpush1.bf16.msra.mxu0 %v3278
        %3536 = vmatprep.subr.bf16.mxu0 0
        %3537 = vmatpush1.bf16.msra.mxu0 %v3279
        %3538 = vmatprep.mubr.bf16.mxu0 %v2931
        %3539 = vmatmul.mubr.bf16.gmra.mrb[0].mxu0 %v2927
        %v3540 = vpop.f32.mrb[0].mxu0
        %v3541 = vadd.f32 %v3476, %v3540
        %v3542 = vpop.f32.mrb[0].mxu0
        %v3543 = vpop.f32.mrb[0].mxu0
        %v3544 = vadd.f32 %v3479, %v3543
        %v3545 = vpop.f32.mrb[0].mxu0
        %3546 = vmatprep.mubr.bf16.mxu0 %v2932
        %3547 = vmatmul.mubr.bf16.gmra.mrb[0].mxu0 %v2928
        %v3548 = vpop.f32.mrb[0].mxu0
        %v3549 = vadd.f32 %v3484, %v3548
        %v3550 = vpop.f32.mrb[0].mxu0
        %v3551 = vpop.f32.mrb[0].mxu0
        %v3552 = vadd.f32 %v3487, %v3551
        %v3553 = vpop.f32.mrb[0].mxu0
        %3554 = vmatprep.mubr.bf16.mxu0 %v2933
        %3555 = vmatmul.mubr.bf16.gmra.mrb[0].mxu0 %v2929
        %v3556 = vpop.f32.mrb[0].mxu0
        %v3557 = vadd.f32 %v3492, %v3556
        %v3558 = vpop.f32.mrb[0].mxu0
        %v3559 = vpop.f32.mrb[0].mxu0
        %v3560 = vadd.f32 %v3495, %v3559
        %v3561 = vpop.f32.mrb[0].mxu0
        %3562 = vmatprep.mubr.bf16.mxu0 %v2934
        %3563 = vmatmul.mubr.bf16.gmra.mrb[0].mxu0 %v2930
        %v3564 = vpop.f32.mrb[0].mxu0
        %v3565 = vadd.f32 %v3500, %v3564
        %v3566 = vpop.f32.mrb[0].mxu0
        %v3567 = vpop.f32.mrb[0].mxu0
        %v3568 = vadd.f32 %v3503, %v3567
        %v3569 = vpop.f32.mrb[0].mxu0
        %3570 = vdwg.mxu0
        %3571 = vmatprep.subr.bf16.mxu0 0
        %3572 = vmatpush1.bf16.msra.mxu0 %v3280
        %3573 = vmatprep.subr.bf16.mxu0 0
        %3574 = vmatpush1.bf16.msra.mxu0 %v3281
        %3575 = vmatprep.subr.bf16.mxu0 0
        %3576 = vmatpush1.bf16.msra.mxu0 %v3282
        %3577 = vmatprep.subr.bf16.mxu0 0
        %3578 = vmatpush1.bf16.msra.mxu0 %v3283
        %3579 = vmatprep.subr.bf16.mxu0 0
        %3580 = vmatpush1.bf16.msra.mxu0 %v3284
        %3581 = vmatprep.subr.bf16.mxu0 0
        %3582 = vmatpush1.bf16.msra.mxu0 %v3285
        %3583 = vmatprep.subr.bf16.mxu0 0
        %3584 = vmatpush1.bf16.msra.mxu0 %v3286
        %3585 = vmatprep.subr.bf16.mxu0 0
        %3586 = vmatpush1.bf16.msra.mxu0 %v3287
        %3587 = vmatprep.subr.bf16.mxu0 0
        %3588 = vmatpush1.bf16.msra.mxu0 %v3288
        %3589 = vmatprep.subr.bf16.mxu0 0
        %3590 = vmatpush1.bf16.msra.mxu0 %v3289
        %3591 = vmatprep.subr.bf16.mxu0 0
        %3592 = vmatpush1.bf16.msra.mxu0 %v3290
        %3593 = vmatprep.subr.bf16.mxu0 0
        %3594 = vmatpush1.bf16.msra.mxu0 %v3291
        %3595 = vmatprep.subr.bf16.mxu0 0
        %3596 = vmatpush1.bf16.msra.mxu0 %v3292
        %3597 = vmatprep.subr.bf16.mxu0 0
        %3598 = vmatpush1.bf16.msra.mxu0 %v3293
        %3599 = vmatprep.subr.bf16.mxu0 0
        %3600 = vmatpush1.bf16.msra.mxu0 %v3294
        %3601 = vmatprep.subr.bf16.mxu0 0
        %3602 = vmatpush1.bf16.msra.mxu0 %v3295
        %3603 = vmatprep.mubr.bf16.mxu0 %v2916
        %3604 = vmatmul.mubr.bf16.gmra.mrb[0].mxu0 %v2912
        %v3605 = vpop.f32.mrb[0].mxu0
        %v3606 = vadd.f32 %v3541, %v3605
        %v3607 = vpop.f32.mrb[0].mxu0
        %v3608 = vpop.f32.mrb[0].mxu0
        %v3609 = vadd.f32 %v3544, %v3608
        %v3610 = vpop.f32.mrb[0].mxu0
        %3611 = vmatprep.mubr.bf16.mxu0 %v2917
        %3612 = vmatmul.mubr.bf16.gmra.mrb[0].mxu0 %v2913
        %v3613 = vpop.f32.mrb[0].mxu0
        %v3614 = vadd.f32 %v3549, %v3613
        %v3615 = vpop.f32.mrb[0].mxu0
        %v3616 = vpop.f32.mrb[0].mxu0
        %v3617 = vadd.f32 %v3552, %v3616
        %v3618 = vpop.f32.mrb[0].mxu0
        %3619 = vmatprep.mubr.bf16.mxu0 %v2918
        %3620 = vmatmul.mubr.bf16.gmra.mrb[0].mxu0 %v2914
        %v3621 = vpop.f32.mrb[0].mxu0
        %v3622 = vadd.f32 %v3557, %v3621
        %v3623 = vpop.f32.mrb[0].mxu0
        %v3624 = vpop.f32.mrb[0].mxu0
        %v3625 = vadd.f32 %v3560, %v3624
        %v3626 = vpop.f32.mrb[0].mxu0
        %3627 = vmatprep.mubr.bf16.mxu0 %v2936
        %3628 = vmatmul.mubr.bf16.gmra.mrb[0].mxu0 %v2935
        %v3629 = vpop.f32.mrb[0].mxu0
        %v3630 = vadd.f32 %v3565, %v3629
        %v3631 = vpop.f32.mrb[0].mxu0
        %v3632 = vpop.f32.mrb[0].mxu0
        %v3633 = vadd.f32 %v3568, %v3632
        %v3634 = vpop.f32.mrb[0].mxu0
        %3635 = vdwg.mxu0
        %3636 = vmatprep.subr.bf16.mxu0 0
        %3637 = vmatpush1.bf16.msra.mxu0 %v3296
        %3638 = vmatprep.subr.bf16.mxu0 0
        %3639 = vmatpush1.bf16.msra.mxu0 %v3297
        %3640 = vmatprep.subr.bf16.mxu0 0
        %3641 = vmatpush1.bf16.msra.mxu0 %v3298
        %3642 = vmatprep.subr.bf16.mxu0 0
        %3643 = vmatpush1.bf16.msra.mxu0 %v3299
        %3644 = vmatprep.subr.bf16.mxu0 0
        %3645 = vmatpush1.bf16.msra.mxu0 %v3300
        %3646 = vmatprep.subr.bf16.mxu0 0
        %3647 = vmatpush1.bf16.msra.mxu0 %v3301
        %3648 = vmatprep.subr.bf16.mxu0 0
        %3649 = vmatpush1.bf16.msra.mxu0 %v3302
        %3650 = vmatprep.subr.bf16.mxu0 0
        %3651 = vmatpush1.bf16.msra.mxu0 %v3303
        %3652 = vmatprep.subr.bf16.mxu0 0
        %3653 = vmatpush1.bf16.msra.mxu0 0
        %3654 = vmatprep.subr.bf16.mxu0 0
        %3655 = vmatpush1.bf16.msra.mxu0 0
        %3656 = vmatprep.subr.bf16.mxu0 0
        %3657 = vmatpush1.bf16.msra.mxu0 0
        %3658 = vmatprep.subr.bf16.mxu0 0
        %3659 = vmatpush1.bf16.msra.mxu0 0
        %3660 = vmatprep.subr.bf16.mxu0 0
        %3661 = vmatpush1.bf16.msra.mxu0 0
        %3662 = vmatprep.subr.bf16.mxu0 0
        %3663 = vmatpush1.bf16.msra.mxu0 0
        %3664 = vmatprep.subr.bf16.mxu0 0
        %3665 = vmatpush1.bf16.msra.mxu0 0
        %3666 = vmatprep.subr.bf16.mxu0 0
        %3667 = vmatpush1.bf16.msra.mxu0 0
        %3668 = vmatprep.mubr.bf16.mxu0 0
        %3669 = vmatmul.mubr.bf16.gmra.mrb[0].mxu0 %v2920
        %v3670 = vpop.f32.mrb[0].mxu0
        %v3671 = vadd.f32 %v3606, %v3670
        %v3672 = vpop.f32.mrb[0].mxu0
        %v3673 = vpop.f32.mrb[0].mxu0
        %v3674 = vadd.f32 %v3609, %v3673
        %v3675 = vpop.f32.mrb[0].mxu0
        %3676 = vmatprep.mubr.bf16.mxu0 0
        %3677 = vmatmul.mubr.bf16.gmra.mrb[0].mxu0 %v2921
        %v3678 = vpop.f32.mrb[0].mxu0
        %v3679 = vadd.f32 %v3614, %v3678
        %v3680 = vpop.f32.mrb[0].mxu0
        %v3681 = vpop.f32.mrb[0].mxu0
        %v3682 = vadd.f32 %v3617, %v3681
        %v3683 = vpop.f32.mrb[0].mxu0
        %3684 = vmatprep.mubr.bf16.mxu0 0
        %3685 = vmatmul.mubr.bf16.gmra.mrb[0].mxu0 %v2922
        %v3686 = vpop.f32.mrb[0].mxu0
        %v3687 = vadd.f32 %v3622, %v3686
        %v3688 = vpop.f32.mrb[0].mxu0
        %v3689 = vpop.f32.mrb[0].mxu0
        %v3690 = vadd.f32 %v3625, %v3689
        %v3691 = vpop.f32.mrb[0].mxu0
        %3692 = vmatprep.mubr.bf16.mxu0 0
        %3693 = vmatmul.mubr.bf16.gmra.mrb[0].mxu0 %v2937
        %v3694 = vpop.f32.mrb[0].mxu0
        %v3695 = vadd.f32 %v3630, %v3694
        %v3696 = vpop.f32.mrb[0].mxu0
        %v3697 = vpop.f32.mrb[0].mxu0
        %v3698 = vadd.f32 %v3633, %v3697
        %v3699 = vpop.f32.mrb[0].mxu0
        %3700 = vdwg.mxu0
        %vm3701 = vcmp.gt.f32.partialorder %v3671, 0.0
        %vm3702 = vcmp.gt.f32.partialorder %v3674, 0.0
        %vm3703 = vcmp.gt.f32.partialorder %v3679, 0.0
        %vm3704 = vcmp.gt.f32.partialorder %v3682, 0.0
        %vm3705 = vcmp.gt.f32.partialorder %v3687, 0.0
        %vm3706 = vcmp.gt.f32.partialorder %v3690, 0.0
        %vm3707 = vcmp.gt.f32.partialorder %v3695, 0.0
        %vm3708 = vcmp.gt.f32.partialorder %v3698, 0.0
        %v3709 = vmul.f32 %v3671, 0.2
        %v3710 = vmul.f32 %v3674, 0.2
        %v3711 = vmul.f32 %v3679, 0.2
        %v3712 = vmul.f32 %v3682, 0.2
        %v3713 = vmul.f32 %v3687, 0.2
        %v3714 = vmul.f32 %v3690, 0.2
        %v3715 = vmul.f32 %v3695, 0.2
        %v3716 = vmul.f32 %v3698, 0.2
        %v3717 = vsel %vm3701, %v3671, %v3709
        %v3718 = vsel %vm3702, %v3674, %v3710
        %v3719 = vsel %vm3703, %v3679, %v3711
        %v3720 = vsel %vm3704, %v3682, %v3712
        %v3721 = vsel %vm3705, %v3687, %v3713
        %v3722 = vsel %vm3706, %v3690, %v3714
        %v3723 = vsel %vm3707, %v3695, %v3715
        %v3724 = vsel %vm3708, %v3698, %v3716
        %v3725 = vpack.c.bf16 %v3718, %v3717
        %v3726 = vpack.c.bf16 %v3720, %v3719
        %v3727 = vpack.c.bf16 %v3722, %v3721
        %v3728 = vpack.c.bf16 %v3724, %v3723
        %v3737 = vrot.slane %v3717, 1
        %v3738 = vrot.slane %v3718, 1
        %v3739 = vsel %vm1832, %v3737, %v3738
        %v3740 = vrot.slane %v3719, 1
        %v3741 = vsel %vm1832, %v3738, %v3740
        %v3742 = vrot.slane %v3720, 1
        %v3743 = vsel %vm1832, %v3740, %v3742
        %v3744 = vrot.slane %v3721, 1
        %v3745 = vsel %vm1832, %v3742, %v3744
        %v3746 = vrot.slane %v3722, 1
        %v3747 = vsel %vm1832, %v3744, %v3746
        %v3748 = vrot.slane %v3723, 1
        %v3749 = vsel %vm1832, %v3746, %v3748
        %v3750 = vrot.slane %v3724, 1
        %v3751 = vsel %vm1832, %v3748, %v3750
        %v3760 = vsel %vm1832, %v3750, 0.0
        %v3761 = vsel %vm452, %v3739, 0.0
        %v3762 = vsel %vm453, %v3741, 0.0
        %v3763 = vsel %vm454, %v3743, 0.0
        %v3764 = vsel %vm455, %v3745, 0.0
        %v3765 = vsel %vm456, %v3747, 0.0
        %v3766 = vsel %vm457, %v3749, 0.0
        %v3767 = vsel %vm458, %v3751, 0.0
        %v3768 = vsel %vm459, %v3760, 0.0
        %v3769 = vpack.c.bf16 %v3762, %v3761
        %v3770 = vpack.c.bf16 %v3764, %v3763
        %v3771 = vpack.c.bf16 %v3766, %v3765
        %v3772 = vpack.c.bf16 %v3768, %v3767
        %v3773 = vpack.c.bf16 %v3719, %v3718
        %v3774 = vpack.c.bf16 %v3721, %v3720
        %v3775 = vpack.c.bf16 %v3723, %v3722
        %v3776 = vpack.c.bf16 0.0, %v3724
        %v3777 = vsel %vm452, %v3741, 0.0
        %v3778 = vsel %vm453, %v3743, 0.0
        %v3779 = vsel %vm454, %v3745, 0.0
        %v3780 = vsel %vm455, %v3747, 0.0
        %v3781 = vsel %vm456, %v3749, 0.0
        %v3782 = vsel %vm457, %v3751, 0.0
        %v3783 = vsel %vm458, %v3760, 0.0
        %v3784 = vpack.c.bf16 %v3778, %v3777
        %v3785 = vpack.c.bf16 %v3780, %v3779
        %v3786 = vpack.c.bf16 %v3782, %v3781
        %v3787 = vpack.c.bf16 0.0, %v3783
        %v3788 = vld [vmem:[#allocation10] sm:$0x1]
        %v3789 = vld [vmem:[#allocation8] sm:$0xf]
        %v3790 = vld [vmem:[#allocation8 + $0x4] sm:$0xf]
        %v3791 = vld [vmem:[#allocation8 + $0x8] sm:$0xf]
        %v3792 = vld [vmem:[#allocation8 + $0xc] sm:$0xf]
        %v3793 = vld [vmem:[#allocation8 + $0x10] sm:$0xf]
        %v3794 = vld [vmem:[#allocation8 + $0x14] sm:$0xf]
        %v3795 = vld [vmem:[#allocation8 + $0x18] sm:$0xf]
        %v3796 = vld [vmem:[#allocation8 + $0x1c] sm:$0xf]
        %v3797 = vld [vmem:[#allocation8 + $0x20] sm:$0xf]
        %v3798 = vld [vmem:[#allocation8 + $0x24] sm:$0xf]
        %v3799 = vld [vmem:[#allocation8 + $0x28] sm:$0xf]
        %v3800 = vld [vmem:[#allocation8 + $0x2c] sm:$0xf]
        %v3801 = vld [vmem:[#allocation8 + $0x30] sm:$0xf]
        %v3802 = vld [vmem:[#allocation8 + $0x34] sm:$0xf]
        %v3803 = vld [vmem:[#allocation8 + $0x38] sm:$0xf]
        %v3804 = vld [vmem:[#allocation8 + $0x3c] sm:$0xf]
        %v3806 = vlaneseq
        %v3807 = vshrl.u32 %v3806, 7
        %v3808 = vsub.s32 0, %v3807
        %v3809 = vrot.slane %v3788, %v3808
        %v3827 = vunpack.c.l.b16 %v3789
        %v3828 = vunpack.c.l.b16 %v3790
        %v3829 = vunpack.c.l.b16 %v3791
        %v3830 = vunpack.c.l.b16 %v3792
        %v3831 = vunpack.c.l.b16 %v3793
        %v3832 = vunpack.c.l.b16 %v3794
        %v3833 = vunpack.c.l.b16 %v3795
        %v3834 = vunpack.c.l.b16 %v3796
        %v3835 = vunpack.c.l.b16 %v3797
        %v3836 = vunpack.c.l.b16 %v3798
        %v3837 = vunpack.c.l.b16 %v3799
        %v3838 = vunpack.c.l.b16 %v3800
        %v3839 = vunpack.c.l.b16 %v3801
        %v3840 = vunpack.c.l.b16 %v3802
        %v3841 = vunpack.c.l.b16 %v3803
        %v3842 = vunpack.c.l.b16 %v3804
        %v3843 = vpack.c.b16 %v3828, %v3827
        %v3844 = vpack.c.b16 %v3830, %v3829
        %v3845 = vpack.c.b16 %v3832, %v3831
        %v3846 = vpack.c.b16 %v3834, %v3833
        %v3847 = vpack.c.b16 %v3836, %v3835
        %v3848 = vpack.c.b16 %v3838, %v3837
        %v3849 = vpack.c.b16 %v3840, %v3839
        %v3850 = vpack.c.b16 %v3842, %v3841
        %3859 = vmatprep.subr.bf16.mxu0 0
        %3860 = vmatpush1.bf16.msra.mxu0 %v3843
        %3861 = vmatprep.subr.bf16.mxu0 0
        %3862 = vmatpush1.bf16.msra.mxu0 %v3844
        %3863 = vmatprep.subr.bf16.mxu0 0
        %3864 = vmatpush1.bf16.msra.mxu0 %v3845
        %3865 = vmatprep.subr.bf16.mxu0 0
        %3866 = vmatpush1.bf16.msra.mxu0 %v3846
        %3867 = vmatprep.subr.bf16.mxu0 0
        %3868 = vmatpush1.bf16.msra.mxu0 %v3847
        %3869 = vmatprep.subr.bf16.mxu0 0
        %3870 = vmatpush1.bf16.msra.mxu0 %v3848
        %3871 = vmatprep.subr.bf16.mxu0 0
        %3872 = vmatpush1.bf16.msra.mxu0 %v3849
        %3873 = vmatprep.subr.bf16.mxu0 0
        %3874 = vmatpush1.bf16.msra.mxu0 %v3850
        %3875 = vmatprep.subr.bf16.mxu0 0
        %3876 = vmatpush1.bf16.msra.mxu0 0
        %3877 = vmatprep.subr.bf16.mxu0 0
        %3878 = vmatpush1.bf16.msra.mxu0 0
        %3879 = vmatprep.subr.bf16.mxu0 0
        %3880 = vmatpush1.bf16.msra.mxu0 0
        %3881 = vmatprep.subr.bf16.mxu0 0
        %3882 = vmatpush1.bf16.msra.mxu0 0
        %3883 = vmatprep.subr.bf16.mxu0 0
        %3884 = vmatpush1.bf16.msra.mxu0 0
        %3885 = vmatprep.subr.bf16.mxu0 0
        %3886 = vmatpush1.bf16.msra.mxu0 0
        %3887 = vmatprep.subr.bf16.mxu0 0
        %3888 = vmatpush1.bf16.msra.mxu0 0
        %3889 = vmatprep.subr.bf16.mxu0 0
        %3890 = vmatpush1.bf16.msra.mxu0 0
        %3891 = vmatprep.mubr.bf16.mxu0 0
        %3892 = vmatmul.mubr.bf16.gmra.mrb[0].mxu0 %v3725
        %v3893 = vpop.f32.mrb[0].mxu0
        %v3894 = vadd.f32 %v3809, %v3893
        %v3895 = vpop.f32.mrb[0].mxu0
        %v3896 = vpop.f32.mrb[0].mxu0
        %v3897 = vadd.f32 %v3809, %v3896
        %v3898 = vpop.f32.mrb[0].mxu0
        %3899 = vmatprep.mubr.bf16.mxu0 0
        %3900 = vmatmul.mubr.bf16.gmra.mrb[0].mxu0 %v3726
        %v3901 = vpop.f32.mrb[0].mxu0
        %v3902 = vadd.f32 %v3809, %v3901
        %v3903 = vpop.f32.mrb[0].mxu0
        %v3904 = vpop.f32.mrb[0].mxu0
        %v3905 = vadd.f32 %v3809, %v3904
        %v3906 = vpop.f32.mrb[0].mxu0
        %3907 = vmatprep.mubr.bf16.mxu0 0
        %3908 = vmatmul.mubr.bf16.gmra.mrb[0].mxu0 %v3727
        %v3909 = vpop.f32.mrb[0].mxu0
        %v3910 = vadd.f32 %v3809, %v3909
        %v3911 = vpop.f32.mrb[0].mxu0
        %v3912 = vpop.f32.mrb[0].mxu0
        %v3913 = vadd.f32 %v3809, %v3912
        %v3914 = vpop.f32.mrb[0].mxu0
        %3915 = vmatprep.mubr.bf16.mxu0 0
        %3916 = vmatmul.mubr.bf16.gmra.mrb[0].mxu0 %v3728
        %v3917 = vpop.f32.mrb[0].mxu0
        %v3918 = vadd.f32 %v3809, %v3917
        %v3919 = vpop.f32.mrb[0].mxu0
        %v3920 = vpop.f32.mrb[0].mxu0
        %v3921 = vadd.f32 %v3809, %v3920
        %v3922 = vpop.f32.mrb[0].mxu0
        %3923 = vdwg.mxu0
        %vm3924 = vcmp.gt.f32.partialorder %v3894, 0.0
        %vm3925 = vcmp.gt.f32.partialorder %v3897, 0.0
        %vm3926 = vcmp.gt.f32.partialorder %v3902, 0.0
        %vm3927 = vcmp.gt.f32.partialorder %v3905, 0.0
        %vm3928 = vcmp.gt.f32.partialorder %v3910, 0.0
        %vm3929 = vcmp.gt.f32.partialorder %v3913, 0.0
        %vm3930 = vcmp.gt.f32.partialorder %v3918, 0.0
        %vm3931 = vcmp.gt.f32.partialorder %v3921, 0.0
        %v3932 = vmul.f32 %v3894, 0.2
        %v3933 = vmul.f32 %v3897, 0.2
        %v3934 = vmul.f32 %v3902, 0.2
        %v3935 = vmul.f32 %v3905, 0.2
        %v3936 = vmul.f32 %v3910, 0.2
        %v3937 = vmul.f32 %v3913, 0.2
        %v3938 = vmul.f32 %v3918, 0.2
        %v3939 = vmul.f32 %v3921, 0.2
        %v3940 = vsel %vm3924, %v3894, %v3932
        %v3941 = vsel %vm3925, %v3897, %v3933
        %v3942 = vsel %vm3926, %v3902, %v3934
        %v3943 = vsel %vm3927, %v3905, %v3935
        %v3944 = vsel %vm3928, %v3910, %v3936
        %v3945 = vsel %vm3929, %v3913, %v3937
        %v3946 = vsel %vm3930, %v3918, %v3938
        %v3947 = vsel %vm3931, %v3921, %v3939
        %v3948 = vpack.c.bf16 %v3941, %v3940
        %v3949 = vpack.c.bf16 %v3943, %v3942
        %v3950 = vpack.c.bf16 %v3945, %v3944
        %v3951 = vpack.c.bf16 %v3947, %v3946
        %v3956 = vunpack.c.l.b16 %v3948
        %v3957 = vunpack.c.h.b16 %v3948
        %v3958 = vunpack.c.l.b16 %v3949
        %v3959 = vunpack.c.h.b16 %v3949
        %v3960 = vunpack.c.l.b16 %v3950
        %v3961 = vunpack.c.h.b16 %v3950
        %v3962 = vunpack.c.l.b16 %v3951
        %v3963 = vunpack.c.h.b16 %v3951
        %v3964 = vpack.c.b16 %v3956, %v3956
        %v3965 = vpack.c.b16 %v3957, %v3957
        %v3966 = vpack.c.b16 %v3958, %v3958
        %v3967 = vpack.c.b16 %v3959, %v3959
        %v3968 = vpack.c.b16 %v3960, %v3960
        %v3969 = vpack.c.b16 %v3961, %v3961
        %v3970 = vpack.c.b16 %v3962, %v3962
        %v3971 = vpack.c.b16 %v3963, %v3963
        %3980 = vst [vmem:[%s298] sm:$0xf] %v3964
        %3981 = vst [vmem:[%s298 + $0x4] sm:$0xf] %v3965
        %3982 = vst [vmem:[%s298 + $0x8] sm:$0xf] %v3966
        %3983 = vst [vmem:[%s298 + $0xc] sm:$0xf] %v3967
        %3984 = vst [vmem:[%s298 + $0x10] sm:$0xf] %v3968
        %3985 = vst [vmem:[%s298 + $0x14] sm:$0xf] %v3969
        %3986 = vst [vmem:[%s298 + $0x18] sm:$0xf] %v3970
        %3987 = vst [vmem:[%s298 + $0x1c] sm:$0xf] %v3971
        %v3988 = vld [vmem:[#allocation8 + $0x40] sm:$0xf]
        %v3989 = vld [vmem:[#allocation8 + $0x44] sm:$0xf]
        %v3990 = vld [vmem:[#allocation8 + $0x48] sm:$0xf]
        %v3991 = vld [vmem:[#allocation8 + $0x4c] sm:$0xf]
        %v3992 = vld [vmem:[#allocation8 + $0x50] sm:$0xf]
        %v3993 = vld [vmem:[#allocation8 + $0x54] sm:$0xf]
        %v3994 = vld [vmem:[#allocation8 + $0x58] sm:$0xf]
        %v3995 = vld [vmem:[#allocation8 + $0x5c] sm:$0xf]
        %v3996 = vld [vmem:[#allocation8 + $0x60] sm:$0xf]
        %v3997 = vld [vmem:[#allocation8 + $0x64] sm:$0xf]
        %v3998 = vld [vmem:[#allocation8 + $0x68] sm:$0xf]
        %v3999 = vld [vmem:[#allocation8 + $0x6c] sm:$0xf]
        %v4000 = vld [vmem:[#allocation8 + $0x70] sm:$0xf]
        %v4001 = vld [vmem:[#allocation8 + $0x74] sm:$0xf]
        %v4002 = vld [vmem:[#allocation8 + $0x78] sm:$0xf]
        %v4003 = vld [vmem:[#allocation8 + $0x7c] sm:$0xf]
        %v4004 = vld [vmem:[#allocation8 + $0x80] sm:$0xf]
        %v4005 = vld [vmem:[#allocation8 + $0x84] sm:$0xf]
        %v4006 = vld [vmem:[#allocation8 + $0x88] sm:$0xf]
        %v4007 = vld [vmem:[#allocation8 + $0x8c] sm:$0xf]
        %v4008 = vld [vmem:[#allocation8 + $0x90] sm:$0xf]
        %v4009 = vld [vmem:[#allocation8 + $0x94] sm:$0xf]
        %v4010 = vld [vmem:[#allocation8 + $0x98] sm:$0xf]
        %v4011 = vld [vmem:[#allocation8 + $0x9c] sm:$0xf]
        %v4012 = vld [vmem:[#allocation8 + $0xa0] sm:$0xf]
        %v4013 = vld [vmem:[#allocation8 + $0xa4] sm:$0xf]
        %v4014 = vld [vmem:[#allocation8 + $0xa8] sm:$0xf]
        %v4015 = vld [vmem:[#allocation8 + $0xac] sm:$0xf]
        %v4016 = vld [vmem:[#allocation8 + $0xb0] sm:$0xf]
        %v4017 = vld [vmem:[#allocation8 + $0xb4] sm:$0xf]
        %v4018 = vld [vmem:[#allocation8 + $0xb8] sm:$0xf]
        %v4019 = vld [vmem:[#allocation8 + $0xbc] sm:$0xf]
        %v4052 = vunpack.c.l.b16 %v3988
        %v4053 = vunpack.c.l.b16 %v3989
        %v4054 = vunpack.c.l.b16 %v3990
        %v4055 = vunpack.c.l.b16 %v3991
        %v4056 = vunpack.c.l.b16 %v3992
        %v4057 = vunpack.c.l.b16 %v3993
        %v4058 = vunpack.c.l.b16 %v3994
        %v4059 = vunpack.c.l.b16 %v3995
        %v4060 = vunpack.c.l.b16 %v3996
        %v4061 = vunpack.c.l.b16 %v3997
        %v4062 = vunpack.c.l.b16 %v3998
        %v4063 = vunpack.c.l.b16 %v3999
        %v4064 = vunpack.c.l.b16 %v4000
        %v4065 = vunpack.c.l.b16 %v4001
        %v4066 = vunpack.c.l.b16 %v4002
        %v4067 = vunpack.c.l.b16 %v4003
        %v4068 = vunpack.c.l.b16 %v4004
        %v4069 = vunpack.c.l.b16 %v4005
        %v4070 = vunpack.c.l.b16 %v4006
        %v4071 = vunpack.c.l.b16 %v4007
        %v4072 = vunpack.c.l.b16 %v4008
        %v4073 = vunpack.c.l.b16 %v4009
        %v4074 = vunpack.c.l.b16 %v4010
        %v4075 = vunpack.c.l.b16 %v4011
        %v4076 = vunpack.c.l.b16 %v4012
        %v4077 = vunpack.c.l.b16 %v4013
        %v4078 = vunpack.c.l.b16 %v4014
        %v4079 = vunpack.c.l.b16 %v4015
        %v4080 = vunpack.c.l.b16 %v4016
        %v4081 = vunpack.c.l.b16 %v4017
        %v4082 = vunpack.c.l.b16 %v4018
        %v4083 = vunpack.c.l.b16 %v4019
        %v4084 = vpack.c.b16 %v4053, %v4052
        %v4085 = vpack.c.b16 %v4055, %v4054
        %v4086 = vpack.c.b16 %v4057, %v4056
        %v4087 = vpack.c.b16 %v4059, %v4058
        %v4088 = vpack.c.b16 %v4061, %v4060
        %v4089 = vpack.c.b16 %v4063, %v4062
        %v4090 = vpack.c.b16 %v4065, %v4064
        %v4091 = vpack.c.b16 %v4067, %v4066
        %v4092 = vpack.c.b16 %v4069, %v4068
        %v4093 = vpack.c.b16 %v4071, %v4070
        %v4094 = vpack.c.b16 %v4073, %v4072
        %v4095 = vpack.c.b16 %v4075, %v4074
        %v4096 = vpack.c.b16 %v4077, %v4076
        %v4097 = vpack.c.b16 %v4079, %v4078
        %v4098 = vpack.c.b16 %v4081, %v4080
        %v4099 = vpack.c.b16 %v4083, %v4082
        %4116 = vmatprep.subr.bf16.mxu0 0
        %4117 = vmatpush1.bf16.msra.mxu0 %v4084
        %4118 = vmatprep.subr.bf16.mxu0 0
        %4119 = vmatpush1.bf16.msra.mxu0 %v4085
        %4120 = vmatprep.subr.bf16.mxu0 0
        %4121 = vmatpush1.bf16.msra.mxu0 %v4086
        %4122 = vmatprep.subr.bf16.mxu0 0
        %4123 = vmatpush1.bf16.msra.mxu0 %v4087
        %4124 = vmatprep.subr.bf16.mxu0 0
        %4125 = vmatpush1.bf16.msra.mxu0 %v4088
        %4126 = vmatprep.subr.bf16.mxu0 0
        %4127 = vmatpush1.bf16.msra.mxu0 %v4089
        %4128 = vmatprep.subr.bf16.mxu0 0
        %4129 = vmatpush1.bf16.msra.mxu0 %v4090
        %4130 = vmatprep.subr.bf16.mxu0 0
        %4131 = vmatpush1.bf16.msra.mxu0 %v4091
        %4132 = vmatprep.subr.bf16.mxu0 0
        %4133 = vmatpush1.bf16.msra.mxu0 %v4092
        %4134 = vmatprep.subr.bf16.mxu0 0
        %4135 = vmatpush1.bf16.msra.mxu0 %v4093
        %4136 = vmatprep.subr.bf16.mxu0 0
        %4137 = vmatpush1.bf16.msra.mxu0 %v4094
        %4138 = vmatprep.subr.bf16.mxu0 0
        %4139 = vmatpush1.bf16.msra.mxu0 %v4095
        %4140 = vmatprep.subr.bf16.mxu0 0
        %4141 = vmatpush1.bf16.msra.mxu0 %v4096
        %4142 = vmatprep.subr.bf16.mxu0 0
        %4143 = vmatpush1.bf16.msra.mxu0 %v4097
        %4144 = vmatprep.subr.bf16.mxu0 0
        %4145 = vmatpush1.bf16.msra.mxu0 %v4098
        %4146 = vmatprep.subr.bf16.mxu0 0
        %4147 = vmatpush1.bf16.msra.mxu0 %v4099
        %4148 = vmatprep.mubr.bf16.mxu0 %v3769
        %4149 = vmatmul.mubr.bf16.gmra.mrb[0].mxu0 %v3725
        %v4150 = vpop.f32.mrb[0].mxu0
        %v4151 = vadd.f32 %v3809, %v4150
        %v4152 = vpop.f32.mrb[0].mxu0
        %v4153 = vpop.f32.mrb[0].mxu0
        %v4154 = vadd.f32 %v3809, %v4153
        %v4155 = vpop.f32.mrb[0].mxu0
        %4156 = vmatprep.mubr.bf16.mxu0 %v3770
        %4157 = vmatmul.mubr.bf16.gmra.mrb[0].mxu0 %v3726
        %v4158 = vpop.f32.mrb[0].mxu0
        %v4159 = vadd.f32 %v3809, %v4158
        %v4160 = vpop.f32.mrb[0].mxu0
        %v4161 = vpop.f32.mrb[0].mxu0
        %v4162 = vadd.f32 %v3809, %v4161
        %v4163 = vpop.f32.mrb[0].mxu0
        %4164 = vmatprep.mubr.bf16.mxu0 %v3771
        %4165 = vmatmul.mubr.bf16.gmra.mrb[0].mxu0 %v3727
        %v4166 = vpop.f32.mrb[0].mxu0
        %v4167 = vadd.f32 %v3809, %v4166
        %v4168 = vpop.f32.mrb[0].mxu0
        %v4169 = vpop.f32.mrb[0].mxu0
        %v4170 = vadd.f32 %v3809, %v4169
        %v4171 = vpop.f32.mrb[0].mxu0
        %4172 = vmatprep.mubr.bf16.mxu0 %v3772
        %4173 = vmatmul.mubr.bf16.gmra.mrb[0].mxu0 %v3728
        %v4174 = vpop.f32.mrb[0].mxu0
        %v4175 = vadd.f32 %v3809, %v4174
        %v4176 = vpop.f32.mrb[0].mxu0
        %v4177 = vpop.f32.mrb[0].mxu0
        %v4178 = vadd.f32 %v3809, %v4177
        %v4179 = vpop.f32.mrb[0].mxu0
        %4180 = vdwg.mxu0
        %vm4181 = vcmp.gt.f32.partialorder %v4151, 0.0
        %vm4182 = vcmp.gt.f32.partialorder %v4154, 0.0
        %vm4183 = vcmp.gt.f32.partialorder %v4159, 0.0
        %vm4184 = vcmp.gt.f32.partialorder %v4162, 0.0
        %vm4185 = vcmp.gt.f32.partialorder %v4167, 0.0
        %vm4186 = vcmp.gt.f32.partialorder %v4170, 0.0
        %vm4187 = vcmp.gt.f32.partialorder %v4175, 0.0
        %vm4188 = vcmp.gt.f32.partialorder %v4178, 0.0
        %v4189 = vmul.f32 %v4151, 0.2
        %v4190 = vmul.f32 %v4154, 0.2
        %v4191 = vmul.f32 %v4159, 0.2
        %v4192 = vmul.f32 %v4162, 0.2
        %v4193 = vmul.f32 %v4167, 0.2
        %v4194 = vmul.f32 %v4170, 0.2
        %v4195 = vmul.f32 %v4175, 0.2
        %v4196 = vmul.f32 %v4178, 0.2
        %v4197 = vsel %vm4181, %v4151, %v4189
        %v4198 = vsel %vm4182, %v4154, %v4190
        %v4199 = vsel %vm4183, %v4159, %v4191
        %v4200 = vsel %vm4184, %v4162, %v4192
        %v4201 = vsel %vm4185, %v4167, %v4193
        %v4202 = vsel %vm4186, %v4170, %v4194
        %v4203 = vsel %vm4187, %v4175, %v4195
        %v4204 = vsel %vm4188, %v4178, %v4196
        %v4205 = vpack.c.bf16 %v4198, %v4197
        %v4206 = vpack.c.bf16 %v4200, %v4199
        %v4207 = vpack.c.bf16 %v4202, %v4201
        %v4208 = vpack.c.bf16 %v4204, %v4203
        %v4213 = vunpack.c.l.b16 %v4205
        %v4214 = vunpack.c.h.b16 %v4205
        %v4215 = vunpack.c.l.b16 %v4206
        %v4216 = vunpack.c.h.b16 %v4206
        %v4217 = vunpack.c.l.b16 %v4207
        %v4218 = vunpack.c.h.b16 %v4207
        %v4219 = vunpack.c.l.b16 %v4208
        %v4220 = vunpack.c.h.b16 %v4208
        %v4221 = vpack.c.b16 %v4213, %v4213
        %v4222 = vpack.c.b16 %v4214, %v4214
        %v4223 = vpack.c.b16 %v4215, %v4215
        %v4224 = vpack.c.b16 %v4216, %v4216
        %v4225 = vpack.c.b16 %v4217, %v4217
        %v4226 = vpack.c.b16 %v4218, %v4218
        %v4227 = vpack.c.b16 %v4219, %v4219
        %v4228 = vpack.c.b16 %v4220, %v4220
        %s4237 = scalar_lea.vmem %s298, 32 [#allocation11]
        %4238 = vst [vmem:[%s4237] sm:$0xf] %v4221
        %4239 = vst [vmem:[%s4237 + $0x4] sm:$0xf] %v4222
        %4240 = vst [vmem:[%s4237 + $0x8] sm:$0xf] %v4223
        %4241 = vst [vmem:[%s4237 + $0xc] sm:$0xf] %v4224
        %4242 = vst [vmem:[%s4237 + $0x10] sm:$0xf] %v4225
        %4243 = vst [vmem:[%s4237 + $0x14] sm:$0xf] %v4226
        %4244 = vst [vmem:[%s4237 + $0x18] sm:$0xf] %v4227
        %4245 = vst [vmem:[%s4237 + $0x1c] sm:$0xf] %v4228
        %v4246 = vld [vmem:[#allocation8 + $0xc0] sm:$0xf]
        %v4247 = vld [vmem:[#allocation8 + $0xc4] sm:$0xf]
        %v4248 = vld [vmem:[#allocation8 + $0xc8] sm:$0xf]
        %v4249 = vld [vmem:[#allocation8 + $0xcc] sm:$0xf]
        %v4250 = vld [vmem:[#allocation8 + $0xd0] sm:$0xf]
        %v4251 = vld [vmem:[#allocation8 + $0xd4] sm:$0xf]
        %v4252 = vld [vmem:[#allocation8 + $0xd8] sm:$0xf]
        %v4253 = vld [vmem:[#allocation8 + $0xdc] sm:$0xf]
        %v4254 = vld [vmem:[#allocation8 + $0xe0] sm:$0xf]
        %v4255 = vld [vmem:[#allocation8 + $0xe4] sm:$0xf]
        %v4256 = vld [vmem:[#allocation8 + $0xe8] sm:$0xf]
        %v4257 = vld [vmem:[#allocation8 + $0xec] sm:$0xf]
        %v4258 = vld [vmem:[#allocation8 + $0xf0] sm:$0xf]
        %v4259 = vld [vmem:[#allocation8 + $0xf4] sm:$0xf]
        %v4260 = vld [vmem:[#allocation8 + $0xf8] sm:$0xf]
        %v4261 = vld [vmem:[#allocation8 + $0xfc] sm:$0xf]
        %v4262 = vld [vmem:[#allocation8 + $0x100] sm:$0xf]
        %v4263 = vld [vmem:[#allocation8 + $0x104] sm:$0xf]
        %v4264 = vld [vmem:[#allocation8 + $0x108] sm:$0xf]
        %v4265 = vld [vmem:[#allocation8 + $0x10c] sm:$0xf]
        %v4266 = vld [vmem:[#allocation8 + $0x110] sm:$0xf]
        %v4267 = vld [vmem:[#allocation8 + $0x114] sm:$0xf]
        %v4268 = vld [vmem:[#allocation8 + $0x118] sm:$0xf]
        %v4269 = vld [vmem:[#allocation8 + $0x11c] sm:$0xf]
        %v4270 = vld [vmem:[#allocation8 + $0x120] sm:$0xf]
        %v4271 = vld [vmem:[#allocation8 + $0x124] sm:$0xf]
        %v4272 = vld [vmem:[#allocation8 + $0x128] sm:$0xf]
        %v4273 = vld [vmem:[#allocation8 + $0x12c] sm:$0xf]
        %v4274 = vld [vmem:[#allocation8 + $0x130] sm:$0xf]
        %v4275 = vld [vmem:[#allocation8 + $0x134] sm:$0xf]
        %v4276 = vld [vmem:[#allocation8 + $0x138] sm:$0xf]
        %v4277 = vld [vmem:[#allocation8 + $0x13c] sm:$0xf]
        %v4310 = vunpack.c.l.b16 %v4246
        %v4311 = vunpack.c.l.b16 %v4247
        %v4312 = vunpack.c.l.b16 %v4248
        %v4313 = vunpack.c.l.b16 %v4249
        %v4314 = vunpack.c.l.b16 %v4250
        %v4315 = vunpack.c.l.b16 %v4251
        %v4316 = vunpack.c.l.b16 %v4252
        %v4317 = vunpack.c.l.b16 %v4253
        %v4318 = vunpack.c.l.b16 %v4254
        %v4319 = vunpack.c.l.b16 %v4255
        %v4320 = vunpack.c.l.b16 %v4256
        %v4321 = vunpack.c.l.b16 %v4257
        %v4322 = vunpack.c.l.b16 %v4258
        %v4323 = vunpack.c.l.b16 %v4259
        %v4324 = vunpack.c.l.b16 %v4260
        %v4325 = vunpack.c.l.b16 %v4261
        %v4326 = vunpack.c.l.b16 %v4262
        %v4327 = vunpack.c.l.b16 %v4263
        %v4328 = vunpack.c.l.b16 %v4264
        %v4329 = vunpack.c.l.b16 %v4265
        %v4330 = vunpack.c.l.b16 %v4266
        %v4331 = vunpack.c.l.b16 %v4267
        %v4332 = vunpack.c.l.b16 %v4268
        %v4333 = vunpack.c.l.b16 %v4269
        %v4334 = vunpack.c.l.b16 %v4270
        %v4335 = vunpack.c.l.b16 %v4271
        %v4336 = vunpack.c.l.b16 %v4272
        %v4337 = vunpack.c.l.b16 %v4273
        %v4338 = vunpack.c.l.b16 %v4274
        %v4339 = vunpack.c.l.b16 %v4275
        %v4340 = vunpack.c.l.b16 %v4276
        %v4341 = vunpack.c.l.b16 %v4277
        %v4342 = vpack.c.b16 %v4311, %v4310
        %v4343 = vpack.c.b16 %v4313, %v4312
        %v4344 = vpack.c.b16 %v4315, %v4314
        %v4345 = vpack.c.b16 %v4317, %v4316
        %v4346 = vpack.c.b16 %v4319, %v4318
        %v4347 = vpack.c.b16 %v4321, %v4320
        %v4348 = vpack.c.b16 %v4323, %v4322
        %v4349 = vpack.c.b16 %v4325, %v4324
        %v4350 = vpack.c.b16 %v4327, %v4326
        %v4351 = vpack.c.b16 %v4329, %v4328
        %v4352 = vpack.c.b16 %v4331, %v4330
        %v4353 = vpack.c.b16 %v4333, %v4332
        %v4354 = vpack.c.b16 %v4335, %v4334
        %v4355 = vpack.c.b16 %v4337, %v4336
        %v4356 = vpack.c.b16 %v4339, %v4338
        %v4357 = vpack.c.b16 %v4341, %v4340
        %4374 = vmatprep.subr.bf16.mxu0 0
        %4375 = vmatpush1.bf16.msra.mxu0 %v4342
        %4376 = vmatprep.subr.bf16.mxu0 0
        %4377 = vmatpush1.bf16.msra.mxu0 %v4343
        %4378 = vmatprep.subr.bf16.mxu0 0
        %4379 = vmatpush1.bf16.msra.mxu0 %v4344
        %4380 = vmatprep.subr.bf16.mxu0 0
        %4381 = vmatpush1.bf16.msra.mxu0 %v4345
        %4382 = vmatprep.subr.bf16.mxu0 0
        %4383 = vmatpush1.bf16.msra.mxu0 %v4346
        %4384 = vmatprep.subr.bf16.mxu0 0
        %4385 = vmatpush1.bf16.msra.mxu0 %v4347
        %4386 = vmatprep.subr.bf16.mxu0 0
        %4387 = vmatpush1.bf16.msra.mxu0 %v4348
        %4388 = vmatprep.subr.bf16.mxu0 0
        %4389 = vmatpush1.bf16.msra.mxu0 %v4349
        %4390 = vmatprep.subr.bf16.mxu0 0
        %4391 = vmatpush1.bf16.msra.mxu0 %v4350
        %4392 = vmatprep.subr.bf16.mxu0 0
        %4393 = vmatpush1.bf16.msra.mxu0 %v4351
        %4394 = vmatprep.subr.bf16.mxu0 0
        %4395 = vmatpush1.bf16.msra.mxu0 %v4352
        %4396 = vmatprep.subr.bf16.mxu0 0
        %4397 = vmatpush1.bf16.msra.mxu0 %v4353
        %4398 = vmatprep.subr.bf16.mxu0 0
        %4399 = vmatpush1.bf16.msra.mxu0 %v4354
        %4400 = vmatprep.subr.bf16.mxu0 0
        %4401 = vmatpush1.bf16.msra.mxu0 %v4355
        %4402 = vmatprep.subr.bf16.mxu0 0
        %4403 = vmatpush1.bf16.msra.mxu0 %v4356
        %4404 = vmatprep.subr.bf16.mxu0 0
        %4405 = vmatpush1.bf16.msra.mxu0 %v4357
        %4406 = vmatprep.mubr.bf16.mxu0 %v3773
        %4407 = vmatmul.mubr.bf16.gmra.mrb[0].mxu0 %v3725
        %v4408 = vpop.f32.mrb[0].mxu0
        %v4409 = vadd.f32 %v3809, %v4408
        %v4410 = vpop.f32.mrb[0].mxu0
        %v4411 = vpop.f32.mrb[0].mxu0
        %v4412 = vadd.f32 %v3809, %v4411
        %v4413 = vpop.f32.mrb[0].mxu0
        %4414 = vmatprep.mubr.bf16.mxu0 %v3774
        %4415 = vmatmul.mubr.bf16.gmra.mrb[0].mxu0 %v3726
        %v4416 = vpop.f32.mrb[0].mxu0
        %v4417 = vadd.f32 %v3809, %v4416
        %v4418 = vpop.f32.mrb[0].mxu0
        %v4419 = vpop.f32.mrb[0].mxu0
        %v4420 = vadd.f32 %v3809, %v4419
        %v4421 = vpop.f32.mrb[0].mxu0
        %4422 = vmatprep.mubr.bf16.mxu0 %v3775
        %4423 = vmatmul.mubr.bf16.gmra.mrb[0].mxu0 %v3727
        %v4424 = vpop.f32.mrb[0].mxu0
        %v4425 = vadd.f32 %v3809, %v4424
        %v4426 = vpop.f32.mrb[0].mxu0
        %v4427 = vpop.f32.mrb[0].mxu0
        %v4428 = vadd.f32 %v3809, %v4427
        %v4429 = vpop.f32.mrb[0].mxu0
        %4430 = vmatprep.mubr.bf16.mxu0 %v3776
        %4431 = vmatmul.mubr.bf16.gmra.mrb[0].mxu0 %v3728
        %v4432 = vpop.f32.mrb[0].mxu0
        %v4433 = vadd.f32 %v3809, %v4432
        %v4434 = vpop.f32.mrb[0].mxu0
        %v4435 = vpop.f32.mrb[0].mxu0
        %v4436 = vadd.f32 %v3809, %v4435
        %v4437 = vpop.f32.mrb[0].mxu0
        %4438 = vdwg.mxu0
        %vm4439 = vcmp.gt.f32.partialorder %v4409, 0.0
        %vm4440 = vcmp.gt.f32.partialorder %v4412, 0.0
        %vm4441 = vcmp.gt.f32.partialorder %v4417, 0.0
        %vm4442 = vcmp.gt.f32.partialorder %v4420, 0.0
        %vm4443 = vcmp.gt.f32.partialorder %v4425, 0.0
        %vm4444 = vcmp.gt.f32.partialorder %v4428, 0.0
        %vm4445 = vcmp.gt.f32.partialorder %v4433, 0.0
        %vm4446 = vcmp.gt.f32.partialorder %v4436, 0.0
        %v4447 = vmul.f32 %v4409, 0.2
        %v4448 = vmul.f32 %v4412, 0.2
        %v4449 = vmul.f32 %v4417, 0.2
        %v4450 = vmul.f32 %v4420, 0.2
        %v4451 = vmul.f32 %v4425, 0.2
        %v4452 = vmul.f32 %v4428, 0.2
        %v4453 = vmul.f32 %v4433, 0.2
        %v4454 = vmul.f32 %v4436, 0.2
        %v4455 = vsel %vm4439, %v4409, %v4447
        %v4456 = vsel %vm4440, %v4412, %v4448
        %v4457 = vsel %vm4441, %v4417, %v4449
        %v4458 = vsel %vm4442, %v4420, %v4450
        %v4459 = vsel %vm4443, %v4425, %v4451
        %v4460 = vsel %vm4444, %v4428, %v4452
        %v4461 = vsel %vm4445, %v4433, %v4453
        %v4462 = vsel %vm4446, %v4436, %v4454
        %v4463 = vpack.c.bf16 %v4456, %v4455
        %v4464 = vpack.c.bf16 %v4458, %v4457
        %v4465 = vpack.c.bf16 %v4460, %v4459
        %v4466 = vpack.c.bf16 %v4462, %v4461
        %v4471 = vunpack.c.l.b16 %v4463
        %v4472 = vunpack.c.h.b16 %v4463
        %v4473 = vunpack.c.l.b16 %v4464
        %v4474 = vunpack.c.h.b16 %v4464
        %v4475 = vunpack.c.l.b16 %v4465
        %v4476 = vunpack.c.h.b16 %v4465
        %v4477 = vunpack.c.l.b16 %v4466
        %v4478 = vunpack.c.h.b16 %v4466
        %v4479 = vpack.c.b16 %v4471, %v4471
        %v4480 = vpack.c.b16 %v4472, %v4472
        %v4481 = vpack.c.b16 %v4473, %v4473
        %v4482 = vpack.c.b16 %v4474, %v4474
        %v4483 = vpack.c.b16 %v4475, %v4475
        %v4484 = vpack.c.b16 %v4476, %v4476
        %v4485 = vpack.c.b16 %v4477, %v4477
        %v4486 = vpack.c.b16 %v4478, %v4478
        %s4495 = scalar_lea.vmem %s298, 64 [#allocation11]
        %4496 = vst [vmem:[%s4495] sm:$0xf] %v4479
        %4497 = vst [vmem:[%s4495 + $0x4] sm:$0xf] %v4480
        %4498 = vst [vmem:[%s4495 + $0x8] sm:$0xf] %v4481
        %4499 = vst [vmem:[%s4495 + $0xc] sm:$0xf] %v4482
        %4500 = vst [vmem:[%s4495 + $0x10] sm:$0xf] %v4483
        %4501 = vst [vmem:[%s4495 + $0x14] sm:$0xf] %v4484
        %4502 = vst [vmem:[%s4495 + $0x18] sm:$0xf] %v4485
        %4503 = vst [vmem:[%s4495 + $0x1c] sm:$0xf] %v4486
        %v4504 = vld [vmem:[#allocation8 + $0x140] sm:$0xf]
        %v4505 = vld [vmem:[#allocation8 + $0x144] sm:$0xf]
        %v4506 = vld [vmem:[#allocation8 + $0x148] sm:$0xf]
        %v4507 = vld [vmem:[#allocation8 + $0x14c] sm:$0xf]
        %v4508 = vld [vmem:[#allocation8 + $0x150] sm:$0xf]
        %v4509 = vld [vmem:[#allocation8 + $0x154] sm:$0xf]
        %v4510 = vld [vmem:[#allocation8 + $0x158] sm:$0xf]
        %v4511 = vld [vmem:[#allocation8 + $0x15c] sm:$0xf]
        %v4512 = vld [vmem:[#allocation8 + $0x160] sm:$0xf]
        %v4513 = vld [vmem:[#allocation8 + $0x164] sm:$0xf]
        %v4514 = vld [vmem:[#allocation8 + $0x168] sm:$0xf]
        %v4515 = vld [vmem:[#allocation8 + $0x16c] sm:$0xf]
        %v4516 = vld [vmem:[#allocation8 + $0x170] sm:$0xf]
        %v4517 = vld [vmem:[#allocation8 + $0x174] sm:$0xf]
        %v4518 = vld [vmem:[#allocation8 + $0x178] sm:$0xf]
        %v4519 = vld [vmem:[#allocation8 + $0x17c] sm:$0xf]
        %v4520 = vld [vmem:[#allocation8 + $0x180] sm:$0xf]
        %v4521 = vld [vmem:[#allocation8 + $0x184] sm:$0xf]
        %v4522 = vld [vmem:[#allocation8 + $0x188] sm:$0xf]
        %v4523 = vld [vmem:[#allocation8 + $0x18c] sm:$0xf]
        %v4524 = vld [vmem:[#allocation8 + $0x190] sm:$0xf]
        %v4525 = vld [vmem:[#allocation8 + $0x194] sm:$0xf]
        %v4526 = vld [vmem:[#allocation8 + $0x198] sm:$0xf]
        %v4527 = vld [vmem:[#allocation8 + $0x19c] sm:$0xf]
        %v4528 = vld [vmem:[#allocation8 + $0x1a0] sm:$0xf]
        %v4529 = vld [vmem:[#allocation8 + $0x1a4] sm:$0xf]
        %v4530 = vld [vmem:[#allocation8 + $0x1a8] sm:$0xf]
        %v4531 = vld [vmem:[#allocation8 + $0x1ac] sm:$0xf]
        %v4532 = vld [vmem:[#allocation8 + $0x1b0] sm:$0xf]
        %v4533 = vld [vmem:[#allocation8 + $0x1b4] sm:$0xf]
        %v4534 = vld [vmem:[#allocation8 + $0x1b8] sm:$0xf]
        %v4535 = vld [vmem:[#allocation8 + $0x1bc] sm:$0xf]
        %v4536 = vld [vmem:[#allocation8 + $0x1c0] sm:$0xf]
        %v4537 = vld [vmem:[#allocation8 + $0x1c4] sm:$0xf]
        %v4538 = vld [vmem:[#allocation8 + $0x1c8] sm:$0xf]
        %v4539 = vld [vmem:[#allocation8 + $0x1cc] sm:$0xf]
        %v4540 = vld [vmem:[#allocation8 + $0x1d0] sm:$0xf]
        %v4541 = vld [vmem:[#allocation8 + $0x1d4] sm:$0xf]
        %v4542 = vld [vmem:[#allocation8 + $0x1d8] sm:$0xf]
        %v4543 = vld [vmem:[#allocation8 + $0x1dc] sm:$0xf]
        %v4544 = vld [vmem:[#allocation8 + $0x1e0] sm:$0xf]
        %v4545 = vld [vmem:[#allocation8 + $0x1e4] sm:$0xf]
        %v4546 = vld [vmem:[#allocation8 + $0x1e8] sm:$0xf]
        %v4547 = vld [vmem:[#allocation8 + $0x1ec] sm:$0xf]
        %v4548 = vld [vmem:[#allocation8 + $0x1f0] sm:$0xf]
        %v4549 = vld [vmem:[#allocation8 + $0x1f4] sm:$0xf]
        %v4550 = vld [vmem:[#allocation8 + $0x1f8] sm:$0xf]
        %v4551 = vld [vmem:[#allocation8 + $0x1fc] sm:$0xf]
        %v4552 = vld [vmem:[#allocation8 + $0x200] sm:$0xf]
        %v4553 = vld [vmem:[#allocation8 + $0x204] sm:$0xf]
        %v4554 = vld [vmem:[#allocation8 + $0x208] sm:$0xf]
        %v4555 = vld [vmem:[#allocation8 + $0x20c] sm:$0xf]
        %v4556 = vld [vmem:[#allocation8 + $0x210] sm:$0xf]
        %v4557 = vld [vmem:[#allocation8 + $0x214] sm:$0xf]
        %v4558 = vld [vmem:[#allocation8 + $0x218] sm:$0xf]
        %v4559 = vld [vmem:[#allocation8 + $0x21c] sm:$0xf]
        %v4560 = vld [vmem:[#allocation8 + $0x220] sm:$0xf]
        %v4561 = vld [vmem:[#allocation8 + $0x224] sm:$0xf]
        %v4562 = vld [vmem:[#allocation8 + $0x228] sm:$0xf]
        %v4563 = vld [vmem:[#allocation8 + $0x22c] sm:$0xf]
        %v4564 = vld [vmem:[#allocation8 + $0x230] sm:$0xf]
        %v4565 = vld [vmem:[#allocation8 + $0x234] sm:$0xf]
        %v4566 = vld [vmem:[#allocation8 + $0x238] sm:$0xf]
        %v4567 = vld [vmem:[#allocation8 + $0x23c] sm:$0xf]
        %v4632 = vunpack.c.l.b16 %v4504
        %v4633 = vunpack.c.l.b16 %v4505
        %v4634 = vunpack.c.l.b16 %v4506
        %v4635 = vunpack.c.l.b16 %v4507
        %v4636 = vunpack.c.l.b16 %v4508
        %v4637 = vunpack.c.l.b16 %v4509
        %v4638 = vunpack.c.l.b16 %v4510
        %v4639 = vunpack.c.l.b16 %v4511
        %v4640 = vunpack.c.l.b16 %v4512
        %v4641 = vunpack.c.l.b16 %v4513
        %v4642 = vunpack.c.l.b16 %v4514
        %v4643 = vunpack.c.l.b16 %v4515
        %v4644 = vunpack.c.l.b16 %v4516
        %v4645 = vunpack.c.l.b16 %v4517
        %v4646 = vunpack.c.l.b16 %v4518
        %v4647 = vunpack.c.l.b16 %v4519
        %v4648 = vunpack.c.l.b16 %v4520
        %v4649 = vunpack.c.l.b16 %v4521
        %v4650 = vunpack.c.l.b16 %v4522
        %v4651 = vunpack.c.l.b16 %v4523
        %v4652 = vunpack.c.l.b16 %v4524
        %v4653 = vunpack.c.l.b16 %v4525
        %v4654 = vunpack.c.l.b16 %v4526
        %v4655 = vunpack.c.l.b16 %v4527
        %v4656 = vunpack.c.l.b16 %v4528
        %v4657 = vunpack.c.l.b16 %v4529
        %v4658 = vunpack.c.l.b16 %v4530
        %v4659 = vunpack.c.l.b16 %v4531
        %v4660 = vunpack.c.l.b16 %v4532
        %v4661 = vunpack.c.l.b16 %v4533
        %v4662 = vunpack.c.l.b16 %v4534
        %v4663 = vunpack.c.l.b16 %v4535
        %v4664 = vunpack.c.l.b16 %v4536
        %v4665 = vunpack.c.l.b16 %v4537
        %v4666 = vunpack.c.l.b16 %v4538
        %v4667 = vunpack.c.l.b16 %v4539
        %v4668 = vunpack.c.l.b16 %v4540
        %v4669 = vunpack.c.l.b16 %v4541
        %v4670 = vunpack.c.l.b16 %v4542
        %v4671 = vunpack.c.l.b16 %v4543
        %v4672 = vunpack.c.l.b16 %v4544
        %v4673 = vunpack.c.l.b16 %v4545
        %v4674 = vunpack.c.l.b16 %v4546
        %v4675 = vunpack.c.l.b16 %v4547
        %v4676 = vunpack.c.l.b16 %v4548
        %v4677 = vunpack.c.l.b16 %v4549
        %v4678 = vunpack.c.l.b16 %v4550
        %v4679 = vunpack.c.l.b16 %v4551
        %v4680 = vunpack.c.l.b16 %v4552
        %v4681 = vunpack.c.l.b16 %v4553
        %v4682 = vunpack.c.l.b16 %v4554
        %v4683 = vunpack.c.l.b16 %v4555
        %v4684 = vunpack.c.l.b16 %v4556
        %v4685 = vunpack.c.l.b16 %v4557
        %v4686 = vunpack.c.l.b16 %v4558
        %v4687 = vunpack.c.l.b16 %v4559
        %v4688 = vunpack.c.l.b16 %v4560
        %v4689 = vunpack.c.l.b16 %v4561
        %v4690 = vunpack.c.l.b16 %v4562
        %v4691 = vunpack.c.l.b16 %v4563
        %v4692 = vunpack.c.l.b16 %v4564
        %v4693 = vunpack.c.l.b16 %v4565
        %v4694 = vunpack.c.l.b16 %v4566
        %v4695 = vunpack.c.l.b16 %v4567
        %v4696 = vpack.c.b16 %v4633, %v4632
        %v4697 = vpack.c.b16 %v4635, %v4634
        %v4698 = vpack.c.b16 %v4637, %v4636
        %v4699 = vpack.c.b16 %v4639, %v4638
        %v4700 = vpack.c.b16 %v4641, %v4640
        %v4701 = vpack.c.b16 %v4643, %v4642
        %v4702 = vpack.c.b16 %v4645, %v4644
        %v4703 = vpack.c.b16 %v4647, %v4646
        %v4704 = vpack.c.b16 %v4649, %v4648
        %v4705 = vpack.c.b16 %v4651, %v4650
        %v4706 = vpack.c.b16 %v4653, %v4652
        %v4707 = vpack.c.b16 %v4655, %v4654
        %v4708 = vpack.c.b16 %v4657, %v4656
        %v4709 = vpack.c.b16 %v4659, %v4658
        %v4710 = vpack.c.b16 %v4661, %v4660
        %v4711 = vpack.c.b16 %v4663, %v4662
        %v4712 = vpack.c.b16 %v4665, %v4664
        %v4713 = vpack.c.b16 %v4667, %v4666
        %v4714 = vpack.c.b16 %v4669, %v4668
        %v4715 = vpack.c.b16 %v4671, %v4670
        %v4716 = vpack.c.b16 %v4673, %v4672
        %v4717 = vpack.c.b16 %v4675, %v4674
        %v4718 = vpack.c.b16 %v4677, %v4676
        %v4719 = vpack.c.b16 %v4679, %v4678
        %v4720 = vpack.c.b16 %v4681, %v4680
        %v4721 = vpack.c.b16 %v4683, %v4682
        %v4722 = vpack.c.b16 %v4685, %v4684
        %v4723 = vpack.c.b16 %v4687, %v4686
        %v4724 = vpack.c.b16 %v4689, %v4688
        %v4725 = vpack.c.b16 %v4691, %v4690
        %v4726 = vpack.c.b16 %v4693, %v4692
        %v4727 = vpack.c.b16 %v4695, %v4694
        %4760 = vmatprep.subr.bf16.mxu0 0
        %4761 = vmatpush1.bf16.msra.mxu0 %v4696
        %4762 = vmatprep.subr.bf16.mxu0 0
        %4763 = vmatpush1.bf16.msra.mxu0 %v4697
        %4764 = vmatprep.subr.bf16.mxu0 0
        %4765 = vmatpush1.bf16.msra.mxu0 %v4698
        %4766 = vmatprep.subr.bf16.mxu0 0
        %4767 = vmatpush1.bf16.msra.mxu0 %v4699
        %4768 = vmatprep.subr.bf16.mxu0 0
        %4769 = vmatpush1.bf16.msra.mxu0 %v4700
        %4770 = vmatprep.subr.bf16.mxu0 0
        %4771 = vmatpush1.bf16.msra.mxu0 %v4701
        %4772 = vmatprep.subr.bf16.mxu0 0
        %4773 = vmatpush1.bf16.msra.mxu0 %v4702
        %4774 = vmatprep.subr.bf16.mxu0 0
        %4775 = vmatpush1.bf16.msra.mxu0 %v4703
        %4776 = vmatprep.subr.bf16.mxu0 0
        %4777 = vmatpush1.bf16.msra.mxu0 %v4704
        %4778 = vmatprep.subr.bf16.mxu0 0
        %4779 = vmatpush1.bf16.msra.mxu0 %v4705
        %4780 = vmatprep.subr.bf16.mxu0 0
        %4781 = vmatpush1.bf16.msra.mxu0 %v4706
        %4782 = vmatprep.subr.bf16.mxu0 0
        %4783 = vmatpush1.bf16.msra.mxu0 %v4707
        %4784 = vmatprep.subr.bf16.mxu0 0
        %4785 = vmatpush1.bf16.msra.mxu0 %v4708
        %4786 = vmatprep.subr.bf16.mxu0 0
        %4787 = vmatpush1.bf16.msra.mxu0 %v4709
        %4788 = vmatprep.subr.bf16.mxu0 0
        %4789 = vmatpush1.bf16.msra.mxu0 %v4710
        %4790 = vmatprep.subr.bf16.mxu0 0
        %4791 = vmatpush1.bf16.msra.mxu0 %v4711
        %4792 = vmatprep.mubr.bf16.mxu0 %v3769
        %4793 = vmatmul.mubr.bf16.gmra.mrb[0].mxu0 %v3725
        %v4794 = vpop.f32.mrb[0].mxu0
        %v4795 = vadd.f32 %v3809, %v4794
        %v4796 = vpop.f32.mrb[0].mxu0
        %v4797 = vpop.f32.mrb[0].mxu0
        %v4798 = vadd.f32 %v3809, %v4797
        %v4799 = vpop.f32.mrb[0].mxu0
        %4800 = vmatprep.mubr.bf16.mxu0 %v3770
        %4801 = vmatmul.mubr.bf16.gmra.mrb[0].mxu0 %v3726
        %v4802 = vpop.f32.mrb[0].mxu0
        %v4803 = vadd.f32 %v3809, %v4802
        %v4804 = vpop.f32.mrb[0].mxu0
        %v4805 = vpop.f32.mrb[0].mxu0
        %v4806 = vadd.f32 %v3809, %v4805
        %v4807 = vpop.f32.mrb[0].mxu0
        %4808 = vmatprep.mubr.bf16.mxu0 %v3771
        %4809 = vmatmul.mubr.bf16.gmra.mrb[0].mxu0 %v3727
        %v4810 = vpop.f32.mrb[0].mxu0
        %v4811 = vadd.f32 %v3809, %v4810
        %v4812 = vpop.f32.mrb[0].mxu0
        %v4813 = vpop.f32.mrb[0].mxu0
        %v4814 = vadd.f32 %v3809, %v4813
        %v4815 = vpop.f32.mrb[0].mxu0
        %4816 = vmatprep.mubr.bf16.mxu0 %v3772
        %4817 = vmatmul.mubr.bf16.gmra.mrb[0].mxu0 %v3728
        %v4818 = vpop.f32.mrb[0].mxu0
        %v4819 = vadd.f32 %v3809, %v4818
        %v4820 = vpop.f32.mrb[0].mxu0
        %v4821 = vpop.f32.mrb[0].mxu0
        %v4822 = vadd.f32 %v3809, %v4821
        %v4823 = vpop.f32.mrb[0].mxu0
        %4824 = vdwg.mxu0
        %4825 = vmatprep.subr.bf16.mxu0 0
        %4826 = vmatpush1.bf16.msra.mxu0 %v4712
        %4827 = vmatprep.subr.bf16.mxu0 0
        %4828 = vmatpush1.bf16.msra.mxu0 %v4713
        %4829 = vmatprep.subr.bf16.mxu0 0
        %4830 = vmatpush1.bf16.msra.mxu0 %v4714
        %4831 = vmatprep.subr.bf16.mxu0 0
        %4832 = vmatpush1.bf16.msra.mxu0 %v4715
        %4833 = vmatprep.subr.bf16.mxu0 0
        %4834 = vmatpush1.bf16.msra.mxu0 %v4716
        %4835 = vmatprep.subr.bf16.mxu0 0
        %4836 = vmatpush1.bf16.msra.mxu0 %v4717
        %4837 = vmatprep.subr.bf16.mxu0 0
        %4838 = vmatpush1.bf16.msra.mxu0 %v4718
        %4839 = vmatprep.subr.bf16.mxu0 0
        %4840 = vmatpush1.bf16.msra.mxu0 %v4719
        %4841 = vmatprep.subr.bf16.mxu0 0
        %4842 = vmatpush1.bf16.msra.mxu0 %v4720
        %4843 = vmatprep.subr.bf16.mxu0 0
        %4844 = vmatpush1.bf16.msra.mxu0 %v4721
        %4845 = vmatprep.subr.bf16.mxu0 0
        %4846 = vmatpush1.bf16.msra.mxu0 %v4722
        %4847 = vmatprep.subr.bf16.mxu0 0
        %4848 = vmatpush1.bf16.msra.mxu0 %v4723
        %4849 = vmatprep.subr.bf16.mxu0 0
        %4850 = vmatpush1.bf16.msra.mxu0 %v4724
        %4851 = vmatprep.subr.bf16.mxu0 0
        %4852 = vmatpush1.bf16.msra.mxu0 %v4725
        %4853 = vmatprep.subr.bf16.mxu0 0
        %4854 = vmatpush1.bf16.msra.mxu0 %v4726
        %4855 = vmatprep.subr.bf16.mxu0 0
        %4856 = vmatpush1.bf16.msra.mxu0 %v4727
        %4857 = vmatprep.mubr.bf16.mxu0 %v3784
        %4858 = vmatmul.mubr.bf16.gmra.mrb[0].mxu0 %v3773
        %v4859 = vpop.f32.mrb[0].mxu0
        %v4860 = vadd.f32 %v4795, %v4859
        %v4861 = vpop.f32.mrb[0].mxu0
        %v4862 = vpop.f32.mrb[0].mxu0
        %v4863 = vadd.f32 %v4798, %v4862
        %v4864 = vpop.f32.mrb[0].mxu0
        %4865 = vmatprep.mubr.bf16.mxu0 %v3785
        %4866 = vmatmul.mubr.bf16.gmra.mrb[0].mxu0 %v3774
        %v4867 = vpop.f32.mrb[0].mxu0
        %v4868 = vadd.f32 %v4803, %v4867
        %v4869 = vpop.f32.mrb[0].mxu0
        %v4870 = vpop.f32.mrb[0].mxu0
        %v4871 = vadd.f32 %v4806, %v4870
        %v4872 = vpop.f32.mrb[0].mxu0
        %4873 = vmatprep.mubr.bf16.mxu0 %v3786
        %4874 = vmatmul.mubr.bf16.gmra.mrb[0].mxu0 %v3775
        %v4875 = vpop.f32.mrb[0].mxu0
        %v4876 = vadd.f32 %v4811, %v4875
        %v4877 = vpop.f32.mrb[0].mxu0
        %v4878 = vpop.f32.mrb[0].mxu0
        %v4879 = vadd.f32 %v4814, %v4878
        %v4880 = vpop.f32.mrb[0].mxu0
        %4881 = vmatprep.mubr.bf16.mxu0 %v3787
        %4882 = vmatmul.mubr.bf16.gmra.mrb[0].mxu0 %v3776
        %v4883 = vpop.f32.mrb[0].mxu0
        %v4884 = vadd.f32 %v4819, %v4883
        %v4885 = vpop.f32.mrb[0].mxu0
        %v4886 = vpop.f32.mrb[0].mxu0
        %v4887 = vadd.f32 %v4822, %v4886
        %v4888 = vpop.f32.mrb[0].mxu0
        %4889 = vdwg.mxu0
        %vm4890 = vcmp.gt.f32.partialorder %v4860, 0.0
        %vm4891 = vcmp.gt.f32.partialorder %v4863, 0.0
        %vm4892 = vcmp.gt.f32.partialorder %v4868, 0.0
        %vm4893 = vcmp.gt.f32.partialorder %v4871, 0.0
        %vm4894 = vcmp.gt.f32.partialorder %v4876, 0.0
        %vm4895 = vcmp.gt.f32.partialorder %v4879, 0.0
        %vm4896 = vcmp.gt.f32.partialorder %v4884, 0.0
        %vm4897 = vcmp.gt.f32.partialorder %v4887, 0.0
        %v4898 = vmul.f32 %v4860, 0.2
        %v4899 = vmul.f32 %v4863, 0.2
        %v4900 = vmul.f32 %v4868, 0.2
        %v4901 = vmul.f32 %v4871, 0.2
        %v4902 = vmul.f32 %v4876, 0.2
        %v4903 = vmul.f32 %v4879, 0.2
        %v4904 = vmul.f32 %v4884, 0.2
        %v4905 = vmul.f32 %v4887, 0.2
        %v4906 = vsel %vm4890, %v4860, %v4898
        %v4907 = vsel %vm4891, %v4863, %v4899
        %v4908 = vsel %vm4892, %v4868, %v4900
        %v4909 = vsel %vm4893, %v4871, %v4901
        %v4910 = vsel %vm4894, %v4876, %v4902
        %v4911 = vsel %vm4895, %v4879, %v4903
        %v4912 = vsel %vm4896, %v4884, %v4904
        %v4913 = vsel %vm4897, %v4887, %v4905
        %v4914 = vpack.c.bf16 %v4907, %v4906
        %v4915 = vpack.c.bf16 %v4909, %v4908
        %v4916 = vpack.c.bf16 %v4911, %v4910
        %v4917 = vpack.c.bf16 %v4913, %v4912
        %v4922 = vunpack.c.l.b16 %v4914
        %v4923 = vunpack.c.h.b16 %v4914
        %v4924 = vunpack.c.l.b16 %v4915
        %v4925 = vunpack.c.h.b16 %v4915
        %v4926 = vunpack.c.l.b16 %v4916
        %v4927 = vunpack.c.h.b16 %v4916
        %v4928 = vunpack.c.l.b16 %v4917
        %v4929 = vunpack.c.h.b16 %v4917
        %v4930 = vpack.c.b16 %v4922, %v4922
        %v4931 = vpack.c.b16 %v4923, %v4923
        %v4932 = vpack.c.b16 %v4924, %v4924
        %v4933 = vpack.c.b16 %v4925, %v4925
        %v4934 = vpack.c.b16 %v4926, %v4926
        %v4935 = vpack.c.b16 %v4927, %v4927
        %v4936 = vpack.c.b16 %v4928, %v4928
        %v4937 = vpack.c.b16 %v4929, %v4929
        %s4946 = scalar_lea.vmem %s298, 96 [#allocation11]
        %4947 = vst [vmem:[%s4946] sm:$0xf] %v4930
        %4948 = vst [vmem:[%s4946 + $0x4] sm:$0xf] %v4931
        %4949 = vst [vmem:[%s4946 + $0x8] sm:$0xf] %v4932
        %4950 = vst [vmem:[%s4946 + $0xc] sm:$0xf] %v4933
        %4951 = vst [vmem:[%s4946 + $0x10] sm:$0xf] %v4934
        %4952 = vst [vmem:[%s4946 + $0x14] sm:$0xf] %v4935
        %4953 = vst [vmem:[%s4946 + $0x18] sm:$0xf] %v4936
        %4954 = vst [vmem:[%s4946 + $0x1c] sm:$0xf] %v4937
        %s4955 = sand.u32 %s142, 1
        %s4956 = scalar_lea.sflag [#allocation4], %s4955
        %s4957 = sand.u32 %s142, 1
        %s4958 = smul.addr %s4957, 128
        %s4959 = scalar_lea.vmem [#allocation11], %s4958
        // Predicated region
        $region61: #{forward.2} parent=39 // pred_check
          %p4960 = pneg %p152
        $region62: #{forward.2} parent=39 // pred_check_branch
          %4962 = sbr.rel (%p4960) target = $region64
        $region63: #{forward.2} parent=39 // pred_region
          %s4964 = ssub.s32 2048, 2048
          %4965 = vsyncadd %s4956, %s4964
          %s4966 = smul.addr %s24, 32
          %s4967 = smul.addr %s4966, 64
          %s4968 = scalar_lea.hbm %s5, %s4967
          %s4969 = sshll.u32 %s4959, 4
          %s4970 = int_to_ptr.vmem [resolvable:$true] %s4969
          %4975 = dma.vmem_to_hbm [thread:$0]  %s4970, 2048, %s4968, %s4956, 64, 64, 4
        $region64: #{forward.2} parent=39 // pred_fallthru
          _
      $region40: #{forward.2} parent=5 // pred_fallthru
        _
      %p4976 = scmp.le.s32.totalorder 2, %s19
      // Predicated region
      $region65: #{forward.2} parent=5 // pred_check
        %p4977 = pneg %p4976
      $region66: #{forward.2} parent=5 // pred_check_branch
        %4979 = sbr.rel (%p4977) target = $region68
      $region67: #{forward.2} parent=5 // pred_region
        %s4980 = ssub.s32 %s19, 2
        // Predicated region
        $region69: #{forward.2} parent=67 // pred_check
          %p4981 = pneg %p158
        $region70: #{forward.2} parent=67 // pred_check_branch
          %4983 = sbr.rel (%p4981) target = $region72
        $region71: #{forward.2} parent=67 // pred_region
          %s4984 = sand.u32 %s143, 1
          %s4985 = scalar_lea.sflag [#allocation4], %s4984
          %s4986 = sand.u32 %s143, 1
          %s4987 = smul.addr %s4986, 128
          %s4988 = scalar_lea.vmem [#allocation11], %s4987
          %4989 = dma.done %s4985, 2048
        $region72: #{forward.2} parent=67 // pred_fallthru
          _
      $region68: #{forward.2} parent=5 // pred_fallthru
        _
    $region6: #{forward.2} parent=1 // loop_footer
      %s23 = sadd.s32 1, %s19
    $region7: #{forward.2} parent=1 // loop_footer_branch
      %18 = sbr.rel target = $region3
    $region8: #{forward.2} parent=1 // loop_exit
      _
    %4990 = vsyncpa [#allocation3], 1
    %s4991 = scalar_lea.sflag [#allocation3], 1
    %4992 = vsyncpa %s4991, 1
    %4993 = vsyncpa [#allocation6], 1
    %4994 = vsyncpa [#allocation9], 1
    %4995 = vsyncpa [#allocation4], 1
    %s4996 = scalar_lea.sflag [#allocation4], 1
    %4997 = vsyncpa %s4996, 1

</llo_original>
